<compile_context>
chip_gen: v7x
topology: tpu7x:2x2x1
jax: 0.10.0
libtpu: 0.0.40
codegen_flags: <defaults>
</compile_context>

<pallas_src>
import functools

import jax
import jax.numpy as jnp
from jax.experimental import pallas as pl
from jax.experimental.pallas import tpu as pltpu

LANE = 128  # TPU lane width


def _round_up(x, m):
    return ((x + m - 1) // m) * m


# ----------------------------------------------------------------------------
# Fused Block kernel: all conv layers + maxpool, one batch element / grid step.
#
# Flat activation layout (inter-layer scratch `act_ref`, shape (act_rows, Cpad)):
#   row = py * Q + px over spatially padded coords (py, px), Q = round_up(W+2, 8).
#   Real pixel (oy, ox) lives at row (oy+1)*Q + (ox+1).  The conv's padding=1
#   halo are the rows/cols that stay zero.
# For "patch row" p = oy*Q + ox, tap (dy, dx) is flat row p + dy*Q + dx, i.e.
# each of the 9 taps is a *contiguous* row-shifted slice -> direct MXU LHS.
# Patch rows with ox >= W are junk; masking them to zero on write-back is
# exactly what re-establishes the halo for the next layer.
# ----------------------------------------------------------------------------
def _block_kernel(*refs, H, W, Q, L, Cpad, Cx, dense_k0, act_rows):
    if L > 1:
        x_ref, w0_ref, wr_ref, b_ref, o_ref, act_ref = refs
    else:
        x_ref, w0_ref, b_ref, o_ref = refs
        wr_ref = act_ref = None

    P = H * Q                      # patch rows fed to the MXU per layer
    Hp, Wp = H // 2, W // 2

    def conv9(get_lhs, w_slab, kstride):
        # 3x3 conv as 9 accumulating (P, kstride) x (kstride, Cpad) matmuls.
        acc = None
        for t, (dy, dx) in enumerate([(a, b) for a in range(3) for b in range(3)]):
            lhs = get_lhs(dy * Q + dx)                        # (P, kstride) bf16
            rhs = w_slab[t * kstride:(t + 1) * kstride, :]    # (kstride, Cpad)
            part = jnp.dot(lhs, rhs, preferred_element_type=jnp.float32)
            acc = part if acc is None else acc + part
        return acc                                            # (P, Cpad) f32

    # ---------------- layer 0 (reads directly from the input block) ---------
    if dense_k0:
        # Wrapper already built the dense im2col -> one K=128 MXU matmul.
        y = jnp.dot(x_ref[0], w0_ref[...], preferred_element_type=jnp.float32)
    else:
        x0 = x_ref[0]                                         # zero-haloed image
        y = conv9(lambda off: x0[off:off + P, :], w0_ref[...], Cx)
    y = jnp.maximum(y + b_ref[0], 0.0)                        # bias + ReLU (f32)

    # ---------------- layers 1 .. L-1 (via the zero-haloed VMEM scratch) ----
    if L > 1:
        # (P, 1) mask of real output columns; lane-broadcast in the select.
        keep = (jax.lax.broadcasted_iota(jnp.int32, (P, 1), 0) % Q) < W

        # Zero only the halo rows the masked write-back never covers:
        #   [0, Q+1): top padded row + left halo of the first real row,
        #   [Q+1+P, act_rows): tail of the bottom padded row + alignment pad.
        act_ref[0:Q + 1, :] = jnp.zeros((Q + 1, Cpad), act_ref.dtype)
        act_ref[Q + 1 + P:act_rows, :] = jnp.zeros(
            (act_rows - (Q + 1 + P), Cpad), act_ref.dtype)

        for l in range(1, L):
            # Junk rows land exactly on the next layer's halo positions.
            act_ref[Q + 1:Q + 1 + P, :] = (
                jnp.where(keep, y, 0.0).astype(act_ref.dtype))
            y = conv9(lambda off: act_ref[off:off + P, :], wr_ref[l - 1], Cpad)
            y = jnp.maximum(y + b_ref[l], 0.0)

    # ---------------- fused MaxPool2d(2, 2) epilogue -------------------------
    # H-pool first: (P, Cpad) -> (Hp, 2, Q, Cpad) keeps the minor (Q, Cpad)
    # dims intact (Q % 8 == 0) -> tile-preserving reshape, max over a MAJOR
    # axis (pure elementwise max of aligned blocks, no relayout).
    yh = jnp.max(y.reshape(Hp, 2, Q, Cpad), axis=1)           # (Hp, Q, Cpad) f32
    # W-pool on the halved data (junk cols dropped first); bf16 store.
    yw = jnp.max(yh[:, :W, :].reshape(Hp, Wp, 2, Cpad), axis=2)
    o_ref[0] = yw.astype(o_ref.dtype)                         # lane-dense bf16


# ----------------------------------------------------------------------------
# Wrapper: NCHW in / NCHW out, PyTorch-style params (w: OIHW, b: (Cout,)).
# ----------------------------------------------------------------------------
def block_forward_nchw(x_nchw, params):
    N, Cin, H, W = x_nchw.shape
    L = len(params)
    Cout = params[0][0].shape[0]
    assert H % 2 == 0 and W % 2 == 0

    Cpad = _round_up(Cout, LANE)         # lane-dense channels for layers >= 1
    Q = _round_up(W + 2, 8)              # padded row width (sublane friendly)
    P = H * Q
    Hp, Wp = H // 2, W // 2
    S = (H + 2) * Q
    act_rows = _round_up(S + 2, 8)       # inter-layer scratch rows (covers taps)

    dense_k0 = 9 * Cin <= LANE           # dense-K packing for tiny-Cin layer 0

    x_nhwc = jnp.transpose(x_nchw, (0, 2, 3, 1))
    w0_oihw, _ = params[0]
    w0_hwio = jnp.transpose(w0_oihw, (2, 3, 1, 0))            # (3,3,Cin,Cout)

    if dense_k0:
        # ---- layer-0 im2col built once in XLA: K0 = 128 dense lanes --------
        Cx = 0
        K0 = LANE
        xp = jnp.pad(x_nhwc, ((0, 0), (1, 1), (1, 1), (0, 0)))
        taps = [xp[:, dy:dy + H, dx:dx + W, :]
                for dy in range(3) for dx in range(3)]
        x_i2c = jnp.concatenate(taps, axis=-1)                # (N,H,W,9*Cin)
        x_i2c = jnp.pad(x_i2c, ((0, 0), (0, 0), (0, Q - W), (0, K0 - 9 * Cin)))
        x_in = x_i2c.reshape(N, P, K0).astype(jnp.bfloat16)   # rows p = oy*Q+ox
        w0 = w0_hwio.reshape(9 * Cin, Cout)                   # row = t*Cin + c
        w0 = jnp.pad(w0, ((0, K0 - 9 * Cin), (0, Cpad - Cout)))
    else:
        # ---- zero-haloed padded image; layer 0 uses the 9-tap path ---------
        Cx = _round_up(Cin, LANE)
        K0 = 9 * Cx
        x_rows = act_rows
        xpd = jnp.pad(x_nhwc, ((0, 0), (1, 1), (1, Q - W - 1), (0, Cx - Cin)))
        x_in = jnp.pad(xpd.reshape(N, S, Cx), ((0, 0), (0, x_rows - S), (0, 0)))
        x_in = x_in.astype(jnp.bfloat16)
        w0 = jnp.pad(w0_hwio, ((0, 0), (0, 0), (0, Cx - Cin), (0, Cpad - Cout)))
        w0 = w0.reshape(K0, Cpad)                             # row = t*Cx + c
    w0 = w0.astype(jnp.bfloat16)

    # ---- weights of layers 1..L-1 and all biases ----------------------------
    if L > 1:
        wr_list = []
        for w_oihw, _ in params[1:]:
            w_hwio = jnp.transpose(w_oihw, (2, 3, 1, 0))      # (3,3,Cout,Cout)
            w_pad = jnp.pad(w_hwio, ((0, 0), (0, 0),
                                     (0, Cpad - Cout), (0, Cpad - Cout)))
            wr_list.append(w_pad.reshape(9 * Cpad, Cpad))     # row = t*Cpad + ci
        wr = jnp.stack(wr_list).astype(jnp.bfloat16)          # (L-1,9Cpad,Cpad)
    b_packed = jnp.stack([jnp.pad(b, (0, Cpad - Cout)).reshape(1, Cpad)
                          for _, b in params])                # (L,1,Cpad) f32

    # ---- pallas_call ---------------------------------------------------------
    in_specs = [pl.BlockSpec((1,) + x_in.shape[1:], lambda n: (n, 0, 0)),
                pl.BlockSpec(w0.shape, lambda n: (0, 0))]
    args = [x_in, w0]
    if L > 1:
        in_specs.append(pl.BlockSpec(wr.shape, lambda n: (0, 0, 0)))
        args.append(wr)
    in_specs.append(pl.BlockSpec((L, 1, Cpad), lambda n: (0, 0, 0)))
    args.append(b_packed)

    scratch = [pltpu.VMEM((act_rows, Cpad), jnp.bfloat16)] if L > 1 else []

    kernel = functools.partial(_block_kernel, H=H, W=W, Q=Q, L=L, Cpad=Cpad,
                               Cx=Cx, dense_k0=dense_k0, act_rows=act_rows)
    out = pl.pallas_call(
        kernel,
        out_shape=jax.ShapeDtypeStruct((N, Hp, Wp, Cpad), jnp.bfloat16),
        grid=(N,),
        in_specs=in_specs,
        out_specs=pl.BlockSpec((1, Hp, Wp, Cpad), lambda n: (n, 0, 0, 0)),
        scratch_shapes=scratch,
        compiler_params=pltpu.CompilerParams(
            dimension_semantics=("parallel",),
            vmem_limit_bytes=64 * 1024 * 1024),
    )(*args)

    out = out[:, :, :, :Cout]                        # drop channel padding
    # NOTE: output is bf16 (per perf review: the next VGG block consumes bf16).
    return jnp.transpose(out, (0, 3, 1, 2))          # NHWC -> NCHW


block_forward = jax.jit(block_forward_nchw)


# ----------------------------------------------------------------------------
# Params init (PyTorch default Conv2d init) and pure-JAX references.
# ----------------------------------------------------------------------------
def init_block_params(key, in_channels, out_channels, no_layers):
    params = []
    cin = in_channels
    for _ in range(no_layers):
        key, kw, kb = jax.random.split(key, 3)
        bound = 1.0 / jnp.sqrt(cin * 9)
        w = jax.random.uniform(kw, (out_channels, cin, 3, 3),
                               jnp.float32, -bound, bound)          # OIHW
        b = jax.random.uniform(kb, (out_channels,), jnp.float32, -bound, bound)
        params.append((w, b))
        cin = out_channels
    return params


def _reference_forward_nchw(x_nchw, params, use_bf16_inputs):
    x = jnp.transpose(x_nchw, (0, 2, 3, 1))
    for w_oihw, b in params:
        w = jnp.transpose(w_oihw, (2, 3, 1, 0))
        if use_bf16_inputs:
            lhs, rhs = x.astype(jnp.bfloat16), w.astype(jnp.bfloat16)
        else:
            lhs, rhs = x, w
        x = jax.lax.conv_general_dilated(
            lhs, rhs, window_strides=(1, 1), padding="SAME",
            dimension_numbers=("NHWC", "HWIO", "NHWC"),
            preferred_element_type=jnp.float32)
        x = jnp.maximum(x + b[None, None, None, :], 0.0)
    x = jax.lax.reduce_window(x, -jnp.inf, jax.lax.max,
                              (1, 2, 2, 1), (1, 2, 2, 1), "VALID")
    return jnp.transpose(x, (0, 3, 1, 2))


if __name__ == "__main__":
    in_channels, out_channels, no_layers = 4, 8, 2
    N, H, W = 2, 16, 16

    key = jax.random.PRNGKey(0)
    key, kx = jax.random.split(key)
    x = jax.random.normal(kx, (N, in_channels, H, W), jnp.float32)  # NCHW

    params = init_block_params(key, in_channels, out_channels, no_layers)

    out = jax.block_until_ready(block_forward(x, params))
    assert out.shape == (N, out_channels, H // 2, W // 2), out.shape
    out_f32 = out.astype(jnp.float32)

    # Tight check vs a reference using the same bf16 MXU inputs / f32 accum
    # (output itself is bf16, hence the ~1% tolerance).
    ref_bf16 = _reference_forward_nchw(x, params, use_bf16_inputs=True)
    assert jnp.allclose(out_f32, ref_bf16, rtol=2e-2, atol=2e-2), (
        float(jnp.max(jnp.abs(out_f32 - ref_bf16))))

    # Loose check vs full-f32 PyTorch semantics.
    ref_f32 = _reference_forward_nchw(x, params, use_bf16_inputs=False)
    assert jnp.allclose(out_f32, ref_f32, rtol=6e-2, atol=6e-2), (
        float(jnp.max(jnp.abs(out_f32 - ref_f32))))

    print("KERNEL_OK")
</pallas_src>

<mosaic_0001>
module attributes {stable_mosaic.version = 11 : i64} {
  func.func @_block_kernel(%arg0: i32, %arg1: memref<1x384x128xbf16, #tpu.memory_space<vmem>>, %arg2: memref<128x128xbf16, #tpu.memory_space<vmem>>, %arg3: memref<1x1152x128xbf16, #tpu.memory_space<vmem>>, %arg4: memref<2x1x128xf32, #tpu.memory_space<vmem>>, %arg5: memref<1x8x8x128xbf16, #tpu.memory_space<vmem>>, %arg6: memref<440x128xbf16, #tpu.memory_space<vmem>>) attributes {dimension_semantics = [#tpu.dimension_semantics<parallel>], iteration_bounds = array<i64: 2>, scalar_prefetch = 0 : i64, scratch_operands = 1 : i64, tpu.core_type = #tpu.core_type<tc>, window_params = [{transform_indices = @transform_0, window_bounds = array<i64: 1, 384, 128>}, {pipeline_mode = #tpu.pipeline_mode<synchronous>, transform_indices = @transform_1, window_bounds = array<i64: 128, 128>}, {pipeline_mode = #tpu.pipeline_mode<synchronous>, transform_indices = @transform_2, window_bounds = array<i64: 1, 1152, 128>}, {pipeline_mode = #tpu.pipeline_mode<synchronous>, transform_indices = @transform_3, window_bounds = array<i64: 2, 1, 128>}, {transform_indices = @transform_4, window_bounds = array<i64: 1, 8, 8, 128>}]} {
    %c0 = arith.constant 0 : index
    %c0_0 = arith.constant 0 : index
    %c0_1 = arith.constant 0 : index
    %0 = vector.load %arg1[%c0, %c0_0, %c0_1] : memref<1x384x128xbf16, #tpu.memory_space<vmem>>, vector<1x384x128xbf16>
    %1 = vector.shape_cast %0 : vector<1x384x128xbf16> to vector<384x128xbf16>
    %c0_2 = arith.constant 0 : index
    %c0_3 = arith.constant 0 : index
    %2 = vector.load %arg2[%c0_2, %c0_3] : memref<128x128xbf16, #tpu.memory_space<vmem>>, vector<128x128xbf16>
    %cst = arith.constant dense<0.000000e+00> : vector<384x128xf32>
    %3 = tpu.matmul %1, %2, %cst {dimension_numbers = #tpu.dot_dimension_numbers<[1], [0], [0], [1], [0, 0, 1, 1], [], []>} : vector<384x128xbf16>, vector<128x128xbf16>, vector<384x128xf32> -> vector<384x128xf32>
    %c0_4 = arith.constant 0 : index
    %c0_5 = arith.constant 0 : index
    %c0_6 = arith.constant 0 : index
    %4 = vector.load %arg4[%c0_4, %c0_5, %c0_6] : memref<2x1x128xf32, #tpu.memory_space<vmem>>, vector<1x1x128xf32>
    %5 = vector.shape_cast %4 : vector<1x1x128xf32> to vector<1x128xf32>
    %6 = vector.broadcast %5 : vector<1x128xf32> to vector<384x128xf32>
    %7 = arith.addf %3, %6 : vector<384x128xf32>
    %cst_7 = arith.constant 0.000000e+00 : f32
    %8 = vector.broadcast %cst_7 : f32 to vector<384x128xf32>
    %9 = arith.maximumf %7, %8 : vector<384x128xf32>
    %10 = tpu.iota {dimensions = array<i32: 0>} : vector<384x1xi32>
    %c24_i32 = arith.constant 24 : i32
    %c0_i32 = arith.constant 0 : i32
    %11 = arith.cmpi eq, %c24_i32, %c0_i32 : i32
    %c1_i32 = arith.constant 1 : i32
    %12 = arith.select %11, %c1_i32, %c24_i32 : i32
    %13 = vector.broadcast %12 : i32 to vector<384x1xi32>
    %14 = arith.remsi %10, %13 : vector<384x1xi32>
    %c0_i32_8 = arith.constant 0 : i32
    %15 = vector.broadcast %c0_i32_8 : i32 to vector<384x1xi32>
    %16 = arith.cmpi ne, %14, %15 : vector<384x1xi32>
    %c0_i32_9 = arith.constant 0 : i32
    %17 = vector.broadcast %c0_i32_9 : i32 to vector<384x1xi32>
    %18 = arith.cmpi slt, %14, %17 : vector<384x1xi32>
    %c0_i32_10 = arith.constant 0 : i32
    %19 = arith.cmpi slt, %12, %c0_i32_10 : i32
    %20 = vector.broadcast %19 : i1 to vector<384x1xi1>
    %21 = vector.broadcast %20 : vector<384x1xi1> to vector<384x1xi1>
    %22 = arith.xori %18, %21 : vector<384x1xi1>
    %23 = arith.andi %22, %16 : vector<384x1xi1>
    %24 = vector.broadcast %12 : i32 to vector<384x1xi32>
    %25 = arith.addi %14, %24 : vector<384x1xi32>
    %26 = arith.select %23, %25, %14 : vector<384x1xi1>, vector<384x1xi32>
    %c16_i32 = arith.constant 16 : i32
    %27 = vector.broadcast %c16_i32 : i32 to vector<384x1xi32>
    %28 = arith.cmpi slt, %26, %27 : vector<384x1xi32>
    %cst_11 = arith.constant 0.000000e+00 : bf16
    %29 = vector.broadcast %cst_11 : bf16 to vector<25x128xbf16>
    %c0_12 = arith.constant 0 : index
    %c0_13 = arith.constant 0 : index
    %30 = vector.load %arg6[%c0_12, %c0_13] : memref<440x128xbf16, #tpu.memory_space<vmem>>, vector<25x128xbf16>
    tpu.vector_store %arg6[%c0_12, %c0_13], %29 {strides = array<i32>} : memref<440x128xbf16, #tpu.memory_space<vmem>>, vector<25x128xbf16>,
    %cst_14 = arith.constant 0.000000e+00 : bf16
    %31 = vector.broadcast %cst_14 : bf16 to vector<31x128xbf16>
    %c409 = arith.constant 409 : index
    %c0_15 = arith.constant 0 : index
    %32 = vector.load %arg6[%c409, %c0_15] : memref<440x128xbf16, #tpu.memory_space<vmem>>, vector<31x128xbf16>
    tpu.vector_store %arg6[%c409, %c0_15], %31 {strides = array<i32>} : memref<440x128xbf16, #tpu.memory_space<vmem>>, vector<31x128xbf16>,
    %cst_16 = arith.constant 0.000000e+00 : f32
    %33 = vector.shape_cast %28 : vector<384x1xi1> to vector<384x1xi1>
    %34 = vector.broadcast %33 : vector<384x1xi1> to vector<384x128xi1>
    %35 = vector.broadcast %cst_16 : f32 to vector<384x128xf32>
    %36 = arith.select %34, %9, %35 : vector<384x128xi1>, vector<384x128xf32>
    %37 = arith.truncf %36 : vector<384x128xf32> to vector<384x128xbf16>
    %c25 = arith.constant 25 : index
    %c0_17 = arith.constant 0 : index
    %38 = vector.load %arg6[%c25, %c0_17] : memref<440x128xbf16, #tpu.memory_space<vmem>>, vector<384x128xbf16>
    tpu.vector_store %arg6[%c25, %c0_17], %37 {strides = array<i32>} : memref<440x128xbf16, #tpu.memory_space<vmem>>, vector<384x128xbf16>,
    %c0_18 = arith.constant 0 : index
    %c0_19 = arith.constant 0 : index
    %c0_20 = arith.constant 0 : index
    %39 = vector.load %arg3[%c0_18, %c0_19, %c0_20] : memref<1x1152x128xbf16, #tpu.memory_space<vmem>>, vector<1x1152x128xbf16>
    %40 = vector.shape_cast %39 : vector<1x1152x128xbf16> to vector<1152x128xbf16>
    %c0_21 = arith.constant 0 : index
    %c0_22 = arith.constant 0 : index
    %41 = vector.load %arg6[%c0_21, %c0_22] : memref<440x128xbf16, #tpu.memory_space<vmem>>, vector<384x128xbf16>
    %42 = vector.extract_strided_slice %40 {offsets = [0, 0], sizes = [128, 128], strides = [1, 1]} : vector<1152x128xbf16> to vector<128x128xbf16>
    %cst_23 = arith.constant dense<0.000000e+00> : vector<384x128xf32>
    %43 = tpu.matmul %41, %42, %cst_23 {dimension_numbers = #tpu.dot_dimension_numbers<[1], [0], [0], [1], [0, 0, 1, 1], [], []>} : vector<384x128xbf16>, vector<128x128xbf16>, vector<384x128xf32> -> vector<384x128xf32>
    %c1 = arith.constant 1 : index
    %c0_24 = arith.constant 0 : index
    %44 = vector.load %arg6[%c1, %c0_24] : memref<440x128xbf16, #tpu.memory_space<vmem>>, vector<384x128xbf16>
    %45 = vector.extract_strided_slice %40 {offsets = [128, 0], sizes = [128, 128], strides = [1, 1]} : vector<1152x128xbf16> to vector<128x128xbf16>
    %cst_25 = arith.constant dense<0.000000e+00> : vector<384x128xf32>
    %46 = tpu.matmul %44, %45, %cst_25 {dimension_numbers = #tpu.dot_dimension_numbers<[1], [0], [0], [1], [0, 0, 1, 1], [], []>} : vector<384x128xbf16>, vector<128x128xbf16>, vector<384x128xf32> -> vector<384x128xf32>
    %47 = arith.addf %43, %46 : vector<384x128xf32>
    %c2 = arith.constant 2 : index
    %c0_26 = arith.constant 0 : index
    %48 = vector.load %arg6[%c2, %c0_26] : memref<440x128xbf16, #tpu.memory_space<vmem>>, vector<384x128xbf16>
    %49 = vector.extract_strided_slice %40 {offsets = [256, 0], sizes = [128, 128], strides = [1, 1]} : vector<1152x128xbf16> to vector<128x128xbf16>
    %cst_27 = arith.constant dense<0.000000e+00> : vector<384x128xf32>
    %50 = tpu.matmul %48, %49, %cst_27 {dimension_numbers = #tpu.dot_dimension_numbers<[1], [0], [0], [1], [0, 0, 1, 1], [], []>} : vector<384x128xbf16>, vector<128x128xbf16>, vector<384x128xf32> -> vector<384x128xf32>
    %51 = arith.addf %47, %50 : vector<384x128xf32>
    %c24 = arith.constant 24 : index
    %c0_28 = arith.constant 0 : index
    %52 = vector.load %arg6[%c24, %c0_28] : memref<440x128xbf16, #tpu.memory_space<vmem>>, vector<384x128xbf16>
    %53 = vector.extract_strided_slice %40 {offsets = [384, 0], sizes = [128, 128], strides = [1, 1]} : vector<1152x128xbf16> to vector<128x128xbf16>
    %cst_29 = arith.constant dense<0.000000e+00> : vector<384x128xf32>
    %54 = tpu.matmul %52, %53, %cst_29 {dimension_numbers = #tpu.dot_dimension_numbers<[1], [0], [0], [1], [0, 0, 1, 1], [], []>} : vector<384x128xbf16>, vector<128x128xbf16>, vector<384x128xf32> -> vector<384x128xf32>
    %55 = arith.addf %51, %54 : vector<384x128xf32>
    %c25_30 = arith.constant 25 : index
    %c0_31 = arith.constant 0 : index
    %56 = vector.load %arg6[%c25_30, %c0_31] : memref<440x128xbf16, #tpu.memory_space<vmem>>, vector<384x128xbf16>
    %57 = vector.extract_strided_slice %40 {offsets = [512, 0], sizes = [128, 128], strides = [1, 1]} : vector<1152x128xbf16> to vector<128x128xbf16>
    %cst_32 = arith.constant dense<0.000000e+00> : vector<384x128xf32>
    %58 = tpu.matmul %56, %57, %cst_32 {dimension_numbers = #tpu.dot_dimension_numbers<[1], [0], [0], [1], [0, 0, 1, 1], [], []>} : vector<384x128xbf16>, vector<128x128xbf16>, vector<384x128xf32> -> vector<384x128xf32>
    %59 = arith.addf %55, %58 : vector<384x128xf32>
    %c26 = arith.constant 26 : index
    %c0_33 = arith.constant 0 : index
    %60 = vector.load %arg6[%c26, %c0_33] : memref<440x128xbf16, #tpu.memory_space<vmem>>, vector<384x128xbf16>
    %61 = vector.extract_strided_slice %40 {offsets = [640, 0], sizes = [128, 128], strides = [1, 1]} : vector<1152x128xbf16> to vector<128x128xbf16>
    %cst_34 = arith.constant dense<0.000000e+00> : vector<384x128xf32>
    %62 = tpu.matmul %60, %61, %cst_34 {dimension_numbers = #tpu.dot_dimension_numbers<[1], [0], [0], [1], [0, 0, 1, 1], [], []>} : vector<384x128xbf16>, vector<128x128xbf16>, vector<384x128xf32> -> vector<384x128xf32>
    %63 = arith.addf %59, %62 : vector<384x128xf32>
    %c48 = arith.constant 48 : index
    %c0_35 = arith.constant 0 : index
    %64 = vector.load %arg6[%c48, %c0_35] : memref<440x128xbf16, #tpu.memory_space<vmem>>, vector<384x128xbf16>
    %65 = vector.extract_strided_slice %40 {offsets = [768, 0], sizes = [128, 128], strides = [1, 1]} : vector<1152x128xbf16> to vector<128x128xbf16>
    %cst_36 = arith.constant dense<0.000000e+00> : vector<384x128xf32>
    %66 = tpu.matmul %64, %65, %cst_36 {dimension_numbers = #tpu.dot_dimension_numbers<[1], [0], [0], [1], [0, 0, 1, 1], [], []>} : vector<384x128xbf16>, vector<128x128xbf16>, vector<384x128xf32> -> vector<384x128xf32>
    %67 = arith.addf %63, %66 : vector<384x128xf32>
    %c49 = arith.constant 49 : index
    %c0_37 = arith.constant 0 : index
    %68 = vector.load %arg6[%c49, %c0_37] : memref<440x128xbf16, #tpu.memory_space<vmem>>, vector<384x128xbf16>
    %69 = vector.extract_strided_slice %40 {offsets = [896, 0], sizes = [128, 128], strides = [1, 1]} : vector<1152x128xbf16> to vector<128x128xbf16>
    %cst_38 = arith.constant dense<0.000000e+00> : vector<384x128xf32>
    %70 = tpu.matmul %68, %69, %cst_38 {dimension_numbers = #tpu.dot_dimension_numbers<[1], [0], [0], [1], [0, 0, 1, 1], [], []>} : vector<384x128xbf16>, vector<128x128xbf16>, vector<384x128xf32> -> vector<384x128xf32>
    %71 = arith.addf %67, %70 : vector<384x128xf32>
    %c50 = arith.constant 50 : index
    %c0_39 = arith.constant 0 : index
    %72 = vector.load %arg6[%c50, %c0_39] : memref<440x128xbf16, #tpu.memory_space<vmem>>, vector<384x128xbf16>
    %73 = vector.extract_strided_slice %40 {offsets = [1024, 0], sizes = [128, 128], strides = [1, 1]} : vector<1152x128xbf16> to vector<128x128xbf16>
    %cst_40 = arith.constant dense<0.000000e+00> : vector<384x128xf32>
    %74 = tpu.matmul %72, %73, %cst_40 {dimension_numbers = #tpu.dot_dimension_numbers<[1], [0], [0], [1], [0, 0, 1, 1], [], []>} : vector<384x128xbf16>, vector<128x128xbf16>, vector<384x128xf32> -> vector<384x128xf32>
    %75 = arith.addf %71, %74 : vector<384x128xf32>
    %c1_41 = arith.constant 1 : index
    %c0_42 = arith.constant 0 : index
    %c0_43 = arith.constant 0 : index
    %76 = vector.load %arg4[%c1_41, %c0_42, %c0_43] : memref<2x1x128xf32, #tpu.memory_space<vmem>>, vector<1x1x128xf32>
    %77 = vector.shape_cast %76 : vector<1x1x128xf32> to vector<1x128xf32>
    %78 = vector.broadcast %77 : vector<1x128xf32> to vector<384x128xf32>
    %79 = arith.addf %75, %78 : vector<384x128xf32>
    %cst_44 = arith.constant 0.000000e+00 : f32
    %80 = vector.broadcast %cst_44 : f32 to vector<384x128xf32>
    %81 = arith.maximumf %79, %80 : vector<384x128xf32>
    %82 = vector.shape_cast %81 : vector<384x128xf32> to vector<8x2x24x128xf32>
    %cst_45 = arith.constant dense<0xFF800000> : vector<8x24x128xf32>
    %83 = vector.multi_reduction <maximumf>, %82, %cst_45 [1] : vector<8x2x24x128xf32> to vector<8x24x128xf32>
    %84 = vector.extract_strided_slice %83 {offsets = [0, 0, 0], sizes = [8, 16, 128], strides = [1, 1, 1]} : vector<8x24x128xf32> to vector<8x16x128xf32>
    %85 = vector.shape_cast %84 : vector<8x16x128xf32> to vector<8x8x2x128xf32>
    %cst_46 = arith.constant dense<0xFF800000> : vector<8x8x128xf32>
    %86 = vector.multi_reduction <maximumf>, %85, %cst_46 [2] : vector<8x8x2x128xf32> to vector<8x8x128xf32>
    %87 = arith.truncf %86 : vector<8x8x128xf32> to vector<8x8x128xbf16>
    %c0_47 = arith.constant 0 : index
    %c0_48 = arith.constant 0 : index
    %c0_49 = arith.constant 0 : index
    %c0_50 = arith.constant 0 : index
    %88 = vector.load %arg5[%c0_47, %c0_48, %c0_49, %c0_50] : memref<1x8x8x128xbf16, #tpu.memory_space<vmem>>, vector<1x8x8x128xbf16>
    %89 = vector.shape_cast %88 : vector<1x8x8x128xbf16> to vector<8x8x128xbf16>
    %90 = vector.shape_cast %87 : vector<8x8x128xbf16> to vector<1x8x8x128xbf16>
    tpu.vector_store %arg5[%c0_47, %c0_48, %c0_49, %c0_50], %90 {strides = array<i32>} : memref<1x8x8x128xbf16, #tpu.memory_space<vmem>>, vector<1x8x8x128xbf16>,
    return
  }
  func.func @transform_0(%arg0: i32) -> (i32, i32, i32) {
    %c0_i32 = arith.constant 0 : i32
    %c0_i32_0 = arith.constant 0 : i32
    %c0_i32_1 = arith.constant 0 : i32
    return %arg0, %c0_i32, %c0_i32_0 : i32, i32, i32
  }
  func.func @transform_1(%arg0: i32) -> (i32, i32) {
    %c0_i32 = arith.constant 0 : i32
    %c0_i32_0 = arith.constant 0 : i32
    %c0_i32_1 = arith.constant 0 : i32
    return %c0_i32, %c0_i32_0 : i32, i32
  }
  func.func @transform_2(%arg0: i32) -> (i32, i32, i32) {
    %c0_i32 = arith.constant 0 : i32
    %c0_i32_0 = arith.constant 0 : i32
    %c0_i32_1 = arith.constant 0 : i32
    %c0_i32_2 = arith.constant 0 : i32
    return %c0_i32, %c0_i32_0, %c0_i32_1 : i32, i32, i32
  }
  func.func @transform_3(%arg0: i32) -> (i32, i32, i32) {
    %c0_i32 = arith.constant 0 : i32
    %c0_i32_0 = arith.constant 0 : i32
    %c0_i32_1 = arith.constant 0 : i32
    %c0_i32_2 = arith.constant 0 : i32
    return %c0_i32, %c0_i32_0, %c0_i32_1 : i32, i32, i32
  }
  func.func @transform_4(%arg0: i32) -> (i32, i32, i32, i32) {
    %c0_i32 = arith.constant 0 : i32
    %c0_i32_0 = arith.constant 0 : i32
    %c0_i32_1 = arith.constant 0 : i32
    %c0_i32_2 = arith.constant 0 : i32
    return %arg0, %c0_i32, %c0_i32_0, %c0_i32_1 : i32, i32, i32, i32
  }
}

</mosaic_0001>

<llo_original>
// kernel: block_forward_nchw.1
$region0: #{block_forward_nchw.1}
  #allocation0 [shape = 'u32[]', space=smem, size = 0x4, offset = 0x4, fixed_abs, tag = 'smem constant byte address 0x4 - core index']
  #allocation1 [shape = 'u32[144,128]{1,0:T(1,128)}', space=vmem, size = 0x12000, scoped, tag = 'internal scratch']
  #allocation2 [shape = 'bf16[440,128]{1,0:T(8,128)(2,1)}', space=vmem, size = 0x1b800, scoped, tag = 'scratch operand']
  %s0 = inlined_call_operand.hbm [shape: bf16[2,384,128], index: 0, kind: input, shape index: {}]
  %s1 = inlined_call_operand.hbm [shape: bf16[128,128], index: 1, kind: input, shape index: {}]
  %s2 = inlined_call_operand.hbm [shape: bf16[1,1152,128], index: 2, kind: input, shape index: {}]
  %s3 = inlined_call_operand.hbm [shape: f32[2,1,128], index: 3, kind: input, shape index: {}]
  %s4 = inlined_call_operand.hbm [shape: bf16[2,8,8,128], index: 4, kind: output, shape index: {}]
  %s5 = sld [smem:[#allocation0]]
  $region65: #{block_forward_nchw.1} parent=0
    _
  %s7 = ssub.s32 1, %s5
  %s8 = scalar_select 0, %s7, %s5
  $region1: #{block_forward_nchw.1} parent=0
    #allocation3 [shape = 'u8[196608]{0}', space=vmem, size = 0x30000, scoped, tag = 'input window, operand 0']
    #allocation4 [shape = 's32[2]{0}', space=sflag, size = 0x8, scoped, tag = 'scoped memory for block_forward_nchw.1']
    #allocation5 [shape = 's32[2]{0}', space=sflag, size = 0x8, scoped, tag = 'scoped memory for block_forward_nchw.1']
    #allocation6 [shape = 'u8[32768]{0}', space=vmem, size = 0x8000, scoped, tag = 'input window, operand 1, single buffered']
    #allocation7 [shape = 's32[1]{0}', space=sflag, size = 0x4, scoped, tag = 'scoped memory for block_forward_nchw.1']
    #allocation8 [shape = 'u8[294912]{0}', space=vmem, size = 0x48000, scoped, tag = 'input window, operand 2, single buffered']
    #allocation9 [shape = 'u8[1024]{0}', space=vmem, size = 0x400, scoped, tag = 'input window, operand 3, single buffered']
    #allocation10 [shape = 's32[1]{0}', space=sflag, size = 0x4, scoped, tag = 'scoped memory for block_forward_nchw.1']
    #allocation11 [shape = 'u8[32768]{0}', space=vmem, size = 0x8000, scoped, tag = 'output window, operand 0']
    %9 = vsyncpa [#allocation4], 0
    %s10 = scalar_lea.sflag [#allocation4], 1
    %11 = vsyncpa %s10, 0
    %12 = vsyncpa [#allocation7], 0
    %13 = vsyncpa [#allocation10], 0
    %14 = vsyncpa [#allocation5], 0
    %s15 = scalar_lea.sflag [#allocation5], 1
    %16 = vsyncpa %s15, 0
    loop: start=0, step=1, limit=4
    $region2: #{block_forward_nchw.1} parent=1 // loop_pre_header
      _
    $region3: #{block_forward_nchw.1} parent=1 // loop_header
      %s18 = sphi 0, %s22
      %p19 = scmp.ge.s32.totalorder %s18, 4
      %s28 = sphi 0, %s30
      %s31 = sphi 0, %s28
      %s32 = sphi 0, %s31
      %s48 = sphi 0, %s32
      %s52 = sphi 0, %s52
      %s54 = sphi 0, %s52
      %s55 = sphi 0, %s54
      %s69 = sphi 0, %s55
      %s73 = sphi 0, %s73
      %s75 = sphi 0, %s73
      %s76 = sphi 0, %s75
      %s90 = sphi 0, %s76
      %s94 = sphi 0, %s94
      %s96 = sphi 0, %s94
      %s97 = sphi 0, %s96
      %s111 = sphi 0, %s97
      %s117 = sphi 0, %s119
      %s120 = sphi 0, %s117
      %s121 = sphi 0, %s120
      %s137 = sphi 0, %s121
    $region4: #{block_forward_nchw.1} parent=1 // loop_header_branch
      %21 = sbr.rel (%p19) target = $region8
    $region5: #{block_forward_nchw.1} parent=1 // loop_body
      %s23 = ssub.s32 %s18, 1
      %s24 = ssub.s32 %s18, 2
      %s25 = sadd.s32 %s18, 1
      %s26 = ssub.s32 %s18, %s25
      %p27 = scmp.eq.s32.totalorder %s26, 0
      %s29 = sadd.s32 %s28, 1
      %s30 = scalar_select %p27, %s28, %s29
      %p33 = pneg %p27
      %p34 = scmp.eq.s32.totalorder %s18, 1
      %p35 = por %p33, %p34
      %p36 = scmp.ne.s32.totalorder %s28, %s31
      %p37 = scmp.eq.s32.totalorder %s18, 0
      %p38 = por %p36, %p37
      %p39 = scmp.ne.s32.totalorder %s28, %s31
      %p40 = scmp.eq.s32.totalorder %s23, 1
      %p41 = por %p39, %p40
      %p42 = scmp.ne.s32.totalorder %s31, %s32
      %p43 = scmp.eq.s32.totalorder %s23, 0
      %p44 = por %p42, %p43
      %p45 = scmp.ne.s32.totalorder %s31, %s32
      %p46 = scmp.eq.s32.totalorder %s24, 1
      %p47 = por %p45, %p46
      %p49 = scmp.ne.s32.totalorder %s32, %s48
      %p50 = scmp.eq.s32.totalorder %s24, 0
      %p51 = por %p49, %p50
      %s53 = sadd.s32 %s52, 1
      %p56 = scmp.eq.s32.totalorder %s18, 1
      %p57 = scmp.ne.s32.totalorder %s52, %s54
      %p58 = scmp.eq.s32.totalorder %s18, 0
      %p59 = por %p57, %p58
      %p60 = scmp.ne.s32.totalorder %s52, %s54
      %p61 = scmp.eq.s32.totalorder %s23, 1
      %p62 = por %p60, %p61
      %p63 = scmp.ne.s32.totalorder %s54, %s55
      %p64 = scmp.eq.s32.totalorder %s23, 0
      %p65 = por %p63, %p64
      %p66 = scmp.ne.s32.totalorder %s54, %s55
      %p67 = scmp.eq.s32.totalorder %s24, 1
      %p68 = por %p66, %p67
      %p70 = scmp.ne.s32.totalorder %s55, %s69
      %p71 = scmp.eq.s32.totalorder %s24, 0
      %p72 = por %p70, %p71
      %s74 = sadd.s32 %s73, 1
      %p77 = scmp.eq.s32.totalorder %s18, 1
      %p78 = scmp.ne.s32.totalorder %s73, %s75
      %p79 = scmp.eq.s32.totalorder %s18, 0
      %p80 = por %p78, %p79
      %p81 = scmp.ne.s32.totalorder %s73, %s75
      %p82 = scmp.eq.s32.totalorder %s23, 1
      %p83 = por %p81, %p82
      %p84 = scmp.ne.s32.totalorder %s75, %s76
      %p85 = scmp.eq.s32.totalorder %s23, 0
      %p86 = por %p84, %p85
      %p87 = scmp.ne.s32.totalorder %s75, %s76
      %p88 = scmp.eq.s32.totalorder %s24, 1
      %p89 = por %p87, %p88
      %p91 = scmp.ne.s32.totalorder %s76, %s90
      %p92 = scmp.eq.s32.totalorder %s24, 0
      %p93 = por %p91, %p92
      %s95 = sadd.s32 %s94, 1
      %p98 = scmp.eq.s32.totalorder %s18, 1
      %p99 = scmp.ne.s32.totalorder %s94, %s96
      %p100 = scmp.eq.s32.totalorder %s18, 0
      %p101 = por %p99, %p100
      %p102 = scmp.ne.s32.totalorder %s94, %s96
      %p103 = scmp.eq.s32.totalorder %s23, 1
      %p104 = por %p102, %p103
      %p105 = scmp.ne.s32.totalorder %s96, %s97
      %p106 = scmp.eq.s32.totalorder %s23, 0
      %p107 = por %p105, %p106
      %p108 = scmp.ne.s32.totalorder %s96, %s97
      %p109 = scmp.eq.s32.totalorder %s24, 1
      %p110 = por %p108, %p109
      %p112 = scmp.ne.s32.totalorder %s97, %s111
      %p113 = scmp.eq.s32.totalorder %s24, 0
      %p114 = por %p112, %p113
      %s115 = ssub.s32 %s18, %s25
      %p116 = scmp.eq.s32.totalorder %s115, 0
      %s118 = sadd.s32 %s117, 1
      %s119 = scalar_select %p116, %s117, %s118
      %p122 = pneg %p116
      %p123 = scmp.eq.s32.totalorder %s18, 1
      %p124 = por %p122, %p123
      %p125 = scmp.ne.s32.totalorder %s117, %s120
      %p126 = scmp.eq.s32.totalorder %s18, 0
      %p127 = por %p125, %p126
      %p128 = scmp.ne.s32.totalorder %s117, %s120
      %p129 = scmp.eq.s32.totalorder %s23, 1
      %p130 = por %p128, %p129
      %p131 = scmp.ne.s32.totalorder %s120, %s121
      %p132 = scmp.eq.s32.totalorder %s23, 0
      %p133 = por %p131, %p132
      %p134 = scmp.ne.s32.totalorder %s120, %s121
      %p135 = scmp.eq.s32.totalorder %s24, 1
      %p136 = por %p134, %p135
      %p138 = scmp.ne.s32.totalorder %s121, %s137
      %p139 = scmp.eq.s32.totalorder %s24, 0
      %p140 = por %p138, %p139
      %p141 = scmp.le.s32.totalorder 1, %s18
      %p142 = scmp.lt.s32.totalorder %s18, 3
      %p143 = pnand %p141, %p142
      %p144 = pneg %p143
      // Predicated region
      $region9: #{block_forward_nchw.1} parent=5 // pred_check
        _
      $region10: #{block_forward_nchw.1} parent=5 // pred_check_branch
        %146 = sbr.rel (%p143) target = $region12
      $region11: #{block_forward_nchw.1} parent=5 // pred_region
        %s147 = ssub.s32 %s18, 1
        // Predicated region
        $region13: #{block_forward_nchw.1} parent=11 // pred_check
          %p148 = pneg %p65
        $region14: #{block_forward_nchw.1} parent=11 // pred_check_branch
          %150 = sbr.rel (%p148) target = $region16
        $region15: #{block_forward_nchw.1} parent=11 // pred_region
          %s152 = ssub.s32 1024, 1024
          %153 = vsyncadd [#allocation7], %s152
          %s154 = sshll.u32 [#allocation6], 4
          %s155 = int_to_ptr.vmem [resolvable:$true] %s154
          %160 = dma.hbm_to_vmem [thread:$0]  %s1, 1024, %s155, [#allocation7], 64, 64, 4
        $region16: #{block_forward_nchw.1} parent=11 // pred_fallthru
          _
        // Predicated region
        $region17: #{block_forward_nchw.1} parent=11 // pred_check
          %p161 = pneg %p86
        $region18: #{block_forward_nchw.1} parent=11 // pred_check_branch
          %163 = sbr.rel (%p161) target = $region20
        $region19: #{block_forward_nchw.1} parent=11 // pred_region
          %s165 = ssub.s32 9216, 9216
          %166 = vsyncadd [#allocation7], %s165
          %s167 = sshll.u32 [#allocation8], 4
          %s168 = int_to_ptr.vmem [resolvable:$true] %s167
          %173 = dma.hbm_to_vmem [thread:$0]  %s2, 9216, %s168, [#allocation7], 64, 64, 4
        $region20: #{block_forward_nchw.1} parent=11 // pred_fallthru
          _
        // Predicated region
        $region21: #{block_forward_nchw.1} parent=11 // pred_check
          %p174 = pneg %p107
        $region22: #{block_forward_nchw.1} parent=11 // pred_check_branch
          %176 = sbr.rel (%p174) target = $region24
        $region23: #{block_forward_nchw.1} parent=11 // pred_region
          %s178 = ssub.s32 32, 32
          %179 = vsyncadd [#allocation10], %s178
          %s180 = sshll.u32 [#allocation9], 4
          %s181 = int_to_ptr.vmem [resolvable:$true] %s180
          %186 = dma.hbm_to_vmem [thread:$0]  %s3, 32, %s181, [#allocation10], 16, 16, 1
        $region24: #{block_forward_nchw.1} parent=11 // pred_fallthru
          _
      $region12: #{block_forward_nchw.1} parent=5 // pred_fallthru
        _
      %p187 = scmp.lt.s32.totalorder %s18, 2
      // Predicated region
      $region25: #{block_forward_nchw.1} parent=5 // pred_check
        %p188 = pneg %p187
      $region26: #{block_forward_nchw.1} parent=5 // pred_check_branch
        %190 = sbr.rel (%p188) target = $region28
      $region27: #{block_forward_nchw.1} parent=5 // pred_region
        // Predicated region
        $region29: #{block_forward_nchw.1} parent=27 // pred_check
          %p191 = pneg %p38
        $region30: #{block_forward_nchw.1} parent=27 // pred_check_branch
          %193 = sbr.rel (%p191) target = $region32
        $region31: #{block_forward_nchw.1} parent=27 // pred_region
          %s194 = sand.u32 %s28, 1
          %s195 = scalar_lea.sflag [#allocation4], %s194
          %s196 = sand.u32 %s28, 1
          %s197 = smul.addr %s196, 192
          %s198 = scalar_lea.vmem [#allocation3], %s197
          %s200 = ssub.s32 3072, 3072
          %201 = vsyncadd %s195, %s200
          %s202 = smul.addr %s18, 48
          %s203 = smul.addr %s202, 64
          %s204 = scalar_lea.hbm %s0, %s203
          %s205 = sshll.u32 %s198, 4
          %s206 = int_to_ptr.vmem [resolvable:$true] %s205
          %211 = dma.hbm_to_vmem [thread:$0]  %s204, 3072, %s206, %s195, 64, 64, 4
        $region32: #{block_forward_nchw.1} parent=27 // pred_fallthru
          _
      $region28: #{block_forward_nchw.1} parent=5 // pred_fallthru
        _
      %p212 = scmp.le.s32.totalorder 1, %s18
      %p213 = scmp.lt.s32.totalorder %s18, 3
      %p214 = pnand %p212, %p213
      %p215 = pneg %p214
      // Predicated region
      $region33: #{block_forward_nchw.1} parent=5 // pred_check
        _
      $region34: #{block_forward_nchw.1} parent=5 // pred_check_branch
        %217 = sbr.rel (%p214) target = $region36
      $region35: #{block_forward_nchw.1} parent=5 // pred_region
        %s218 = ssub.s32 %s18, 1
        %s219 = sand.u32 %s31, 1
        %s220 = scalar_lea.sflag [#allocation4], %s219
        %s221 = sand.u32 %s31, 1
        %s222 = smul.addr %s221, 192
        %s223 = scalar_lea.vmem [#allocation3], %s222
        // Predicated region
        $region37: #{block_forward_nchw.1} parent=35 // pred_check
          %p224 = pneg %p44
        $region38: #{block_forward_nchw.1} parent=35 // pred_check_branch
          %226 = sbr.rel (%p224) target = $region40
        $region39: #{block_forward_nchw.1} parent=35 // pred_region
          %227 = dma.done %s220, 3072
        $region40: #{block_forward_nchw.1} parent=35 // pred_fallthru
          _
        // Predicated region
        $region41: #{block_forward_nchw.1} parent=35 // pred_check
          %p228 = pneg %p65
        $region42: #{block_forward_nchw.1} parent=35 // pred_check_branch
          %230 = sbr.rel (%p228) target = $region44
        $region43: #{block_forward_nchw.1} parent=35 // pred_region
          %231 = dma.done [#allocation7], 1024
        $region44: #{block_forward_nchw.1} parent=35 // pred_fallthru
          _
        // Predicated region
        $region45: #{block_forward_nchw.1} parent=35 // pred_check
          %p232 = pneg %p86
        $region46: #{block_forward_nchw.1} parent=35 // pred_check_branch
          %234 = sbr.rel (%p232) target = $region48
        $region47: #{block_forward_nchw.1} parent=35 // pred_region
          %235 = dma.done [#allocation7], 9216
        $region48: #{block_forward_nchw.1} parent=35 // pred_fallthru
          _
        // Predicated region
        $region49: #{block_forward_nchw.1} parent=35 // pred_check
          %p236 = pneg %p107
        $region50: #{block_forward_nchw.1} parent=35 // pred_check_branch
          %238 = sbr.rel (%p236) target = $region52
        $region51: #{block_forward_nchw.1} parent=35 // pred_region
          %239 = dma.done [#allocation10], 32
        $region52: #{block_forward_nchw.1} parent=35 // pred_fallthru
          _
        %s240 = sand.u32 %s31, 1
        %s241 = scalar_lea.sflag [#allocation4], %s240
        %s242 = sand.u32 %s31, 1
        %s243 = smul.addr %s242, 192
        %s244 = scalar_lea.vmem [#allocation3], %s243
        %p245 = pneg %p44
        %p246 = pneg %p41
        %p247 = pneg %p65
        %p248 = pneg %p62
        %p249 = pneg %p86
        %p250 = pneg %p83
        %p251 = pneg %p107
        %p252 = pneg %p104
        %p253 = pneg %p133
        %p254 = pneg %p130
        %s255 = sand.u32 %s120, 1
        %s256 = scalar_lea.sflag [#allocation5], %s255
        %s257 = sand.u32 %s120, 1
        %s258 = smul.addr %s257, 32
        %s259 = scalar_lea.vmem [#allocation11], %s258
        %v261 = vld [vmem:[%s223] sm:$0xf]
        %v262 = vld [vmem:[%s223 + $0x4] sm:$0xf]
        %v263 = vld [vmem:[%s223 + $0x8] sm:$0xf]
        %v264 = vld [vmem:[%s223 + $0xc] sm:$0xf]
        %v265 = vld [vmem:[%s223 + $0x10] sm:$0xf]
        %v266 = vld [vmem:[%s223 + $0x14] sm:$0xf]
        %v267 = vld [vmem:[%s223 + $0x18] sm:$0xf]
        %v268 = vld [vmem:[%s223 + $0x1c] sm:$0xf]
        %v269 = vld [vmem:[%s223 + $0x20] sm:$0xf]
        %v270 = vld [vmem:[%s223 + $0x24] sm:$0xf]
        %v271 = vld [vmem:[%s223 + $0x28] sm:$0xf]
        %v272 = vld [vmem:[%s223 + $0x2c] sm:$0xf]
        %v273 = vld [vmem:[%s223 + $0x30] sm:$0xf]
        %v274 = vld [vmem:[%s223 + $0x34] sm:$0xf]
        %v275 = vld [vmem:[%s223 + $0x38] sm:$0xf]
        %v276 = vld [vmem:[%s223 + $0x3c] sm:$0xf]
        %v277 = vld [vmem:[%s223 + $0x40] sm:$0xf]
        %v278 = vld [vmem:[%s223 + $0x44] sm:$0xf]
        %v279 = vld [vmem:[%s223 + $0x48] sm:$0xf]
        %v280 = vld [vmem:[%s223 + $0x4c] sm:$0xf]
        %v281 = vld [vmem:[%s223 + $0x50] sm:$0xf]
        %v282 = vld [vmem:[%s223 + $0x54] sm:$0xf]
        %v283 = vld [vmem:[%s223 + $0x58] sm:$0xf]
        %v284 = vld [vmem:[%s223 + $0x5c] sm:$0xf]
        %v285 = vld [vmem:[%s223 + $0x60] sm:$0xf]
        %v286 = vld [vmem:[%s223 + $0x64] sm:$0xf]
        %v287 = vld [vmem:[%s223 + $0x68] sm:$0xf]
        %v288 = vld [vmem:[%s223 + $0x6c] sm:$0xf]
        %v289 = vld [vmem:[%s223 + $0x70] sm:$0xf]
        %v290 = vld [vmem:[%s223 + $0x74] sm:$0xf]
        %v291 = vld [vmem:[%s223 + $0x78] sm:$0xf]
        %v292 = vld [vmem:[%s223 + $0x7c] sm:$0xf]
        %v293 = vld [vmem:[%s223 + $0x80] sm:$0xf]
        %v294 = vld [vmem:[%s223 + $0x84] sm:$0xf]
        %v295 = vld [vmem:[%s223 + $0x88] sm:$0xf]
        %v296 = vld [vmem:[%s223 + $0x8c] sm:$0xf]
        %v297 = vld [vmem:[%s223 + $0x90] sm:$0xf]
        %v298 = vld [vmem:[%s223 + $0x94] sm:$0xf]
        %v299 = vld [vmem:[%s223 + $0x98] sm:$0xf]
        %v300 = vld [vmem:[%s223 + $0x9c] sm:$0xf]
        %v301 = vld [vmem:[%s223 + $0xa0] sm:$0xf]
        %v302 = vld [vmem:[%s223 + $0xa4] sm:$0xf]
        %v303 = vld [vmem:[%s223 + $0xa8] sm:$0xf]
        %v304 = vld [vmem:[%s223 + $0xac] sm:$0xf]
        %v305 = vld [vmem:[%s223 + $0xb0] sm:$0xf]
        %v306 = vld [vmem:[%s223 + $0xb4] sm:$0xf]
        %v307 = vld [vmem:[%s223 + $0xb8] sm:$0xf]
        %v308 = vld [vmem:[%s223 + $0xbc] sm:$0xf]
        %v309 = vld [vmem:[#allocation6] sm:$0xf]
        %v310 = vld [vmem:[#allocation6 + $0x4] sm:$0xf]
        %v311 = vld [vmem:[#allocation6 + $0x8] sm:$0xf]
        %v312 = vld [vmem:[#allocation6 + $0xc] sm:$0xf]
        %v313 = vld [vmem:[#allocation6 + $0x10] sm:$0xf]
        %v314 = vld [vmem:[#allocation6 + $0x14] sm:$0xf]
        %v315 = vld [vmem:[#allocation6 + $0x18] sm:$0xf]
        %v316 = vld [vmem:[#allocation6 + $0x1c] sm:$0xf]
        %v317 = vld [vmem:[#allocation6 + $0x20] sm:$0xf]
        %v318 = vld [vmem:[#allocation6 + $0x24] sm:$0xf]
        %v319 = vld [vmem:[#allocation6 + $0x28] sm:$0xf]
        %v320 = vld [vmem:[#allocation6 + $0x2c] sm:$0xf]
        %v321 = vld [vmem:[#allocation6 + $0x30] sm:$0xf]
        %v322 = vld [vmem:[#allocation6 + $0x34] sm:$0xf]
        %v323 = vld [vmem:[#allocation6 + $0x38] sm:$0xf]
        %v324 = vld [vmem:[#allocation6 + $0x3c] sm:$0xf]
        %v325 = vld [vmem:[#allocation9] sm:$0x1]
        %v327 = vlaneseq
        %v328 = vshrl.u32 %v327, 7
        %v329 = vsub.s32 0, %v328
        %v330 = vrot.slane %v325, %v329
        %v380 = vunpack.c.l.b16 %v261
        %v381 = vunpack.c.l.b16 %v262
        %v382 = vunpack.c.l.b16 %v263
        %v383 = vunpack.c.l.b16 %v264
        %v384 = vunpack.c.l.b16 %v265
        %v385 = vunpack.c.l.b16 %v266
        %v386 = vunpack.c.l.b16 %v267
        %v387 = vunpack.c.l.b16 %v268
        %v388 = vunpack.c.l.b16 %v269
        %v389 = vunpack.c.l.b16 %v270
        %v390 = vunpack.c.l.b16 %v271
        %v391 = vunpack.c.l.b16 %v272
        %v392 = vunpack.c.l.b16 %v273
        %v393 = vunpack.c.l.b16 %v274
        %v394 = vunpack.c.l.b16 %v275
        %v395 = vunpack.c.l.b16 %v276
        %v396 = vunpack.c.l.b16 %v277
        %v397 = vunpack.c.l.b16 %v278
        %v398 = vunpack.c.l.b16 %v279
        %v399 = vunpack.c.l.b16 %v280
        %v400 = vunpack.c.l.b16 %v281
        %v401 = vunpack.c.l.b16 %v282
        %v402 = vunpack.c.l.b16 %v283
        %v403 = vunpack.c.l.b16 %v284
        %v404 = vunpack.c.l.b16 %v285
        %v405 = vunpack.c.l.b16 %v286
        %v406 = vunpack.c.l.b16 %v287
        %v407 = vunpack.c.l.b16 %v288
        %v408 = vunpack.c.l.b16 %v289
        %v409 = vunpack.c.l.b16 %v290
        %v410 = vunpack.c.l.b16 %v291
        %v411 = vunpack.c.l.b16 %v292
        %v412 = vunpack.c.l.b16 %v293
        %v413 = vunpack.c.l.b16 %v294
        %v414 = vunpack.c.l.b16 %v295
        %v415 = vunpack.c.l.b16 %v296
        %v416 = vunpack.c.l.b16 %v297
        %v417 = vunpack.c.l.b16 %v298
        %v418 = vunpack.c.l.b16 %v299
        %v419 = vunpack.c.l.b16 %v300
        %v420 = vunpack.c.l.b16 %v301
        %v421 = vunpack.c.l.b16 %v302
        %v422 = vunpack.c.l.b16 %v303
        %v423 = vunpack.c.l.b16 %v304
        %v424 = vunpack.c.l.b16 %v305
        %v425 = vunpack.c.l.b16 %v306
        %v426 = vunpack.c.l.b16 %v307
        %v427 = vunpack.c.l.b16 %v308
        %v428 = vpack.c.b16 %v381, %v380
        %v429 = vpack.c.b16 %v383, %v382
        %v430 = vpack.c.b16 %v385, %v384
        %v431 = vpack.c.b16 %v387, %v386
        %v432 = vpack.c.b16 %v389, %v388
        %v433 = vpack.c.b16 %v391, %v390
        %v434 = vpack.c.b16 %v393, %v392
        %v435 = vpack.c.b16 %v395, %v394
        %v436 = vpack.c.b16 %v397, %v396
        %v437 = vpack.c.b16 %v399, %v398
        %v438 = vpack.c.b16 %v401, %v400
        %v439 = vpack.c.b16 %v403, %v402
        %v440 = vpack.c.b16 %v405, %v404
        %v441 = vpack.c.b16 %v407, %v406
        %v442 = vpack.c.b16 %v409, %v408
        %v443 = vpack.c.b16 %v411, %v410
        %v444 = vpack.c.b16 %v413, %v412
        %v445 = vpack.c.b16 %v415, %v414
        %v446 = vpack.c.b16 %v417, %v416
        %v447 = vpack.c.b16 %v419, %v418
        %v448 = vpack.c.b16 %v421, %v420
        %v449 = vpack.c.b16 %v423, %v422
        %v450 = vpack.c.b16 %v425, %v424
        %v451 = vpack.c.b16 %v427, %v426
        %v492 = vunpack.c.l.b16 %v309
        %v493 = vunpack.c.l.b16 %v310
        %v494 = vunpack.c.l.b16 %v311
        %v495 = vunpack.c.l.b16 %v312
        %v496 = vunpack.c.l.b16 %v313
        %v497 = vunpack.c.l.b16 %v314
        %v498 = vunpack.c.l.b16 %v315
        %v499 = vunpack.c.l.b16 %v316
        %v500 = vunpack.c.l.b16 %v317
        %v501 = vunpack.c.l.b16 %v318
        %v502 = vunpack.c.l.b16 %v319
        %v503 = vunpack.c.l.b16 %v320
        %v504 = vunpack.c.l.b16 %v321
        %v505 = vunpack.c.l.b16 %v322
        %v506 = vunpack.c.l.b16 %v323
        %v507 = vunpack.c.l.b16 %v324
        %v508 = vpack.c.b16 %v493, %v492
        %v509 = vpack.c.b16 %v495, %v494
        %v510 = vpack.c.b16 %v497, %v496
        %v511 = vpack.c.b16 %v499, %v498
        %v512 = vpack.c.b16 %v501, %v500
        %v513 = vpack.c.b16 %v503, %v502
        %v514 = vpack.c.b16 %v505, %v504
        %v515 = vpack.c.b16 %v507, %v506
        %524 = vmatprep.subr.bf16.mxu0 0
        %525 = vmatpush1.bf16.msra.mxu0 %v508
        %526 = vmatprep.subr.bf16.mxu0 0
        %527 = vmatpush1.bf16.msra.mxu0 %v509
        %528 = vmatprep.subr.bf16.mxu0 0
        %529 = vmatpush1.bf16.msra.mxu0 %v510
        %530 = vmatprep.subr.bf16.mxu0 0
        %531 = vmatpush1.bf16.msra.mxu0 %v511
        %532 = vmatprep.subr.bf16.mxu0 0
        %533 = vmatpush1.bf16.msra.mxu0 %v512
        %534 = vmatprep.subr.bf16.mxu0 0
        %535 = vmatpush1.bf16.msra.mxu0 %v513
        %536 = vmatprep.subr.bf16.mxu0 0
        %537 = vmatpush1.bf16.msra.mxu0 %v514
        %538 = vmatprep.subr.bf16.mxu0 0
        %539 = vmatpush1.bf16.msra.mxu0 %v515
        %540 = vmatprep.subr.bf16.mxu0 0
        %541 = vmatpush1.bf16.msra.mxu0 0
        %542 = vmatprep.subr.bf16.mxu0 0
        %543 = vmatpush1.bf16.msra.mxu0 0
        %544 = vmatprep.subr.bf16.mxu0 0
        %545 = vmatpush1.bf16.msra.mxu0 0
        %546 = vmatprep.subr.bf16.mxu0 0
        %547 = vmatpush1.bf16.msra.mxu0 0
        %548 = vmatprep.subr.bf16.mxu0 0
        %549 = vmatpush1.bf16.msra.mxu0 0
        %550 = vmatprep.subr.bf16.mxu0 0
        %551 = vmatpush1.bf16.msra.mxu0 0
        %552 = vmatprep.subr.bf16.mxu0 0
        %553 = vmatpush1.bf16.msra.mxu0 0
        %554 = vmatprep.subr.bf16.mxu0 0
        %555 = vmatpush1.bf16.msra.mxu0 0
        %556 = vmatprep.mubr.bf16.mxu0 0
        %557 = vmatmul.mubr.bf16.gmra.mrb[0].mxu0 %v428
        %v558 = vpop.f32.mrb[0].mxu0
        %v559 = vadd.f32 %v330, %v558
        %v560 = vpop.f32.mrb[0].mxu0
        %v561 = vpop.f32.mrb[0].mxu0
        %v562 = vadd.f32 %v330, %v561
        %v563 = vpop.f32.mrb[0].mxu0
        %564 = vmatprep.mubr.bf16.mxu0 0
        %565 = vmatmul.mubr.bf16.gmra.mrb[0].mxu0 %v429
        %v566 = vpop.f32.mrb[0].mxu0
        %v567 = vadd.f32 %v330, %v566
        %v568 = vpop.f32.mrb[0].mxu0
        %v569 = vpop.f32.mrb[0].mxu0
        %v570 = vadd.f32 %v330, %v569
        %v571 = vpop.f32.mrb[0].mxu0
        %572 = vmatprep.mubr.bf16.mxu0 0
        %573 = vmatmul.mubr.bf16.gmra.mrb[0].mxu0 %v430
        %v574 = vpop.f32.mrb[0].mxu0
        %v575 = vadd.f32 %v330, %v574
        %v576 = vpop.f32.mrb[0].mxu0
        %v577 = vpop.f32.mrb[0].mxu0
        %v578 = vadd.f32 %v330, %v577
        %v579 = vpop.f32.mrb[0].mxu0
        %580 = vmatprep.mubr.bf16.mxu0 0
        %581 = vmatmul.mubr.bf16.gmra.mrb[0].mxu0 %v431
        %v582 = vpop.f32.mrb[0].mxu0
        %v583 = vadd.f32 %v330, %v582
        %v584 = vpop.f32.mrb[0].mxu0
        %v585 = vpop.f32.mrb[0].mxu0
        %v586 = vadd.f32 %v330, %v585
        %v587 = vpop.f32.mrb[0].mxu0
        %588 = vmatprep.mubr.bf16.mxu0 0
        %589 = vmatmul.mubr.bf16.gmra.mrb[0].mxu0 %v432
        %v590 = vpop.f32.mrb[0].mxu0
        %v591 = vadd.f32 %v330, %v590
        %v592 = vpop.f32.mrb[0].mxu0
        %v593 = vpop.f32.mrb[0].mxu0
        %v594 = vadd.f32 %v330, %v593
        %v595 = vpop.f32.mrb[0].mxu0
        %596 = vmatprep.mubr.bf16.mxu0 0
        %597 = vmatmul.mubr.bf16.gmra.mrb[0].mxu0 %v433
        %v598 = vpop.f32.mrb[0].mxu0
        %v599 = vadd.f32 %v330, %v598
        %v600 = vpop.f32.mrb[0].mxu0
        %v601 = vpop.f32.mrb[0].mxu0
        %v602 = vadd.f32 %v330, %v601
        %v603 = vpop.f32.mrb[0].mxu0
        %604 = vmatprep.mubr.bf16.mxu0 0
        %605 = vmatmul.mubr.bf16.gmra.mrb[0].mxu0 %v434
        %v606 = vpop.f32.mrb[0].mxu0
        %v607 = vadd.f32 %v330, %v606
        %v608 = vpop.f32.mrb[0].mxu0
        %v609 = vpop.f32.mrb[0].mxu0
        %v610 = vadd.f32 %v330, %v609
        %v611 = vpop.f32.mrb[0].mxu0
        %612 = vmatprep.mubr.bf16.mxu0 0
        %613 = vmatmul.mubr.bf16.gmra.mrb[0].mxu0 %v435
        %v614 = vpop.f32.mrb[0].mxu0
        %v615 = vadd.f32 %v330, %v614
        %v616 = vpop.f32.mrb[0].mxu0
        %v617 = vpop.f32.mrb[0].mxu0
        %v618 = vadd.f32 %v330, %v617
        %v619 = vpop.f32.mrb[0].mxu0
        %620 = vmatprep.mubr.bf16.mxu0 0
        %621 = vmatmul.mubr.bf16.gmra.mrb[0].mxu0 %v436
        %v622 = vpop.f32.mrb[0].mxu0
        %v623 = vadd.f32 %v330, %v622
        %v624 = vpop.f32.mrb[0].mxu0
        %v625 = vpop.f32.mrb[0].mxu0
        %v626 = vadd.f32 %v330, %v625
        %v627 = vpop.f32.mrb[0].mxu0
        %628 = vmatprep.mubr.bf16.mxu0 0
        %629 = vmatmul.mubr.bf16.gmra.mrb[0].mxu0 %v437
        %v630 = vpop.f32.mrb[0].mxu0
        %v631 = vadd.f32 %v330, %v630
        %v632 = vpop.f32.mrb[0].mxu0
        %v633 = vpop.f32.mrb[0].mxu0
        %v634 = vadd.f32 %v330, %v633
        %v635 = vpop.f32.mrb[0].mxu0
        %636 = vmatprep.mubr.bf16.mxu0 0
        %637 = vmatmul.mubr.bf16.gmra.mrb[0].mxu0 %v438
        %v638 = vpop.f32.mrb[0].mxu0
        %v639 = vadd.f32 %v330, %v638
        %v640 = vpop.f32.mrb[0].mxu0
        %v641 = vpop.f32.mrb[0].mxu0
        %v642 = vadd.f32 %v330, %v641
        %v643 = vpop.f32.mrb[0].mxu0
        %644 = vmatprep.mubr.bf16.mxu0 0
        %645 = vmatmul.mubr.bf16.gmra.mrb[0].mxu0 %v439
        %v646 = vpop.f32.mrb[0].mxu0
        %v647 = vadd.f32 %v330, %v646
        %v648 = vpop.f32.mrb[0].mxu0
        %v649 = vpop.f32.mrb[0].mxu0
        %v650 = vadd.f32 %v330, %v649
        %v651 = vpop.f32.mrb[0].mxu0
        %652 = vmatprep.mubr.bf16.mxu0 0
        %653 = vmatmul.mubr.bf16.gmra.mrb[0].mxu0 %v440
        %v654 = vpop.f32.mrb[0].mxu0
        %v655 = vadd.f32 %v330, %v654
        %v656 = vpop.f32.mrb[0].mxu0
        %v657 = vpop.f32.mrb[0].mxu0
        %v658 = vadd.f32 %v330, %v657
        %v659 = vpop.f32.mrb[0].mxu0
        %660 = vmatprep.mubr.bf16.mxu0 0
        %661 = vmatmul.mubr.bf16.gmra.mrb[0].mxu0 %v441
        %v662 = vpop.f32.mrb[0].mxu0
        %v663 = vadd.f32 %v330, %v662
        %v664 = vpop.f32.mrb[0].mxu0
        %v665 = vpop.f32.mrb[0].mxu0
        %v666 = vadd.f32 %v330, %v665
        %v667 = vpop.f32.mrb[0].mxu0
        %668 = vmatprep.mubr.bf16.mxu0 0
        %669 = vmatmul.mubr.bf16.gmra.mrb[0].mxu0 %v442
        %v670 = vpop.f32.mrb[0].mxu0
        %v671 = vadd.f32 %v330, %v670
        %v672 = vpop.f32.mrb[0].mxu0
        %v673 = vpop.f32.mrb[0].mxu0
        %v674 = vadd.f32 %v330, %v673
        %v675 = vpop.f32.mrb[0].mxu0
        %676 = vmatprep.mubr.bf16.mxu0 0
        %677 = vmatmul.mubr.bf16.gmra.mrb[0].mxu0 %v443
        %v678 = vpop.f32.mrb[0].mxu0
        %v679 = vadd.f32 %v330, %v678
        %v680 = vpop.f32.mrb[0].mxu0
        %v681 = vpop.f32.mrb[0].mxu0
        %v682 = vadd.f32 %v330, %v681
        %v683 = vpop.f32.mrb[0].mxu0
        %684 = vmatprep.mubr.bf16.mxu0 0
        %685 = vmatmul.mubr.bf16.gmra.mrb[0].mxu0 %v444
        %v686 = vpop.f32.mrb[0].mxu0
        %v687 = vadd.f32 %v330, %v686
        %v688 = vpop.f32.mrb[0].mxu0
        %v689 = vpop.f32.mrb[0].mxu0
        %v690 = vadd.f32 %v330, %v689
        %v691 = vpop.f32.mrb[0].mxu0
        %692 = vmatprep.mubr.bf16.mxu0 0
        %693 = vmatmul.mubr.bf16.gmra.mrb[0].mxu0 %v445
        %v694 = vpop.f32.mrb[0].mxu0
        %v695 = vadd.f32 %v330, %v694
        %v696 = vpop.f32.mrb[0].mxu0
        %v697 = vpop.f32.mrb[0].mxu0
        %v698 = vadd.f32 %v330, %v697
        %v699 = vpop.f32.mrb[0].mxu0
        %700 = vmatprep.mubr.bf16.mxu0 0
        %701 = vmatmul.mubr.bf16.gmra.mrb[0].mxu0 %v446
        %v702 = vpop.f32.mrb[0].mxu0
        %v703 = vadd.f32 %v330, %v702
        %v704 = vpop.f32.mrb[0].mxu0
        %v705 = vpop.f32.mrb[0].mxu0
        %v706 = vadd.f32 %v330, %v705
        %v707 = vpop.f32.mrb[0].mxu0
        %708 = vmatprep.mubr.bf16.mxu0 0
        %709 = vmatmul.mubr.bf16.gmra.mrb[0].mxu0 %v447
        %v710 = vpop.f32.mrb[0].mxu0
        %v711 = vadd.f32 %v330, %v710
        %v712 = vpop.f32.mrb[0].mxu0
        %v713 = vpop.f32.mrb[0].mxu0
        %v714 = vadd.f32 %v330, %v713
        %v715 = vpop.f32.mrb[0].mxu0
        %716 = vmatprep.mubr.bf16.mxu0 0
        %717 = vmatmul.mubr.bf16.gmra.mrb[0].mxu0 %v448
        %v718 = vpop.f32.mrb[0].mxu0
        %v719 = vadd.f32 %v330, %v718
        %v720 = vpop.f32.mrb[0].mxu0
        %v721 = vpop.f32.mrb[0].mxu0
        %v722 = vadd.f32 %v330, %v721
        %v723 = vpop.f32.mrb[0].mxu0
        %724 = vmatprep.mubr.bf16.mxu0 0
        %725 = vmatmul.mubr.bf16.gmra.mrb[0].mxu0 %v449
        %v726 = vpop.f32.mrb[0].mxu0
        %v727 = vadd.f32 %v330, %v726
        %v728 = vpop.f32.mrb[0].mxu0
        %v729 = vpop.f32.mrb[0].mxu0
        %v730 = vadd.f32 %v330, %v729
        %v731 = vpop.f32.mrb[0].mxu0
        %732 = vmatprep.mubr.bf16.mxu0 0
        %733 = vmatmul.mubr.bf16.gmra.mrb[0].mxu0 %v450
        %v734 = vpop.f32.mrb[0].mxu0
        %v735 = vadd.f32 %v330, %v734
        %v736 = vpop.f32.mrb[0].mxu0
        %v737 = vpop.f32.mrb[0].mxu0
        %v738 = vadd.f32 %v330, %v737
        %v739 = vpop.f32.mrb[0].mxu0
        %740 = vmatprep.mubr.bf16.mxu0 0
        %741 = vmatmul.mubr.bf16.gmra.mrb[0].mxu0 %v451
        %v742 = vpop.f32.mrb[0].mxu0
        %v743 = vadd.f32 %v330, %v742
        %v744 = vpop.f32.mrb[0].mxu0
        %v745 = vpop.f32.mrb[0].mxu0
        %v746 = vadd.f32 %v330, %v745
        %v747 = vpop.f32.mrb[0].mxu0
        %748 = vdwg.mxu0
        %v749 = vmax.f32 %v559, 0.0
        %v750 = vmax.f32 %v562, 0.0
        %v751 = vmax.f32 %v567, 0.0
        %v752 = vmax.f32 %v570, 0.0
        %v753 = vmax.f32 %v575, 0.0
        %v754 = vmax.f32 %v578, 0.0
        %v755 = vmax.f32 %v583, 0.0
        %v756 = vmax.f32 %v586, 0.0
        %v757 = vmax.f32 %v591, 0.0
        %v758 = vmax.f32 %v594, 0.0
        %v759 = vmax.f32 %v599, 0.0
        %v760 = vmax.f32 %v602, 0.0
        %v761 = vmax.f32 %v607, 0.0
        %v762 = vmax.f32 %v610, 0.0
        %v763 = vmax.f32 %v615, 0.0
        %v764 = vmax.f32 %v618, 0.0
        %v765 = vmax.f32 %v623, 0.0
        %v766 = vmax.f32 %v626, 0.0
        %v767 = vmax.f32 %v631, 0.0
        %v768 = vmax.f32 %v634, 0.0
        %v769 = vmax.f32 %v639, 0.0
        %v770 = vmax.f32 %v642, 0.0
        %v771 = vmax.f32 %v647, 0.0
        %v772 = vmax.f32 %v650, 0.0
        %v773 = vmax.f32 %v655, 0.0
        %v774 = vmax.f32 %v658, 0.0
        %v775 = vmax.f32 %v663, 0.0
        %v776 = vmax.f32 %v666, 0.0
        %v777 = vmax.f32 %v671, 0.0
        %v778 = vmax.f32 %v674, 0.0
        %v779 = vmax.f32 %v679, 0.0
        %v780 = vmax.f32 %v682, 0.0
        %v781 = vmax.f32 %v687, 0.0
        %v782 = vmax.f32 %v690, 0.0
        %v783 = vmax.f32 %v695, 0.0
        %v784 = vmax.f32 %v698, 0.0
        %v785 = vmax.f32 %v703, 0.0
        %v786 = vmax.f32 %v706, 0.0
        %v787 = vmax.f32 %v711, 0.0
        %v788 = vmax.f32 %v714, 0.0
        %v789 = vmax.f32 %v719, 0.0
        %v790 = vmax.f32 %v722, 0.0
        %v791 = vmax.f32 %v727, 0.0
        %v792 = vmax.f32 %v730, 0.0
        %v793 = vmax.f32 %v735, 0.0
        %v794 = vmax.f32 %v738, 0.0
        %v795 = vmax.f32 %v743, 0.0
        %v796 = vmax.f32 %v746, 0.0
        %v797 = vlaneseq
        %v798 = vshrl.u32 %v797, 7
        %v799 = vadd.s32 %v798, 8
        %v800 = vadd.s32 %v798, 16
        %v801 = vadd.s32 %v798, 24
        %v802 = vadd.s32 %v798, 32
        %v803 = vadd.s32 %v798, 40
        %v804 = vadd.s32 %v798, 48
        %v805 = vadd.s32 %v798, 56
        %v806 = vadd.s32 %v798, 64
        %v807 = vadd.s32 %v798, 72
        %v808 = vadd.s32 %v798, 80
        %v809 = vadd.s32 %v798, 88
        %v810 = vadd.s32 %v798, 96
        %v811 = vadd.s32 %v798, 104
        %v812 = vadd.s32 %v798, 112
        %v813 = vadd.s32 %v798, 120
        %v814 = vadd.s32 %v798, 128
        %v815 = vadd.s32 %v798, 136
        %v816 = vadd.s32 %v798, 144
        %v817 = vadd.s32 %v798, 152
        %v818 = vadd.s32 %v798, 160
        %v819 = vadd.s32 %v798, 168
        %v820 = vadd.s32 %v798, 176
        %v821 = vadd.s32 %v798, 184
        %v822 = vadd.s32 %v798, 192
        %v823 = vadd.s32 %v798, 200
        %v824 = vadd.s32 %v798, 208
        %v825 = vadd.s32 %v798, 216
        %v826 = vadd.s32 %v798, 224
        %v827 = vadd.s32 %v798, 232
        %v828 = vadd.s32 %v798, 240
        %v829 = vadd.s32 %v798, 248
        %v830 = vadd.s32 %v798, 256
        %v831 = vadd.s32 %v798, 264
        %v832 = vadd.s32 %v798, 272
        %v833 = vadd.s32 %v798, 280
        %v834 = vadd.s32 %v798, 288
        %v835 = vadd.s32 %v798, 296
        %v836 = vadd.s32 %v798, 304
        %v837 = vadd.s32 %v798, 312
        %v838 = vadd.s32 %v798, 320
        %v839 = vadd.s32 %v798, 328
        %v840 = vadd.s32 %v798, 336
        %v841 = vadd.s32 %v798, 344
        %v842 = vadd.s32 %v798, 352
        %v843 = vadd.s32 %v798, 360
        %v844 = vadd.s32 %v798, 368
        %v845 = vadd.s32 %v798, 376
        %vm846 = vcmp.lt.s32.totalorder %v798, 0
        %v847 = vsub.s32 0, %v798
        %v848 = vsel %vm846, %v847, %v798
        %v849 = vmul.u32.u64.compose %v848, 2863311531
        %v850 = vextract.low.u32 %v849
        %v851 = vextract.high.u32 %v849
        %v852 = vshrl.u32 %v851, 4
        %v853 = vmul.u32 %v852, 24
        %v854 = vsub.s32 %v848, %v853
        %v855 = vsub.s32 0, %v854
        %v856 = vsel %vm846, %v855, %v854
        %vm857 = vcmp.lt.s32.totalorder %v799, 0
        %v858 = vsub.s32 0, %v799
        %v859 = vsel %vm857, %v858, %v799
        %v860 = vmul.u32.u64.compose %v859, 2863311531
        %v861 = vextract.low.u32 %v860
        %v862 = vextract.high.u32 %v860
        %v863 = vshrl.u32 %v862, 4
        %v864 = vmul.u32 %v863, 24
        %v865 = vsub.s32 %v859, %v864
        %v866 = vsub.s32 0, %v865
        %v867 = vsel %vm857, %v866, %v865
        %vm868 = vcmp.lt.s32.totalorder %v800, 0
        %v869 = vsub.s32 0, %v800
        %v870 = vsel %vm868, %v869, %v800
        %v871 = vmul.u32.u64.compose %v870, 2863311531
        %v872 = vextract.low.u32 %v871
        %v873 = vextract.high.u32 %v871
        %v874 = vshrl.u32 %v873, 4
        %v875 = vmul.u32 %v874, 24
        %v876 = vsub.s32 %v870, %v875
        %v877 = vsub.s32 0, %v876
        %v878 = vsel %vm868, %v877, %v876
        %vm879 = vcmp.lt.s32.totalorder %v801, 0
        %v880 = vsub.s32 0, %v801
        %v881 = vsel %vm879, %v880, %v801
        %v882 = vmul.u32.u64.compose %v881, 2863311531
        %v883 = vextract.low.u32 %v882
        %v884 = vextract.high.u32 %v882
        %v885 = vshrl.u32 %v884, 4
        %v886 = vmul.u32 %v885, 24
        %v887 = vsub.s32 %v881, %v886
        %v888 = vsub.s32 0, %v887
        %v889 = vsel %vm879, %v888, %v887
        %vm890 = vcmp.lt.s32.totalorder %v802, 0
        %v891 = vsub.s32 0, %v802
        %v892 = vsel %vm890, %v891, %v802
        %v893 = vmul.u32.u64.compose %v892, 2863311531
        %v894 = vextract.low.u32 %v893
        %v895 = vextract.high.u32 %v893
        %v896 = vshrl.u32 %v895, 4
        %v897 = vmul.u32 %v896, 24
        %v898 = vsub.s32 %v892, %v897
        %v899 = vsub.s32 0, %v898
        %v900 = vsel %vm890, %v899, %v898
        %vm901 = vcmp.lt.s32.totalorder %v803, 0
        %v902 = vsub.s32 0, %v803
        %v903 = vsel %vm901, %v902, %v803
        %v904 = vmul.u32.u64.compose %v903, 2863311531
        %v905 = vextract.low.u32 %v904
        %v906 = vextract.high.u32 %v904
        %v907 = vshrl.u32 %v906, 4
        %v908 = vmul.u32 %v907, 24
        %v909 = vsub.s32 %v903, %v908
        %v910 = vsub.s32 0, %v909
        %v911 = vsel %vm901, %v910, %v909
        %vm912 = vcmp.lt.s32.totalorder %v804, 0
        %v913 = vsub.s32 0, %v804
        %v914 = vsel %vm912, %v913, %v804
        %v915 = vmul.u32.u64.compose %v914, 2863311531
        %v916 = vextract.low.u32 %v915
        %v917 = vextract.high.u32 %v915
        %v918 = vshrl.u32 %v917, 4
        %v919 = vmul.u32 %v918, 24
        %v920 = vsub.s32 %v914, %v919
        %v921 = vsub.s32 0, %v920
        %v922 = vsel %vm912, %v921, %v920
        %vm923 = vcmp.lt.s32.totalorder %v805, 0
        %v924 = vsub.s32 0, %v805
        %v925 = vsel %vm923, %v924, %v805
        %v926 = vmul.u32.u64.compose %v925, 2863311531
        %v927 = vextract.low.u32 %v926
        %v928 = vextract.high.u32 %v926
        %v929 = vshrl.u32 %v928, 4
        %v930 = vmul.u32 %v929, 24
        %v931 = vsub.s32 %v925, %v930
        %v932 = vsub.s32 0, %v931
        %v933 = vsel %vm923, %v932, %v931
        %vm934 = vcmp.lt.s32.totalorder %v806, 0
        %v935 = vsub.s32 0, %v806
        %v936 = vsel %vm934, %v935, %v806
        %v937 = vmul.u32.u64.compose %v936, 2863311531
        %v938 = vextract.low.u32 %v937
        %v939 = vextract.high.u32 %v937
        %v940 = vshrl.u32 %v939, 4
        %v941 = vmul.u32 %v940, 24
        %v942 = vsub.s32 %v936, %v941
        %v943 = vsub.s32 0, %v942
        %v944 = vsel %vm934, %v943, %v942
        %vm945 = vcmp.lt.s32.totalorder %v807, 0
        %v946 = vsub.s32 0, %v807
        %v947 = vsel %vm945, %v946, %v807
        %v948 = vmul.u32.u64.compose %v947, 2863311531
        %v949 = vextract.low.u32 %v948
        %v950 = vextract.high.u32 %v948
        %v951 = vshrl.u32 %v950, 4
        %v952 = vmul.u32 %v951, 24
        %v953 = vsub.s32 %v947, %v952
        %v954 = vsub.s32 0, %v953
        %v955 = vsel %vm945, %v954, %v953
        %vm956 = vcmp.lt.s32.totalorder %v808, 0
        %v957 = vsub.s32 0, %v808
        %v958 = vsel %vm956, %v957, %v808
        %v959 = vmul.u32.u64.compose %v958, 2863311531
        %v960 = vextract.low.u32 %v959
        %v961 = vextract.high.u32 %v959
        %v962 = vshrl.u32 %v961, 4
        %v963 = vmul.u32 %v962, 24
        %v964 = vsub.s32 %v958, %v963
        %v965 = vsub.s32 0, %v964
        %v966 = vsel %vm956, %v965, %v964
        %vm967 = vcmp.lt.s32.totalorder %v809, 0
        %v968 = vsub.s32 0, %v809
        %v969 = vsel %vm967, %v968, %v809
        %v970 = vmul.u32.u64.compose %v969, 2863311531
        %v971 = vextract.low.u32 %v970
        %v972 = vextract.high.u32 %v970
        %v973 = vshrl.u32 %v972, 4
        %v974 = vmul.u32 %v973, 24
        %v975 = vsub.s32 %v969, %v974
        %v976 = vsub.s32 0, %v975
        %v977 = vsel %vm967, %v976, %v975
        %vm978 = vcmp.lt.s32.totalorder %v810, 0
        %v979 = vsub.s32 0, %v810
        %v980 = vsel %vm978, %v979, %v810
        %v981 = vmul.u32.u64.compose %v980, 2863311531
        %v982 = vextract.low.u32 %v981
        %v983 = vextract.high.u32 %v981
        %v984 = vshrl.u32 %v983, 4
        %v985 = vmul.u32 %v984, 24
        %v986 = vsub.s32 %v980, %v985
        %v987 = vsub.s32 0, %v986
        %v988 = vsel %vm978, %v987, %v986
        %vm989 = vcmp.lt.s32.totalorder %v811, 0
        %v990 = vsub.s32 0, %v811
        %v991 = vsel %vm989, %v990, %v811
        %v992 = vmul.u32.u64.compose %v991, 2863311531
        %v993 = vextract.low.u32 %v992
        %v994 = vextract.high.u32 %v992
        %v995 = vshrl.u32 %v994, 4
        %v996 = vmul.u32 %v995, 24
        %v997 = vsub.s32 %v991, %v996
        %v998 = vsub.s32 0, %v997
        %v999 = vsel %vm989, %v998, %v997
        %vm1000 = vcmp.lt.s32.totalorder %v812, 0
        %v1001 = vsub.s32 0, %v812
        %v1002 = vsel %vm1000, %v1001, %v812
        %v1003 = vmul.u32.u64.compose %v1002, 2863311531
        %v1004 = vextract.low.u32 %v1003
        %v1005 = vextract.high.u32 %v1003
        %v1006 = vshrl.u32 %v1005, 4
        %v1007 = vmul.u32 %v1006, 24
        %v1008 = vsub.s32 %v1002, %v1007
        %v1009 = vsub.s32 0, %v1008
        %v1010 = vsel %vm1000, %v1009, %v1008
        %vm1011 = vcmp.lt.s32.totalorder %v813, 0
        %v1012 = vsub.s32 0, %v813
        %v1013 = vsel %vm1011, %v1012, %v813
        %v1014 = vmul.u32.u64.compose %v1013, 2863311531
        %v1015 = vextract.low.u32 %v1014
        %v1016 = vextract.high.u32 %v1014
        %v1017 = vshrl.u32 %v1016, 4
        %v1018 = vmul.u32 %v1017, 24
        %v1019 = vsub.s32 %v1013, %v1018
        %v1020 = vsub.s32 0, %v1019
        %v1021 = vsel %vm1011, %v1020, %v1019
        %vm1022 = vcmp.lt.s32.totalorder %v814, 0
        %v1023 = vsub.s32 0, %v814
        %v1024 = vsel %vm1022, %v1023, %v814
        %v1025 = vmul.u32.u64.compose %v1024, 2863311531
        %v1026 = vextract.low.u32 %v1025
        %v1027 = vextract.high.u32 %v1025
        %v1028 = vshrl.u32 %v1027, 4
        %v1029 = vmul.u32 %v1028, 24
        %v1030 = vsub.s32 %v1024, %v1029
        %v1031 = vsub.s32 0, %v1030
        %v1032 = vsel %vm1022, %v1031, %v1030
        %vm1033 = vcmp.lt.s32.totalorder %v815, 0
        %v1034 = vsub.s32 0, %v815
        %v1035 = vsel %vm1033, %v1034, %v815
        %v1036 = vmul.u32.u64.compose %v1035, 2863311531
        %v1037 = vextract.low.u32 %v1036
        %v1038 = vextract.high.u32 %v1036
        %v1039 = vshrl.u32 %v1038, 4
        %v1040 = vmul.u32 %v1039, 24
        %v1041 = vsub.s32 %v1035, %v1040
        %v1042 = vsub.s32 0, %v1041
        %v1043 = vsel %vm1033, %v1042, %v1041
        %vm1044 = vcmp.lt.s32.totalorder %v816, 0
        %v1045 = vsub.s32 0, %v816
        %v1046 = vsel %vm1044, %v1045, %v816
        %v1047 = vmul.u32.u64.compose %v1046, 2863311531
        %v1048 = vextract.low.u32 %v1047
        %v1049 = vextract.high.u32 %v1047
        %v1050 = vshrl.u32 %v1049, 4
        %v1051 = vmul.u32 %v1050, 24
        %v1052 = vsub.s32 %v1046, %v1051
        %v1053 = vsub.s32 0, %v1052
        %v1054 = vsel %vm1044, %v1053, %v1052
        %vm1055 = vcmp.lt.s32.totalorder %v817, 0
        %v1056 = vsub.s32 0, %v817
        %v1057 = vsel %vm1055, %v1056, %v817
        %v1058 = vmul.u32.u64.compose %v1057, 2863311531
        %v1059 = vextract.low.u32 %v1058
        %v1060 = vextract.high.u32 %v1058
        %v1061 = vshrl.u32 %v1060, 4
        %v1062 = vmul.u32 %v1061, 24
        %v1063 = vsub.s32 %v1057, %v1062
        %v1064 = vsub.s32 0, %v1063
        %v1065 = vsel %vm1055, %v1064, %v1063
        %vm1066 = vcmp.lt.s32.totalorder %v818, 0
        %v1067 = vsub.s32 0, %v818
        %v1068 = vsel %vm1066, %v1067, %v818
        %v1069 = vmul.u32.u64.compose %v1068, 2863311531
        %v1070 = vextract.low.u32 %v1069
        %v1071 = vextract.high.u32 %v1069
        %v1072 = vshrl.u32 %v1071, 4
        %v1073 = vmul.u32 %v1072, 24
        %v1074 = vsub.s32 %v1068, %v1073
        %v1075 = vsub.s32 0, %v1074
        %v1076 = vsel %vm1066, %v1075, %v1074
        %vm1077 = vcmp.lt.s32.totalorder %v819, 0
        %v1078 = vsub.s32 0, %v819
        %v1079 = vsel %vm1077, %v1078, %v819
        %v1080 = vmul.u32.u64.compose %v1079, 2863311531
        %v1081 = vextract.low.u32 %v1080
        %v1082 = vextract.high.u32 %v1080
        %v1083 = vshrl.u32 %v1082, 4
        %v1084 = vmul.u32 %v1083, 24
        %v1085 = vsub.s32 %v1079, %v1084
        %v1086 = vsub.s32 0, %v1085
        %v1087 = vsel %vm1077, %v1086, %v1085
        %vm1088 = vcmp.lt.s32.totalorder %v820, 0
        %v1089 = vsub.s32 0, %v820
        %v1090 = vsel %vm1088, %v1089, %v820
        %v1091 = vmul.u32.u64.compose %v1090, 2863311531
        %v1092 = vextract.low.u32 %v1091
        %v1093 = vextract.high.u32 %v1091
        %v1094 = vshrl.u32 %v1093, 4
        %v1095 = vmul.u32 %v1094, 24
        %v1096 = vsub.s32 %v1090, %v1095
        %v1097 = vsub.s32 0, %v1096
        %v1098 = vsel %vm1088, %v1097, %v1096
        %vm1099 = vcmp.lt.s32.totalorder %v821, 0
        %v1100 = vsub.s32 0, %v821
        %v1101 = vsel %vm1099, %v1100, %v821
        %v1102 = vmul.u32.u64.compose %v1101, 2863311531
        %v1103 = vextract.low.u32 %v1102
        %v1104 = vextract.high.u32 %v1102
        %v1105 = vshrl.u32 %v1104, 4
        %v1106 = vmul.u32 %v1105, 24
        %v1107 = vsub.s32 %v1101, %v1106
        %v1108 = vsub.s32 0, %v1107
        %v1109 = vsel %vm1099, %v1108, %v1107
        %vm1110 = vcmp.lt.s32.totalorder %v822, 0
        %v1111 = vsub.s32 0, %v822
        %v1112 = vsel %vm1110, %v1111, %v822
        %v1113 = vmul.u32.u64.compose %v1112, 2863311531
        %v1114 = vextract.low.u32 %v1113
        %v1115 = vextract.high.u32 %v1113
        %v1116 = vshrl.u32 %v1115, 4
        %v1117 = vmul.u32 %v1116, 24
        %v1118 = vsub.s32 %v1112, %v1117
        %v1119 = vsub.s32 0, %v1118
        %v1120 = vsel %vm1110, %v1119, %v1118
        %vm1121 = vcmp.lt.s32.totalorder %v823, 0
        %v1122 = vsub.s32 0, %v823
        %v1123 = vsel %vm1121, %v1122, %v823
        %v1124 = vmul.u32.u64.compose %v1123, 2863311531
        %v1125 = vextract.low.u32 %v1124
        %v1126 = vextract.high.u32 %v1124
        %v1127 = vshrl.u32 %v1126, 4
        %v1128 = vmul.u32 %v1127, 24
        %v1129 = vsub.s32 %v1123, %v1128
        %v1130 = vsub.s32 0, %v1129
        %v1131 = vsel %vm1121, %v1130, %v1129
        %vm1132 = vcmp.lt.s32.totalorder %v824, 0
        %v1133 = vsub.s32 0, %v824
        %v1134 = vsel %vm1132, %v1133, %v824
        %v1135 = vmul.u32.u64.compose %v1134, 2863311531
        %v1136 = vextract.low.u32 %v1135
        %v1137 = vextract.high.u32 %v1135
        %v1138 = vshrl.u32 %v1137, 4
        %v1139 = vmul.u32 %v1138, 24
        %v1140 = vsub.s32 %v1134, %v1139
        %v1141 = vsub.s32 0, %v1140
        %v1142 = vsel %vm1132, %v1141, %v1140
        %vm1143 = vcmp.lt.s32.totalorder %v825, 0
        %v1144 = vsub.s32 0, %v825
        %v1145 = vsel %vm1143, %v1144, %v825
        %v1146 = vmul.u32.u64.compose %v1145, 2863311531
        %v1147 = vextract.low.u32 %v1146
        %v1148 = vextract.high.u32 %v1146
        %v1149 = vshrl.u32 %v1148, 4
        %v1150 = vmul.u32 %v1149, 24
        %v1151 = vsub.s32 %v1145, %v1150
        %v1152 = vsub.s32 0, %v1151
        %v1153 = vsel %vm1143, %v1152, %v1151
        %vm1154 = vcmp.lt.s32.totalorder %v826, 0
        %v1155 = vsub.s32 0, %v826
        %v1156 = vsel %vm1154, %v1155, %v826
        %v1157 = vmul.u32.u64.compose %v1156, 2863311531
        %v1158 = vextract.low.u32 %v1157
        %v1159 = vextract.high.u32 %v1157
        %v1160 = vshrl.u32 %v1159, 4
        %v1161 = vmul.u32 %v1160, 24
        %v1162 = vsub.s32 %v1156, %v1161
        %v1163 = vsub.s32 0, %v1162
        %v1164 = vsel %vm1154, %v1163, %v1162
        %vm1165 = vcmp.lt.s32.totalorder %v827, 0
        %v1166 = vsub.s32 0, %v827
        %v1167 = vsel %vm1165, %v1166, %v827
        %v1168 = vmul.u32.u64.compose %v1167, 2863311531
        %v1169 = vextract.low.u32 %v1168
        %v1170 = vextract.high.u32 %v1168
        %v1171 = vshrl.u32 %v1170, 4
        %v1172 = vmul.u32 %v1171, 24
        %v1173 = vsub.s32 %v1167, %v1172
        %v1174 = vsub.s32 0, %v1173
        %v1175 = vsel %vm1165, %v1174, %v1173
        %vm1176 = vcmp.lt.s32.totalorder %v828, 0
        %v1177 = vsub.s32 0, %v828
        %v1178 = vsel %vm1176, %v1177, %v828
        %v1179 = vmul.u32.u64.compose %v1178, 2863311531
        %v1180 = vextract.low.u32 %v1179
        %v1181 = vextract.high.u32 %v1179
        %v1182 = vshrl.u32 %v1181, 4
        %v1183 = vmul.u32 %v1182, 24
        %v1184 = vsub.s32 %v1178, %v1183
        %v1185 = vsub.s32 0, %v1184
        %v1186 = vsel %vm1176, %v1185, %v1184
        %vm1187 = vcmp.lt.s32.totalorder %v829, 0
        %v1188 = vsub.s32 0, %v829
        %v1189 = vsel %vm1187, %v1188, %v829
        %v1190 = vmul.u32.u64.compose %v1189, 2863311531
        %v1191 = vextract.low.u32 %v1190
        %v1192 = vextract.high.u32 %v1190
        %v1193 = vshrl.u32 %v1192, 4
        %v1194 = vmul.u32 %v1193, 24
        %v1195 = vsub.s32 %v1189, %v1194
        %v1196 = vsub.s32 0, %v1195
        %v1197 = vsel %vm1187, %v1196, %v1195
        %vm1198 = vcmp.lt.s32.totalorder %v830, 0
        %v1199 = vsub.s32 0, %v830
        %v1200 = vsel %vm1198, %v1199, %v830
        %v1201 = vmul.u32.u64.compose %v1200, 2863311531
        %v1202 = vextract.low.u32 %v1201
        %v1203 = vextract.high.u32 %v1201
        %v1204 = vshrl.u32 %v1203, 4
        %v1205 = vmul.u32 %v1204, 24
        %v1206 = vsub.s32 %v1200, %v1205
        %v1207 = vsub.s32 0, %v1206
        %v1208 = vsel %vm1198, %v1207, %v1206
        %vm1209 = vcmp.lt.s32.totalorder %v831, 0
        %v1210 = vsub.s32 0, %v831
        %v1211 = vsel %vm1209, %v1210, %v831
        %v1212 = vmul.u32.u64.compose %v1211, 2863311531
        %v1213 = vextract.low.u32 %v1212
        %v1214 = vextract.high.u32 %v1212
        %v1215 = vshrl.u32 %v1214, 4
        %v1216 = vmul.u32 %v1215, 24
        %v1217 = vsub.s32 %v1211, %v1216
        %v1218 = vsub.s32 0, %v1217
        %v1219 = vsel %vm1209, %v1218, %v1217
        %vm1220 = vcmp.lt.s32.totalorder %v832, 0
        %v1221 = vsub.s32 0, %v832
        %v1222 = vsel %vm1220, %v1221, %v832
        %v1223 = vmul.u32.u64.compose %v1222, 2863311531
        %v1224 = vextract.low.u32 %v1223
        %v1225 = vextract.high.u32 %v1223
        %v1226 = vshrl.u32 %v1225, 4
        %v1227 = vmul.u32 %v1226, 24
        %v1228 = vsub.s32 %v1222, %v1227
        %v1229 = vsub.s32 0, %v1228
        %v1230 = vsel %vm1220, %v1229, %v1228
        %vm1231 = vcmp.lt.s32.totalorder %v833, 0
        %v1232 = vsub.s32 0, %v833
        %v1233 = vsel %vm1231, %v1232, %v833
        %v1234 = vmul.u32.u64.compose %v1233, 2863311531
        %v1235 = vextract.low.u32 %v1234
        %v1236 = vextract.high.u32 %v1234
        %v1237 = vshrl.u32 %v1236, 4
        %v1238 = vmul.u32 %v1237, 24
        %v1239 = vsub.s32 %v1233, %v1238
        %v1240 = vsub.s32 0, %v1239
        %v1241 = vsel %vm1231, %v1240, %v1239
        %vm1242 = vcmp.lt.s32.totalorder %v834, 0
        %v1243 = vsub.s32 0, %v834
        %v1244 = vsel %vm1242, %v1243, %v834
        %v1245 = vmul.u32.u64.compose %v1244, 2863311531
        %v1246 = vextract.low.u32 %v1245
        %v1247 = vextract.high.u32 %v1245
        %v1248 = vshrl.u32 %v1247, 4
        %v1249 = vmul.u32 %v1248, 24
        %v1250 = vsub.s32 %v1244, %v1249
        %v1251 = vsub.s32 0, %v1250
        %v1252 = vsel %vm1242, %v1251, %v1250
        %vm1253 = vcmp.lt.s32.totalorder %v835, 0
        %v1254 = vsub.s32 0, %v835
        %v1255 = vsel %vm1253, %v1254, %v835
        %v1256 = vmul.u32.u64.compose %v1255, 2863311531
        %v1257 = vextract.low.u32 %v1256
        %v1258 = vextract.high.u32 %v1256
        %v1259 = vshrl.u32 %v1258, 4
        %v1260 = vmul.u32 %v1259, 24
        %v1261 = vsub.s32 %v1255, %v1260
        %v1262 = vsub.s32 0, %v1261
        %v1263 = vsel %vm1253, %v1262, %v1261
        %vm1264 = vcmp.lt.s32.totalorder %v836, 0
        %v1265 = vsub.s32 0, %v836
        %v1266 = vsel %vm1264, %v1265, %v836
        %v1267 = vmul.u32.u64.compose %v1266, 2863311531
        %v1268 = vextract.low.u32 %v1267
        %v1269 = vextract.high.u32 %v1267
        %v1270 = vshrl.u32 %v1269, 4
        %v1271 = vmul.u32 %v1270, 24
        %v1272 = vsub.s32 %v1266, %v1271
        %v1273 = vsub.s32 0, %v1272
        %v1274 = vsel %vm1264, %v1273, %v1272
        %vm1275 = vcmp.lt.s32.totalorder %v837, 0
        %v1276 = vsub.s32 0, %v837
        %v1277 = vsel %vm1275, %v1276, %v837
        %v1278 = vmul.u32.u64.compose %v1277, 2863311531
        %v1279 = vextract.low.u32 %v1278
        %v1280 = vextract.high.u32 %v1278
        %v1281 = vshrl.u32 %v1280, 4
        %v1282 = vmul.u32 %v1281, 24
        %v1283 = vsub.s32 %v1277, %v1282
        %v1284 = vsub.s32 0, %v1283
        %v1285 = vsel %vm1275, %v1284, %v1283
        %vm1286 = vcmp.lt.s32.totalorder %v838, 0
        %v1287 = vsub.s32 0, %v838
        %v1288 = vsel %vm1286, %v1287, %v838
        %v1289 = vmul.u32.u64.compose %v1288, 2863311531
        %v1290 = vextract.low.u32 %v1289
        %v1291 = vextract.high.u32 %v1289
        %v1292 = vshrl.u32 %v1291, 4
        %v1293 = vmul.u32 %v1292, 24
        %v1294 = vsub.s32 %v1288, %v1293
        %v1295 = vsub.s32 0, %v1294
        %v1296 = vsel %vm1286, %v1295, %v1294
        %vm1297 = vcmp.lt.s32.totalorder %v839, 0
        %v1298 = vsub.s32 0, %v839
        %v1299 = vsel %vm1297, %v1298, %v839
        %v1300 = vmul.u32.u64.compose %v1299, 2863311531
        %v1301 = vextract.low.u32 %v1300
        %v1302 = vextract.high.u32 %v1300
        %v1303 = vshrl.u32 %v1302, 4
        %v1304 = vmul.u32 %v1303, 24
        %v1305 = vsub.s32 %v1299, %v1304
        %v1306 = vsub.s32 0, %v1305
        %v1307 = vsel %vm1297, %v1306, %v1305
        %vm1308 = vcmp.lt.s32.totalorder %v840, 0
        %v1309 = vsub.s32 0, %v840
        %v1310 = vsel %vm1308, %v1309, %v840
        %v1311 = vmul.u32.u64.compose %v1310, 2863311531
        %v1312 = vextract.low.u32 %v1311
        %v1313 = vextract.high.u32 %v1311
        %v1314 = vshrl.u32 %v1313, 4
        %v1315 = vmul.u32 %v1314, 24
        %v1316 = vsub.s32 %v1310, %v1315
        %v1317 = vsub.s32 0, %v1316
        %v1318 = vsel %vm1308, %v1317, %v1316
        %vm1319 = vcmp.lt.s32.totalorder %v841, 0
        %v1320 = vsub.s32 0, %v841
        %v1321 = vsel %vm1319, %v1320, %v841
        %v1322 = vmul.u32.u64.compose %v1321, 2863311531
        %v1323 = vextract.low.u32 %v1322
        %v1324 = vextract.high.u32 %v1322
        %v1325 = vshrl.u32 %v1324, 4
        %v1326 = vmul.u32 %v1325, 24
        %v1327 = vsub.s32 %v1321, %v1326
        %v1328 = vsub.s32 0, %v1327
        %v1329 = vsel %vm1319, %v1328, %v1327
        %vm1330 = vcmp.lt.s32.totalorder %v842, 0
        %v1331 = vsub.s32 0, %v842
        %v1332 = vsel %vm1330, %v1331, %v842
        %v1333 = vmul.u32.u64.compose %v1332, 2863311531
        %v1334 = vextract.low.u32 %v1333
        %v1335 = vextract.high.u32 %v1333
        %v1336 = vshrl.u32 %v1335, 4
        %v1337 = vmul.u32 %v1336, 24
        %v1338 = vsub.s32 %v1332, %v1337
        %v1339 = vsub.s32 0, %v1338
        %v1340 = vsel %vm1330, %v1339, %v1338
        %vm1341 = vcmp.lt.s32.totalorder %v843, 0
        %v1342 = vsub.s32 0, %v843
        %v1343 = vsel %vm1341, %v1342, %v843
        %v1344 = vmul.u32.u64.compose %v1343, 2863311531
        %v1345 = vextract.low.u32 %v1344
        %v1346 = vextract.high.u32 %v1344
        %v1347 = vshrl.u32 %v1346, 4
        %v1348 = vmul.u32 %v1347, 24
        %v1349 = vsub.s32 %v1343, %v1348
        %v1350 = vsub.s32 0, %v1349
        %v1351 = vsel %vm1341, %v1350, %v1349
        %vm1352 = vcmp.lt.s32.totalorder %v844, 0
        %v1353 = vsub.s32 0, %v844
        %v1354 = vsel %vm1352, %v1353, %v844
        %v1355 = vmul.u32.u64.compose %v1354, 2863311531
        %v1356 = vextract.low.u32 %v1355
        %v1357 = vextract.high.u32 %v1355
        %v1358 = vshrl.u32 %v1357, 4
        %v1359 = vmul.u32 %v1358, 24
        %v1360 = vsub.s32 %v1354, %v1359
        %v1361 = vsub.s32 0, %v1360
        %v1362 = vsel %vm1352, %v1361, %v1360
        %vm1363 = vcmp.lt.s32.totalorder %v845, 0
        %v1364 = vsub.s32 0, %v845
        %v1365 = vsel %vm1363, %v1364, %v845
        %v1366 = vmul.u32.u64.compose %v1365, 2863311531
        %v1367 = vextract.low.u32 %v1366
        %v1368 = vextract.high.u32 %v1366
        %v1369 = vshrl.u32 %v1368, 4
        %v1370 = vmul.u32 %v1369, 24
        %v1371 = vsub.s32 %v1365, %v1370
        %v1372 = vsub.s32 0, %v1371
        %v1373 = vsel %vm1363, %v1372, %v1371
        %vm1374 = vcmp.ne.s32.totalorder %v856, 0
        %vm1375 = vcmp.ne.s32.totalorder %v867, 0
        %vm1376 = vcmp.ne.s32.totalorder %v878, 0
        %vm1377 = vcmp.ne.s32.totalorder %v889, 0
        %vm1378 = vcmp.ne.s32.totalorder %v900, 0
        %vm1379 = vcmp.ne.s32.totalorder %v911, 0
        %vm1380 = vcmp.ne.s32.totalorder %v922, 0
        %vm1381 = vcmp.ne.s32.totalorder %v933, 0
        %vm1382 = vcmp.ne.s32.totalorder %v944, 0
        %vm1383 = vcmp.ne.s32.totalorder %v955, 0
        %vm1384 = vcmp.ne.s32.totalorder %v966, 0
        %vm1385 = vcmp.ne.s32.totalorder %v977, 0
        %vm1386 = vcmp.ne.s32.totalorder %v988, 0
        %vm1387 = vcmp.ne.s32.totalorder %v999, 0
        %vm1388 = vcmp.ne.s32.totalorder %v1010, 0
        %vm1389 = vcmp.ne.s32.totalorder %v1021, 0
        %vm1390 = vcmp.ne.s32.totalorder %v1032, 0
        %vm1391 = vcmp.ne.s32.totalorder %v1043, 0
        %vm1392 = vcmp.ne.s32.totalorder %v1054, 0
        %vm1393 = vcmp.ne.s32.totalorder %v1065, 0
        %vm1394 = vcmp.ne.s32.totalorder %v1076, 0
        %vm1395 = vcmp.ne.s32.totalorder %v1087, 0
        %vm1396 = vcmp.ne.s32.totalorder %v1098, 0
        %vm1397 = vcmp.ne.s32.totalorder %v1109, 0
        %vm1398 = vcmp.ne.s32.totalorder %v1120, 0
        %vm1399 = vcmp.ne.s32.totalorder %v1131, 0
        %vm1400 = vcmp.ne.s32.totalorder %v1142, 0
        %vm1401 = vcmp.ne.s32.totalorder %v1153, 0
        %vm1402 = vcmp.ne.s32.totalorder %v1164, 0
        %vm1403 = vcmp.ne.s32.totalorder %v1175, 0
        %vm1404 = vcmp.ne.s32.totalorder %v1186, 0
        %vm1405 = vcmp.ne.s32.totalorder %v1197, 0
        %vm1406 = vcmp.ne.s32.totalorder %v1208, 0
        %vm1407 = vcmp.ne.s32.totalorder %v1219, 0
        %vm1408 = vcmp.ne.s32.totalorder %v1230, 0
        %vm1409 = vcmp.ne.s32.totalorder %v1241, 0
        %vm1410 = vcmp.ne.s32.totalorder %v1252, 0
        %vm1411 = vcmp.ne.s32.totalorder %v1263, 0
        %vm1412 = vcmp.ne.s32.totalorder %v1274, 0
        %vm1413 = vcmp.ne.s32.totalorder %v1285, 0
        %vm1414 = vcmp.ne.s32.totalorder %v1296, 0
        %vm1415 = vcmp.ne.s32.totalorder %v1307, 0
        %vm1416 = vcmp.ne.s32.totalorder %v1318, 0
        %vm1417 = vcmp.ne.s32.totalorder %v1329, 0
        %vm1418 = vcmp.ne.s32.totalorder %v1340, 0
        %vm1419 = vcmp.ne.s32.totalorder %v1351, 0
        %vm1420 = vcmp.ne.s32.totalorder %v1362, 0
        %vm1421 = vcmp.ne.s32.totalorder %v1373, 0
        %vm1422 = vcmp.lt.s32.totalorder %v856, 0
        %vm1423 = vcmp.lt.s32.totalorder %v867, 0
        %vm1424 = vcmp.lt.s32.totalorder %v878, 0
        %vm1425 = vcmp.lt.s32.totalorder %v889, 0
        %vm1426 = vcmp.lt.s32.totalorder %v900, 0
        %vm1427 = vcmp.lt.s32.totalorder %v911, 0
        %vm1428 = vcmp.lt.s32.totalorder %v922, 0
        %vm1429 = vcmp.lt.s32.totalorder %v933, 0
        %vm1430 = vcmp.lt.s32.totalorder %v944, 0
        %vm1431 = vcmp.lt.s32.totalorder %v955, 0
        %vm1432 = vcmp.lt.s32.totalorder %v966, 0
        %vm1433 = vcmp.lt.s32.totalorder %v977, 0
        %vm1434 = vcmp.lt.s32.totalorder %v988, 0
        %vm1435 = vcmp.lt.s32.totalorder %v999, 0
        %vm1436 = vcmp.lt.s32.totalorder %v1010, 0
        %vm1437 = vcmp.lt.s32.totalorder %v1021, 0
        %vm1438 = vcmp.lt.s32.totalorder %v1032, 0
        %vm1439 = vcmp.lt.s32.totalorder %v1043, 0
        %vm1440 = vcmp.lt.s32.totalorder %v1054, 0
        %vm1441 = vcmp.lt.s32.totalorder %v1065, 0
        %vm1442 = vcmp.lt.s32.totalorder %v1076, 0
        %vm1443 = vcmp.lt.s32.totalorder %v1087, 0
        %vm1444 = vcmp.lt.s32.totalorder %v1098, 0
        %vm1445 = vcmp.lt.s32.totalorder %v1109, 0
        %vm1446 = vcmp.lt.s32.totalorder %v1120, 0
        %vm1447 = vcmp.lt.s32.totalorder %v1131, 0
        %vm1448 = vcmp.lt.s32.totalorder %v1142, 0
        %vm1449 = vcmp.lt.s32.totalorder %v1153, 0
        %vm1450 = vcmp.lt.s32.totalorder %v1164, 0
        %vm1451 = vcmp.lt.s32.totalorder %v1175, 0
        %vm1452 = vcmp.lt.s32.totalorder %v1186, 0
        %vm1453 = vcmp.lt.s32.totalorder %v1197, 0
        %vm1454 = vcmp.lt.s32.totalorder %v1208, 0
        %vm1455 = vcmp.lt.s32.totalorder %v1219, 0
        %vm1456 = vcmp.lt.s32.totalorder %v1230, 0
        %vm1457 = vcmp.lt.s32.totalorder %v1241, 0
        %vm1458 = vcmp.lt.s32.totalorder %v1252, 0
        %vm1459 = vcmp.lt.s32.totalorder %v1263, 0
        %vm1460 = vcmp.lt.s32.totalorder %v1274, 0
        %vm1461 = vcmp.lt.s32.totalorder %v1285, 0
        %vm1462 = vcmp.lt.s32.totalorder %v1296, 0
        %vm1463 = vcmp.lt.s32.totalorder %v1307, 0
        %vm1464 = vcmp.lt.s32.totalorder %v1318, 0
        %vm1465 = vcmp.lt.s32.totalorder %v1329, 0
        %vm1466 = vcmp.lt.s32.totalorder %v1340, 0
        %vm1467 = vcmp.lt.s32.totalorder %v1351, 0
        %vm1468 = vcmp.lt.s32.totalorder %v1362, 0
        %vm1469 = vcmp.lt.s32.totalorder %v1373, 0
        %vm1470 = vmand %vm1422, %vm1374
        %vm1471 = vmand %vm1423, %vm1375
        %vm1472 = vmand %vm1424, %vm1376
        %vm1473 = vmand %vm1425, %vm1377
        %vm1474 = vmand %vm1426, %vm1378
        %vm1475 = vmand %vm1427, %vm1379
        %vm1476 = vmand %vm1428, %vm1380
        %vm1477 = vmand %vm1429, %vm1381
        %vm1478 = vmand %vm1430, %vm1382
        %vm1479 = vmand %vm1431, %vm1383
        %vm1480 = vmand %vm1432, %vm1384
        %vm1481 = vmand %vm1433, %vm1385
        %vm1482 = vmand %vm1434, %vm1386
        %vm1483 = vmand %vm1435, %vm1387
        %vm1484 = vmand %vm1436, %vm1388
        %vm1485 = vmand %vm1437, %vm1389
        %vm1486 = vmand %vm1438, %vm1390
        %vm1487 = vmand %vm1439, %vm1391
        %vm1488 = vmand %vm1440, %vm1392
        %vm1489 = vmand %vm1441, %vm1393
        %vm1490 = vmand %vm1442, %vm1394
        %vm1491 = vmand %vm1443, %vm1395
        %vm1492 = vmand %vm1444, %vm1396
        %vm1493 = vmand %vm1445, %vm1397
        %vm1494 = vmand %vm1446, %vm1398
        %vm1495 = vmand %vm1447, %vm1399
        %vm1496 = vmand %vm1448, %vm1400
        %vm1497 = vmand %vm1449, %vm1401
        %vm1498 = vmand %vm1450, %vm1402
        %vm1499 = vmand %vm1451, %vm1403
        %vm1500 = vmand %vm1452, %vm1404
        %vm1501 = vmand %vm1453, %vm1405
        %vm1502 = vmand %vm1454, %vm1406
        %vm1503 = vmand %vm1455, %vm1407
        %vm1504 = vmand %vm1456, %vm1408
        %vm1505 = vmand %vm1457, %vm1409
        %vm1506 = vmand %vm1458, %vm1410
        %vm1507 = vmand %vm1459, %vm1411
        %vm1508 = vmand %vm1460, %vm1412
        %vm1509 = vmand %vm1461, %vm1413
        %vm1510 = vmand %vm1462, %vm1414
        %vm1511 = vmand %vm1463, %vm1415
        %vm1512 = vmand %vm1464, %vm1416
        %vm1513 = vmand %vm1465, %vm1417
        %vm1514 = vmand %vm1466, %vm1418
        %vm1515 = vmand %vm1467, %vm1419
        %vm1516 = vmand %vm1468, %vm1420
        %vm1517 = vmand %vm1469, %vm1421
        %v1518 = vadd.s32 %v856, 24
        %v1519 = vadd.s32 %v867, 24
        %v1520 = vadd.s32 %v878, 24
        %v1521 = vadd.s32 %v889, 24
        %v1522 = vadd.s32 %v900, 24
        %v1523 = vadd.s32 %v911, 24
        %v1524 = vadd.s32 %v922, 24
        %v1525 = vadd.s32 %v933, 24
        %v1526 = vadd.s32 %v944, 24
        %v1527 = vadd.s32 %v955, 24
        %v1528 = vadd.s32 %v966, 24
        %v1529 = vadd.s32 %v977, 24
        %v1530 = vadd.s32 %v988, 24
        %v1531 = vadd.s32 %v999, 24
        %v1532 = vadd.s32 %v1010, 24
        %v1533 = vadd.s32 %v1021, 24
        %v1534 = vadd.s32 %v1032, 24
        %v1535 = vadd.s32 %v1043, 24
        %v1536 = vadd.s32 %v1054, 24
        %v1537 = vadd.s32 %v1065, 24
        %v1538 = vadd.s32 %v1076, 24
        %v1539 = vadd.s32 %v1087, 24
        %v1540 = vadd.s32 %v1098, 24
        %v1541 = vadd.s32 %v1109, 24
        %v1542 = vadd.s32 %v1120, 24
        %v1543 = vadd.s32 %v1131, 24
        %v1544 = vadd.s32 %v1142, 24
        %v1545 = vadd.s32 %v1153, 24
        %v1546 = vadd.s32 %v1164, 24
        %v1547 = vadd.s32 %v1175, 24
        %v1548 = vadd.s32 %v1186, 24
        %v1549 = vadd.s32 %v1197, 24
        %v1550 = vadd.s32 %v1208, 24
        %v1551 = vadd.s32 %v1219, 24
        %v1552 = vadd.s32 %v1230, 24
        %v1553 = vadd.s32 %v1241, 24
        %v1554 = vadd.s32 %v1252, 24
        %v1555 = vadd.s32 %v1263, 24
        %v1556 = vadd.s32 %v1274, 24
        %v1557 = vadd.s32 %v1285, 24
        %v1558 = vadd.s32 %v1296, 24
        %v1559 = vadd.s32 %v1307, 24
        %v1560 = vadd.s32 %v1318, 24
        %v1561 = vadd.s32 %v1329, 24
        %v1562 = vadd.s32 %v1340, 24
        %v1563 = vadd.s32 %v1351, 24
        %v1564 = vadd.s32 %v1362, 24
        %v1565 = vadd.s32 %v1373, 24
        %v1566 = vsel %vm1470, %v1518, %v856
        %v1567 = vsel %vm1471, %v1519, %v867
        %v1568 = vsel %vm1472, %v1520, %v878
        %v1569 = vsel %vm1473, %v1521, %v889
        %v1570 = vsel %vm1474, %v1522, %v900
        %v1571 = vsel %vm1475, %v1523, %v911
        %v1572 = vsel %vm1476, %v1524, %v922
        %v1573 = vsel %vm1477, %v1525, %v933
        %v1574 = vsel %vm1478, %v1526, %v944
        %v1575 = vsel %vm1479, %v1527, %v955
        %v1576 = vsel %vm1480, %v1528, %v966
        %v1577 = vsel %vm1481, %v1529, %v977
        %v1578 = vsel %vm1482, %v1530, %v988
        %v1579 = vsel %vm1483, %v1531, %v999
        %v1580 = vsel %vm1484, %v1532, %v1010
        %v1581 = vsel %vm1485, %v1533, %v1021
        %v1582 = vsel %vm1486, %v1534, %v1032
        %v1583 = vsel %vm1487, %v1535, %v1043
        %v1584 = vsel %vm1488, %v1536, %v1054
        %v1585 = vsel %vm1489, %v1537, %v1065
        %v1586 = vsel %vm1490, %v1538, %v1076
        %v1587 = vsel %vm1491, %v1539, %v1087
        %v1588 = vsel %vm1492, %v1540, %v1098
        %v1589 = vsel %vm1493, %v1541, %v1109
        %v1590 = vsel %vm1494, %v1542, %v1120
        %v1591 = vsel %vm1495, %v1543, %v1131
        %v1592 = vsel %vm1496, %v1544, %v1142
        %v1593 = vsel %vm1497, %v1545, %v1153
        %v1594 = vsel %vm1498, %v1546, %v1164
        %v1595 = vsel %vm1499, %v1547, %v1175
        %v1596 = vsel %vm1500, %v1548, %v1186
        %v1597 = vsel %vm1501, %v1549, %v1197
        %v1598 = vsel %vm1502, %v1550, %v1208
        %v1599 = vsel %vm1503, %v1551, %v1219
        %v1600 = vsel %vm1504, %v1552, %v1230
        %v1601 = vsel %vm1505, %v1553, %v1241
        %v1602 = vsel %vm1506, %v1554, %v1252
        %v1603 = vsel %vm1507, %v1555, %v1263
        %v1604 = vsel %vm1508, %v1556, %v1274
        %v1605 = vsel %vm1509, %v1557, %v1285
        %v1606 = vsel %vm1510, %v1558, %v1296
        %v1607 = vsel %vm1511, %v1559, %v1307
        %v1608 = vsel %vm1512, %v1560, %v1318
        %v1609 = vsel %vm1513, %v1561, %v1329
        %v1610 = vsel %vm1514, %v1562, %v1340
        %v1611 = vsel %vm1515, %v1563, %v1351
        %v1612 = vsel %vm1516, %v1564, %v1362
        %v1613 = vsel %vm1517, %v1565, %v1373
        %vm1614 = vcmp.lt.s32.totalorder %v1566, 16
        %vm1615 = vcmp.lt.s32.totalorder %v1567, 16
        %vm1616 = vcmp.lt.s32.totalorder %v1568, 16
        %vm1617 = vcmp.lt.s32.totalorder %v1569, 16
        %vm1618 = vcmp.lt.s32.totalorder %v1570, 16
        %vm1619 = vcmp.lt.s32.totalorder %v1571, 16
        %vm1620 = vcmp.lt.s32.totalorder %v1572, 16
        %vm1621 = vcmp.lt.s32.totalorder %v1573, 16
        %vm1622 = vcmp.lt.s32.totalorder %v1574, 16
        %vm1623 = vcmp.lt.s32.totalorder %v1575, 16
        %vm1624 = vcmp.lt.s32.totalorder %v1576, 16
        %vm1625 = vcmp.lt.s32.totalorder %v1577, 16
        %vm1626 = vcmp.lt.s32.totalorder %v1578, 16
        %vm1627 = vcmp.lt.s32.totalorder %v1579, 16
        %vm1628 = vcmp.lt.s32.totalorder %v1580, 16
        %vm1629 = vcmp.lt.s32.totalorder %v1581, 16
        %vm1630 = vcmp.lt.s32.totalorder %v1582, 16
        %vm1631 = vcmp.lt.s32.totalorder %v1583, 16
        %vm1632 = vcmp.lt.s32.totalorder %v1584, 16
        %vm1633 = vcmp.lt.s32.totalorder %v1585, 16
        %vm1634 = vcmp.lt.s32.totalorder %v1586, 16
        %vm1635 = vcmp.lt.s32.totalorder %v1587, 16
        %vm1636 = vcmp.lt.s32.totalorder %v1588, 16
        %vm1637 = vcmp.lt.s32.totalorder %v1589, 16
        %vm1638 = vcmp.lt.s32.totalorder %v1590, 16
        %vm1639 = vcmp.lt.s32.totalorder %v1591, 16
        %vm1640 = vcmp.lt.s32.totalorder %v1592, 16
        %vm1641 = vcmp.lt.s32.totalorder %v1593, 16
        %vm1642 = vcmp.lt.s32.totalorder %v1594, 16
        %vm1643 = vcmp.lt.s32.totalorder %v1595, 16
        %vm1644 = vcmp.lt.s32.totalorder %v1596, 16
        %vm1645 = vcmp.lt.s32.totalorder %v1597, 16
        %vm1646 = vcmp.lt.s32.totalorder %v1598, 16
        %vm1647 = vcmp.lt.s32.totalorder %v1599, 16
        %vm1648 = vcmp.lt.s32.totalorder %v1600, 16
        %vm1649 = vcmp.lt.s32.totalorder %v1601, 16
        %vm1650 = vcmp.lt.s32.totalorder %v1602, 16
        %vm1651 = vcmp.lt.s32.totalorder %v1603, 16
        %vm1652 = vcmp.lt.s32.totalorder %v1604, 16
        %vm1653 = vcmp.lt.s32.totalorder %v1605, 16
        %vm1654 = vcmp.lt.s32.totalorder %v1606, 16
        %vm1655 = vcmp.lt.s32.totalorder %v1607, 16
        %vm1656 = vcmp.lt.s32.totalorder %v1608, 16
        %vm1657 = vcmp.lt.s32.totalorder %v1609, 16
        %vm1658 = vcmp.lt.s32.totalorder %v1610, 16
        %vm1659 = vcmp.lt.s32.totalorder %v1611, 16
        %vm1660 = vcmp.lt.s32.totalorder %v1612, 16
        %vm1661 = vcmp.lt.s32.totalorder %v1613, 16
        %1662 = vst [vmem:[#allocation2] sm:$0xf] 0
        %1663 = vst [vmem:[#allocation2 + $0x4] sm:$0xf] 0
        %1664 = vst [vmem:[#allocation2 + $0x8] sm:$0xf] 0
        %vm1665 = vcmask 1040384
        %vm1666 = vsmask.f32 256
        %vm1667 = vmand %vm1665, %vm1666
        %v1668 = vld [vmem:[#allocation2 + $0xc] sm:$0x1]
        %v1669 = vsel %vm1667, 0, %v1668
        %1670 = vst [vmem:[#allocation2 + $0xc] sm:$0x1] %v1669
        %vm1671 = vcmask 1043456
        %vm1672 = vsmask.f32 7938
        %vm1673 = vmand %vm1671, %vm1672
        %v1674 = vld [vmem:[#allocation2 + $0xcc] sm:$0xf]
        %v1675 = vsel %vm1673, 0, %v1674
        %1676 = vst [vmem:[#allocation2 + $0xcc] sm:$0xf] %v1675
        %1677 = vst [vmem:[#allocation2 + $0xd0] sm:$0xf] 0
        %1678 = vst [vmem:[#allocation2 + $0xd4] sm:$0xf] 0
        %1679 = vst [vmem:[#allocation2 + $0xd8] sm:$0xf] 0
        %v1680 = vsel %vm1614, 1, 0
        %v1681 = vsel %vm1615, 1, 0
        %v1682 = vsel %vm1616, 1, 0
        %v1683 = vsel %vm1617, 1, 0
        %v1684 = vsel %vm1618, 1, 0
        %v1685 = vsel %vm1619, 1, 0
        %v1686 = vsel %vm1620, 1, 0
        %v1687 = vsel %vm1621, 1, 0
        %v1688 = vsel %vm1622, 1, 0
        %v1689 = vsel %vm1623, 1, 0
        %v1690 = vsel %vm1624, 1, 0
        %v1691 = vsel %vm1625, 1, 0
        %v1692 = vsel %vm1626, 1, 0
        %v1693 = vsel %vm1627, 1, 0
        %v1694 = vsel %vm1628, 1, 0
        %v1695 = vsel %vm1629, 1, 0
        %v1696 = vsel %vm1630, 1, 0
        %v1697 = vsel %vm1631, 1, 0
        %v1698 = vsel %vm1632, 1, 0
        %v1699 = vsel %vm1633, 1, 0
        %v1700 = vsel %vm1634, 1, 0
        %v1701 = vsel %vm1635, 1, 0
        %v1702 = vsel %vm1636, 1, 0
        %v1703 = vsel %vm1637, 1, 0
        %v1704 = vsel %vm1638, 1, 0
        %v1705 = vsel %vm1639, 1, 0
        %v1706 = vsel %vm1640, 1, 0
        %v1707 = vsel %vm1641, 1, 0
        %v1708 = vsel %vm1642, 1, 0
        %v1709 = vsel %vm1643, 1, 0
        %v1710 = vsel %vm1644, 1, 0
        %v1711 = vsel %vm1645, 1, 0
        %v1712 = vsel %vm1646, 1, 0
        %v1713 = vsel %vm1647, 1, 0
        %v1714 = vsel %vm1648, 1, 0
        %v1715 = vsel %vm1649, 1, 0
        %v1716 = vsel %vm1650, 1, 0
        %v1717 = vsel %vm1651, 1, 0
        %v1718 = vsel %vm1652, 1, 0
        %v1719 = vsel %vm1653, 1, 0
        %v1720 = vsel %vm1654, 1, 0
        %v1721 = vsel %vm1655, 1, 0
        %v1722 = vsel %vm1656, 1, 0
        %v1723 = vsel %vm1657, 1, 0
        %v1724 = vsel %vm1658, 1, 0
        %v1725 = vsel %vm1659, 1, 0
        %v1726 = vsel %vm1660, 1, 0
        %v1727 = vsel %vm1661, 1, 0
        %vm1728 = vcmp.eq.s32.totalorder %v1680, 1
        %vm1729 = vcmp.eq.s32.totalorder %v1681, 1
        %vm1730 = vcmp.eq.s32.totalorder %v1682, 1
        %vm1731 = vcmp.eq.s32.totalorder %v1683, 1
        %vm1732 = vcmp.eq.s32.totalorder %v1684, 1
        %vm1733 = vcmp.eq.s32.totalorder %v1685, 1
        %vm1734 = vcmp.eq.s32.totalorder %v1686, 1
        %vm1735 = vcmp.eq.s32.totalorder %v1687, 1
        %vm1736 = vcmp.eq.s32.totalorder %v1688, 1
        %vm1737 = vcmp.eq.s32.totalorder %v1689, 1
        %vm1738 = vcmp.eq.s32.totalorder %v1690, 1
        %vm1739 = vcmp.eq.s32.totalorder %v1691, 1
        %vm1740 = vcmp.eq.s32.totalorder %v1692, 1
        %vm1741 = vcmp.eq.s32.totalorder %v1693, 1
        %vm1742 = vcmp.eq.s32.totalorder %v1694, 1
        %vm1743 = vcmp.eq.s32.totalorder %v1695, 1
        %vm1744 = vcmp.eq.s32.totalorder %v1696, 1
        %vm1745 = vcmp.eq.s32.totalorder %v1697, 1
        %vm1746 = vcmp.eq.s32.totalorder %v1698, 1
        %vm1747 = vcmp.eq.s32.totalorder %v1699, 1
        %vm1748 = vcmp.eq.s32.totalorder %v1700, 1
        %vm1749 = vcmp.eq.s32.totalorder %v1701, 1
        %vm1750 = vcmp.eq.s32.totalorder %v1702, 1
        %vm1751 = vcmp.eq.s32.totalorder %v1703, 1
        %vm1752 = vcmp.eq.s32.totalorder %v1704, 1
        %vm1753 = vcmp.eq.s32.totalorder %v1705, 1
        %vm1754 = vcmp.eq.s32.totalorder %v1706, 1
        %vm1755 = vcmp.eq.s32.totalorder %v1707, 1
        %vm1756 = vcmp.eq.s32.totalorder %v1708, 1
        %vm1757 = vcmp.eq.s32.totalorder %v1709, 1
        %vm1758 = vcmp.eq.s32.totalorder %v1710, 1
        %vm1759 = vcmp.eq.s32.totalorder %v1711, 1
        %vm1760 = vcmp.eq.s32.totalorder %v1712, 1
        %vm1761 = vcmp.eq.s32.totalorder %v1713, 1
        %vm1762 = vcmp.eq.s32.totalorder %v1714, 1
        %vm1763 = vcmp.eq.s32.totalorder %v1715, 1
        %vm1764 = vcmp.eq.s32.totalorder %v1716, 1
        %vm1765 = vcmp.eq.s32.totalorder %v1717, 1
        %vm1766 = vcmp.eq.s32.totalorder %v1718, 1
        %vm1767 = vcmp.eq.s32.totalorder %v1719, 1
        %vm1768 = vcmp.eq.s32.totalorder %v1720, 1
        %vm1769 = vcmp.eq.s32.totalorder %v1721, 1
        %vm1770 = vcmp.eq.s32.totalorder %v1722, 1
        %vm1771 = vcmp.eq.s32.totalorder %v1723, 1
        %vm1772 = vcmp.eq.s32.totalorder %v1724, 1
        %vm1773 = vcmp.eq.s32.totalorder %v1725, 1
        %vm1774 = vcmp.eq.s32.totalorder %v1726, 1
        %vm1775 = vcmp.eq.s32.totalorder %v1727, 1
        %v1776 = vsel %vm1728, %v749, 0.0
        %v1777 = vsel %vm1729, %v750, 0.0
        %v1778 = vsel %vm1730, %v751, 0.0
        %v1779 = vsel %vm1731, %v752, 0.0
        %v1780 = vsel %vm1732, %v753, 0.0
        %v1781 = vsel %vm1733, %v754, 0.0
        %v1782 = vsel %vm1734, %v755, 0.0
        %v1783 = vsel %vm1735, %v756, 0.0
        %v1784 = vsel %vm1736, %v757, 0.0
        %v1785 = vsel %vm1737, %v758, 0.0
        %v1786 = vsel %vm1738, %v759, 0.0
        %v1787 = vsel %vm1739, %v760, 0.0
        %v1788 = vsel %vm1740, %v761, 0.0
        %v1789 = vsel %vm1741, %v762, 0.0
        %v1790 = vsel %vm1742, %v763, 0.0
        %v1791 = vsel %vm1743, %v764, 0.0
        %v1792 = vsel %vm1744, %v765, 0.0
        %v1793 = vsel %vm1745, %v766, 0.0
        %v1794 = vsel %vm1746, %v767, 0.0
        %v1795 = vsel %vm1747, %v768, 0.0
        %v1796 = vsel %vm1748, %v769, 0.0
        %v1797 = vsel %vm1749, %v770, 0.0
        %v1798 = vsel %vm1750, %v771, 0.0
        %v1799 = vsel %vm1751, %v772, 0.0
        %v1800 = vsel %vm1752, %v773, 0.0
        %v1801 = vsel %vm1753, %v774, 0.0
        %v1802 = vsel %vm1754, %v775, 0.0
        %v1803 = vsel %vm1755, %v776, 0.0
        %v1804 = vsel %vm1756, %v777, 0.0
        %v1805 = vsel %vm1757, %v778, 0.0
        %v1806 = vsel %vm1758, %v779, 0.0
        %v1807 = vsel %vm1759, %v780, 0.0
        %v1808 = vsel %vm1760, %v781, 0.0
        %v1809 = vsel %vm1761, %v782, 0.0
        %v1810 = vsel %vm1762, %v783, 0.0
        %v1811 = vsel %vm1763, %v784, 0.0
        %v1812 = vsel %vm1764, %v785, 0.0
        %v1813 = vsel %vm1765, %v786, 0.0
        %v1814 = vsel %vm1766, %v787, 0.0
        %v1815 = vsel %vm1767, %v788, 0.0
        %v1816 = vsel %vm1768, %v789, 0.0
        %v1817 = vsel %vm1769, %v790, 0.0
        %v1818 = vsel %vm1770, %v791, 0.0
        %v1819 = vsel %vm1771, %v792, 0.0
        %v1820 = vsel %vm1772, %v793, 0.0
        %v1821 = vsel %vm1773, %v794, 0.0
        %v1822 = vsel %vm1774, %v795, 0.0
        %v1823 = vsel %vm1775, %v796, 0.0
        %v1824 = vpack.c.bf16 %v1777, %v1776
        %v1825 = vpack.c.bf16 %v1779, %v1778
        %v1826 = vpack.c.bf16 %v1781, %v1780
        %v1827 = vpack.c.bf16 %v1783, %v1782
        %v1828 = vpack.c.bf16 %v1785, %v1784
        %v1829 = vpack.c.bf16 %v1787, %v1786
        %v1830 = vpack.c.bf16 %v1789, %v1788
        %v1831 = vpack.c.bf16 %v1791, %v1790
        %v1832 = vpack.c.bf16 %v1793, %v1792
        %v1833 = vpack.c.bf16 %v1795, %v1794
        %v1834 = vpack.c.bf16 %v1797, %v1796
        %v1835 = vpack.c.bf16 %v1799, %v1798
        %v1836 = vpack.c.bf16 %v1801, %v1800
        %v1837 = vpack.c.bf16 %v1803, %v1802
        %v1838 = vpack.c.bf16 %v1805, %v1804
        %v1839 = vpack.c.bf16 %v1807, %v1806
        %v1840 = vpack.c.bf16 %v1809, %v1808
        %v1841 = vpack.c.bf16 %v1811, %v1810
        %v1842 = vpack.c.bf16 %v1813, %v1812
        %v1843 = vpack.c.bf16 %v1815, %v1814
        %v1844 = vpack.c.bf16 %v1817, %v1816
        %v1845 = vpack.c.bf16 %v1819, %v1818
        %v1846 = vpack.c.bf16 %v1821, %v1820
        %v1847 = vpack.c.bf16 %v1823, %v1822
        %v1872 = vunpack.c.l.b16 %v1824
        %v1873 = vunpack.c.h.b16 %v1824
        %v1874 = vunpack.c.l.b16 %v1825
        %v1875 = vunpack.c.h.b16 %v1825
        %v1876 = vunpack.c.l.b16 %v1826
        %v1877 = vunpack.c.h.b16 %v1826
        %v1878 = vunpack.c.l.b16 %v1827
        %v1879 = vunpack.c.h.b16 %v1827
        %v1880 = vunpack.c.l.b16 %v1828
        %v1881 = vunpack.c.h.b16 %v1828
        %v1882 = vunpack.c.l.b16 %v1829
        %v1883 = vunpack.c.h.b16 %v1829
        %v1884 = vunpack.c.l.b16 %v1830
        %v1885 = vunpack.c.h.b16 %v1830
        %v1886 = vunpack.c.l.b16 %v1831
        %v1887 = vunpack.c.h.b16 %v1831
        %v1888 = vunpack.c.l.b16 %v1832
        %v1889 = vunpack.c.h.b16 %v1832
        %v1890 = vunpack.c.l.b16 %v1833
        %v1891 = vunpack.c.h.b16 %v1833
        %v1892 = vunpack.c.l.b16 %v1834
        %v1893 = vunpack.c.h.b16 %v1834
        %v1894 = vunpack.c.l.b16 %v1835
        %v1895 = vunpack.c.h.b16 %v1835
        %v1896 = vunpack.c.l.b16 %v1836
        %v1897 = vunpack.c.h.b16 %v1836
        %v1898 = vunpack.c.l.b16 %v1837
        %v1899 = vunpack.c.h.b16 %v1837
        %v1900 = vunpack.c.l.b16 %v1838
        %v1901 = vunpack.c.h.b16 %v1838
        %v1902 = vunpack.c.l.b16 %v1839
        %v1903 = vunpack.c.h.b16 %v1839
        %v1904 = vunpack.c.l.b16 %v1840
        %v1905 = vunpack.c.h.b16 %v1840
        %v1906 = vunpack.c.l.b16 %v1841
        %v1907 = vunpack.c.h.b16 %v1841
        %v1908 = vunpack.c.l.b16 %v1842
        %v1909 = vunpack.c.h.b16 %v1842
        %v1910 = vunpack.c.l.b16 %v1843
        %v1911 = vunpack.c.h.b16 %v1843
        %v1912 = vunpack.c.l.b16 %v1844
        %v1913 = vunpack.c.h.b16 %v1844
        %v1914 = vunpack.c.l.b16 %v1845
        %v1915 = vunpack.c.h.b16 %v1845
        %v1916 = vunpack.c.l.b16 %v1846
        %v1917 = vunpack.c.h.b16 %v1846
        %v1918 = vunpack.c.l.b16 %v1847
        %v1919 = vunpack.c.h.b16 %v1847
        %v1920 = vpack.c.b16 %v1872, %v1872
        %v1921 = vpack.c.b16 %v1873, %v1873
        %v1922 = vpack.c.b16 %v1874, %v1874
        %v1923 = vpack.c.b16 %v1875, %v1875
        %v1924 = vpack.c.b16 %v1876, %v1876
        %v1925 = vpack.c.b16 %v1877, %v1877
        %v1926 = vpack.c.b16 %v1878, %v1878
        %v1927 = vpack.c.b16 %v1879, %v1879
        %v1928 = vpack.c.b16 %v1880, %v1880
        %v1929 = vpack.c.b16 %v1881, %v1881
        %v1930 = vpack.c.b16 %v1882, %v1882
        %v1931 = vpack.c.b16 %v1883, %v1883
        %v1932 = vpack.c.b16 %v1884, %v1884
        %v1933 = vpack.c.b16 %v1885, %v1885
        %v1934 = vpack.c.b16 %v1886, %v1886
        %v1935 = vpack.c.b16 %v1887, %v1887
        %v1936 = vpack.c.b16 %v1888, %v1888
        %v1937 = vpack.c.b16 %v1889, %v1889
        %v1938 = vpack.c.b16 %v1890, %v1890
        %v1939 = vpack.c.b16 %v1891, %v1891
        %v1940 = vpack.c.b16 %v1892, %v1892
        %v1941 = vpack.c.b16 %v1893, %v1893
        %v1942 = vpack.c.b16 %v1894, %v1894
        %v1943 = vpack.c.b16 %v1895, %v1895
        %v1944 = vpack.c.b16 %v1896, %v1896
        %v1945 = vpack.c.b16 %v1897, %v1897
        %v1946 = vpack.c.b16 %v1898, %v1898
        %v1947 = vpack.c.b16 %v1899, %v1899
        %v1948 = vpack.c.b16 %v1900, %v1900
        %v1949 = vpack.c.b16 %v1901, %v1901
        %v1950 = vpack.c.b16 %v1902, %v1902
        %v1951 = vpack.c.b16 %v1903, %v1903
        %v1952 = vpack.c.b16 %v1904, %v1904
        %v1953 = vpack.c.b16 %v1905, %v1905
        %v1954 = vpack.c.b16 %v1906, %v1906
        %v1955 = vpack.c.b16 %v1907, %v1907
        %v1956 = vpack.c.b16 %v1908, %v1908
        %v1957 = vpack.c.b16 %v1909, %v1909
        %v1958 = vpack.c.b16 %v1910, %v1910
        %v1959 = vpack.c.b16 %v1911, %v1911
        %v1960 = vpack.c.b16 %v1912, %v1912
        %v1961 = vpack.c.b16 %v1913, %v1913
        %v1962 = vpack.c.b16 %v1914, %v1914
        %v1963 = vpack.c.b16 %v1915, %v1915
        %v1964 = vpack.c.b16 %v1916, %v1916
        %v1965 = vpack.c.b16 %v1917, %v1917
        %v1966 = vpack.c.b16 %v1918, %v1918
        %v1967 = vpack.c.b16 %v1919, %v1919
        %vm1968 = vsmask.f32 4368
        %vm1969 = vmor %vm1666, %vm1968
        %v1971 = vshrl.u32 %v1920, 16
        %v1973 = vrot.slane %v1971, 7
        %v1974 = vshll.u32 %v1920, 16
        %v1976 = vor.u32 %v1973, %v1974
        %v1977 = vrot.slane %v1973, 4
        %v1979 = vshrl.u32 %v1921, 16
        %v1981 = vrot.slane %v1979, 7
        %v1982 = vshll.u32 %v1921, 16
        %v1984 = vor.u32 %v1981, %v1982
        %v1985 = vsel %vm1969, %v1977, %v1984
        %v1986 = vrot.slane %v1981, 4
        %v1988 = vshrl.u32 %v1922, 16
        %v1990 = vrot.slane %v1988, 7
        %v1991 = vshll.u32 %v1922, 16
        %v1993 = vor.u32 %v1990, %v1991
        %v1994 = vsel %vm1969, %v1986, %v1993
        %v1995 = vrot.slane %v1990, 4
        %v1997 = vshrl.u32 %v1923, 16
        %v1999 = vrot.slane %v1997, 7
        %v2000 = vshll.u32 %v1923, 16
        %v2002 = vor.u32 %v1999, %v2000
        %v2003 = vsel %vm1969, %v1995, %v2002
        %v2004 = vrot.slane %v1999, 4
        %v2006 = vshrl.u32 %v1924, 16
        %v2008 = vrot.slane %v2006, 7
        %v2009 = vshll.u32 %v1924, 16
        %v2011 = vor.u32 %v2008, %v2009
        %v2012 = vsel %vm1969, %v2004, %v2011
        %v2013 = vrot.slane %v2008, 4
        %v2015 = vshrl.u32 %v1925, 16
        %v2017 = vrot.slane %v2015, 7
        %v2018 = vshll.u32 %v1925, 16
        %v2020 = vor.u32 %v2017, %v2018
        %v2021 = vsel %vm1969, %v2013, %v2020
        %v2022 = vrot.slane %v2017, 4
        %v2024 = vshrl.u32 %v1926, 16
        %v2026 = vrot.slane %v2024, 7
        %v2027 = vshll.u32 %v1926, 16
        %v2029 = vor.u32 %v2026, %v2027
        %v2030 = vsel %vm1969, %v2022, %v2029
        %v2031 = vrot.slane %v2026, 4
        %v2033 = vshrl.u32 %v1927, 16
        %v2035 = vrot.slane %v2033, 7
        %v2036 = vshll.u32 %v1927, 16
        %v2038 = vor.u32 %v2035, %v2036
        %v2039 = vsel %vm1969, %v2031, %v2038
        %v2040 = vrot.slane %v2035, 4
        %v2042 = vshrl.u32 %v1928, 16
        %v2044 = vrot.slane %v2042, 7
        %v2045 = vshll.u32 %v1928, 16
        %v2047 = vor.u32 %v2044, %v2045
        %v2048 = vsel %vm1969, %v2040, %v2047
        %v2049 = vrot.slane %v2044, 4
        %v2051 = vshrl.u32 %v1929, 16
        %v2053 = vrot.slane %v2051, 7
        %v2054 = vshll.u32 %v1929, 16
        %v2056 = vor.u32 %v2053, %v2054
        %v2057 = vsel %vm1969, %v2049, %v2056
        %v2058 = vrot.slane %v2053, 4
        %v2060 = vshrl.u32 %v1930, 16
        %v2062 = vrot.slane %v2060, 7
        %v2063 = vshll.u32 %v1930, 16
        %v2065 = vor.u32 %v2062, %v2063
        %v2066 = vsel %vm1969, %v2058, %v2065
        %v2067 = vrot.slane %v2062, 4
        %v2069 = vshrl.u32 %v1931, 16
        %v2071 = vrot.slane %v2069, 7
        %v2072 = vshll.u32 %v1931, 16
        %v2074 = vor.u32 %v2071, %v2072
        %v2075 = vsel %vm1969, %v2067, %v2074
        %v2076 = vrot.slane %v2071, 4
        %v2078 = vshrl.u32 %v1932, 16
        %v2080 = vrot.slane %v2078, 7
        %v2081 = vshll.u32 %v1932, 16
        %v2083 = vor.u32 %v2080, %v2081
        %v2084 = vsel %vm1969, %v2076, %v2083
        %v2085 = vrot.slane %v2080, 4
        %v2087 = vshrl.u32 %v1933, 16
        %v2089 = vrot.slane %v2087, 7
        %v2090 = vshll.u32 %v1933, 16
        %v2092 = vor.u32 %v2089, %v2090
        %v2093 = vsel %vm1969, %v2085, %v2092
        %v2094 = vrot.slane %v2089, 4
        %v2096 = vshrl.u32 %v1934, 16
        %v2098 = vrot.slane %v2096, 7
        %v2099 = vshll.u32 %v1934, 16
        %v2101 = vor.u32 %v2098, %v2099
        %v2102 = vsel %vm1969, %v2094, %v2101
        %v2103 = vrot.slane %v2098, 4
        %v2105 = vshrl.u32 %v1935, 16
        %v2107 = vrot.slane %v2105, 7
        %v2108 = vshll.u32 %v1935, 16
        %v2110 = vor.u32 %v2107, %v2108
        %v2111 = vsel %vm1969, %v2103, %v2110
        %v2112 = vrot.slane %v2107, 4
        %v2114 = vshrl.u32 %v1936, 16
        %v2116 = vrot.slane %v2114, 7
        %v2117 = vshll.u32 %v1936, 16
        %v2119 = vor.u32 %v2116, %v2117
        %v2120 = vsel %vm1969, %v2112, %v2119
        %v2121 = vrot.slane %v2116, 4
        %v2123 = vshrl.u32 %v1937, 16
        %v2125 = vrot.slane %v2123, 7
        %v2126 = vshll.u32 %v1937, 16
        %v2128 = vor.u32 %v2125, %v2126
        %v2129 = vsel %vm1969, %v2121, %v2128
        %v2130 = vrot.slane %v2125, 4
        %v2132 = vshrl.u32 %v1938, 16
        %v2134 = vrot.slane %v2132, 7
        %v2135 = vshll.u32 %v1938, 16
        %v2137 = vor.u32 %v2134, %v2135
        %v2138 = vsel %vm1969, %v2130, %v2137
        %v2139 = vrot.slane %v2134, 4
        %v2141 = vshrl.u32 %v1939, 16
        %v2143 = vrot.slane %v2141, 7
        %v2144 = vshll.u32 %v1939, 16
        %v2146 = vor.u32 %v2143, %v2144
        %v2147 = vsel %vm1969, %v2139, %v2146
        %v2148 = vrot.slane %v2143, 4
        %v2150 = vshrl.u32 %v1940, 16
        %v2152 = vrot.slane %v2150, 7
        %v2153 = vshll.u32 %v1940, 16
        %v2155 = vor.u32 %v2152, %v2153
        %v2156 = vsel %vm1969, %v2148, %v2155
        %v2157 = vrot.slane %v2152, 4
        %v2159 = vshrl.u32 %v1941, 16
        %v2161 = vrot.slane %v2159, 7
        %v2162 = vshll.u32 %v1941, 16
        %v2164 = vor.u32 %v2161, %v2162
        %v2165 = vsel %vm1969, %v2157, %v2164
        %v2166 = vrot.slane %v2161, 4
        %v2168 = vshrl.u32 %v1942, 16
        %v2170 = vrot.slane %v2168, 7
        %v2171 = vshll.u32 %v1942, 16
        %v2173 = vor.u32 %v2170, %v2171
        %v2174 = vsel %vm1969, %v2166, %v2173
        %v2175 = vrot.slane %v2170, 4
        %v2177 = vshrl.u32 %v1943, 16
        %v2179 = vrot.slane %v2177, 7
        %v2180 = vshll.u32 %v1943, 16
        %v2182 = vor.u32 %v2179, %v2180
        %v2183 = vsel %vm1969, %v2175, %v2182
        %v2184 = vrot.slane %v2179, 4
        %v2186 = vshrl.u32 %v1944, 16
        %v2188 = vrot.slane %v2186, 7
        %v2189 = vshll.u32 %v1944, 16
        %v2191 = vor.u32 %v2188, %v2189
        %v2192 = vsel %vm1969, %v2184, %v2191
        %v2193 = vrot.slane %v2188, 4
        %v2195 = vshrl.u32 %v1945, 16
        %v2197 = vrot.slane %v2195, 7
        %v2198 = vshll.u32 %v1945, 16
        %v2200 = vor.u32 %v2197, %v2198
        %v2201 = vsel %vm1969, %v2193, %v2200
        %v2202 = vrot.slane %v2197, 4
        %v2204 = vshrl.u32 %v1946, 16
        %v2206 = vrot.slane %v2204, 7
        %v2207 = vshll.u32 %v1946, 16
        %v2209 = vor.u32 %v2206, %v2207
        %v2210 = vsel %vm1969, %v2202, %v2209
        %v2211 = vrot.slane %v2206, 4
        %v2213 = vshrl.u32 %v1947, 16
        %v2215 = vrot.slane %v2213, 7
        %v2216 = vshll.u32 %v1947, 16
        %v2218 = vor.u32 %v2215, %v2216
        %v2219 = vsel %vm1969, %v2211, %v2218
        %v2220 = vrot.slane %v2215, 4
        %v2222 = vshrl.u32 %v1948, 16
        %v2224 = vrot.slane %v2222, 7
        %v2225 = vshll.u32 %v1948, 16
        %v2227 = vor.u32 %v2224, %v2225
        %v2228 = vsel %vm1969, %v2220, %v2227
        %v2229 = vrot.slane %v2224, 4
        %v2231 = vshrl.u32 %v1949, 16
        %v2233 = vrot.slane %v2231, 7
        %v2234 = vshll.u32 %v1949, 16
        %v2236 = vor.u32 %v2233, %v2234
        %v2237 = vsel %vm1969, %v2229, %v2236
        %v2238 = vrot.slane %v2233, 4
        %v2240 = vshrl.u32 %v1950, 16
        %v2242 = vrot.slane %v2240, 7
        %v2243 = vshll.u32 %v1950, 16
        %v2245 = vor.u32 %v2242, %v2243
        %v2246 = vsel %vm1969, %v2238, %v2245
        %v2247 = vrot.slane %v2242, 4
        %v2249 = vshrl.u32 %v1951, 16
        %v2251 = vrot.slane %v2249, 7
        %v2252 = vshll.u32 %v1951, 16
        %v2254 = vor.u32 %v2251, %v2252
        %v2255 = vsel %vm1969, %v2247, %v2254
        %v2256 = vrot.slane %v2251, 4
        %v2258 = vshrl.u32 %v1952, 16
        %v2260 = vrot.slane %v2258, 7
        %v2261 = vshll.u32 %v1952, 16
        %v2263 = vor.u32 %v2260, %v2261
        %v2264 = vsel %vm1969, %v2256, %v2263
        %v2265 = vrot.slane %v2260, 4
        %v2267 = vshrl.u32 %v1953, 16
        %v2269 = vrot.slane %v2267, 7
        %v2270 = vshll.u32 %v1953, 16
        %v2272 = vor.u32 %v2269, %v2270
        %v2273 = vsel %vm1969, %v2265, %v2272
        %v2274 = vrot.slane %v2269, 4
        %v2276 = vshrl.u32 %v1954, 16
        %v2278 = vrot.slane %v2276, 7
        %v2279 = vshll.u32 %v1954, 16
        %v2281 = vor.u32 %v2278, %v2279
        %v2282 = vsel %vm1969, %v2274, %v2281
        %v2283 = vrot.slane %v2278, 4
        %v2285 = vshrl.u32 %v1955, 16
        %v2287 = vrot.slane %v2285, 7
        %v2288 = vshll.u32 %v1955, 16
        %v2290 = vor.u32 %v2287, %v2288
        %v2291 = vsel %vm1969, %v2283, %v2290
        %v2292 = vrot.slane %v2287, 4
        %v2294 = vshrl.u32 %v1956, 16
        %v2296 = vrot.slane %v2294, 7
        %v2297 = vshll.u32 %v1956, 16
        %v2299 = vor.u32 %v2296, %v2297
        %v2300 = vsel %vm1969, %v2292, %v2299
        %v2301 = vrot.slane %v2296, 4
        %v2303 = vshrl.u32 %v1957, 16
        %v2305 = vrot.slane %v2303, 7
        %v2306 = vshll.u32 %v1957, 16
        %v2308 = vor.u32 %v2305, %v2306
        %v2309 = vsel %vm1969, %v2301, %v2308
        %v2310 = vrot.slane %v2305, 4
        %v2312 = vshrl.u32 %v1958, 16
        %v2314 = vrot.slane %v2312, 7
        %v2315 = vshll.u32 %v1958, 16
        %v2317 = vor.u32 %v2314, %v2315
        %v2318 = vsel %vm1969, %v2310, %v2317
        %v2319 = vrot.slane %v2314, 4
        %v2321 = vshrl.u32 %v1959, 16
        %v2323 = vrot.slane %v2321, 7
        %v2324 = vshll.u32 %v1959, 16
        %v2326 = vor.u32 %v2323, %v2324
        %v2327 = vsel %vm1969, %v2319, %v2326
        %v2328 = vrot.slane %v2323, 4
        %v2330 = vshrl.u32 %v1960, 16
        %v2332 = vrot.slane %v2330, 7
        %v2333 = vshll.u32 %v1960, 16
        %v2335 = vor.u32 %v2332, %v2333
        %v2336 = vsel %vm1969, %v2328, %v2335
        %v2337 = vrot.slane %v2332, 4
        %v2339 = vshrl.u32 %v1961, 16
        %v2341 = vrot.slane %v2339, 7
        %v2342 = vshll.u32 %v1961, 16
        %v2344 = vor.u32 %v2341, %v2342
        %v2345 = vsel %vm1969, %v2337, %v2344
        %v2346 = vrot.slane %v2341, 4
        %v2348 = vshrl.u32 %v1962, 16
        %v2350 = vrot.slane %v2348, 7
        %v2351 = vshll.u32 %v1962, 16
        %v2353 = vor.u32 %v2350, %v2351
        %v2354 = vsel %vm1969, %v2346, %v2353
        %v2355 = vrot.slane %v2350, 4
        %v2357 = vshrl.u32 %v1963, 16
        %v2359 = vrot.slane %v2357, 7
        %v2360 = vshll.u32 %v1963, 16
        %v2362 = vor.u32 %v2359, %v2360
        %v2363 = vsel %vm1969, %v2355, %v2362
        %v2364 = vrot.slane %v2359, 4
        %v2366 = vshrl.u32 %v1964, 16
        %v2368 = vrot.slane %v2366, 7
        %v2369 = vshll.u32 %v1964, 16
        %v2371 = vor.u32 %v2368, %v2369
        %v2372 = vsel %vm1969, %v2364, %v2371
        %v2373 = vrot.slane %v2368, 4
        %v2375 = vshrl.u32 %v1965, 16
        %v2377 = vrot.slane %v2375, 7
        %v2378 = vshll.u32 %v1965, 16
        %v2380 = vor.u32 %v2377, %v2378
        %v2381 = vsel %vm1969, %v2373, %v2380
        %v2382 = vrot.slane %v2377, 4
        %v2384 = vshrl.u32 %v1966, 16
        %v2386 = vrot.slane %v2384, 7
        %v2387 = vshll.u32 %v1966, 16
        %v2389 = vor.u32 %v2386, %v2387
        %v2390 = vsel %vm1969, %v2382, %v2389
        %v2391 = vrot.slane %v2386, 4
        %v2393 = vshrl.u32 %v1967, 16
        %v2395 = vrot.slane %v2393, 7
        %v2396 = vshll.u32 %v1967, 16
        %v2398 = vor.u32 %v2395, %v2396
        %v2399 = vsel %vm1969, %v2391, %v2398
        %v2400 = vrot.slane %v2395, 4
        %v2450 = vld [vmem:[#allocation2 + $0xc] sm:$0xf]
        %v2451 = vsel %vm1673, %v1976, %v2450
        %2452 = vst [vmem:[#allocation2 + $0xc] sm:$0xf] %v2451
        %2453 = vst [vmem:[#allocation2 + $0x10] sm:$0xf] %v1985
        %2454 = vst [vmem:[#allocation2 + $0x14] sm:$0xf] %v1994
        %2455 = vst [vmem:[#allocation2 + $0x18] sm:$0xf] %v2003
        %2456 = vst [vmem:[#allocation2 + $0x1c] sm:$0xf] %v2012
        %2457 = vst [vmem:[#allocation2 + $0x20] sm:$0xf] %v2021
        %2458 = vst [vmem:[#allocation2 + $0x24] sm:$0xf] %v2030
        %2459 = vst [vmem:[#allocation2 + $0x28] sm:$0xf] %v2039
        %2460 = vst [vmem:[#allocation2 + $0x2c] sm:$0xf] %v2048
        %2461 = vst [vmem:[#allocation2 + $0x30] sm:$0xf] %v2057
        %2462 = vst [vmem:[#allocation2 + $0x34] sm:$0xf] %v2066
        %2463 = vst [vmem:[#allocation2 + $0x38] sm:$0xf] %v2075
        %2464 = vst [vmem:[#allocation2 + $0x3c] sm:$0xf] %v2084
        %2465 = vst [vmem:[#allocation2 + $0x40] sm:$0xf] %v2093
        %2466 = vst [vmem:[#allocation2 + $0x44] sm:$0xf] %v2102
        %2467 = vst [vmem:[#allocation2 + $0x48] sm:$0xf] %v2111
        %2468 = vst [vmem:[#allocation2 + $0x4c] sm:$0xf] %v2120
        %2469 = vst [vmem:[#allocation2 + $0x50] sm:$0xf] %v2129
        %2470 = vst [vmem:[#allocation2 + $0x54] sm:$0xf] %v2138
        %2471 = vst [vmem:[#allocation2 + $0x58] sm:$0xf] %v2147
        %2472 = vst [vmem:[#allocation2 + $0x5c] sm:$0xf] %v2156
        %2473 = vst [vmem:[#allocation2 + $0x60] sm:$0xf] %v2165
        %2474 = vst [vmem:[#allocation2 + $0x64] sm:$0xf] %v2174
        %2475 = vst [vmem:[#allocation2 + $0x68] sm:$0xf] %v2183
        %2476 = vst [vmem:[#allocation2 + $0x6c] sm:$0xf] %v2192
        %2477 = vst [vmem:[#allocation2 + $0x70] sm:$0xf] %v2201
        %2478 = vst [vmem:[#allocation2 + $0x74] sm:$0xf] %v2210
        %2479 = vst [vmem:[#allocation2 + $0x78] sm:$0xf] %v2219
        %2480 = vst [vmem:[#allocation2 + $0x7c] sm:$0xf] %v2228
        %2481 = vst [vmem:[#allocation2 + $0x80] sm:$0xf] %v2237
        %2482 = vst [vmem:[#allocation2 + $0x84] sm:$0xf] %v2246
        %2483 = vst [vmem:[#allocation2 + $0x88] sm:$0xf] %v2255
        %2484 = vst [vmem:[#allocation2 + $0x8c] sm:$0xf] %v2264
        %2485 = vst [vmem:[#allocation2 + $0x90] sm:$0xf] %v2273
        %2486 = vst [vmem:[#allocation2 + $0x94] sm:$0xf] %v2282
        %2487 = vst [vmem:[#allocation2 + $0x98] sm:$0xf] %v2291
        %2488 = vst [vmem:[#allocation2 + $0x9c] sm:$0xf] %v2300
        %2489 = vst [vmem:[#allocation2 + $0xa0] sm:$0xf] %v2309
        %2490 = vst [vmem:[#allocation2 + $0xa4] sm:$0xf] %v2318
        %2491 = vst [vmem:[#allocation2 + $0xa8] sm:$0xf] %v2327
        %2492 = vst [vmem:[#allocation2 + $0xac] sm:$0xf] %v2336
        %2493 = vst [vmem:[#allocation2 + $0xb0] sm:$0xf] %v2345
        %2494 = vst [vmem:[#allocation2 + $0xb4] sm:$0xf] %v2354
        %2495 = vst [vmem:[#allocation2 + $0xb8] sm:$0xf] %v2363
        %2496 = vst [vmem:[#allocation2 + $0xbc] sm:$0xf] %v2372
        %2497 = vst [vmem:[#allocation2 + $0xc0] sm:$0xf] %v2381
        %2498 = vst [vmem:[#allocation2 + $0xc4] sm:$0xf] %v2390
        %2499 = vst [vmem:[#allocation2 + $0xc8] sm:$0xf] %v2399
        %v2500 = vld [vmem:[#allocation2 + $0xcc] sm:$0x1]
        %v2501 = vsel %vm1667, %v2400, %v2500
        %2502 = vst [vmem:[#allocation2 + $0xcc] sm:$0x1] %v2501
        %v2503 = vld [vmem:[#allocation8] sm:$0xf]
        %v2504 = vld [vmem:[#allocation8 + $0x4] sm:$0xf]
        %v2505 = vld [vmem:[#allocation8 + $0x8] sm:$0xf]
        %v2506 = vld [vmem:[#allocation8 + $0xc] sm:$0xf]
        %v2507 = vld [vmem:[#allocation8 + $0x10] sm:$0xf]
        %v2508 = vld [vmem:[#allocation8 + $0x14] sm:$0xf]
        %v2509 = vld [vmem:[#allocation8 + $0x18] sm:$0xf]
        %v2510 = vld [vmem:[#allocation8 + $0x1c] sm:$0xf]
        %v2511 = vld [vmem:[#allocation8 + $0x20] sm:$0xf]
        %v2512 = vld [vmem:[#allocation8 + $0x24] sm:$0xf]
        %v2513 = vld [vmem:[#allocation8 + $0x28] sm:$0xf]
        %v2514 = vld [vmem:[#allocation8 + $0x2c] sm:$0xf]
        %v2515 = vld [vmem:[#allocation8 + $0x30] sm:$0xf]
        %v2516 = vld [vmem:[#allocation8 + $0x34] sm:$0xf]
        %v2517 = vld [vmem:[#allocation8 + $0x38] sm:$0xf]
        %v2518 = vld [vmem:[#allocation8 + $0x3c] sm:$0xf]
        %v2519 = vld [vmem:[#allocation8 + $0x40] sm:$0xf]
        %v2520 = vld [vmem:[#allocation8 + $0x44] sm:$0xf]
        %v2521 = vld [vmem:[#allocation8 + $0x48] sm:$0xf]
        %v2522 = vld [vmem:[#allocation8 + $0x4c] sm:$0xf]
        %v2523 = vld [vmem:[#allocation8 + $0x50] sm:$0xf]
        %v2524 = vld [vmem:[#allocation8 + $0x54] sm:$0xf]
        %v2525 = vld [vmem:[#allocation8 + $0x58] sm:$0xf]
        %v2526 = vld [vmem:[#allocation8 + $0x5c] sm:$0xf]
        %v2527 = vld [vmem:[#allocation8 + $0x60] sm:$0xf]
        %v2528 = vld [vmem:[#allocation8 + $0x64] sm:$0xf]
        %v2529 = vld [vmem:[#allocation8 + $0x68] sm:$0xf]
        %v2530 = vld [vmem:[#allocation8 + $0x6c] sm:$0xf]
        %v2531 = vld [vmem:[#allocation8 + $0x70] sm:$0xf]
        %v2532 = vld [vmem:[#allocation8 + $0x74] sm:$0xf]
        %v2533 = vld [vmem:[#allocation8 + $0x78] sm:$0xf]
        %v2534 = vld [vmem:[#allocation8 + $0x7c] sm:$0xf]
        %v2535 = vld [vmem:[#allocation8 + $0x80] sm:$0xf]
        %v2536 = vld [vmem:[#allocation8 + $0x84] sm:$0xf]
        %v2537 = vld [vmem:[#allocation8 + $0x88] sm:$0xf]
        %v2538 = vld [vmem:[#allocation8 + $0x8c] sm:$0xf]
        %v2539 = vld [vmem:[#allocation8 + $0x90] sm:$0xf]
        %v2540 = vld [vmem:[#allocation8 + $0x94] sm:$0xf]
        %v2541 = vld [vmem:[#allocation8 + $0x98] sm:$0xf]
        %v2542 = vld [vmem:[#allocation8 + $0x9c] sm:$0xf]
        %v2543 = vld [vmem:[#allocation8 + $0xa0] sm:$0xf]
        %v2544 = vld [vmem:[#allocation8 + $0xa4] sm:$0xf]
        %v2545 = vld [vmem:[#allocation8 + $0xa8] sm:$0xf]
        %v2546 = vld [vmem:[#allocation8 + $0xac] sm:$0xf]
        %v2547 = vld [vmem:[#allocation8 + $0xb0] sm:$0xf]
        %v2548 = vld [vmem:[#allocation8 + $0xb4] sm:$0xf]
        %v2549 = vld [vmem:[#allocation8 + $0xb8] sm:$0xf]
        %v2550 = vld [vmem:[#allocation8 + $0xbc] sm:$0xf]
        %v2551 = vld [vmem:[#allocation8 + $0xc0] sm:$0xf]
        %v2552 = vld [vmem:[#allocation8 + $0xc4] sm:$0xf]
        %v2553 = vld [vmem:[#allocation8 + $0xc8] sm:$0xf]
        %v2554 = vld [vmem:[#allocation8 + $0xcc] sm:$0xf]
        %v2555 = vld [vmem:[#allocation8 + $0xd0] sm:$0xf]
        %v2556 = vld [vmem:[#allocation8 + $0xd4] sm:$0xf]
        %v2557 = vld [vmem:[#allocation8 + $0xd8] sm:$0xf]
        %v2558 = vld [vmem:[#allocation8 + $0xdc] sm:$0xf]
        %v2559 = vld [vmem:[#allocation8 + $0xe0] sm:$0xf]
        %v2560 = vld [vmem:[#allocation8 + $0xe4] sm:$0xf]
        %v2561 = vld [vmem:[#allocation8 + $0xe8] sm:$0xf]
        %v2562 = vld [vmem:[#allocation8 + $0xec] sm:$0xf]
        %v2563 = vld [vmem:[#allocation8 + $0xf0] sm:$0xf]
        %v2564 = vld [vmem:[#allocation8 + $0xf4] sm:$0xf]
        %v2565 = vld [vmem:[#allocation8 + $0xf8] sm:$0xf]
        %v2566 = vld [vmem:[#allocation8 + $0xfc] sm:$0xf]
        %v2567 = vld [vmem:[#allocation8 + $0x100] sm:$0xf]
        %v2568 = vld [vmem:[#allocation8 + $0x104] sm:$0xf]
        %v2569 = vld [vmem:[#allocation8 + $0x108] sm:$0xf]
        %v2570 = vld [vmem:[#allocation8 + $0x10c] sm:$0xf]
        %v2571 = vld [vmem:[#allocation8 + $0x110] sm:$0xf]
        %v2572 = vld [vmem:[#allocation8 + $0x114] sm:$0xf]
        %v2573 = vld [vmem:[#allocation8 + $0x118] sm:$0xf]
        %v2574 = vld [vmem:[#allocation8 + $0x11c] sm:$0xf]
        %v2575 = vld [vmem:[#allocation8 + $0x120] sm:$0xf]
        %v2576 = vld [vmem:[#allocation8 + $0x124] sm:$0xf]
        %v2577 = vld [vmem:[#allocation8 + $0x128] sm:$0xf]
        %v2578 = vld [vmem:[#allocation8 + $0x12c] sm:$0xf]
        %v2579 = vld [vmem:[#allocation8 + $0x130] sm:$0xf]
        %v2580 = vld [vmem:[#allocation8 + $0x134] sm:$0xf]
        %v2581 = vld [vmem:[#allocation8 + $0x138] sm:$0xf]
        %v2582 = vld [vmem:[#allocation8 + $0x13c] sm:$0xf]
        %v2583 = vld [vmem:[#allocation8 + $0x140] sm:$0xf]
        %v2584 = vld [vmem:[#allocation8 + $0x144] sm:$0xf]
        %v2585 = vld [vmem:[#allocation8 + $0x148] sm:$0xf]
        %v2586 = vld [vmem:[#allocation8 + $0x14c] sm:$0xf]
        %v2587 = vld [vmem:[#allocation8 + $0x150] sm:$0xf]
        %v2588 = vld [vmem:[#allocation8 + $0x154] sm:$0xf]
        %v2589 = vld [vmem:[#allocation8 + $0x158] sm:$0xf]
        %v2590 = vld [vmem:[#allocation8 + $0x15c] sm:$0xf]
        %v2591 = vld [vmem:[#allocation8 + $0x160] sm:$0xf]
        %v2592 = vld [vmem:[#allocation8 + $0x164] sm:$0xf]
        %v2593 = vld [vmem:[#allocation8 + $0x168] sm:$0xf]
        %v2594 = vld [vmem:[#allocation8 + $0x16c] sm:$0xf]
        %v2595 = vld [vmem:[#allocation8 + $0x170] sm:$0xf]
        %v2596 = vld [vmem:[#allocation8 + $0x174] sm:$0xf]
        %v2597 = vld [vmem:[#allocation8 + $0x178] sm:$0xf]
        %v2598 = vld [vmem:[#allocation8 + $0x17c] sm:$0xf]
        %v2599 = vld [vmem:[#allocation8 + $0x180] sm:$0xf]
        %v2600 = vld [vmem:[#allocation8 + $0x184] sm:$0xf]
        %v2601 = vld [vmem:[#allocation8 + $0x188] sm:$0xf]
        %v2602 = vld [vmem:[#allocation8 + $0x18c] sm:$0xf]
        %v2603 = vld [vmem:[#allocation8 + $0x190] sm:$0xf]
        %v2604 = vld [vmem:[#allocation8 + $0x194] sm:$0xf]
        %v2605 = vld [vmem:[#allocation8 + $0x198] sm:$0xf]
        %v2606 = vld [vmem:[#allocation8 + $0x19c] sm:$0xf]
        %v2607 = vld [vmem:[#allocation8 + $0x1a0] sm:$0xf]
        %v2608 = vld [vmem:[#allocation8 + $0x1a4] sm:$0xf]
        %v2609 = vld [vmem:[#allocation8 + $0x1a8] sm:$0xf]
        %v2610 = vld [vmem:[#allocation8 + $0x1ac] sm:$0xf]
        %v2611 = vld [vmem:[#allocation8 + $0x1b0] sm:$0xf]
        %v2612 = vld [vmem:[#allocation8 + $0x1b4] sm:$0xf]
        %v2613 = vld [vmem:[#allocation8 + $0x1b8] sm:$0xf]
        %v2614 = vld [vmem:[#allocation8 + $0x1bc] sm:$0xf]
        %v2615 = vld [vmem:[#allocation8 + $0x1c0] sm:$0xf]
        %v2616 = vld [vmem:[#allocation8 + $0x1c4] sm:$0xf]
        %v2617 = vld [vmem:[#allocation8 + $0x1c8] sm:$0xf]
        %v2618 = vld [vmem:[#allocation8 + $0x1cc] sm:$0xf]
        %v2619 = vld [vmem:[#allocation8 + $0x1d0] sm:$0xf]
        %v2620 = vld [vmem:[#allocation8 + $0x1d4] sm:$0xf]
        %v2621 = vld [vmem:[#allocation8 + $0x1d8] sm:$0xf]
        %v2622 = vld [vmem:[#allocation8 + $0x1dc] sm:$0xf]
        %v2623 = vld [vmem:[#allocation8 + $0x1e0] sm:$0xf]
        %v2624 = vld [vmem:[#allocation8 + $0x1e4] sm:$0xf]
        %v2625 = vld [vmem:[#allocation8 + $0x1e8] sm:$0xf]
        %v2626 = vld [vmem:[#allocation8 + $0x1ec] sm:$0xf]
        %v2627 = vld [vmem:[#allocation8 + $0x1f0] sm:$0xf]
        %v2628 = vld [vmem:[#allocation8 + $0x1f4] sm:$0xf]
        %v2629 = vld [vmem:[#allocation8 + $0x1f8] sm:$0xf]
        %v2630 = vld [vmem:[#allocation8 + $0x1fc] sm:$0xf]
        %v2631 = vld [vmem:[#allocation8 + $0x200] sm:$0xf]
        %v2632 = vld [vmem:[#allocation8 + $0x204] sm:$0xf]
        %v2633 = vld [vmem:[#allocation8 + $0x208] sm:$0xf]
        %v2634 = vld [vmem:[#allocation8 + $0x20c] sm:$0xf]
        %v2635 = vld [vmem:[#allocation8 + $0x210] sm:$0xf]
        %v2636 = vld [vmem:[#allocation8 + $0x214] sm:$0xf]
        %v2637 = vld [vmem:[#allocation8 + $0x218] sm:$0xf]
        %v2638 = vld [vmem:[#allocation8 + $0x21c] sm:$0xf]
        %v2639 = vld [vmem:[#allocation8 + $0x220] sm:$0xf]
        %v2640 = vld [vmem:[#allocation8 + $0x224] sm:$0xf]
        %v2641 = vld [vmem:[#allocation8 + $0x228] sm:$0xf]
        %v2642 = vld [vmem:[#allocation8 + $0x22c] sm:$0xf]
        %v2643 = vld [vmem:[#allocation8 + $0x230] sm:$0xf]
        %v2644 = vld [vmem:[#allocation8 + $0x234] sm:$0xf]
        %v2645 = vld [vmem:[#allocation8 + $0x238] sm:$0xf]
        %v2646 = vld [vmem:[#allocation8 + $0x23c] sm:$0xf]
        %v2647 = vld [vmem:[#allocation2] sm:$0xf]
        %v2648 = vld [vmem:[#allocation2 + $0x4] sm:$0xf]
        %v2649 = vld [vmem:[#allocation2 + $0x8] sm:$0xf]
        %v2650 = vld [vmem:[#allocation2 + $0xc] sm:$0xf]
        %v2651 = vld [vmem:[#allocation2 + $0x10] sm:$0xf]
        %v2652 = vld [vmem:[#allocation2 + $0x14] sm:$0xf]
        %v2653 = vld [vmem:[#allocation2 + $0x18] sm:$0xf]
        %v2654 = vld [vmem:[#allocation2 + $0x1c] sm:$0xf]
        %v2655 = vld [vmem:[#allocation2 + $0x20] sm:$0xf]
        %v2656 = vld [vmem:[#allocation2 + $0x24] sm:$0xf]
        %v2657 = vld [vmem:[#allocation2 + $0x28] sm:$0xf]
        %v2658 = vld [vmem:[#allocation2 + $0x2c] sm:$0xf]
        %v2659 = vld [vmem:[#allocation2 + $0x30] sm:$0xf]
        %v2660 = vld [vmem:[#allocation2 + $0x34] sm:$0xf]
        %v2661 = vld [vmem:[#allocation2 + $0x38] sm:$0xf]
        %v2662 = vld [vmem:[#allocation2 + $0x3c] sm:$0xf]
        %v2663 = vld [vmem:[#allocation2 + $0x40] sm:$0xf]
        %v2664 = vld [vmem:[#allocation2 + $0x44] sm:$0xf]
        %v2665 = vld [vmem:[#allocation2 + $0x48] sm:$0xf]
        %v2666 = vld [vmem:[#allocation2 + $0x4c] sm:$0xf]
        %v2667 = vld [vmem:[#allocation2 + $0x50] sm:$0xf]
        %v2668 = vld [vmem:[#allocation2 + $0x54] sm:$0xf]
        %v2669 = vld [vmem:[#allocation2 + $0x58] sm:$0xf]
        %v2670 = vld [vmem:[#allocation2 + $0x5c] sm:$0xf]
        %v2671 = vld [vmem:[#allocation2 + $0x60] sm:$0xf]
        %v2672 = vld [vmem:[#allocation2 + $0x64] sm:$0xf]
        %v2673 = vld [vmem:[#allocation2 + $0x68] sm:$0xf]
        %v2674 = vld [vmem:[#allocation2 + $0x6c] sm:$0xf]
        %v2675 = vld [vmem:[#allocation2 + $0x70] sm:$0xf]
        %v2676 = vld [vmem:[#allocation2 + $0x74] sm:$0xf]
        %v2677 = vld [vmem:[#allocation2 + $0x78] sm:$0xf]
        %v2678 = vld [vmem:[#allocation2 + $0x7c] sm:$0xf]
        %v2679 = vld [vmem:[#allocation2 + $0x80] sm:$0xf]
        %v2680 = vld [vmem:[#allocation2 + $0x84] sm:$0xf]
        %v2681 = vld [vmem:[#allocation2 + $0x88] sm:$0xf]
        %v2682 = vld [vmem:[#allocation2 + $0x8c] sm:$0xf]
        %v2683 = vld [vmem:[#allocation2 + $0x90] sm:$0xf]
        %v2684 = vld [vmem:[#allocation2 + $0x94] sm:$0xf]
        %v2685 = vld [vmem:[#allocation2 + $0x98] sm:$0xf]
        %v2686 = vld [vmem:[#allocation2 + $0x9c] sm:$0xf]
        %v2687 = vld [vmem:[#allocation2 + $0xa0] sm:$0xf]
        %v2688 = vld [vmem:[#allocation2 + $0xa4] sm:$0xf]
        %v2689 = vld [vmem:[#allocation2 + $0xa8] sm:$0xf]
        %v2690 = vld [vmem:[#allocation2 + $0xac] sm:$0xf]
        %v2691 = vld [vmem:[#allocation2 + $0xb0] sm:$0xf]
        %v2692 = vld [vmem:[#allocation2 + $0xb4] sm:$0xf]
        %v2693 = vld [vmem:[#allocation2 + $0xb8] sm:$0xf]
        %v2694 = vld [vmem:[#allocation2 + $0xbc] sm:$0xf]
        %v2695 = vld [vmem:[#allocation2 + $0xc0] sm:$0x1]
        %v2745 = vunpack.c.l.b16 %v2647
        %v2746 = vunpack.c.l.b16 %v2648
        %v2747 = vunpack.c.l.b16 %v2649
        %v2748 = vunpack.c.l.b16 %v2650
        %v2749 = vunpack.c.l.b16 %v2651
        %v2750 = vunpack.c.l.b16 %v2652
        %v2751 = vunpack.c.l.b16 %v2653
        %v2752 = vunpack.c.l.b16 %v2654
        %v2753 = vunpack.c.l.b16 %v2655
        %v2754 = vunpack.c.l.b16 %v2656
        %v2755 = vunpack.c.l.b16 %v2657
        %v2756 = vunpack.c.l.b16 %v2658
        %v2757 = vunpack.c.l.b16 %v2659
        %v2758 = vunpack.c.l.b16 %v2660
        %v2759 = vunpack.c.l.b16 %v2661
        %v2760 = vunpack.c.l.b16 %v2662
        %v2761 = vunpack.c.l.b16 %v2663
        %v2762 = vunpack.c.l.b16 %v2664
        %v2763 = vunpack.c.l.b16 %v2665
        %v2764 = vunpack.c.l.b16 %v2666
        %v2765 = vunpack.c.l.b16 %v2667
        %v2766 = vunpack.c.l.b16 %v2668
        %v2767 = vunpack.c.l.b16 %v2669
        %v2768 = vunpack.c.l.b16 %v2670
        %v2769 = vunpack.c.l.b16 %v2671
        %v2770 = vunpack.c.l.b16 %v2672
        %v2771 = vunpack.c.l.b16 %v2673
        %v2772 = vunpack.c.l.b16 %v2674
        %v2773 = vunpack.c.l.b16 %v2675
        %v2774 = vunpack.c.l.b16 %v2676
        %v2775 = vunpack.c.l.b16 %v2677
        %v2776 = vunpack.c.l.b16 %v2678
        %v2777 = vunpack.c.l.b16 %v2679
        %v2778 = vunpack.c.l.b16 %v2680
        %v2779 = vunpack.c.l.b16 %v2681
        %v2780 = vunpack.c.l.b16 %v2682
        %v2781 = vunpack.c.l.b16 %v2683
        %v2782 = vunpack.c.l.b16 %v2684
        %v2783 = vunpack.c.l.b16 %v2685
        %v2784 = vunpack.c.l.b16 %v2686
        %v2785 = vunpack.c.l.b16 %v2687
        %v2786 = vunpack.c.l.b16 %v2688
        %v2787 = vunpack.c.l.b16 %v2689
        %v2788 = vunpack.c.l.b16 %v2690
        %v2789 = vunpack.c.l.b16 %v2691
        %v2790 = vunpack.c.l.b16 %v2692
        %v2791 = vunpack.c.l.b16 %v2693
        %v2792 = vunpack.c.l.b16 %v2694
        %v2793 = vunpack.c.l.b16 %v2695
        %v2794 = vpack.c.b16 %v2746, %v2745
        %v2795 = vpack.c.b16 %v2748, %v2747
        %v2796 = vpack.c.b16 %v2750, %v2749
        %v2797 = vpack.c.b16 %v2752, %v2751
        %v2798 = vpack.c.b16 %v2754, %v2753
        %v2799 = vpack.c.b16 %v2756, %v2755
        %v2800 = vpack.c.b16 %v2758, %v2757
        %v2801 = vpack.c.b16 %v2760, %v2759
        %v2802 = vpack.c.b16 %v2762, %v2761
        %v2803 = vpack.c.b16 %v2764, %v2763
        %v2804 = vpack.c.b16 %v2766, %v2765
        %v2805 = vpack.c.b16 %v2768, %v2767
        %v2806 = vpack.c.b16 %v2770, %v2769
        %v2807 = vpack.c.b16 %v2772, %v2771
        %v2808 = vpack.c.b16 %v2774, %v2773
        %v2809 = vpack.c.b16 %v2776, %v2775
        %v2810 = vpack.c.b16 %v2778, %v2777
        %v2811 = vpack.c.b16 %v2780, %v2779
        %v2812 = vpack.c.b16 %v2782, %v2781
        %v2813 = vpack.c.b16 %v2784, %v2783
        %v2814 = vpack.c.b16 %v2786, %v2785
        %v2815 = vpack.c.b16 %v2788, %v2787
        %v2816 = vpack.c.b16 %v2790, %v2789
        %v2817 = vpack.c.b16 %v2792, %v2791
        %v2818 = vpack.c.b16 %v2793, %v2793
        %vm2819 = vsmask.f32 7424
        %v2821 = vshrl.u32 %v2794, 16
        %v2823 = vshll.u32 %v2794, 16
        %v2825 = vrot.slane %v2823, 1
        %v2826 = vor.u32 %v2821, %v2825
        %v2828 = vshll.u32 %v2795, 16
        %v2830 = vrot.slane %v2828, 1
        %v2831 = vsel %vm2819, %v2826, %v2830
        %v2832 = vshrl.u32 %v2795, 16
        %v2834 = vor.u32 %v2832, %v2830
        %v2836 = vshll.u32 %v2796, 16
        %v2838 = vrot.slane %v2836, 1
        %v2839 = vsel %vm2819, %v2834, %v2838
        %v2840 = vshrl.u32 %v2796, 16
        %v2842 = vor.u32 %v2840, %v2838
        %v2844 = vshll.u32 %v2797, 16
        %v2846 = vrot.slane %v2844, 1
        %v2847 = vsel %vm2819, %v2842, %v2846
        %v2848 = vshrl.u32 %v2797, 16
        %v2850 = vor.u32 %v2848, %v2846
        %v2852 = vshll.u32 %v2798, 16
        %v2854 = vrot.slane %v2852, 1
        %v2855 = vsel %vm2819, %v2850, %v2854
        %v2856 = vshrl.u32 %v2798, 16
        %v2858 = vor.u32 %v2856, %v2854
        %v2860 = vshll.u32 %v2799, 16
        %v2862 = vrot.slane %v2860, 1
        %v2863 = vsel %vm2819, %v2858, %v2862
        %v2864 = vshrl.u32 %v2799, 16
        %v2866 = vor.u32 %v2864, %v2862
        %v2868 = vshll.u32 %v2800, 16
        %v2870 = vrot.slane %v2868, 1
        %v2871 = vsel %vm2819, %v2866, %v2870
        %v2872 = vshrl.u32 %v2800, 16
        %v2874 = vor.u32 %v2872, %v2870
        %v2876 = vshll.u32 %v2801, 16
        %v2878 = vrot.slane %v2876, 1
        %v2879 = vsel %vm2819, %v2874, %v2878
        %v2880 = vshrl.u32 %v2801, 16
        %v2882 = vor.u32 %v2880, %v2878
        %v2884 = vshll.u32 %v2802, 16
        %v2886 = vrot.slane %v2884, 1
        %v2887 = vsel %vm2819, %v2882, %v2886
        %v2888 = vshrl.u32 %v2802, 16
        %v2890 = vor.u32 %v2888, %v2886
        %v2892 = vshll.u32 %v2803, 16
        %v2894 = vrot.slane %v2892, 1
        %v2895 = vsel %vm2819, %v2890, %v2894
        %v2896 = vshrl.u32 %v2803, 16
        %v2898 = vor.u32 %v2896, %v2894
        %v2900 = vshll.u32 %v2804, 16
        %v2902 = vrot.slane %v2900, 1
        %v2903 = vsel %vm2819, %v2898, %v2902
        %v2904 = vshrl.u32 %v2804, 16
        %v2906 = vor.u32 %v2904, %v2902
        %v2908 = vshll.u32 %v2805, 16
        %v2910 = vrot.slane %v2908, 1
        %v2911 = vsel %vm2819, %v2906, %v2910
        %v2912 = vshrl.u32 %v2805, 16
        %v2914 = vor.u32 %v2912, %v2910
        %v2916 = vshll.u32 %v2806, 16
        %v2918 = vrot.slane %v2916, 1
        %v2919 = vsel %vm2819, %v2914, %v2918
        %v2920 = vshrl.u32 %v2806, 16
        %v2922 = vor.u32 %v2920, %v2918
        %v2924 = vshll.u32 %v2807, 16
        %v2926 = vrot.slane %v2924, 1
        %v2927 = vsel %vm2819, %v2922, %v2926
        %v2928 = vshrl.u32 %v2807, 16
        %v2930 = vor.u32 %v2928, %v2926
        %v2932 = vshll.u32 %v2808, 16
        %v2934 = vrot.slane %v2932, 1
        %v2935 = vsel %vm2819, %v2930, %v2934
        %v2936 = vshrl.u32 %v2808, 16
        %v2938 = vor.u32 %v2936, %v2934
        %v2940 = vshll.u32 %v2809, 16
        %v2942 = vrot.slane %v2940, 1
        %v2943 = vsel %vm2819, %v2938, %v2942
        %v2944 = vshrl.u32 %v2809, 16
        %v2946 = vor.u32 %v2944, %v2942
        %v2948 = vshll.u32 %v2810, 16
        %v2950 = vrot.slane %v2948, 1
        %v2951 = vsel %vm2819, %v2946, %v2950
        %v2952 = vshrl.u32 %v2810, 16
        %v2954 = vor.u32 %v2952, %v2950
        %v2956 = vshll.u32 %v2811, 16
        %v2958 = vrot.slane %v2956, 1
        %v2959 = vsel %vm2819, %v2954, %v2958
        %v2960 = vshrl.u32 %v2811, 16
        %v2962 = vor.u32 %v2960, %v2958
        %v2964 = vshll.u32 %v2812, 16
        %v2966 = vrot.slane %v2964, 1
        %v2967 = vsel %vm2819, %v2962, %v2966
        %v2968 = vshrl.u32 %v2812, 16
        %v2970 = vor.u32 %v2968, %v2966
        %v2972 = vshll.u32 %v2813, 16
        %v2974 = vrot.slane %v2972, 1
        %v2975 = vsel %vm2819, %v2970, %v2974
        %v2976 = vshrl.u32 %v2813, 16
        %v2978 = vor.u32 %v2976, %v2974
        %v2980 = vshll.u32 %v2814, 16
        %v2982 = vrot.slane %v2980, 1
        %v2983 = vsel %vm2819, %v2978, %v2982
        %v2984 = vshrl.u32 %v2814, 16
        %v2986 = vor.u32 %v2984, %v2982
        %v2988 = vshll.u32 %v2815, 16
        %v2990 = vrot.slane %v2988, 1
        %v2991 = vsel %vm2819, %v2986, %v2990
        %v2992 = vshrl.u32 %v2815, 16
        %v2994 = vor.u32 %v2992, %v2990
        %v2996 = vshll.u32 %v2816, 16
        %v2998 = vrot.slane %v2996, 1
        %v2999 = vsel %vm2819, %v2994, %v2998
        %v3000 = vshrl.u32 %v2816, 16
        %v3002 = vor.u32 %v3000, %v2998
        %v3004 = vshll.u32 %v2817, 16
        %v3006 = vrot.slane %v3004, 1
        %v3007 = vsel %vm2819, %v3002, %v3006
        %v3008 = vshrl.u32 %v2817, 16
        %v3010 = vor.u32 %v3008, %v3006
        %v3012 = vshll.u32 %v2818, 16
        %v3014 = vrot.slane %v3012, 1
        %v3015 = vsel %vm2819, %v3010, %v3014
        %v3056 = vunpack.c.l.b16 %v2519
        %v3057 = vunpack.c.l.b16 %v2520
        %v3058 = vunpack.c.l.b16 %v2521
        %v3059 = vunpack.c.l.b16 %v2522
        %v3060 = vunpack.c.l.b16 %v2523
        %v3061 = vunpack.c.l.b16 %v2524
        %v3062 = vunpack.c.l.b16 %v2525
        %v3063 = vunpack.c.l.b16 %v2526
        %v3064 = vunpack.c.l.b16 %v2527
        %v3065 = vunpack.c.l.b16 %v2528
        %v3066 = vunpack.c.l.b16 %v2529
        %v3067 = vunpack.c.l.b16 %v2530
        %v3068 = vunpack.c.l.b16 %v2531
        %v3069 = vunpack.c.l.b16 %v2532
        %v3070 = vunpack.c.l.b16 %v2533
        %v3071 = vunpack.c.l.b16 %v2534
        %v3072 = vpack.c.b16 %v3057, %v3056
        %v3073 = vpack.c.b16 %v3059, %v3058
        %v3074 = vpack.c.b16 %v3061, %v3060
        %v3075 = vpack.c.b16 %v3063, %v3062
        %v3076 = vpack.c.b16 %v3065, %v3064
        %v3077 = vpack.c.b16 %v3067, %v3066
        %v3078 = vpack.c.b16 %v3069, %v3068
        %v3079 = vpack.c.b16 %v3071, %v3070
        %3088 = vmatprep.subr.bf16.mxu0 0
        %3089 = vmatpush1.bf16.msra.mxu0 %v3072
        %3090 = vmatprep.subr.bf16.mxu0 0
        %3091 = vmatpush1.bf16.msra.mxu0 %v3073
        %3092 = vmatprep.subr.bf16.mxu0 0
        %3093 = vmatpush1.bf16.msra.mxu0 %v3074
        %3094 = vmatprep.subr.bf16.mxu0 0
        %3095 = vmatpush1.bf16.msra.mxu0 %v3075
        %3096 = vmatprep.subr.bf16.mxu0 0
        %3097 = vmatpush1.bf16.msra.mxu0 %v3076
        %3098 = vmatprep.subr.bf16.mxu0 0
        %3099 = vmatpush1.bf16.msra.mxu0 %v3077
        %3100 = vmatprep.subr.bf16.mxu0 0
        %3101 = vmatpush1.bf16.msra.mxu0 %v3078
        %3102 = vmatprep.subr.bf16.mxu0 0
        %3103 = vmatpush1.bf16.msra.mxu0 %v3079
        %3104 = vmatprep.subr.bf16.mxu0 0
        %3105 = vmatpush1.bf16.msra.mxu0 0
        %3106 = vmatprep.subr.bf16.mxu0 0
        %3107 = vmatpush1.bf16.msra.mxu0 0
        %3108 = vmatprep.subr.bf16.mxu0 0
        %3109 = vmatpush1.bf16.msra.mxu0 0
        %3110 = vmatprep.subr.bf16.mxu0 0
        %3111 = vmatpush1.bf16.msra.mxu0 0
        %3112 = vmatprep.subr.bf16.mxu0 0
        %3113 = vmatpush1.bf16.msra.mxu0 0
        %3114 = vmatprep.subr.bf16.mxu0 0
        %3115 = vmatpush1.bf16.msra.mxu0 0
        %3116 = vmatprep.subr.bf16.mxu0 0
        %3117 = vmatpush1.bf16.msra.mxu0 0
        %3118 = vmatprep.subr.bf16.mxu0 0
        %3119 = vmatpush1.bf16.msra.mxu0 0
        %3120 = vmatprep.mubr.bf16.mxu0 0
        %3121 = vmatmul.mubr.bf16.gmra.mrb[0].mxu0 %v2831
        %v3122 = vpop.f32.mrb[0].mxu0
        %v3123 = vadd.f32 0.0, %v3122
        %v3124 = vpop.f32.mrb[0].mxu0
        %v3125 = vpop.f32.mrb[0].mxu0
        %v3126 = vadd.f32 0.0, %v3125
        %v3127 = vpop.f32.mrb[0].mxu0
        %3128 = vmatprep.mubr.bf16.mxu0 0
        %3129 = vmatmul.mubr.bf16.gmra.mrb[0].mxu0 %v2839
        %v3130 = vpop.f32.mrb[0].mxu0
        %v3131 = vpop.f32.mrb[0].mxu0
        %v3132 = vpop.f32.mrb[0].mxu0
        %v3133 = vadd.f32 0.0, %v3132
        %v3134 = vpop.f32.mrb[0].mxu0
        %3135 = vmatprep.mubr.bf16.mxu0 0
        %3136 = vmatmul.mubr.bf16.gmra.mrb[0].mxu0 %v2847
        %v3137 = vpop.f32.mrb[0].mxu0
        %v3138 = vadd.f32 0.0, %v3137
        %v3139 = vpop.f32.mrb[0].mxu0
        %v3140 = vpop.f32.mrb[0].mxu0
        %v3141 = vpop.f32.mrb[0].mxu0
        %3142 = vmatprep.mubr.bf16.mxu0 0
        %3143 = vmatmul.mubr.bf16.gmra.mrb[0].mxu0 %v2855
        %v3144 = vpop.f32.mrb[0].mxu0
        %v3145 = vadd.f32 0.0, %v3144
        %v3146 = vpop.f32.mrb[0].mxu0
        %v3147 = vpop.f32.mrb[0].mxu0
        %v3148 = vadd.f32 0.0, %v3147
        %v3149 = vpop.f32.mrb[0].mxu0
        %3150 = vmatprep.mubr.bf16.mxu0 0
        %3151 = vmatmul.mubr.bf16.gmra.mrb[0].mxu0 %v2863
        %v3152 = vpop.f32.mrb[0].mxu0
        %v3153 = vpop.f32.mrb[0].mxu0
        %v3154 = vpop.f32.mrb[0].mxu0
        %v3155 = vadd.f32 0.0, %v3154
        %v3156 = vpop.f32.mrb[0].mxu0
        %3157 = vmatprep.mubr.bf16.mxu0 0
        %3158 = vmatmul.mubr.bf16.gmra.mrb[0].mxu0 %v2871
        %v3159 = vpop.f32.mrb[0].mxu0
        %v3160 = vadd.f32 0.0, %v3159
        %v3161 = vpop.f32.mrb[0].mxu0
        %v3162 = vpop.f32.mrb[0].mxu0
        %v3163 = vpop.f32.mrb[0].mxu0
        %3164 = vmatprep.mubr.bf16.mxu0 0
        %3165 = vmatmul.mubr.bf16.gmra.mrb[0].mxu0 %v2879
        %v3166 = vpop.f32.mrb[0].mxu0
        %v3167 = vadd.f32 0.0, %v3166
        %v3168 = vpop.f32.mrb[0].mxu0
        %v3169 = vpop.f32.mrb[0].mxu0
        %v3170 = vadd.f32 0.0, %v3169
        %v3171 = vpop.f32.mrb[0].mxu0
        %3172 = vmatprep.mubr.bf16.mxu0 0
        %3173 = vmatmul.mubr.bf16.gmra.mrb[0].mxu0 %v2887
        %v3174 = vpop.f32.mrb[0].mxu0
        %v3175 = vpop.f32.mrb[0].mxu0
        %v3176 = vpop.f32.mrb[0].mxu0
        %v3177 = vadd.f32 0.0, %v3176
        %v3178 = vpop.f32.mrb[0].mxu0
        %3179 = vmatprep.mubr.bf16.mxu0 0
        %3180 = vmatmul.mubr.bf16.gmra.mrb[0].mxu0 %v2895
        %v3181 = vpop.f32.mrb[0].mxu0
        %v3182 = vadd.f32 0.0, %v3181
        %v3183 = vpop.f32.mrb[0].mxu0
        %v3184 = vpop.f32.mrb[0].mxu0
        %v3185 = vpop.f32.mrb[0].mxu0
        %3186 = vmatprep.mubr.bf16.mxu0 0
        %3187 = vmatmul.mubr.bf16.gmra.mrb[0].mxu0 %v2903
        %v3188 = vpop.f32.mrb[0].mxu0
        %v3189 = vadd.f32 0.0, %v3188
        %v3190 = vpop.f32.mrb[0].mxu0
        %v3191 = vpop.f32.mrb[0].mxu0
        %v3192 = vadd.f32 0.0, %v3191
        %v3193 = vpop.f32.mrb[0].mxu0
        %3194 = vmatprep.mubr.bf16.mxu0 0
        %3195 = vmatmul.mubr.bf16.gmra.mrb[0].mxu0 %v2911
        %v3196 = vpop.f32.mrb[0].mxu0
        %v3197 = vpop.f32.mrb[0].mxu0
        %v3198 = vpop.f32.mrb[0].mxu0
        %v3199 = vadd.f32 0.0, %v3198
        %v3200 = vpop.f32.mrb[0].mxu0
        %3201 = vmatprep.mubr.bf16.mxu0 0
        %3202 = vmatmul.mubr.bf16.gmra.mrb[0].mxu0 %v2919
        %v3203 = vpop.f32.mrb[0].mxu0
        %v3204 = vadd.f32 0.0, %v3203
        %v3205 = vpop.f32.mrb[0].mxu0
        %v3206 = vpop.f32.mrb[0].mxu0
        %v3207 = vpop.f32.mrb[0].mxu0
        %3208 = vmatprep.mubr.bf16.mxu0 0
        %3209 = vmatmul.mubr.bf16.gmra.mrb[0].mxu0 %v2927
        %v3210 = vpop.f32.mrb[0].mxu0
        %v3211 = vadd.f32 0.0, %v3210
        %v3212 = vpop.f32.mrb[0].mxu0
        %v3213 = vpop.f32.mrb[0].mxu0
        %v3214 = vadd.f32 0.0, %v3213
        %v3215 = vpop.f32.mrb[0].mxu0
        %3216 = vmatprep.mubr.bf16.mxu0 0
        %3217 = vmatmul.mubr.bf16.gmra.mrb[0].mxu0 %v2935
        %v3218 = vpop.f32.mrb[0].mxu0
        %v3219 = vpop.f32.mrb[0].mxu0
        %v3220 = vpop.f32.mrb[0].mxu0
        %v3221 = vadd.f32 0.0, %v3220
        %v3222 = vpop.f32.mrb[0].mxu0
        %3223 = vmatprep.mubr.bf16.mxu0 0
        %3224 = vmatmul.mubr.bf16.gmra.mrb[0].mxu0 %v2943
        %v3225 = vpop.f32.mrb[0].mxu0
        %v3226 = vadd.f32 0.0, %v3225
        %v3227 = vpop.f32.mrb[0].mxu0
        %v3228 = vpop.f32.mrb[0].mxu0
        %v3229 = vpop.f32.mrb[0].mxu0
        %3230 = vmatprep.mubr.bf16.mxu0 0
        %3231 = vmatmul.mubr.bf16.gmra.mrb[0].mxu0 %v2951
        %v3232 = vpop.f32.mrb[0].mxu0
        %v3233 = vadd.f32 0.0, %v3232
        %v3234 = vpop.f32.mrb[0].mxu0
        %v3235 = vpop.f32.mrb[0].mxu0
        %v3236 = vadd.f32 0.0, %v3235
        %v3237 = vpop.f32.mrb[0].mxu0
        %3238 = vmatprep.mubr.bf16.mxu0 0
        %3239 = vmatmul.mubr.bf16.gmra.mrb[0].mxu0 %v2959
        %v3240 = vpop.f32.mrb[0].mxu0
        %v3241 = vpop.f32.mrb[0].mxu0
        %v3242 = vpop.f32.mrb[0].mxu0
        %v3243 = vadd.f32 0.0, %v3242
        %v3244 = vpop.f32.mrb[0].mxu0
        %3245 = vmatprep.mubr.bf16.mxu0 0
        %3246 = vmatmul.mubr.bf16.gmra.mrb[0].mxu0 %v2967
        %v3247 = vpop.f32.mrb[0].mxu0
        %v3248 = vadd.f32 0.0, %v3247
        %v3249 = vpop.f32.mrb[0].mxu0
        %v3250 = vpop.f32.mrb[0].mxu0
        %v3251 = vpop.f32.mrb[0].mxu0
        %3252 = vmatprep.mubr.bf16.mxu0 0
        %3253 = vmatmul.mubr.bf16.gmra.mrb[0].mxu0 %v2975
        %v3254 = vpop.f32.mrb[0].mxu0
        %v3255 = vadd.f32 0.0, %v3254
        %v3256 = vpop.f32.mrb[0].mxu0
        %v3257 = vpop.f32.mrb[0].mxu0
        %v3258 = vadd.f32 0.0, %v3257
        %v3259 = vpop.f32.mrb[0].mxu0
        %3260 = vmatprep.mubr.bf16.mxu0 0
        %3261 = vmatmul.mubr.bf16.gmra.mrb[0].mxu0 %v2983
        %v3262 = vpop.f32.mrb[0].mxu0
        %v3263 = vpop.f32.mrb[0].mxu0
        %v3264 = vpop.f32.mrb[0].mxu0
        %v3265 = vadd.f32 0.0, %v3264
        %v3266 = vpop.f32.mrb[0].mxu0
        %3267 = vmatprep.mubr.bf16.mxu0 0
        %3268 = vmatmul.mubr.bf16.gmra.mrb[0].mxu0 %v2991
        %v3269 = vpop.f32.mrb[0].mxu0
        %v3270 = vadd.f32 0.0, %v3269
        %v3271 = vpop.f32.mrb[0].mxu0
        %v3272 = vpop.f32.mrb[0].mxu0
        %v3273 = vpop.f32.mrb[0].mxu0
        %3274 = vmatprep.mubr.bf16.mxu0 0
        %3275 = vmatmul.mubr.bf16.gmra.mrb[0].mxu0 %v2999
        %v3276 = vpop.f32.mrb[0].mxu0
        %v3277 = vadd.f32 0.0, %v3276
        %v3278 = vpop.f32.mrb[0].mxu0
        %v3279 = vpop.f32.mrb[0].mxu0
        %v3280 = vadd.f32 0.0, %v3279
        %v3281 = vpop.f32.mrb[0].mxu0
        %3282 = vmatprep.mubr.bf16.mxu0 0
        %3283 = vmatmul.mubr.bf16.gmra.mrb[0].mxu0 %v3007
        %v3284 = vpop.f32.mrb[0].mxu0
        %v3285 = vpop.f32.mrb[0].mxu0
        %v3286 = vpop.f32.mrb[0].mxu0
        %v3287 = vadd.f32 0.0, %v3286
        %v3288 = vpop.f32.mrb[0].mxu0
        %3289 = vmatprep.mubr.bf16.mxu0 0
        %3290 = vmatmul.mubr.bf16.gmra.mrb[0].mxu0 %v3015
        %v3291 = vpop.f32.mrb[0].mxu0
        %v3292 = vadd.f32 0.0, %v3291
        %v3293 = vpop.f32.mrb[0].mxu0
        %v3294 = vpop.f32.mrb[0].mxu0
        %v3295 = vpop.f32.mrb[0].mxu0
        %3296 = vdwg.mxu0
        %v3337 = vunpack.c.l.b16 %v2503
        %v3338 = vunpack.c.l.b16 %v2504
        %v3339 = vunpack.c.l.b16 %v2505
        %v3340 = vunpack.c.l.b16 %v2506
        %v3341 = vunpack.c.l.b16 %v2507
        %v3342 = vunpack.c.l.b16 %v2508
        %v3343 = vunpack.c.l.b16 %v2509
        %v3344 = vunpack.c.l.b16 %v2510
        %v3345 = vunpack.c.l.b16 %v2511
        %v3346 = vunpack.c.l.b16 %v2512
        %v3347 = vunpack.c.l.b16 %v2513
        %v3348 = vunpack.c.l.b16 %v2514
        %v3349 = vunpack.c.l.b16 %v2515
        %v3350 = vunpack.c.l.b16 %v2516
        %v3351 = vunpack.c.l.b16 %v2517
        %v3352 = vunpack.c.l.b16 %v2518
        %v3353 = vpack.c.b16 %v3338, %v3337
        %v3354 = vpack.c.b16 %v3340, %v3339
        %v3355 = vpack.c.b16 %v3342, %v3341
        %v3356 = vpack.c.b16 %v3344, %v3343
        %v3357 = vpack.c.b16 %v3346, %v3345
        %v3358 = vpack.c.b16 %v3348, %v3347
        %v3359 = vpack.c.b16 %v3350, %v3349
        %v3360 = vpack.c.b16 %v3352, %v3351
        %3369 = vmatprep.subr.bf16.mxu0 0
        %3370 = vmatpush1.bf16.msra.mxu0 %v3353
        %3371 = vmatprep.subr.bf16.mxu0 0
        %3372 = vmatpush1.bf16.msra.mxu0 %v3354
        %3373 = vmatprep.subr.bf16.mxu0 0
        %3374 = vmatpush1.bf16.msra.mxu0 %v3355
        %3375 = vmatprep.subr.bf16.mxu0 0
        %3376 = vmatpush1.bf16.msra.mxu0 %v3356
        %3377 = vmatprep.subr.bf16.mxu0 0
        %3378 = vmatpush1.bf16.msra.mxu0 %v3357
        %3379 = vmatprep.subr.bf16.mxu0 0
        %3380 = vmatpush1.bf16.msra.mxu0 %v3358
        %3381 = vmatprep.subr.bf16.mxu0 0
        %3382 = vmatpush1.bf16.msra.mxu0 %v3359
        %3383 = vmatprep.subr.bf16.mxu0 0
        %3384 = vmatpush1.bf16.msra.mxu0 %v3360
        %3385 = vmatprep.subr.bf16.mxu0 0
        %3386 = vmatpush1.bf16.msra.mxu0 0
        %3387 = vmatprep.subr.bf16.mxu0 0
        %3388 = vmatpush1.bf16.msra.mxu0 0
        %3389 = vmatprep.subr.bf16.mxu0 0
        %3390 = vmatpush1.bf16.msra.mxu0 0
        %3391 = vmatprep.subr.bf16.mxu0 0
        %3392 = vmatpush1.bf16.msra.mxu0 0
        %3393 = vmatprep.subr.bf16.mxu0 0
        %3394 = vmatpush1.bf16.msra.mxu0 0
        %3395 = vmatprep.subr.bf16.mxu0 0
        %3396 = vmatpush1.bf16.msra.mxu0 0
        %3397 = vmatprep.subr.bf16.mxu0 0
        %3398 = vmatpush1.bf16.msra.mxu0 0
        %3399 = vmatprep.subr.bf16.mxu0 0
        %3400 = vmatpush1.bf16.msra.mxu0 0
        %3401 = vmatprep.mubr.bf16.mxu0 0
        %3402 = vmatmul.mubr.bf16.gmra.mrb[0].mxu0 %v2794
        %v3403 = vpop.f32.mrb[0].mxu0
        %v3404 = vadd.f32 %v3123, %v3403
        %v3405 = vpop.f32.mrb[0].mxu0
        %v3406 = vpop.f32.mrb[0].mxu0
        %v3407 = vadd.f32 %v3126, %v3406
        %v3408 = vpop.f32.mrb[0].mxu0
        %3409 = vmatprep.mubr.bf16.mxu0 0
        %3410 = vmatmul.mubr.bf16.gmra.mrb[0].mxu0 %v2795
        %v3411 = vpop.f32.mrb[0].mxu0
        %v3412 = vpop.f32.mrb[0].mxu0
        %v3413 = vpop.f32.mrb[0].mxu0
        %v3414 = vadd.f32 %v3133, %v3413
        %v3415 = vpop.f32.mrb[0].mxu0
        %3416 = vmatprep.mubr.bf16.mxu0 0
        %3417 = vmatmul.mubr.bf16.gmra.mrb[0].mxu0 %v2796
        %v3418 = vpop.f32.mrb[0].mxu0
        %v3419 = vadd.f32 %v3138, %v3418
        %v3420 = vpop.f32.mrb[0].mxu0
        %v3421 = vpop.f32.mrb[0].mxu0
        %v3422 = vpop.f32.mrb[0].mxu0
        %3423 = vmatprep.mubr.bf16.mxu0 0
        %3424 = vmatmul.mubr.bf16.gmra.mrb[0].mxu0 %v2797
        %v3425 = vpop.f32.mrb[0].mxu0
        %v3426 = vadd.f32 %v3145, %v3425
        %v3427 = vpop.f32.mrb[0].mxu0
        %v3428 = vpop.f32.mrb[0].mxu0
        %v3429 = vadd.f32 %v3148, %v3428
        %v3430 = vpop.f32.mrb[0].mxu0
        %3431 = vmatprep.mubr.bf16.mxu0 0
        %3432 = vmatmul.mubr.bf16.gmra.mrb[0].mxu0 %v2798
        %v3433 = vpop.f32.mrb[0].mxu0
        %v3434 = vpop.f32.mrb[0].mxu0
        %v3435 = vpop.f32.mrb[0].mxu0
        %v3436 = vadd.f32 %v3155, %v3435
        %v3437 = vpop.f32.mrb[0].mxu0
        %3438 = vmatprep.mubr.bf16.mxu0 0
        %3439 = vmatmul.mubr.bf16.gmra.mrb[0].mxu0 %v2799
        %v3440 = vpop.f32.mrb[0].mxu0
        %v3441 = vadd.f32 %v3160, %v3440
        %v3442 = vpop.f32.mrb[0].mxu0
        %v3443 = vpop.f32.mrb[0].mxu0
        %v3444 = vpop.f32.mrb[0].mxu0
        %3445 = vmatprep.mubr.bf16.mxu0 0
        %3446 = vmatmul.mubr.bf16.gmra.mrb[0].mxu0 %v2800
        %v3447 = vpop.f32.mrb[0].mxu0
        %v3448 = vadd.f32 %v3167, %v3447
        %v3449 = vpop.f32.mrb[0].mxu0
        %v3450 = vpop.f32.mrb[0].mxu0
        %v3451 = vadd.f32 %v3170, %v3450
        %v3452 = vpop.f32.mrb[0].mxu0
        %3453 = vmatprep.mubr.bf16.mxu0 0
        %3454 = vmatmul.mubr.bf16.gmra.mrb[0].mxu0 %v2801
        %v3455 = vpop.f32.mrb[0].mxu0
        %v3456 = vpop.f32.mrb[0].mxu0
        %v3457 = vpop.f32.mrb[0].mxu0
        %v3458 = vadd.f32 %v3177, %v3457
        %v3459 = vpop.f32.mrb[0].mxu0
        %3460 = vmatprep.mubr.bf16.mxu0 0
        %3461 = vmatmul.mubr.bf16.gmra.mrb[0].mxu0 %v2802
        %v3462 = vpop.f32.mrb[0].mxu0
        %v3463 = vadd.f32 %v3182, %v3462
        %v3464 = vpop.f32.mrb[0].mxu0
        %v3465 = vpop.f32.mrb[0].mxu0
        %v3466 = vpop.f32.mrb[0].mxu0
        %3467 = vmatprep.mubr.bf16.mxu0 0
        %3468 = vmatmul.mubr.bf16.gmra.mrb[0].mxu0 %v2803
        %v3469 = vpop.f32.mrb[0].mxu0
        %v3470 = vadd.f32 %v3189, %v3469
        %v3471 = vpop.f32.mrb[0].mxu0
        %v3472 = vpop.f32.mrb[0].mxu0
        %v3473 = vadd.f32 %v3192, %v3472
        %v3474 = vpop.f32.mrb[0].mxu0
        %3475 = vmatprep.mubr.bf16.mxu0 0
        %3476 = vmatmul.mubr.bf16.gmra.mrb[0].mxu0 %v2804
        %v3477 = vpop.f32.mrb[0].mxu0
        %v3478 = vpop.f32.mrb[0].mxu0
        %v3479 = vpop.f32.mrb[0].mxu0
        %v3480 = vadd.f32 %v3199, %v3479
        %v3481 = vpop.f32.mrb[0].mxu0
        %3482 = vmatprep.mubr.bf16.mxu0 0
        %3483 = vmatmul.mubr.bf16.gmra.mrb[0].mxu0 %v2805
        %v3484 = vpop.f32.mrb[0].mxu0
        %v3485 = vadd.f32 %v3204, %v3484
        %v3486 = vpop.f32.mrb[0].mxu0
        %v3487 = vpop.f32.mrb[0].mxu0
        %v3488 = vpop.f32.mrb[0].mxu0
        %3489 = vmatprep.mubr.bf16.mxu0 0
        %3490 = vmatmul.mubr.bf16.gmra.mrb[0].mxu0 %v2806
        %v3491 = vpop.f32.mrb[0].mxu0
        %v3492 = vadd.f32 %v3211, %v3491
        %v3493 = vpop.f32.mrb[0].mxu0
        %v3494 = vpop.f32.mrb[0].mxu0
        %v3495 = vadd.f32 %v3214, %v3494
        %v3496 = vpop.f32.mrb[0].mxu0
        %3497 = vmatprep.mubr.bf16.mxu0 0
        %3498 = vmatmul.mubr.bf16.gmra.mrb[0].mxu0 %v2807
        %v3499 = vpop.f32.mrb[0].mxu0
        %v3500 = vpop.f32.mrb[0].mxu0
        %v3501 = vpop.f32.mrb[0].mxu0
        %v3502 = vadd.f32 %v3221, %v3501
        %v3503 = vpop.f32.mrb[0].mxu0
        %3504 = vmatprep.mubr.bf16.mxu0 0
        %3505 = vmatmul.mubr.bf16.gmra.mrb[0].mxu0 %v2808
        %v3506 = vpop.f32.mrb[0].mxu0
        %v3507 = vadd.f32 %v3226, %v3506
        %v3508 = vpop.f32.mrb[0].mxu0
        %v3509 = vpop.f32.mrb[0].mxu0
        %v3510 = vpop.f32.mrb[0].mxu0
        %3511 = vmatprep.mubr.bf16.mxu0 0
        %3512 = vmatmul.mubr.bf16.gmra.mrb[0].mxu0 %v2809
        %v3513 = vpop.f32.mrb[0].mxu0
        %v3514 = vadd.f32 %v3233, %v3513
        %v3515 = vpop.f32.mrb[0].mxu0
        %v3516 = vpop.f32.mrb[0].mxu0
        %v3517 = vadd.f32 %v3236, %v3516
        %v3518 = vpop.f32.mrb[0].mxu0
        %3519 = vmatprep.mubr.bf16.mxu0 0
        %3520 = vmatmul.mubr.bf16.gmra.mrb[0].mxu0 %v2810
        %v3521 = vpop.f32.mrb[0].mxu0
        %v3522 = vpop.f32.mrb[0].mxu0
        %v3523 = vpop.f32.mrb[0].mxu0
        %v3524 = vadd.f32 %v3243, %v3523
        %v3525 = vpop.f32.mrb[0].mxu0
        %3526 = vmatprep.mubr.bf16.mxu0 0
        %3527 = vmatmul.mubr.bf16.gmra.mrb[0].mxu0 %v2811
        %v3528 = vpop.f32.mrb[0].mxu0
        %v3529 = vadd.f32 %v3248, %v3528
        %v3530 = vpop.f32.mrb[0].mxu0
        %v3531 = vpop.f32.mrb[0].mxu0
        %v3532 = vpop.f32.mrb[0].mxu0
        %3533 = vmatprep.mubr.bf16.mxu0 0
        %3534 = vmatmul.mubr.bf16.gmra.mrb[0].mxu0 %v2812
        %v3535 = vpop.f32.mrb[0].mxu0
        %v3536 = vadd.f32 %v3255, %v3535
        %v3537 = vpop.f32.mrb[0].mxu0
        %v3538 = vpop.f32.mrb[0].mxu0
        %v3539 = vadd.f32 %v3258, %v3538
        %v3540 = vpop.f32.mrb[0].mxu0
        %3541 = vmatprep.mubr.bf16.mxu0 0
        %3542 = vmatmul.mubr.bf16.gmra.mrb[0].mxu0 %v2813
        %v3543 = vpop.f32.mrb[0].mxu0
        %v3544 = vpop.f32.mrb[0].mxu0
        %v3545 = vpop.f32.mrb[0].mxu0
        %v3546 = vadd.f32 %v3265, %v3545
        %v3547 = vpop.f32.mrb[0].mxu0
        %3548 = vmatprep.mubr.bf16.mxu0 0
        %3549 = vmatmul.mubr.bf16.gmra.mrb[0].mxu0 %v2814
        %v3550 = vpop.f32.mrb[0].mxu0
        %v3551 = vadd.f32 %v3270, %v3550
        %v3552 = vpop.f32.mrb[0].mxu0
        %v3553 = vpop.f32.mrb[0].mxu0
        %v3554 = vpop.f32.mrb[0].mxu0
        %3555 = vmatprep.mubr.bf16.mxu0 0
        %3556 = vmatmul.mubr.bf16.gmra.mrb[0].mxu0 %v2815
        %v3557 = vpop.f32.mrb[0].mxu0
        %v3558 = vadd.f32 %v3277, %v3557
        %v3559 = vpop.f32.mrb[0].mxu0
        %v3560 = vpop.f32.mrb[0].mxu0
        %v3561 = vadd.f32 %v3280, %v3560
        %v3562 = vpop.f32.mrb[0].mxu0
        %3563 = vmatprep.mubr.bf16.mxu0 0
        %3564 = vmatmul.mubr.bf16.gmra.mrb[0].mxu0 %v2816
        %v3565 = vpop.f32.mrb[0].mxu0
        %v3566 = vpop.f32.mrb[0].mxu0
        %v3567 = vpop.f32.mrb[0].mxu0
        %v3568 = vadd.f32 %v3287, %v3567
        %v3569 = vpop.f32.mrb[0].mxu0
        %3570 = vmatprep.mubr.bf16.mxu0 0
        %3571 = vmatmul.mubr.bf16.gmra.mrb[0].mxu0 %v2817
        %v3572 = vpop.f32.mrb[0].mxu0
        %v3573 = vadd.f32 %v3292, %v3572
        %v3574 = vpop.f32.mrb[0].mxu0
        %v3575 = vpop.f32.mrb[0].mxu0
        %v3576 = vpop.f32.mrb[0].mxu0
        %3577 = vdwg.mxu0
        %v3578 = vld [vmem:[#allocation2] sm:$0xe]
        %v3580 = vunpack.c.l.b16 %v3578
        %v3581 = vpack.c.b16 %v2746, %v3580
        %vm3582 = vcmask 1046528
        %v3583 = vrot.slane %v3581, 1
        %v3584 = vrot.slane %v2795, 1
        %v3585 = vsel %vm3582, %v3583, %v3584
        %v3586 = vrot.slane %v2796, 1
        %v3587 = vsel %vm3582, %v3584, %v3586
        %v3588 = vrot.slane %v2797, 1
        %v3589 = vsel %vm3582, %v3586, %v3588
        %v3590 = vrot.slane %v2798, 1
        %v3591 = vsel %vm3582, %v3588, %v3590
        %v3592 = vrot.slane %v2799, 1
        %v3593 = vsel %vm3582, %v3590, %v3592
        %v3594 = vrot.slane %v2800, 1
        %v3595 = vsel %vm3582, %v3592, %v3594
        %v3596 = vrot.slane %v2801, 1
        %v3597 = vsel %vm3582, %v3594, %v3596
        %v3598 = vrot.slane %v2802, 1
        %v3599 = vsel %vm3582, %v3596, %v3598
        %v3600 = vrot.slane %v2803, 1
        %v3601 = vsel %vm3582, %v3598, %v3600
        %v3602 = vrot.slane %v2804, 1
        %v3603 = vsel %vm3582, %v3600, %v3602
        %v3604 = vrot.slane %v2805, 1
        %v3605 = vsel %vm3582, %v3602, %v3604
        %v3606 = vrot.slane %v2806, 1
        %v3607 = vsel %vm3582, %v3604, %v3606
        %v3608 = vrot.slane %v2807, 1
        %v3609 = vsel %vm3582, %v3606, %v3608
        %v3610 = vrot.slane %v2808, 1
        %v3611 = vsel %vm3582, %v3608, %v3610
        %v3612 = vrot.slane %v2809, 1
        %v3613 = vsel %vm3582, %v3610, %v3612
        %v3614 = vrot.slane %v2810, 1
        %v3615 = vsel %vm3582, %v3612, %v3614
        %v3616 = vrot.slane %v2811, 1
        %v3617 = vsel %vm3582, %v3614, %v3616
        %v3618 = vrot.slane %v2812, 1
        %v3619 = vsel %vm3582, %v3616, %v3618
        %v3620 = vrot.slane %v2813, 1
        %v3621 = vsel %vm3582, %v3618, %v3620
        %v3622 = vrot.slane %v2814, 1
        %v3623 = vsel %vm3582, %v3620, %v3622
        %v3624 = vrot.slane %v2815, 1
        %v3625 = vsel %vm3582, %v3622, %v3624
        %v3626 = vrot.slane %v2816, 1
        %v3627 = vsel %vm3582, %v3624, %v3626
        %v3628 = vrot.slane %v2817, 1
        %v3629 = vsel %vm3582, %v3626, %v3628
        %v3630 = vrot.slane %v2818, 1
        %v3631 = vsel %vm3582, %v3628, %v3630
        %v3672 = vunpack.c.l.b16 %v2535
        %v3673 = vunpack.c.l.b16 %v2536
        %v3674 = vunpack.c.l.b16 %v2537
        %v3675 = vunpack.c.l.b16 %v2538
        %v3676 = vunpack.c.l.b16 %v2539
        %v3677 = vunpack.c.l.b16 %v2540
        %v3678 = vunpack.c.l.b16 %v2541
        %v3679 = vunpack.c.l.b16 %v2542
        %v3680 = vunpack.c.l.b16 %v2543
        %v3681 = vunpack.c.l.b16 %v2544
        %v3682 = vunpack.c.l.b16 %v2545
        %v3683 = vunpack.c.l.b16 %v2546
        %v3684 = vunpack.c.l.b16 %v2547
        %v3685 = vunpack.c.l.b16 %v2548
        %v3686 = vunpack.c.l.b16 %v2549
        %v3687 = vunpack.c.l.b16 %v2550
        %v3688 = vpack.c.b16 %v3673, %v3672
        %v3689 = vpack.c.b16 %v3675, %v3674
        %v3690 = vpack.c.b16 %v3677, %v3676
        %v3691 = vpack.c.b16 %v3679, %v3678
        %v3692 = vpack.c.b16 %v3681, %v3680
        %v3693 = vpack.c.b16 %v3683, %v3682
        %v3694 = vpack.c.b16 %v3685, %v3684
        %v3695 = vpack.c.b16 %v3687, %v3686
        %3704 = vmatprep.subr.bf16.mxu0 0
        %3705 = vmatpush1.bf16.msra.mxu0 %v3688
        %3706 = vmatprep.subr.bf16.mxu0 0
        %3707 = vmatpush1.bf16.msra.mxu0 %v3689
        %3708 = vmatprep.subr.bf16.mxu0 0
        %3709 = vmatpush1.bf16.msra.mxu0 %v3690
        %3710 = vmatprep.subr.bf16.mxu0 0
        %3711 = vmatpush1.bf16.msra.mxu0 %v3691
        %3712 = vmatprep.subr.bf16.mxu0 0
        %3713 = vmatpush1.bf16.msra.mxu0 %v3692
        %3714 = vmatprep.subr.bf16.mxu0 0
        %3715 = vmatpush1.bf16.msra.mxu0 %v3693
        %3716 = vmatprep.subr.bf16.mxu0 0
        %3717 = vmatpush1.bf16.msra.mxu0 %v3694
        %3718 = vmatprep.subr.bf16.mxu0 0
        %3719 = vmatpush1.bf16.msra.mxu0 %v3695
        %3720 = vmatprep.subr.bf16.mxu0 0
        %3721 = vmatpush1.bf16.msra.mxu0 0
        %3722 = vmatprep.subr.bf16.mxu0 0
        %3723 = vmatpush1.bf16.msra.mxu0 0
        %3724 = vmatprep.subr.bf16.mxu0 0
        %3725 = vmatpush1.bf16.msra.mxu0 0
        %3726 = vmatprep.subr.bf16.mxu0 0
        %3727 = vmatpush1.bf16.msra.mxu0 0
        %3728 = vmatprep.subr.bf16.mxu0 0
        %3729 = vmatpush1.bf16.msra.mxu0 0
        %3730 = vmatprep.subr.bf16.mxu0 0
        %3731 = vmatpush1.bf16.msra.mxu0 0
        %3732 = vmatprep.subr.bf16.mxu0 0
        %3733 = vmatpush1.bf16.msra.mxu0 0
        %3734 = vmatprep.subr.bf16.mxu0 0
        %3735 = vmatpush1.bf16.msra.mxu0 0
        %3736 = vmatprep.mubr.bf16.mxu0 0
        %3737 = vmatmul.mubr.bf16.gmra.mrb[0].mxu0 %v3585
        %v3738 = vpop.f32.mrb[0].mxu0
        %v3739 = vadd.f32 0.0, %v3738
        %v3740 = vpop.f32.mrb[0].mxu0
        %v3741 = vpop.f32.mrb[0].mxu0
        %v3742 = vadd.f32 0.0, %v3741
        %v3743 = vpop.f32.mrb[0].mxu0
        %3744 = vmatprep.mubr.bf16.mxu0 0
        %3745 = vmatmul.mubr.bf16.gmra.mrb[0].mxu0 %v3587
        %v3746 = vpop.f32.mrb[0].mxu0
        %v3747 = vpop.f32.mrb[0].mxu0
        %v3748 = vpop.f32.mrb[0].mxu0
        %v3749 = vadd.f32 0.0, %v3748
        %v3750 = vpop.f32.mrb[0].mxu0
        %3751 = vmatprep.mubr.bf16.mxu0 0
        %3752 = vmatmul.mubr.bf16.gmra.mrb[0].mxu0 %v3589
        %v3753 = vpop.f32.mrb[0].mxu0
        %v3754 = vadd.f32 0.0, %v3753
        %v3755 = vpop.f32.mrb[0].mxu0
        %v3756 = vpop.f32.mrb[0].mxu0
        %v3757 = vpop.f32.mrb[0].mxu0
        %3758 = vmatprep.mubr.bf16.mxu0 0
        %3759 = vmatmul.mubr.bf16.gmra.mrb[0].mxu0 %v3591
        %v3760 = vpop.f32.mrb[0].mxu0
        %v3761 = vadd.f32 0.0, %v3760
        %v3762 = vpop.f32.mrb[0].mxu0
        %v3763 = vpop.f32.mrb[0].mxu0
        %v3764 = vadd.f32 0.0, %v3763
        %v3765 = vpop.f32.mrb[0].mxu0
        %3766 = vmatprep.mubr.bf16.mxu0 0
        %3767 = vmatmul.mubr.bf16.gmra.mrb[0].mxu0 %v3593
        %v3768 = vpop.f32.mrb[0].mxu0
        %v3769 = vpop.f32.mrb[0].mxu0
        %v3770 = vpop.f32.mrb[0].mxu0
        %v3771 = vadd.f32 0.0, %v3770
        %v3772 = vpop.f32.mrb[0].mxu0
        %3773 = vmatprep.mubr.bf16.mxu0 0
        %3774 = vmatmul.mubr.bf16.gmra.mrb[0].mxu0 %v3595
        %v3775 = vpop.f32.mrb[0].mxu0
        %v3776 = vadd.f32 0.0, %v3775
        %v3777 = vpop.f32.mrb[0].mxu0
        %v3778 = vpop.f32.mrb[0].mxu0
        %v3779 = vpop.f32.mrb[0].mxu0
        %3780 = vmatprep.mubr.bf16.mxu0 0
        %3781 = vmatmul.mubr.bf16.gmra.mrb[0].mxu0 %v3597
        %v3782 = vpop.f32.mrb[0].mxu0
        %v3783 = vadd.f32 0.0, %v3782
        %v3784 = vpop.f32.mrb[0].mxu0
        %v3785 = vpop.f32.mrb[0].mxu0
        %v3786 = vadd.f32 0.0, %v3785
        %v3787 = vpop.f32.mrb[0].mxu0
        %3788 = vmatprep.mubr.bf16.mxu0 0
        %3789 = vmatmul.mubr.bf16.gmra.mrb[0].mxu0 %v3599
        %v3790 = vpop.f32.mrb[0].mxu0
        %v3791 = vpop.f32.mrb[0].mxu0
        %v3792 = vpop.f32.mrb[0].mxu0
        %v3793 = vadd.f32 0.0, %v3792
        %v3794 = vpop.f32.mrb[0].mxu0
        %3795 = vmatprep.mubr.bf16.mxu0 0
        %3796 = vmatmul.mubr.bf16.gmra.mrb[0].mxu0 %v3601
        %v3797 = vpop.f32.mrb[0].mxu0
        %v3798 = vadd.f32 0.0, %v3797
        %v3799 = vpop.f32.mrb[0].mxu0
        %v3800 = vpop.f32.mrb[0].mxu0
        %v3801 = vpop.f32.mrb[0].mxu0
        %3802 = vmatprep.mubr.bf16.mxu0 0
        %3803 = vmatmul.mubr.bf16.gmra.mrb[0].mxu0 %v3603
        %v3804 = vpop.f32.mrb[0].mxu0
        %v3805 = vadd.f32 0.0, %v3804
        %v3806 = vpop.f32.mrb[0].mxu0
        %v3807 = vpop.f32.mrb[0].mxu0
        %v3808 = vadd.f32 0.0, %v3807
        %v3809 = vpop.f32.mrb[0].mxu0
        %3810 = vmatprep.mubr.bf16.mxu0 0
        %3811 = vmatmul.mubr.bf16.gmra.mrb[0].mxu0 %v3605
        %v3812 = vpop.f32.mrb[0].mxu0
        %v3813 = vpop.f32.mrb[0].mxu0
        %v3814 = vpop.f32.mrb[0].mxu0
        %v3815 = vadd.f32 0.0, %v3814
        %v3816 = vpop.f32.mrb[0].mxu0
        %3817 = vmatprep.mubr.bf16.mxu0 0
        %3818 = vmatmul.mubr.bf16.gmra.mrb[0].mxu0 %v3607
        %v3819 = vpop.f32.mrb[0].mxu0
        %v3820 = vadd.f32 0.0, %v3819
        %v3821 = vpop.f32.mrb[0].mxu0
        %v3822 = vpop.f32.mrb[0].mxu0
        %v3823 = vpop.f32.mrb[0].mxu0
        %3824 = vmatprep.mubr.bf16.mxu0 0
        %3825 = vmatmul.mubr.bf16.gmra.mrb[0].mxu0 %v3609
        %v3826 = vpop.f32.mrb[0].mxu0
        %v3827 = vadd.f32 0.0, %v3826
        %v3828 = vpop.f32.mrb[0].mxu0
        %v3829 = vpop.f32.mrb[0].mxu0
        %v3830 = vadd.f32 0.0, %v3829
        %v3831 = vpop.f32.mrb[0].mxu0
        %3832 = vmatprep.mubr.bf16.mxu0 0
        %3833 = vmatmul.mubr.bf16.gmra.mrb[0].mxu0 %v3611
        %v3834 = vpop.f32.mrb[0].mxu0
        %v3835 = vpop.f32.mrb[0].mxu0
        %v3836 = vpop.f32.mrb[0].mxu0
        %v3837 = vadd.f32 0.0, %v3836
        %v3838 = vpop.f32.mrb[0].mxu0
        %3839 = vmatprep.mubr.bf16.mxu0 0
        %3840 = vmatmul.mubr.bf16.gmra.mrb[0].mxu0 %v3613
        %v3841 = vpop.f32.mrb[0].mxu0
        %v3842 = vadd.f32 0.0, %v3841
        %v3843 = vpop.f32.mrb[0].mxu0
        %v3844 = vpop.f32.mrb[0].mxu0
        %v3845 = vpop.f32.mrb[0].mxu0
        %3846 = vmatprep.mubr.bf16.mxu0 0
        %3847 = vmatmul.mubr.bf16.gmra.mrb[0].mxu0 %v3615
        %v3848 = vpop.f32.mrb[0].mxu0
        %v3849 = vadd.f32 0.0, %v3848
        %v3850 = vpop.f32.mrb[0].mxu0
        %v3851 = vpop.f32.mrb[0].mxu0
        %v3852 = vadd.f32 0.0, %v3851
        %v3853 = vpop.f32.mrb[0].mxu0
        %3854 = vmatprep.mubr.bf16.mxu0 0
        %3855 = vmatmul.mubr.bf16.gmra.mrb[0].mxu0 %v3617
        %v3856 = vpop.f32.mrb[0].mxu0
        %v3857 = vpop.f32.mrb[0].mxu0
        %v3858 = vpop.f32.mrb[0].mxu0
        %v3859 = vadd.f32 0.0, %v3858
        %v3860 = vpop.f32.mrb[0].mxu0
        %3861 = vmatprep.mubr.bf16.mxu0 0
        %3862 = vmatmul.mubr.bf16.gmra.mrb[0].mxu0 %v3619
        %v3863 = vpop.f32.mrb[0].mxu0
        %v3864 = vadd.f32 0.0, %v3863
        %v3865 = vpop.f32.mrb[0].mxu0
        %v3866 = vpop.f32.mrb[0].mxu0
        %v3867 = vpop.f32.mrb[0].mxu0
        %3868 = vmatprep.mubr.bf16.mxu0 0
        %3869 = vmatmul.mubr.bf16.gmra.mrb[0].mxu0 %v3621
        %v3870 = vpop.f32.mrb[0].mxu0
        %v3871 = vadd.f32 0.0, %v3870
        %v3872 = vpop.f32.mrb[0].mxu0
        %v3873 = vpop.f32.mrb[0].mxu0
        %v3874 = vadd.f32 0.0, %v3873
        %v3875 = vpop.f32.mrb[0].mxu0
        %3876 = vmatprep.mubr.bf16.mxu0 0
        %3877 = vmatmul.mubr.bf16.gmra.mrb[0].mxu0 %v3623
        %v3878 = vpop.f32.mrb[0].mxu0
        %v3879 = vpop.f32.mrb[0].mxu0
        %v3880 = vpop.f32.mrb[0].mxu0
        %v3881 = vadd.f32 0.0, %v3880
        %v3882 = vpop.f32.mrb[0].mxu0
        %3883 = vmatprep.mubr.bf16.mxu0 0
        %3884 = vmatmul.mubr.bf16.gmra.mrb[0].mxu0 %v3625
        %v3885 = vpop.f32.mrb[0].mxu0
        %v3886 = vadd.f32 0.0, %v3885
        %v3887 = vpop.f32.mrb[0].mxu0
        %v3888 = vpop.f32.mrb[0].mxu0
        %v3889 = vpop.f32.mrb[0].mxu0
        %3890 = vmatprep.mubr.bf16.mxu0 0
        %3891 = vmatmul.mubr.bf16.gmra.mrb[0].mxu0 %v3627
        %v3892 = vpop.f32.mrb[0].mxu0
        %v3893 = vadd.f32 0.0, %v3892
        %v3894 = vpop.f32.mrb[0].mxu0
        %v3895 = vpop.f32.mrb[0].mxu0
        %v3896 = vadd.f32 0.0, %v3895
        %v3897 = vpop.f32.mrb[0].mxu0
        %3898 = vmatprep.mubr.bf16.mxu0 0
        %3899 = vmatmul.mubr.bf16.gmra.mrb[0].mxu0 %v3629
        %v3900 = vpop.f32.mrb[0].mxu0
        %v3901 = vpop.f32.mrb[0].mxu0
        %v3902 = vpop.f32.mrb[0].mxu0
        %v3903 = vadd.f32 0.0, %v3902
        %v3904 = vpop.f32.mrb[0].mxu0
        %3905 = vmatprep.mubr.bf16.mxu0 0
        %3906 = vmatmul.mubr.bf16.gmra.mrb[0].mxu0 %v3631
        %v3907 = vpop.f32.mrb[0].mxu0
        %v3908 = vadd.f32 0.0, %v3907
        %v3909 = vpop.f32.mrb[0].mxu0
        %v3910 = vpop.f32.mrb[0].mxu0
        %v3911 = vpop.f32.mrb[0].mxu0
        %3912 = vdwg.mxu0
        %v3913 = vadd.f32 %v3404, %v3739
        %v3914 = vadd.f32 %v3407, %v3742
        %v3915 = vadd.f32 %v3414, %v3749
        %v3916 = vadd.f32 %v3419, %v3754
        %v3917 = vadd.f32 %v3426, %v3761
        %v3918 = vadd.f32 %v3429, %v3764
        %v3919 = vadd.f32 %v3436, %v3771
        %v3920 = vadd.f32 %v3441, %v3776
        %v3921 = vadd.f32 %v3448, %v3783
        %v3922 = vadd.f32 %v3451, %v3786
        %v3923 = vadd.f32 %v3458, %v3793
        %v3924 = vadd.f32 %v3463, %v3798
        %v3925 = vadd.f32 %v3470, %v3805
        %v3926 = vadd.f32 %v3473, %v3808
        %v3927 = vadd.f32 %v3480, %v3815
        %v3928 = vadd.f32 %v3485, %v3820
        %v3929 = vadd.f32 %v3492, %v3827
        %v3930 = vadd.f32 %v3495, %v3830
        %v3931 = vadd.f32 %v3502, %v3837
        %v3932 = vadd.f32 %v3507, %v3842
        %v3933 = vadd.f32 %v3514, %v3849
        %v3934 = vadd.f32 %v3517, %v3852
        %v3935 = vadd.f32 %v3524, %v3859
        %v3936 = vadd.f32 %v3529, %v3864
        %v3937 = vadd.f32 %v3536, %v3871
        %v3938 = vadd.f32 %v3539, %v3874
        %v3939 = vadd.f32 %v3546, %v3881
        %v3940 = vadd.f32 %v3551, %v3886
        %v3941 = vadd.f32 %v3558, %v3893
        %v3942 = vadd.f32 %v3561, %v3896
        %v3943 = vadd.f32 %v3568, %v3903
        %v3944 = vadd.f32 %v3573, %v3908
        %v3945 = vld [vmem:[#allocation2 + $0xc] sm:$0xf]
        %v3946 = vld [vmem:[#allocation2 + $0x10] sm:$0xf]
        %v3947 = vld [vmem:[#allocation2 + $0x14] sm:$0xf]
        %v3948 = vld [vmem:[#allocation2 + $0x18] sm:$0xf]
        %v3949 = vld [vmem:[#allocation2 + $0x1c] sm:$0xf]
        %v3950 = vld [vmem:[#allocation2 + $0x20] sm:$0xf]
        %v3951 = vld [vmem:[#allocation2 + $0x24] sm:$0xf]
        %v3952 = vld [vmem:[#allocation2 + $0x28] sm:$0xf]
        %v3953 = vld [vmem:[#allocation2 + $0x2c] sm:$0xf]
        %v3954 = vld [vmem:[#allocation2 + $0x30] sm:$0xf]
        %v3955 = vld [vmem:[#allocation2 + $0x34] sm:$0xf]
        %v3956 = vld [vmem:[#allocation2 + $0x38] sm:$0xf]
        %v3957 = vld [vmem:[#allocation2 + $0x3c] sm:$0xf]
        %v3958 = vld [vmem:[#allocation2 + $0x40] sm:$0xf]
        %v3959 = vld [vmem:[#allocation2 + $0x44] sm:$0xf]
        %v3960 = vld [vmem:[#allocation2 + $0x48] sm:$0xf]
        %v3961 = vld [vmem:[#allocation2 + $0x4c] sm:$0xf]
        %v3962 = vld [vmem:[#allocation2 + $0x50] sm:$0xf]
        %v3963 = vld [vmem:[#allocation2 + $0x54] sm:$0xf]
        %v3964 = vld [vmem:[#allocation2 + $0x58] sm:$0xf]
        %v3965 = vld [vmem:[#allocation2 + $0x5c] sm:$0xf]
        %v3966 = vld [vmem:[#allocation2 + $0x60] sm:$0xf]
        %v3967 = vld [vmem:[#allocation2 + $0x64] sm:$0xf]
        %v3968 = vld [vmem:[#allocation2 + $0x68] sm:$0xf]
        %v3969 = vld [vmem:[#allocation2 + $0x6c] sm:$0xf]
        %v3970 = vld [vmem:[#allocation2 + $0x70] sm:$0xf]
        %v3971 = vld [vmem:[#allocation2 + $0x74] sm:$0xf]
        %v3972 = vld [vmem:[#allocation2 + $0x78] sm:$0xf]
        %v3973 = vld [vmem:[#allocation2 + $0x7c] sm:$0xf]
        %v3974 = vld [vmem:[#allocation2 + $0x80] sm:$0xf]
        %v3975 = vld [vmem:[#allocation2 + $0x84] sm:$0xf]
        %v3976 = vld [vmem:[#allocation2 + $0x88] sm:$0xf]
        %v3977 = vld [vmem:[#allocation2 + $0x8c] sm:$0xf]
        %v3978 = vld [vmem:[#allocation2 + $0x90] sm:$0xf]
        %v3979 = vld [vmem:[#allocation2 + $0x94] sm:$0xf]
        %v3980 = vld [vmem:[#allocation2 + $0x98] sm:$0xf]
        %v3981 = vld [vmem:[#allocation2 + $0x9c] sm:$0xf]
        %v3982 = vld [vmem:[#allocation2 + $0xa0] sm:$0xf]
        %v3983 = vld [vmem:[#allocation2 + $0xa4] sm:$0xf]
        %v3984 = vld [vmem:[#allocation2 + $0xa8] sm:$0xf]
        %v3985 = vld [vmem:[#allocation2 + $0xac] sm:$0xf]
        %v3986 = vld [vmem:[#allocation2 + $0xb0] sm:$0xf]
        %v3987 = vld [vmem:[#allocation2 + $0xb4] sm:$0xf]
        %v3988 = vld [vmem:[#allocation2 + $0xb8] sm:$0xf]
        %v3989 = vld [vmem:[#allocation2 + $0xbc] sm:$0xf]
        %v3990 = vld [vmem:[#allocation2 + $0xc0] sm:$0xf]
        %v3991 = vld [vmem:[#allocation2 + $0xc4] sm:$0xf]
        %v3992 = vld [vmem:[#allocation2 + $0xc8] sm:$0xf]
        %v4041 = vunpack.c.l.b16 %v3945
        %v4042 = vunpack.c.l.b16 %v3946
        %v4043 = vunpack.c.l.b16 %v3947
        %v4044 = vunpack.c.l.b16 %v3948
        %v4045 = vunpack.c.l.b16 %v3949
        %v4046 = vunpack.c.l.b16 %v3950
        %v4047 = vunpack.c.l.b16 %v3951
        %v4048 = vunpack.c.l.b16 %v3952
        %v4049 = vunpack.c.l.b16 %v3953
        %v4050 = vunpack.c.l.b16 %v3954
        %v4051 = vunpack.c.l.b16 %v3955
        %v4052 = vunpack.c.l.b16 %v3956
        %v4053 = vunpack.c.l.b16 %v3957
        %v4054 = vunpack.c.l.b16 %v3958
        %v4055 = vunpack.c.l.b16 %v3959
        %v4056 = vunpack.c.l.b16 %v3960
        %v4057 = vunpack.c.l.b16 %v3961
        %v4058 = vunpack.c.l.b16 %v3962
        %v4059 = vunpack.c.l.b16 %v3963
        %v4060 = vunpack.c.l.b16 %v3964
        %v4061 = vunpack.c.l.b16 %v3965
        %v4062 = vunpack.c.l.b16 %v3966
        %v4063 = vunpack.c.l.b16 %v3967
        %v4064 = vunpack.c.l.b16 %v3968
        %v4065 = vunpack.c.l.b16 %v3969
        %v4066 = vunpack.c.l.b16 %v3970
        %v4067 = vunpack.c.l.b16 %v3971
        %v4068 = vunpack.c.l.b16 %v3972
        %v4069 = vunpack.c.l.b16 %v3973
        %v4070 = vunpack.c.l.b16 %v3974
        %v4071 = vunpack.c.l.b16 %v3975
        %v4072 = vunpack.c.l.b16 %v3976
        %v4073 = vunpack.c.l.b16 %v3977
        %v4074 = vunpack.c.l.b16 %v3978
        %v4075 = vunpack.c.l.b16 %v3979
        %v4076 = vunpack.c.l.b16 %v3980
        %v4077 = vunpack.c.l.b16 %v3981
        %v4078 = vunpack.c.l.b16 %v3982
        %v4079 = vunpack.c.l.b16 %v3983
        %v4080 = vunpack.c.l.b16 %v3984
        %v4081 = vunpack.c.l.b16 %v3985
        %v4082 = vunpack.c.l.b16 %v3986
        %v4083 = vunpack.c.l.b16 %v3987
        %v4084 = vunpack.c.l.b16 %v3988
        %v4085 = vunpack.c.l.b16 %v3989
        %v4086 = vunpack.c.l.b16 %v3990
        %v4087 = vunpack.c.l.b16 %v3991
        %v4088 = vunpack.c.l.b16 %v3992
        %v4089 = vpack.c.b16 %v4042, %v4041
        %v4090 = vpack.c.b16 %v4044, %v4043
        %v4091 = vpack.c.b16 %v4046, %v4045
        %v4092 = vpack.c.b16 %v4048, %v4047
        %v4093 = vpack.c.b16 %v4050, %v4049
        %v4094 = vpack.c.b16 %v4052, %v4051
        %v4095 = vpack.c.b16 %v4054, %v4053
        %v4096 = vpack.c.b16 %v4056, %v4055
        %v4097 = vpack.c.b16 %v4058, %v4057
        %v4098 = vpack.c.b16 %v4060, %v4059
        %v4099 = vpack.c.b16 %v4062, %v4061
        %v4100 = vpack.c.b16 %v4064, %v4063
        %v4101 = vpack.c.b16 %v4066, %v4065
        %v4102 = vpack.c.b16 %v4068, %v4067
        %v4103 = vpack.c.b16 %v4070, %v4069
        %v4104 = vpack.c.b16 %v4072, %v4071
        %v4105 = vpack.c.b16 %v4074, %v4073
        %v4106 = vpack.c.b16 %v4076, %v4075
        %v4107 = vpack.c.b16 %v4078, %v4077
        %v4108 = vpack.c.b16 %v4080, %v4079
        %v4109 = vpack.c.b16 %v4082, %v4081
        %v4110 = vpack.c.b16 %v4084, %v4083
        %v4111 = vpack.c.b16 %v4086, %v4085
        %v4112 = vpack.c.b16 %v4088, %v4087
        %v4153 = vunpack.c.l.b16 %v2551
        %v4154 = vunpack.c.l.b16 %v2552
        %v4155 = vunpack.c.l.b16 %v2553
        %v4156 = vunpack.c.l.b16 %v2554
        %v4157 = vunpack.c.l.b16 %v2555
        %v4158 = vunpack.c.l.b16 %v2556
        %v4159 = vunpack.c.l.b16 %v2557
        %v4160 = vunpack.c.l.b16 %v2558
        %v4161 = vunpack.c.l.b16 %v2559
        %v4162 = vunpack.c.l.b16 %v2560
        %v4163 = vunpack.c.l.b16 %v2561
        %v4164 = vunpack.c.l.b16 %v2562
        %v4165 = vunpack.c.l.b16 %v2563
        %v4166 = vunpack.c.l.b16 %v2564
        %v4167 = vunpack.c.l.b16 %v2565
        %v4168 = vunpack.c.l.b16 %v2566
        %v4169 = vpack.c.b16 %v4154, %v4153
        %v4170 = vpack.c.b16 %v4156, %v4155
        %v4171 = vpack.c.b16 %v4158, %v4157
        %v4172 = vpack.c.b16 %v4160, %v4159
        %v4173 = vpack.c.b16 %v4162, %v4161
        %v4174 = vpack.c.b16 %v4164, %v4163
        %v4175 = vpack.c.b16 %v4166, %v4165
        %v4176 = vpack.c.b16 %v4168, %v4167
        %4185 = vmatprep.subr.bf16.mxu0 0
        %4186 = vmatpush1.bf16.msra.mxu0 %v4169
        %4187 = vmatprep.subr.bf16.mxu0 0
        %4188 = vmatpush1.bf16.msra.mxu0 %v4170
        %4189 = vmatprep.subr.bf16.mxu0 0
        %4190 = vmatpush1.bf16.msra.mxu0 %v4171
        %4191 = vmatprep.subr.bf16.mxu0 0
        %4192 = vmatpush1.bf16.msra.mxu0 %v4172
        %4193 = vmatprep.subr.bf16.mxu0 0
        %4194 = vmatpush1.bf16.msra.mxu0 %v4173
        %4195 = vmatprep.subr.bf16.mxu0 0
        %4196 = vmatpush1.bf16.msra.mxu0 %v4174
        %4197 = vmatprep.subr.bf16.mxu0 0
        %4198 = vmatpush1.bf16.msra.mxu0 %v4175
        %4199 = vmatprep.subr.bf16.mxu0 0
        %4200 = vmatpush1.bf16.msra.mxu0 %v4176
        %4201 = vmatprep.subr.bf16.mxu0 0
        %4202 = vmatpush1.bf16.msra.mxu0 0
        %4203 = vmatprep.subr.bf16.mxu0 0
        %4204 = vmatpush1.bf16.msra.mxu0 0
        %4205 = vmatprep.subr.bf16.mxu0 0
        %4206 = vmatpush1.bf16.msra.mxu0 0
        %4207 = vmatprep.subr.bf16.mxu0 0
        %4208 = vmatpush1.bf16.msra.mxu0 0
        %4209 = vmatprep.subr.bf16.mxu0 0
        %4210 = vmatpush1.bf16.msra.mxu0 0
        %4211 = vmatprep.subr.bf16.mxu0 0
        %4212 = vmatpush1.bf16.msra.mxu0 0
        %4213 = vmatprep.subr.bf16.mxu0 0
        %4214 = vmatpush1.bf16.msra.mxu0 0
        %4215 = vmatprep.subr.bf16.mxu0 0
        %4216 = vmatpush1.bf16.msra.mxu0 0
        %4217 = vmatprep.mubr.bf16.mxu0 0
        %4218 = vmatmul.mubr.bf16.gmra.mrb[0].mxu0 %v4089
        %v4219 = vpop.f32.mrb[0].mxu0
        %v4220 = vadd.f32 0.0, %v4219
        %v4221 = vpop.f32.mrb[0].mxu0
        %v4222 = vpop.f32.mrb[0].mxu0
        %v4223 = vadd.f32 0.0, %v4222
        %v4224 = vpop.f32.mrb[0].mxu0
        %4225 = vmatprep.mubr.bf16.mxu0 0
        %4226 = vmatmul.mubr.bf16.gmra.mrb[0].mxu0 %v4090
        %v4227 = vpop.f32.mrb[0].mxu0
        %v4228 = vpop.f32.mrb[0].mxu0
        %v4229 = vpop.f32.mrb[0].mxu0
        %v4230 = vadd.f32 0.0, %v4229
        %v4231 = vpop.f32.mrb[0].mxu0
        %4232 = vmatprep.mubr.bf16.mxu0 0
        %4233 = vmatmul.mubr.bf16.gmra.mrb[0].mxu0 %v4091
        %v4234 = vpop.f32.mrb[0].mxu0
        %v4235 = vadd.f32 0.0, %v4234
        %v4236 = vpop.f32.mrb[0].mxu0
        %v4237 = vpop.f32.mrb[0].mxu0
        %v4238 = vpop.f32.mrb[0].mxu0
        %4239 = vmatprep.mubr.bf16.mxu0 0
        %4240 = vmatmul.mubr.bf16.gmra.mrb[0].mxu0 %v4092
        %v4241 = vpop.f32.mrb[0].mxu0
        %v4242 = vadd.f32 0.0, %v4241
        %v4243 = vpop.f32.mrb[0].mxu0
        %v4244 = vpop.f32.mrb[0].mxu0
        %v4245 = vadd.f32 0.0, %v4244
        %v4246 = vpop.f32.mrb[0].mxu0
        %4247 = vmatprep.mubr.bf16.mxu0 0
        %4248 = vmatmul.mubr.bf16.gmra.mrb[0].mxu0 %v4093
        %v4249 = vpop.f32.mrb[0].mxu0
        %v4250 = vpop.f32.mrb[0].mxu0
        %v4251 = vpop.f32.mrb[0].mxu0
        %v4252 = vadd.f32 0.0, %v4251
        %v4253 = vpop.f32.mrb[0].mxu0
        %4254 = vmatprep.mubr.bf16.mxu0 0
        %4255 = vmatmul.mubr.bf16.gmra.mrb[0].mxu0 %v4094
        %v4256 = vpop.f32.mrb[0].mxu0
        %v4257 = vadd.f32 0.0, %v4256
        %v4258 = vpop.f32.mrb[0].mxu0
        %v4259 = vpop.f32.mrb[0].mxu0
        %v4260 = vpop.f32.mrb[0].mxu0
        %4261 = vmatprep.mubr.bf16.mxu0 0
        %4262 = vmatmul.mubr.bf16.gmra.mrb[0].mxu0 %v4095
        %v4263 = vpop.f32.mrb[0].mxu0
        %v4264 = vadd.f32 0.0, %v4263
        %v4265 = vpop.f32.mrb[0].mxu0
        %v4266 = vpop.f32.mrb[0].mxu0
        %v4267 = vadd.f32 0.0, %v4266
        %v4268 = vpop.f32.mrb[0].mxu0
        %4269 = vmatprep.mubr.bf16.mxu0 0
        %4270 = vmatmul.mubr.bf16.gmra.mrb[0].mxu0 %v4096
        %v4271 = vpop.f32.mrb[0].mxu0
        %v4272 = vpop.f32.mrb[0].mxu0
        %v4273 = vpop.f32.mrb[0].mxu0
        %v4274 = vadd.f32 0.0, %v4273
        %v4275 = vpop.f32.mrb[0].mxu0
        %4276 = vmatprep.mubr.bf16.mxu0 0
        %4277 = vmatmul.mubr.bf16.gmra.mrb[0].mxu0 %v4097
        %v4278 = vpop.f32.mrb[0].mxu0
        %v4279 = vadd.f32 0.0, %v4278
        %v4280 = vpop.f32.mrb[0].mxu0
        %v4281 = vpop.f32.mrb[0].mxu0
        %v4282 = vpop.f32.mrb[0].mxu0
        %4283 = vmatprep.mubr.bf16.mxu0 0
        %4284 = vmatmul.mubr.bf16.gmra.mrb[0].mxu0 %v4098
        %v4285 = vpop.f32.mrb[0].mxu0
        %v4286 = vadd.f32 0.0, %v4285
        %v4287 = vpop.f32.mrb[0].mxu0
        %v4288 = vpop.f32.mrb[0].mxu0
        %v4289 = vadd.f32 0.0, %v4288
        %v4290 = vpop.f32.mrb[0].mxu0
        %4291 = vmatprep.mubr.bf16.mxu0 0
        %4292 = vmatmul.mubr.bf16.gmra.mrb[0].mxu0 %v4099
        %v4293 = vpop.f32.mrb[0].mxu0
        %v4294 = vpop.f32.mrb[0].mxu0
        %v4295 = vpop.f32.mrb[0].mxu0
        %v4296 = vadd.f32 0.0, %v4295
        %v4297 = vpop.f32.mrb[0].mxu0
        %4298 = vmatprep.mubr.bf16.mxu0 0
        %4299 = vmatmul.mubr.bf16.gmra.mrb[0].mxu0 %v4100
        %v4300 = vpop.f32.mrb[0].mxu0
        %v4301 = vadd.f32 0.0, %v4300
        %v4302 = vpop.f32.mrb[0].mxu0
        %v4303 = vpop.f32.mrb[0].mxu0
        %v4304 = vpop.f32.mrb[0].mxu0
        %4305 = vmatprep.mubr.bf16.mxu0 0
        %4306 = vmatmul.mubr.bf16.gmra.mrb[0].mxu0 %v4101
        %v4307 = vpop.f32.mrb[0].mxu0
        %v4308 = vadd.f32 0.0, %v4307
        %v4309 = vpop.f32.mrb[0].mxu0
        %v4310 = vpop.f32.mrb[0].mxu0
        %v4311 = vadd.f32 0.0, %v4310
        %v4312 = vpop.f32.mrb[0].mxu0
        %4313 = vmatprep.mubr.bf16.mxu0 0
        %4314 = vmatmul.mubr.bf16.gmra.mrb[0].mxu0 %v4102
        %v4315 = vpop.f32.mrb[0].mxu0
        %v4316 = vpop.f32.mrb[0].mxu0
        %v4317 = vpop.f32.mrb[0].mxu0
        %v4318 = vadd.f32 0.0, %v4317
        %v4319 = vpop.f32.mrb[0].mxu0
        %4320 = vmatprep.mubr.bf16.mxu0 0
        %4321 = vmatmul.mubr.bf16.gmra.mrb[0].mxu0 %v4103
        %v4322 = vpop.f32.mrb[0].mxu0
        %v4323 = vadd.f32 0.0, %v4322
        %v4324 = vpop.f32.mrb[0].mxu0
        %v4325 = vpop.f32.mrb[0].mxu0
        %v4326 = vpop.f32.mrb[0].mxu0
        %4327 = vmatprep.mubr.bf16.mxu0 0
        %4328 = vmatmul.mubr.bf16.gmra.mrb[0].mxu0 %v4104
        %v4329 = vpop.f32.mrb[0].mxu0
        %v4330 = vadd.f32 0.0, %v4329
        %v4331 = vpop.f32.mrb[0].mxu0
        %v4332 = vpop.f32.mrb[0].mxu0
        %v4333 = vadd.f32 0.0, %v4332
        %v4334 = vpop.f32.mrb[0].mxu0
        %4335 = vmatprep.mubr.bf16.mxu0 0
        %4336 = vmatmul.mubr.bf16.gmra.mrb[0].mxu0 %v4105
        %v4337 = vpop.f32.mrb[0].mxu0
        %v4338 = vpop.f32.mrb[0].mxu0
        %v4339 = vpop.f32.mrb[0].mxu0
        %v4340 = vadd.f32 0.0, %v4339
        %v4341 = vpop.f32.mrb[0].mxu0
        %4342 = vmatprep.mubr.bf16.mxu0 0
        %4343 = vmatmul.mubr.bf16.gmra.mrb[0].mxu0 %v4106
        %v4344 = vpop.f32.mrb[0].mxu0
        %v4345 = vadd.f32 0.0, %v4344
        %v4346 = vpop.f32.mrb[0].mxu0
        %v4347 = vpop.f32.mrb[0].mxu0
        %v4348 = vpop.f32.mrb[0].mxu0
        %4349 = vmatprep.mubr.bf16.mxu0 0
        %4350 = vmatmul.mubr.bf16.gmra.mrb[0].mxu0 %v4107
        %v4351 = vpop.f32.mrb[0].mxu0
        %v4352 = vadd.f32 0.0, %v4351
        %v4353 = vpop.f32.mrb[0].mxu0
        %v4354 = vpop.f32.mrb[0].mxu0
        %v4355 = vadd.f32 0.0, %v4354
        %v4356 = vpop.f32.mrb[0].mxu0
        %4357 = vmatprep.mubr.bf16.mxu0 0
        %4358 = vmatmul.mubr.bf16.gmra.mrb[0].mxu0 %v4108
        %v4359 = vpop.f32.mrb[0].mxu0
        %v4360 = vpop.f32.mrb[0].mxu0
        %v4361 = vpop.f32.mrb[0].mxu0
        %v4362 = vadd.f32 0.0, %v4361
        %v4363 = vpop.f32.mrb[0].mxu0
        %4364 = vmatprep.mubr.bf16.mxu0 0
        %4365 = vmatmul.mubr.bf16.gmra.mrb[0].mxu0 %v4109
        %v4366 = vpop.f32.mrb[0].mxu0
        %v4367 = vadd.f32 0.0, %v4366
        %v4368 = vpop.f32.mrb[0].mxu0
        %v4369 = vpop.f32.mrb[0].mxu0
        %v4370 = vpop.f32.mrb[0].mxu0
        %4371 = vmatprep.mubr.bf16.mxu0 0
        %4372 = vmatmul.mubr.bf16.gmra.mrb[0].mxu0 %v4110
        %v4373 = vpop.f32.mrb[0].mxu0
        %v4374 = vadd.f32 0.0, %v4373
        %v4375 = vpop.f32.mrb[0].mxu0
        %v4376 = vpop.f32.mrb[0].mxu0
        %v4377 = vadd.f32 0.0, %v4376
        %v4378 = vpop.f32.mrb[0].mxu0
        %4379 = vmatprep.mubr.bf16.mxu0 0
        %4380 = vmatmul.mubr.bf16.gmra.mrb[0].mxu0 %v4111
        %v4381 = vpop.f32.mrb[0].mxu0
        %v4382 = vpop.f32.mrb[0].mxu0
        %v4383 = vpop.f32.mrb[0].mxu0
        %v4384 = vadd.f32 0.0, %v4383
        %v4385 = vpop.f32.mrb[0].mxu0
        %4386 = vmatprep.mubr.bf16.mxu0 0
        %4387 = vmatmul.mubr.bf16.gmra.mrb[0].mxu0 %v4112
        %v4388 = vpop.f32.mrb[0].mxu0
        %v4389 = vadd.f32 0.0, %v4388
        %v4390 = vpop.f32.mrb[0].mxu0
        %v4391 = vpop.f32.mrb[0].mxu0
        %v4392 = vpop.f32.mrb[0].mxu0
        %4393 = vdwg.mxu0
        %v4394 = vadd.f32 %v3913, %v4220
        %v4395 = vadd.f32 %v3914, %v4223
        %v4396 = vadd.f32 %v3915, %v4230
        %v4397 = vadd.f32 %v3916, %v4235
        %v4398 = vadd.f32 %v3917, %v4242
        %v4399 = vadd.f32 %v3918, %v4245
        %v4400 = vadd.f32 %v3919, %v4252
        %v4401 = vadd.f32 %v3920, %v4257
        %v4402 = vadd.f32 %v3921, %v4264
        %v4403 = vadd.f32 %v3922, %v4267
        %v4404 = vadd.f32 %v3923, %v4274
        %v4405 = vadd.f32 %v3924, %v4279
        %v4406 = vadd.f32 %v3925, %v4286
        %v4407 = vadd.f32 %v3926, %v4289
        %v4408 = vadd.f32 %v3927, %v4296
        %v4409 = vadd.f32 %v3928, %v4301
        %v4410 = vadd.f32 %v3929, %v4308
        %v4411 = vadd.f32 %v3930, %v4311
        %v4412 = vadd.f32 %v3931, %v4318
        %v4413 = vadd.f32 %v3932, %v4323
        %v4414 = vadd.f32 %v3933, %v4330
        %v4415 = vadd.f32 %v3934, %v4333
        %v4416 = vadd.f32 %v3935, %v4340
        %v4417 = vadd.f32 %v3936, %v4345
        %v4418 = vadd.f32 %v3937, %v4352
        %v4419 = vadd.f32 %v3938, %v4355
        %v4420 = vadd.f32 %v3939, %v4362
        %v4421 = vadd.f32 %v3940, %v4367
        %v4422 = vadd.f32 %v3941, %v4374
        %v4423 = vadd.f32 %v3942, %v4377
        %v4424 = vadd.f32 %v3943, %v4384
        %v4425 = vadd.f32 %v3944, %v4389
        %v4426 = vld [vmem:[#allocation2 + $0xc] sm:$0xf]
        %v4427 = vld [vmem:[#allocation2 + $0x10] sm:$0xf]
        %v4428 = vld [vmem:[#allocation2 + $0x14] sm:$0xf]
        %v4429 = vld [vmem:[#allocation2 + $0x18] sm:$0xf]
        %v4430 = vld [vmem:[#allocation2 + $0x1c] sm:$0xf]
        %v4431 = vld [vmem:[#allocation2 + $0x20] sm:$0xf]
        %v4432 = vld [vmem:[#allocation2 + $0x24] sm:$0xf]
        %v4433 = vld [vmem:[#allocation2 + $0x28] sm:$0xf]
        %v4434 = vld [vmem:[#allocation2 + $0x2c] sm:$0xf]
        %v4435 = vld [vmem:[#allocation2 + $0x30] sm:$0xf]
        %v4436 = vld [vmem:[#allocation2 + $0x34] sm:$0xf]
        %v4437 = vld [vmem:[#allocation2 + $0x38] sm:$0xf]
        %v4438 = vld [vmem:[#allocation2 + $0x3c] sm:$0xf]
        %v4439 = vld [vmem:[#allocation2 + $0x40] sm:$0xf]
        %v4440 = vld [vmem:[#allocation2 + $0x44] sm:$0xf]
        %v4441 = vld [vmem:[#allocation2 + $0x48] sm:$0xf]
        %v4442 = vld [vmem:[#allocation2 + $0x4c] sm:$0xf]
        %v4443 = vld [vmem:[#allocation2 + $0x50] sm:$0xf]
        %v4444 = vld [vmem:[#allocation2 + $0x54] sm:$0xf]
        %v4445 = vld [vmem:[#allocation2 + $0x58] sm:$0xf]
        %v4446 = vld [vmem:[#allocation2 + $0x5c] sm:$0xf]
        %v4447 = vld [vmem:[#allocation2 + $0x60] sm:$0xf]
        %v4448 = vld [vmem:[#allocation2 + $0x64] sm:$0xf]
        %v4449 = vld [vmem:[#allocation2 + $0x68] sm:$0xf]
        %v4450 = vld [vmem:[#allocation2 + $0x6c] sm:$0xf]
        %v4451 = vld [vmem:[#allocation2 + $0x70] sm:$0xf]
        %v4452 = vld [vmem:[#allocation2 + $0x74] sm:$0xf]
        %v4453 = vld [vmem:[#allocation2 + $0x78] sm:$0xf]
        %v4454 = vld [vmem:[#allocation2 + $0x7c] sm:$0xf]
        %v4455 = vld [vmem:[#allocation2 + $0x80] sm:$0xf]
        %v4456 = vld [vmem:[#allocation2 + $0x84] sm:$0xf]
        %v4457 = vld [vmem:[#allocation2 + $0x88] sm:$0xf]
        %v4458 = vld [vmem:[#allocation2 + $0x8c] sm:$0xf]
        %v4459 = vld [vmem:[#allocation2 + $0x90] sm:$0xf]
        %v4460 = vld [vmem:[#allocation2 + $0x94] sm:$0xf]
        %v4461 = vld [vmem:[#allocation2 + $0x98] sm:$0xf]
        %v4462 = vld [vmem:[#allocation2 + $0x9c] sm:$0xf]
        %v4463 = vld [vmem:[#allocation2 + $0xa0] sm:$0xf]
        %v4464 = vld [vmem:[#allocation2 + $0xa4] sm:$0xf]
        %v4465 = vld [vmem:[#allocation2 + $0xa8] sm:$0xf]
        %v4466 = vld [vmem:[#allocation2 + $0xac] sm:$0xf]
        %v4467 = vld [vmem:[#allocation2 + $0xb0] sm:$0xf]
        %v4468 = vld [vmem:[#allocation2 + $0xb4] sm:$0xf]
        %v4469 = vld [vmem:[#allocation2 + $0xb8] sm:$0xf]
        %v4470 = vld [vmem:[#allocation2 + $0xbc] sm:$0xf]
        %v4471 = vld [vmem:[#allocation2 + $0xc0] sm:$0xf]
        %v4472 = vld [vmem:[#allocation2 + $0xc4] sm:$0xf]
        %v4473 = vld [vmem:[#allocation2 + $0xc8] sm:$0xf]
        %v4474 = vld [vmem:[#allocation2 + $0xcc] sm:$0x1]
        %v4524 = vunpack.c.l.b16 %v4426
        %v4525 = vunpack.c.l.b16 %v4427
        %v4526 = vunpack.c.l.b16 %v4428
        %v4527 = vunpack.c.l.b16 %v4429
        %v4528 = vunpack.c.l.b16 %v4430
        %v4529 = vunpack.c.l.b16 %v4431
        %v4530 = vunpack.c.l.b16 %v4432
        %v4531 = vunpack.c.l.b16 %v4433
        %v4532 = vunpack.c.l.b16 %v4434
        %v4533 = vunpack.c.l.b16 %v4435
        %v4534 = vunpack.c.l.b16 %v4436
        %v4535 = vunpack.c.l.b16 %v4437
        %v4536 = vunpack.c.l.b16 %v4438
        %v4537 = vunpack.c.l.b16 %v4439
        %v4538 = vunpack.c.l.b16 %v4440
        %v4539 = vunpack.c.l.b16 %v4441
        %v4540 = vunpack.c.l.b16 %v4442
        %v4541 = vunpack.c.l.b16 %v4443
        %v4542 = vunpack.c.l.b16 %v4444
        %v4543 = vunpack.c.l.b16 %v4445
        %v4544 = vunpack.c.l.b16 %v4446
        %v4545 = vunpack.c.l.b16 %v4447
        %v4546 = vunpack.c.l.b16 %v4448
        %v4547 = vunpack.c.l.b16 %v4449
        %v4548 = vunpack.c.l.b16 %v4450
        %v4549 = vunpack.c.l.b16 %v4451
        %v4550 = vunpack.c.l.b16 %v4452
        %v4551 = vunpack.c.l.b16 %v4453
        %v4552 = vunpack.c.l.b16 %v4454
        %v4553 = vunpack.c.l.b16 %v4455
        %v4554 = vunpack.c.l.b16 %v4456
        %v4555 = vunpack.c.l.b16 %v4457
        %v4556 = vunpack.c.l.b16 %v4458
        %v4557 = vunpack.c.l.b16 %v4459
        %v4558 = vunpack.c.l.b16 %v4460
        %v4559 = vunpack.c.l.b16 %v4461
        %v4560 = vunpack.c.l.b16 %v4462
        %v4561 = vunpack.c.l.b16 %v4463
        %v4562 = vunpack.c.l.b16 %v4464
        %v4563 = vunpack.c.l.b16 %v4465
        %v4564 = vunpack.c.l.b16 %v4466
        %v4565 = vunpack.c.l.b16 %v4467
        %v4566 = vunpack.c.l.b16 %v4468
        %v4567 = vunpack.c.l.b16 %v4469
        %v4568 = vunpack.c.l.b16 %v4470
        %v4569 = vunpack.c.l.b16 %v4471
        %v4570 = vunpack.c.l.b16 %v4472
        %v4571 = vunpack.c.l.b16 %v4473
        %v4572 = vunpack.c.l.b16 %v4474
        %v4573 = vpack.c.b16 %v4525, %v4524
        %v4574 = vpack.c.b16 %v4527, %v4526
        %v4575 = vpack.c.b16 %v4529, %v4528
        %v4576 = vpack.c.b16 %v4531, %v4530
        %v4577 = vpack.c.b16 %v4533, %v4532
        %v4578 = vpack.c.b16 %v4535, %v4534
        %v4579 = vpack.c.b16 %v4537, %v4536
        %v4580 = vpack.c.b16 %v4539, %v4538
        %v4581 = vpack.c.b16 %v4541, %v4540
        %v4582 = vpack.c.b16 %v4543, %v4542
        %v4583 = vpack.c.b16 %v4545, %v4544
        %v4584 = vpack.c.b16 %v4547, %v4546
        %v4585 = vpack.c.b16 %v4549, %v4548
        %v4586 = vpack.c.b16 %v4551, %v4550
        %v4587 = vpack.c.b16 %v4553, %v4552
        %v4588 = vpack.c.b16 %v4555, %v4554
        %v4589 = vpack.c.b16 %v4557, %v4556
        %v4590 = vpack.c.b16 %v4559, %v4558
        %v4591 = vpack.c.b16 %v4561, %v4560
        %v4592 = vpack.c.b16 %v4563, %v4562
        %v4593 = vpack.c.b16 %v4565, %v4564
        %v4594 = vpack.c.b16 %v4567, %v4566
        %v4595 = vpack.c.b16 %v4569, %v4568
        %v4596 = vpack.c.b16 %v4571, %v4570
        %v4597 = vpack.c.b16 %v4572, %v4572
        %v4599 = vshrl.u32 %v4573, 16
        %v4601 = vshll.u32 %v4573, 16
        %v4603 = vrot.slane %v4601, 1
        %v4604 = vor.u32 %v4599, %v4603
        %v4606 = vshll.u32 %v4574, 16
        %v4608 = vrot.slane %v4606, 1
        %v4609 = vsel %vm2819, %v4604, %v4608
        %v4610 = vshrl.u32 %v4574, 16
        %v4612 = vor.u32 %v4610, %v4608
        %v4614 = vshll.u32 %v4575, 16
        %v4616 = vrot.slane %v4614, 1
        %v4617 = vsel %vm2819, %v4612, %v4616
        %v4618 = vshrl.u32 %v4575, 16
        %v4620 = vor.u32 %v4618, %v4616
        %v4622 = vshll.u32 %v4576, 16
        %v4624 = vrot.slane %v4622, 1
        %v4625 = vsel %vm2819, %v4620, %v4624
        %v4626 = vshrl.u32 %v4576, 16
        %v4628 = vor.u32 %v4626, %v4624
        %v4630 = vshll.u32 %v4577, 16
        %v4632 = vrot.slane %v4630, 1
        %v4633 = vsel %vm2819, %v4628, %v4632
        %v4634 = vshrl.u32 %v4577, 16
        %v4636 = vor.u32 %v4634, %v4632
        %v4638 = vshll.u32 %v4578, 16
        %v4640 = vrot.slane %v4638, 1
        %v4641 = vsel %vm2819, %v4636, %v4640
        %v4642 = vshrl.u32 %v4578, 16
        %v4644 = vor.u32 %v4642, %v4640
        %v4646 = vshll.u32 %v4579, 16
        %v4648 = vrot.slane %v4646, 1
        %v4649 = vsel %vm2819, %v4644, %v4648
        %v4650 = vshrl.u32 %v4579, 16
        %v4652 = vor.u32 %v4650, %v4648
        %v4654 = vshll.u32 %v4580, 16
        %v4656 = vrot.slane %v4654, 1
        %v4657 = vsel %vm2819, %v4652, %v4656
        %v4658 = vshrl.u32 %v4580, 16
        %v4660 = vor.u32 %v4658, %v4656
        %v4662 = vshll.u32 %v4581, 16
        %v4664 = vrot.slane %v4662, 1
        %v4665 = vsel %vm2819, %v4660, %v4664
        %v4666 = vshrl.u32 %v4581, 16
        %v4668 = vor.u32 %v4666, %v4664
        %v4670 = vshll.u32 %v4582, 16
        %v4672 = vrot.slane %v4670, 1
        %v4673 = vsel %vm2819, %v4668, %v4672
        %v4674 = vshrl.u32 %v4582, 16
        %v4676 = vor.u32 %v4674, %v4672
        %v4678 = vshll.u32 %v4583, 16
        %v4680 = vrot.slane %v4678, 1
        %v4681 = vsel %vm2819, %v4676, %v4680
        %v4682 = vshrl.u32 %v4583, 16
        %v4684 = vor.u32 %v4682, %v4680
        %v4686 = vshll.u32 %v4584, 16
        %v4688 = vrot.slane %v4686, 1
        %v4689 = vsel %vm2819, %v4684, %v4688
        %v4690 = vshrl.u32 %v4584, 16
        %v4692 = vor.u32 %v4690, %v4688
        %v4694 = vshll.u32 %v4585, 16
        %v4696 = vrot.slane %v4694, 1
        %v4697 = vsel %vm2819, %v4692, %v4696
        %v4698 = vshrl.u32 %v4585, 16
        %v4700 = vor.u32 %v4698, %v4696
        %v4702 = vshll.u32 %v4586, 16
        %v4704 = vrot.slane %v4702, 1
        %v4705 = vsel %vm2819, %v4700, %v4704
        %v4706 = vshrl.u32 %v4586, 16
        %v4708 = vor.u32 %v4706, %v4704
        %v4710 = vshll.u32 %v4587, 16
        %v4712 = vrot.slane %v4710, 1
        %v4713 = vsel %vm2819, %v4708, %v4712
        %v4714 = vshrl.u32 %v4587, 16
        %v4716 = vor.u32 %v4714, %v4712
        %v4718 = vshll.u32 %v4588, 16
        %v4720 = vrot.slane %v4718, 1
        %v4721 = vsel %vm2819, %v4716, %v4720
        %v4722 = vshrl.u32 %v4588, 16
        %v4724 = vor.u32 %v4722, %v4720
        %v4726 = vshll.u32 %v4589, 16
        %v4728 = vrot.slane %v4726, 1
        %v4729 = vsel %vm2819, %v4724, %v4728
        %v4730 = vshrl.u32 %v4589, 16
        %v4732 = vor.u32 %v4730, %v4728
        %v4734 = vshll.u32 %v4590, 16
        %v4736 = vrot.slane %v4734, 1
        %v4737 = vsel %vm2819, %v4732, %v4736
        %v4738 = vshrl.u32 %v4590, 16
        %v4740 = vor.u32 %v4738, %v4736
        %v4742 = vshll.u32 %v4591, 16
        %v4744 = vrot.slane %v4742, 1
        %v4745 = vsel %vm2819, %v4740, %v4744
        %v4746 = vshrl.u32 %v4591, 16
        %v4748 = vor.u32 %v4746, %v4744
        %v4750 = vshll.u32 %v4592, 16
        %v4752 = vrot.slane %v4750, 1
        %v4753 = vsel %vm2819, %v4748, %v4752
        %v4754 = vshrl.u32 %v4592, 16
        %v4756 = vor.u32 %v4754, %v4752
        %v4758 = vshll.u32 %v4593, 16
        %v4760 = vrot.slane %v4758, 1
        %v4761 = vsel %vm2819, %v4756, %v4760
        %v4762 = vshrl.u32 %v4593, 16
        %v4764 = vor.u32 %v4762, %v4760
        %v4766 = vshll.u32 %v4594, 16
        %v4768 = vrot.slane %v4766, 1
        %v4769 = vsel %vm2819, %v4764, %v4768
        %v4770 = vshrl.u32 %v4594, 16
        %v4772 = vor.u32 %v4770, %v4768
        %v4774 = vshll.u32 %v4595, 16
        %v4776 = vrot.slane %v4774, 1
        %v4777 = vsel %vm2819, %v4772, %v4776
        %v4778 = vshrl.u32 %v4595, 16
        %v4780 = vor.u32 %v4778, %v4776
        %v4782 = vshll.u32 %v4596, 16
        %v4784 = vrot.slane %v4782, 1
        %v4785 = vsel %vm2819, %v4780, %v4784
        %v4786 = vshrl.u32 %v4596, 16
        %v4788 = vor.u32 %v4786, %v4784
        %v4790 = vshll.u32 %v4597, 16
        %v4792 = vrot.slane %v4790, 1
        %v4793 = vsel %vm2819, %v4788, %v4792
        %v4834 = vunpack.c.l.b16 %v2567
        %v4835 = vunpack.c.l.b16 %v2568
        %v4836 = vunpack.c.l.b16 %v2569
        %v4837 = vunpack.c.l.b16 %v2570
        %v4838 = vunpack.c.l.b16 %v2571
        %v4839 = vunpack.c.l.b16 %v2572
        %v4840 = vunpack.c.l.b16 %v2573
        %v4841 = vunpack.c.l.b16 %v2574
        %v4842 = vunpack.c.l.b16 %v2575
        %v4843 = vunpack.c.l.b16 %v2576
        %v4844 = vunpack.c.l.b16 %v2577
        %v4845 = vunpack.c.l.b16 %v2578
        %v4846 = vunpack.c.l.b16 %v2579
        %v4847 = vunpack.c.l.b16 %v2580
        %v4848 = vunpack.c.l.b16 %v2581
        %v4849 = vunpack.c.l.b16 %v2582
        %v4850 = vpack.c.b16 %v4835, %v4834
        %v4851 = vpack.c.b16 %v4837, %v4836
        %v4852 = vpack.c.b16 %v4839, %v4838
        %v4853 = vpack.c.b16 %v4841, %v4840
        %v4854 = vpack.c.b16 %v4843, %v4842
        %v4855 = vpack.c.b16 %v4845, %v4844
        %v4856 = vpack.c.b16 %v4847, %v4846
        %v4857 = vpack.c.b16 %v4849, %v4848
        %4866 = vmatprep.subr.bf16.mxu0 0
        %4867 = vmatpush1.bf16.msra.mxu0 %v4850
        %4868 = vmatprep.subr.bf16.mxu0 0
        %4869 = vmatpush1.bf16.msra.mxu0 %v4851
        %4870 = vmatprep.subr.bf16.mxu0 0
        %4871 = vmatpush1.bf16.msra.mxu0 %v4852
        %4872 = vmatprep.subr.bf16.mxu0 0
        %4873 = vmatpush1.bf16.msra.mxu0 %v4853
        %4874 = vmatprep.subr.bf16.mxu0 0
        %4875 = vmatpush1.bf16.msra.mxu0 %v4854
        %4876 = vmatprep.subr.bf16.mxu0 0
        %4877 = vmatpush1.bf16.msra.mxu0 %v4855
        %4878 = vmatprep.subr.bf16.mxu0 0
        %4879 = vmatpush1.bf16.msra.mxu0 %v4856
        %4880 = vmatprep.subr.bf16.mxu0 0
        %4881 = vmatpush1.bf16.msra.mxu0 %v4857
        %4882 = vmatprep.subr.bf16.mxu0 0
        %4883 = vmatpush1.bf16.msra.mxu0 0
        %4884 = vmatprep.subr.bf16.mxu0 0
        %4885 = vmatpush1.bf16.msra.mxu0 0
        %4886 = vmatprep.subr.bf16.mxu0 0
        %4887 = vmatpush1.bf16.msra.mxu0 0
        %4888 = vmatprep.subr.bf16.mxu0 0
        %4889 = vmatpush1.bf16.msra.mxu0 0
        %4890 = vmatprep.subr.bf16.mxu0 0
        %4891 = vmatpush1.bf16.msra.mxu0 0
        %4892 = vmatprep.subr.bf16.mxu0 0
        %4893 = vmatpush1.bf16.msra.mxu0 0
        %4894 = vmatprep.subr.bf16.mxu0 0
        %4895 = vmatpush1.bf16.msra.mxu0 0
        %4896 = vmatprep.subr.bf16.mxu0 0
        %4897 = vmatpush1.bf16.msra.mxu0 0
        %4898 = vmatprep.mubr.bf16.mxu0 0
        %4899 = vmatmul.mubr.bf16.gmra.mrb[0].mxu0 %v4609
        %v4900 = vpop.f32.mrb[0].mxu0
        %v4901 = vadd.f32 0.0, %v4900
        %v4902 = vpop.f32.mrb[0].mxu0
        %v4903 = vpop.f32.mrb[0].mxu0
        %v4904 = vadd.f32 0.0, %v4903
        %v4905 = vpop.f32.mrb[0].mxu0
        %4906 = vmatprep.mubr.bf16.mxu0 0
        %4907 = vmatmul.mubr.bf16.gmra.mrb[0].mxu0 %v4617
        %v4908 = vpop.f32.mrb[0].mxu0
        %v4909 = vpop.f32.mrb[0].mxu0
        %v4910 = vpop.f32.mrb[0].mxu0
        %v4911 = vadd.f32 0.0, %v4910
        %v4912 = vpop.f32.mrb[0].mxu0
        %4913 = vmatprep.mubr.bf16.mxu0 0
        %4914 = vmatmul.mubr.bf16.gmra.mrb[0].mxu0 %v4625
        %v4915 = vpop.f32.mrb[0].mxu0
        %v4916 = vadd.f32 0.0, %v4915
        %v4917 = vpop.f32.mrb[0].mxu0
        %v4918 = vpop.f32.mrb[0].mxu0
        %v4919 = vpop.f32.mrb[0].mxu0
        %4920 = vmatprep.mubr.bf16.mxu0 0
        %4921 = vmatmul.mubr.bf16.gmra.mrb[0].mxu0 %v4633
        %v4922 = vpop.f32.mrb[0].mxu0
        %v4923 = vadd.f32 0.0, %v4922
        %v4924 = vpop.f32.mrb[0].mxu0
        %v4925 = vpop.f32.mrb[0].mxu0
        %v4926 = vadd.f32 0.0, %v4925
        %v4927 = vpop.f32.mrb[0].mxu0
        %4928 = vmatprep.mubr.bf16.mxu0 0
        %4929 = vmatmul.mubr.bf16.gmra.mrb[0].mxu0 %v4641
        %v4930 = vpop.f32.mrb[0].mxu0
        %v4931 = vpop.f32.mrb[0].mxu0
        %v4932 = vpop.f32.mrb[0].mxu0
        %v4933 = vadd.f32 0.0, %v4932
        %v4934 = vpop.f32.mrb[0].mxu0
        %4935 = vmatprep.mubr.bf16.mxu0 0
        %4936 = vmatmul.mubr.bf16.gmra.mrb[0].mxu0 %v4649
        %v4937 = vpop.f32.mrb[0].mxu0
        %v4938 = vadd.f32 0.0, %v4937
        %v4939 = vpop.f32.mrb[0].mxu0
        %v4940 = vpop.f32.mrb[0].mxu0
        %v4941 = vpop.f32.mrb[0].mxu0
        %4942 = vmatprep.mubr.bf16.mxu0 0
        %4943 = vmatmul.mubr.bf16.gmra.mrb[0].mxu0 %v4657
        %v4944 = vpop.f32.mrb[0].mxu0
        %v4945 = vadd.f32 0.0, %v4944
        %v4946 = vpop.f32.mrb[0].mxu0
        %v4947 = vpop.f32.mrb[0].mxu0
        %v4948 = vadd.f32 0.0, %v4947
        %v4949 = vpop.f32.mrb[0].mxu0
        %4950 = vmatprep.mubr.bf16.mxu0 0
        %4951 = vmatmul.mubr.bf16.gmra.mrb[0].mxu0 %v4665
        %v4952 = vpop.f32.mrb[0].mxu0
        %v4953 = vpop.f32.mrb[0].mxu0
        %v4954 = vpop.f32.mrb[0].mxu0
        %v4955 = vadd.f32 0.0, %v4954
        %v4956 = vpop.f32.mrb[0].mxu0
        %4957 = vmatprep.mubr.bf16.mxu0 0
        %4958 = vmatmul.mubr.bf16.gmra.mrb[0].mxu0 %v4673
        %v4959 = vpop.f32.mrb[0].mxu0
        %v4960 = vadd.f32 0.0, %v4959
        %v4961 = vpop.f32.mrb[0].mxu0
        %v4962 = vpop.f32.mrb[0].mxu0
        %v4963 = vpop.f32.mrb[0].mxu0
        %4964 = vmatprep.mubr.bf16.mxu0 0
        %4965 = vmatmul.mubr.bf16.gmra.mrb[0].mxu0 %v4681
        %v4966 = vpop.f32.mrb[0].mxu0
        %v4967 = vadd.f32 0.0, %v4966
        %v4968 = vpop.f32.mrb[0].mxu0
        %v4969 = vpop.f32.mrb[0].mxu0
        %v4970 = vadd.f32 0.0, %v4969
        %v4971 = vpop.f32.mrb[0].mxu0
        %4972 = vmatprep.mubr.bf16.mxu0 0
        %4973 = vmatmul.mubr.bf16.gmra.mrb[0].mxu0 %v4689
        %v4974 = vpop.f32.mrb[0].mxu0
        %v4975 = vpop.f32.mrb[0].mxu0
        %v4976 = vpop.f32.mrb[0].mxu0
        %v4977 = vadd.f32 0.0, %v4976
        %v4978 = vpop.f32.mrb[0].mxu0
        %4979 = vmatprep.mubr.bf16.mxu0 0
        %4980 = vmatmul.mubr.bf16.gmra.mrb[0].mxu0 %v4697
        %v4981 = vpop.f32.mrb[0].mxu0
        %v4982 = vadd.f32 0.0, %v4981
        %v4983 = vpop.f32.mrb[0].mxu0
        %v4984 = vpop.f32.mrb[0].mxu0
        %v4985 = vpop.f32.mrb[0].mxu0
        %4986 = vmatprep.mubr.bf16.mxu0 0
        %4987 = vmatmul.mubr.bf16.gmra.mrb[0].mxu0 %v4705
        %v4988 = vpop.f32.mrb[0].mxu0
        %v4989 = vadd.f32 0.0, %v4988
        %v4990 = vpop.f32.mrb[0].mxu0
        %v4991 = vpop.f32.mrb[0].mxu0
        %v4992 = vadd.f32 0.0, %v4991
        %v4993 = vpop.f32.mrb[0].mxu0
        %4994 = vmatprep.mubr.bf16.mxu0 0
        %4995 = vmatmul.mubr.bf16.gmra.mrb[0].mxu0 %v4713
        %v4996 = vpop.f32.mrb[0].mxu0
        %v4997 = vpop.f32.mrb[0].mxu0
        %v4998 = vpop.f32.mrb[0].mxu0
        %v4999 = vadd.f32 0.0, %v4998
        %v5000 = vpop.f32.mrb[0].mxu0
        %5001 = vmatprep.mubr.bf16.mxu0 0
        %5002 = vmatmul.mubr.bf16.gmra.mrb[0].mxu0 %v4721
        %v5003 = vpop.f32.mrb[0].mxu0
        %v5004 = vadd.f32 0.0, %v5003
        %v5005 = vpop.f32.mrb[0].mxu0
        %v5006 = vpop.f32.mrb[0].mxu0
        %v5007 = vpop.f32.mrb[0].mxu0
        %5008 = vmatprep.mubr.bf16.mxu0 0
        %5009 = vmatmul.mubr.bf16.gmra.mrb[0].mxu0 %v4729
        %v5010 = vpop.f32.mrb[0].mxu0
        %v5011 = vadd.f32 0.0, %v5010
        %v5012 = vpop.f32.mrb[0].mxu0
        %v5013 = vpop.f32.mrb[0].mxu0
        %v5014 = vadd.f32 0.0, %v5013
        %v5015 = vpop.f32.mrb[0].mxu0
        %5016 = vmatprep.mubr.bf16.mxu0 0
        %5017 = vmatmul.mubr.bf16.gmra.mrb[0].mxu0 %v4737
        %v5018 = vpop.f32.mrb[0].mxu0
        %v5019 = vpop.f32.mrb[0].mxu0
        %v5020 = vpop.f32.mrb[0].mxu0
        %v5021 = vadd.f32 0.0, %v5020
        %v5022 = vpop.f32.mrb[0].mxu0
        %5023 = vmatprep.mubr.bf16.mxu0 0
        %5024 = vmatmul.mubr.bf16.gmra.mrb[0].mxu0 %v4745
        %v5025 = vpop.f32.mrb[0].mxu0
        %v5026 = vadd.f32 0.0, %v5025
        %v5027 = vpop.f32.mrb[0].mxu0
        %v5028 = vpop.f32.mrb[0].mxu0
        %v5029 = vpop.f32.mrb[0].mxu0
        %5030 = vmatprep.mubr.bf16.mxu0 0
        %5031 = vmatmul.mubr.bf16.gmra.mrb[0].mxu0 %v4753
        %v5032 = vpop.f32.mrb[0].mxu0
        %v5033 = vadd.f32 0.0, %v5032
        %v5034 = vpop.f32.mrb[0].mxu0
        %v5035 = vpop.f32.mrb[0].mxu0
        %v5036 = vadd.f32 0.0, %v5035
        %v5037 = vpop.f32.mrb[0].mxu0
        %5038 = vmatprep.mubr.bf16.mxu0 0
        %5039 = vmatmul.mubr.bf16.gmra.mrb[0].mxu0 %v4761
        %v5040 = vpop.f32.mrb[0].mxu0
        %v5041 = vpop.f32.mrb[0].mxu0
        %v5042 = vpop.f32.mrb[0].mxu0
        %v5043 = vadd.f32 0.0, %v5042
        %v5044 = vpop.f32.mrb[0].mxu0
        %5045 = vmatprep.mubr.bf16.mxu0 0
        %5046 = vmatmul.mubr.bf16.gmra.mrb[0].mxu0 %v4769
        %v5047 = vpop.f32.mrb[0].mxu0
        %v5048 = vadd.f32 0.0, %v5047
        %v5049 = vpop.f32.mrb[0].mxu0
        %v5050 = vpop.f32.mrb[0].mxu0
        %v5051 = vpop.f32.mrb[0].mxu0
        %5052 = vmatprep.mubr.bf16.mxu0 0
        %5053 = vmatmul.mubr.bf16.gmra.mrb[0].mxu0 %v4777
        %v5054 = vpop.f32.mrb[0].mxu0
        %v5055 = vadd.f32 0.0, %v5054
        %v5056 = vpop.f32.mrb[0].mxu0
        %v5057 = vpop.f32.mrb[0].mxu0
        %v5058 = vadd.f32 0.0, %v5057
        %v5059 = vpop.f32.mrb[0].mxu0
        %5060 = vmatprep.mubr.bf16.mxu0 0
        %5061 = vmatmul.mubr.bf16.gmra.mrb[0].mxu0 %v4785
        %v5062 = vpop.f32.mrb[0].mxu0
        %v5063 = vpop.f32.mrb[0].mxu0
        %v5064 = vpop.f32.mrb[0].mxu0
        %v5065 = vadd.f32 0.0, %v5064
        %v5066 = vpop.f32.mrb[0].mxu0
        %5067 = vmatprep.mubr.bf16.mxu0 0
        %5068 = vmatmul.mubr.bf16.gmra.mrb[0].mxu0 %v4793
        %v5069 = vpop.f32.mrb[0].mxu0
        %v5070 = vadd.f32 0.0, %v5069
        %v5071 = vpop.f32.mrb[0].mxu0
        %v5072 = vpop.f32.mrb[0].mxu0
        %v5073 = vpop.f32.mrb[0].mxu0
        %5074 = vdwg.mxu0
        %v5075 = vadd.f32 %v4394, %v4901
        %v5076 = vadd.f32 %v4395, %v4904
        %v5077 = vadd.f32 %v4396, %v4911
        %v5078 = vadd.f32 %v4397, %v4916
        %v5079 = vadd.f32 %v4398, %v4923
        %v5080 = vadd.f32 %v4399, %v4926
        %v5081 = vadd.f32 %v4400, %v4933
        %v5082 = vadd.f32 %v4401, %v4938
        %v5083 = vadd.f32 %v4402, %v4945
        %v5084 = vadd.f32 %v4403, %v4948
        %v5085 = vadd.f32 %v4404, %v4955
        %v5086 = vadd.f32 %v4405, %v4960
        %v5087 = vadd.f32 %v4406, %v4967
        %v5088 = vadd.f32 %v4407, %v4970
        %v5089 = vadd.f32 %v4408, %v4977
        %v5090 = vadd.f32 %v4409, %v4982
        %v5091 = vadd.f32 %v4410, %v4989
        %v5092 = vadd.f32 %v4411, %v4992
        %v5093 = vadd.f32 %v4412, %v4999
        %v5094 = vadd.f32 %v4413, %v5004
        %v5095 = vadd.f32 %v4414, %v5011
        %v5096 = vadd.f32 %v4415, %v5014
        %v5097 = vadd.f32 %v4416, %v5021
        %v5098 = vadd.f32 %v4417, %v5026
        %v5099 = vadd.f32 %v4418, %v5033
        %v5100 = vadd.f32 %v4419, %v5036
        %v5101 = vadd.f32 %v4420, %v5043
        %v5102 = vadd.f32 %v4421, %v5048
        %v5103 = vadd.f32 %v4422, %v5055
        %v5104 = vadd.f32 %v4423, %v5058
        %v5105 = vadd.f32 %v4424, %v5065
        %v5106 = vadd.f32 %v4425, %v5070
        %v5107 = vld [vmem:[#allocation2 + $0xc] sm:$0xe]
        %v5109 = vunpack.c.l.b16 %v5107
        %v5110 = vpack.c.b16 %v4525, %v5109
        %v5111 = vrot.slane %v5110, 1
        %v5112 = vrot.slane %v4574, 1
        %v5113 = vsel %vm3582, %v5111, %v5112
        %v5114 = vrot.slane %v4575, 1
        %v5115 = vsel %vm3582, %v5112, %v5114
        %v5116 = vrot.slane %v4576, 1
        %v5117 = vsel %vm3582, %v5114, %v5116
        %v5118 = vrot.slane %v4577, 1
        %v5119 = vsel %vm3582, %v5116, %v5118
        %v5120 = vrot.slane %v4578, 1
        %v5121 = vsel %vm3582, %v5118, %v5120
        %v5122 = vrot.slane %v4579, 1
        %v5123 = vsel %vm3582, %v5120, %v5122
        %v5124 = vrot.slane %v4580, 1
        %v5125 = vsel %vm3582, %v5122, %v5124
        %v5126 = vrot.slane %v4581, 1
        %v5127 = vsel %vm3582, %v5124, %v5126
        %v5128 = vrot.slane %v4582, 1
        %v5129 = vsel %vm3582, %v5126, %v5128
        %v5130 = vrot.slane %v4583, 1
        %v5131 = vsel %vm3582, %v5128, %v5130
        %v5132 = vrot.slane %v4584, 1
        %v5133 = vsel %vm3582, %v5130, %v5132
        %v5134 = vrot.slane %v4585, 1
        %v5135 = vsel %vm3582, %v5132, %v5134
        %v5136 = vrot.slane %v4586, 1
        %v5137 = vsel %vm3582, %v5134, %v5136
        %v5138 = vrot.slane %v4587, 1
        %v5139 = vsel %vm3582, %v5136, %v5138
        %v5140 = vrot.slane %v4588, 1
        %v5141 = vsel %vm3582, %v5138, %v5140
        %v5142 = vrot.slane %v4589, 1
        %v5143 = vsel %vm3582, %v5140, %v5142
        %v5144 = vrot.slane %v4590, 1
        %v5145 = vsel %vm3582, %v5142, %v5144
        %v5146 = vrot.slane %v4591, 1
        %v5147 = vsel %vm3582, %v5144, %v5146
        %v5148 = vrot.slane %v4592, 1
        %v5149 = vsel %vm3582, %v5146, %v5148
        %v5150 = vrot.slane %v4593, 1
        %v5151 = vsel %vm3582, %v5148, %v5150
        %v5152 = vrot.slane %v4594, 1
        %v5153 = vsel %vm3582, %v5150, %v5152
        %v5154 = vrot.slane %v4595, 1
        %v5155 = vsel %vm3582, %v5152, %v5154
        %v5156 = vrot.slane %v4596, 1
        %v5157 = vsel %vm3582, %v5154, %v5156
        %v5158 = vrot.slane %v4597, 1
        %v5159 = vsel %vm3582, %v5156, %v5158
        %v5200 = vunpack.c.l.b16 %v2583
        %v5201 = vunpack.c.l.b16 %v2584
        %v5202 = vunpack.c.l.b16 %v2585
        %v5203 = vunpack.c.l.b16 %v2586
        %v5204 = vunpack.c.l.b16 %v2587
        %v5205 = vunpack.c.l.b16 %v2588
        %v5206 = vunpack.c.l.b16 %v2589
        %v5207 = vunpack.c.l.b16 %v2590
        %v5208 = vunpack.c.l.b16 %v2591
        %v5209 = vunpack.c.l.b16 %v2592
        %v5210 = vunpack.c.l.b16 %v2593
        %v5211 = vunpack.c.l.b16 %v2594
        %v5212 = vunpack.c.l.b16 %v2595
        %v5213 = vunpack.c.l.b16 %v2596
        %v5214 = vunpack.c.l.b16 %v2597
        %v5215 = vunpack.c.l.b16 %v2598
        %v5216 = vpack.c.b16 %v5201, %v5200
        %v5217 = vpack.c.b16 %v5203, %v5202
        %v5218 = vpack.c.b16 %v5205, %v5204
        %v5219 = vpack.c.b16 %v5207, %v5206
        %v5220 = vpack.c.b16 %v5209, %v5208
        %v5221 = vpack.c.b16 %v5211, %v5210
        %v5222 = vpack.c.b16 %v5213, %v5212
        %v5223 = vpack.c.b16 %v5215, %v5214
        %5232 = vmatprep.subr.bf16.mxu0 0
        %5233 = vmatpush1.bf16.msra.mxu0 %v5216
        %5234 = vmatprep.subr.bf16.mxu0 0
        %5235 = vmatpush1.bf16.msra.mxu0 %v5217
        %5236 = vmatprep.subr.bf16.mxu0 0
        %5237 = vmatpush1.bf16.msra.mxu0 %v5218
        %5238 = vmatprep.subr.bf16.mxu0 0
        %5239 = vmatpush1.bf16.msra.mxu0 %v5219
        %5240 = vmatprep.subr.bf16.mxu0 0
        %5241 = vmatpush1.bf16.msra.mxu0 %v5220
        %5242 = vmatprep.subr.bf16.mxu0 0
        %5243 = vmatpush1.bf16.msra.mxu0 %v5221
        %5244 = vmatprep.subr.bf16.mxu0 0
        %5245 = vmatpush1.bf16.msra.mxu0 %v5222
        %5246 = vmatprep.subr.bf16.mxu0 0
        %5247 = vmatpush1.bf16.msra.mxu0 %v5223
        %5248 = vmatprep.subr.bf16.mxu0 0
        %5249 = vmatpush1.bf16.msra.mxu0 0
        %5250 = vmatprep.subr.bf16.mxu0 0
        %5251 = vmatpush1.bf16.msra.mxu0 0
        %5252 = vmatprep.subr.bf16.mxu0 0
        %5253 = vmatpush1.bf16.msra.mxu0 0
        %5254 = vmatprep.subr.bf16.mxu0 0
        %5255 = vmatpush1.bf16.msra.mxu0 0
        %5256 = vmatprep.subr.bf16.mxu0 0
        %5257 = vmatpush1.bf16.msra.mxu0 0
        %5258 = vmatprep.subr.bf16.mxu0 0
        %5259 = vmatpush1.bf16.msra.mxu0 0
        %5260 = vmatprep.subr.bf16.mxu0 0
        %5261 = vmatpush1.bf16.msra.mxu0 0
        %5262 = vmatprep.subr.bf16.mxu0 0
        %5263 = vmatpush1.bf16.msra.mxu0 0
        %5264 = vmatprep.mubr.bf16.mxu0 0
        %5265 = vmatmul.mubr.bf16.gmra.mrb[0].mxu0 %v5113
        %v5266 = vpop.f32.mrb[0].mxu0
        %v5267 = vadd.f32 0.0, %v5266
        %v5268 = vpop.f32.mrb[0].mxu0
        %v5269 = vpop.f32.mrb[0].mxu0
        %v5270 = vadd.f32 0.0, %v5269
        %v5271 = vpop.f32.mrb[0].mxu0
        %5272 = vmatprep.mubr.bf16.mxu0 0
        %5273 = vmatmul.mubr.bf16.gmra.mrb[0].mxu0 %v5115
        %v5274 = vpop.f32.mrb[0].mxu0
        %v5275 = vpop.f32.mrb[0].mxu0
        %v5276 = vpop.f32.mrb[0].mxu0
        %v5277 = vadd.f32 0.0, %v5276
        %v5278 = vpop.f32.mrb[0].mxu0
        %5279 = vmatprep.mubr.bf16.mxu0 0
        %5280 = vmatmul.mubr.bf16.gmra.mrb[0].mxu0 %v5117
        %v5281 = vpop.f32.mrb[0].mxu0
        %v5282 = vadd.f32 0.0, %v5281
        %v5283 = vpop.f32.mrb[0].mxu0
        %v5284 = vpop.f32.mrb[0].mxu0
        %v5285 = vpop.f32.mrb[0].mxu0
        %5286 = vmatprep.mubr.bf16.mxu0 0
        %5287 = vmatmul.mubr.bf16.gmra.mrb[0].mxu0 %v5119
        %v5288 = vpop.f32.mrb[0].mxu0
        %v5289 = vadd.f32 0.0, %v5288
        %v5290 = vpop.f32.mrb[0].mxu0
        %v5291 = vpop.f32.mrb[0].mxu0
        %v5292 = vadd.f32 0.0, %v5291
        %v5293 = vpop.f32.mrb[0].mxu0
        %5294 = vmatprep.mubr.bf16.mxu0 0
        %5295 = vmatmul.mubr.bf16.gmra.mrb[0].mxu0 %v5121
        %v5296 = vpop.f32.mrb[0].mxu0
        %v5297 = vpop.f32.mrb[0].mxu0
        %v5298 = vpop.f32.mrb[0].mxu0
        %v5299 = vadd.f32 0.0, %v5298
        %v5300 = vpop.f32.mrb[0].mxu0
        %5301 = vmatprep.mubr.bf16.mxu0 0
        %5302 = vmatmul.mubr.bf16.gmra.mrb[0].mxu0 %v5123
        %v5303 = vpop.f32.mrb[0].mxu0
        %v5304 = vadd.f32 0.0, %v5303
        %v5305 = vpop.f32.mrb[0].mxu0
        %v5306 = vpop.f32.mrb[0].mxu0
        %v5307 = vpop.f32.mrb[0].mxu0
        %5308 = vmatprep.mubr.bf16.mxu0 0
        %5309 = vmatmul.mubr.bf16.gmra.mrb[0].mxu0 %v5125
        %v5310 = vpop.f32.mrb[0].mxu0
        %v5311 = vadd.f32 0.0, %v5310
        %v5312 = vpop.f32.mrb[0].mxu0
        %v5313 = vpop.f32.mrb[0].mxu0
        %v5314 = vadd.f32 0.0, %v5313
        %v5315 = vpop.f32.mrb[0].mxu0
        %5316 = vmatprep.mubr.bf16.mxu0 0
        %5317 = vmatmul.mubr.bf16.gmra.mrb[0].mxu0 %v5127
        %v5318 = vpop.f32.mrb[0].mxu0
        %v5319 = vpop.f32.mrb[0].mxu0
        %v5320 = vpop.f32.mrb[0].mxu0
        %v5321 = vadd.f32 0.0, %v5320
        %v5322 = vpop.f32.mrb[0].mxu0
        %5323 = vmatprep.mubr.bf16.mxu0 0
        %5324 = vmatmul.mubr.bf16.gmra.mrb[0].mxu0 %v5129
        %v5325 = vpop.f32.mrb[0].mxu0
        %v5326 = vadd.f32 0.0, %v5325
        %v5327 = vpop.f32.mrb[0].mxu0
        %v5328 = vpop.f32.mrb[0].mxu0
        %v5329 = vpop.f32.mrb[0].mxu0
        %5330 = vmatprep.mubr.bf16.mxu0 0
        %5331 = vmatmul.mubr.bf16.gmra.mrb[0].mxu0 %v5131
        %v5332 = vpop.f32.mrb[0].mxu0
        %v5333 = vadd.f32 0.0, %v5332
        %v5334 = vpop.f32.mrb[0].mxu0
        %v5335 = vpop.f32.mrb[0].mxu0
        %v5336 = vadd.f32 0.0, %v5335
        %v5337 = vpop.f32.mrb[0].mxu0
        %5338 = vmatprep.mubr.bf16.mxu0 0
        %5339 = vmatmul.mubr.bf16.gmra.mrb[0].mxu0 %v5133
        %v5340 = vpop.f32.mrb[0].mxu0
        %v5341 = vpop.f32.mrb[0].mxu0
        %v5342 = vpop.f32.mrb[0].mxu0
        %v5343 = vadd.f32 0.0, %v5342
        %v5344 = vpop.f32.mrb[0].mxu0
        %5345 = vmatprep.mubr.bf16.mxu0 0
        %5346 = vmatmul.mubr.bf16.gmra.mrb[0].mxu0 %v5135
        %v5347 = vpop.f32.mrb[0].mxu0
        %v5348 = vadd.f32 0.0, %v5347
        %v5349 = vpop.f32.mrb[0].mxu0
        %v5350 = vpop.f32.mrb[0].mxu0
        %v5351 = vpop.f32.mrb[0].mxu0
        %5352 = vmatprep.mubr.bf16.mxu0 0
        %5353 = vmatmul.mubr.bf16.gmra.mrb[0].mxu0 %v5137
        %v5354 = vpop.f32.mrb[0].mxu0
        %v5355 = vadd.f32 0.0, %v5354
        %v5356 = vpop.f32.mrb[0].mxu0
        %v5357 = vpop.f32.mrb[0].mxu0
        %v5358 = vadd.f32 0.0, %v5357
        %v5359 = vpop.f32.mrb[0].mxu0
        %5360 = vmatprep.mubr.bf16.mxu0 0
        %5361 = vmatmul.mubr.bf16.gmra.mrb[0].mxu0 %v5139
        %v5362 = vpop.f32.mrb[0].mxu0
        %v5363 = vpop.f32.mrb[0].mxu0
        %v5364 = vpop.f32.mrb[0].mxu0
        %v5365 = vadd.f32 0.0, %v5364
        %v5366 = vpop.f32.mrb[0].mxu0
        %5367 = vmatprep.mubr.bf16.mxu0 0
        %5368 = vmatmul.mubr.bf16.gmra.mrb[0].mxu0 %v5141
        %v5369 = vpop.f32.mrb[0].mxu0
        %v5370 = vadd.f32 0.0, %v5369
        %v5371 = vpop.f32.mrb[0].mxu0
        %v5372 = vpop.f32.mrb[0].mxu0
        %v5373 = vpop.f32.mrb[0].mxu0
        %5374 = vmatprep.mubr.bf16.mxu0 0
        %5375 = vmatmul.mubr.bf16.gmra.mrb[0].mxu0 %v5143
        %v5376 = vpop.f32.mrb[0].mxu0
        %v5377 = vadd.f32 0.0, %v5376
        %v5378 = vpop.f32.mrb[0].mxu0
        %v5379 = vpop.f32.mrb[0].mxu0
        %v5380 = vadd.f32 0.0, %v5379
        %v5381 = vpop.f32.mrb[0].mxu0
        %5382 = vmatprep.mubr.bf16.mxu0 0
        %5383 = vmatmul.mubr.bf16.gmra.mrb[0].mxu0 %v5145
        %v5384 = vpop.f32.mrb[0].mxu0
        %v5385 = vpop.f32.mrb[0].mxu0
        %v5386 = vpop.f32.mrb[0].mxu0
        %v5387 = vadd.f32 0.0, %v5386
        %v5388 = vpop.f32.mrb[0].mxu0
        %5389 = vmatprep.mubr.bf16.mxu0 0
        %5390 = vmatmul.mubr.bf16.gmra.mrb[0].mxu0 %v5147
        %v5391 = vpop.f32.mrb[0].mxu0
        %v5392 = vadd.f32 0.0, %v5391
        %v5393 = vpop.f32.mrb[0].mxu0
        %v5394 = vpop.f32.mrb[0].mxu0
        %v5395 = vpop.f32.mrb[0].mxu0
        %5396 = vmatprep.mubr.bf16.mxu0 0
        %5397 = vmatmul.mubr.bf16.gmra.mrb[0].mxu0 %v5149
        %v5398 = vpop.f32.mrb[0].mxu0
        %v5399 = vadd.f32 0.0, %v5398
        %v5400 = vpop.f32.mrb[0].mxu0
        %v5401 = vpop.f32.mrb[0].mxu0
        %v5402 = vadd.f32 0.0, %v5401
        %v5403 = vpop.f32.mrb[0].mxu0
        %5404 = vmatprep.mubr.bf16.mxu0 0
        %5405 = vmatmul.mubr.bf16.gmra.mrb[0].mxu0 %v5151
        %v5406 = vpop.f32.mrb[0].mxu0
        %v5407 = vpop.f32.mrb[0].mxu0
        %v5408 = vpop.f32.mrb[0].mxu0
        %v5409 = vadd.f32 0.0, %v5408
        %v5410 = vpop.f32.mrb[0].mxu0
        %5411 = vmatprep.mubr.bf16.mxu0 0
        %5412 = vmatmul.mubr.bf16.gmra.mrb[0].mxu0 %v5153
        %v5413 = vpop.f32.mrb[0].mxu0
        %v5414 = vadd.f32 0.0, %v5413
        %v5415 = vpop.f32.mrb[0].mxu0
        %v5416 = vpop.f32.mrb[0].mxu0
        %v5417 = vpop.f32.mrb[0].mxu0
        %5418 = vmatprep.mubr.bf16.mxu0 0
        %5419 = vmatmul.mubr.bf16.gmra.mrb[0].mxu0 %v5155
        %v5420 = vpop.f32.mrb[0].mxu0
        %v5421 = vadd.f32 0.0, %v5420
        %v5422 = vpop.f32.mrb[0].mxu0
        %v5423 = vpop.f32.mrb[0].mxu0
        %v5424 = vadd.f32 0.0, %v5423
        %v5425 = vpop.f32.mrb[0].mxu0
        %5426 = vmatprep.mubr.bf16.mxu0 0
        %5427 = vmatmul.mubr.bf16.gmra.mrb[0].mxu0 %v5157
        %v5428 = vpop.f32.mrb[0].mxu0
        %v5429 = vpop.f32.mrb[0].mxu0
        %v5430 = vpop.f32.mrb[0].mxu0
        %v5431 = vadd.f32 0.0, %v5430
        %v5432 = vpop.f32.mrb[0].mxu0
        %5433 = vmatprep.mubr.bf16.mxu0 0
        %5434 = vmatmul.mubr.bf16.gmra.mrb[0].mxu0 %v5159
        %v5435 = vpop.f32.mrb[0].mxu0
        %v5436 = vadd.f32 0.0, %v5435
        %v5437 = vpop.f32.mrb[0].mxu0
        %v5438 = vpop.f32.mrb[0].mxu0
        %v5439 = vpop.f32.mrb[0].mxu0
        %5440 = vdwg.mxu0
        %v5441 = vadd.f32 %v5075, %v5267
        %v5442 = vadd.f32 %v5076, %v5270
        %v5443 = vadd.f32 %v5077, %v5277
        %v5444 = vadd.f32 %v5078, %v5282
        %v5445 = vadd.f32 %v5079, %v5289
        %v5446 = vadd.f32 %v5080, %v5292
        %v5447 = vadd.f32 %v5081, %v5299
        %v5448 = vadd.f32 %v5082, %v5304
        %v5449 = vadd.f32 %v5083, %v5311
        %v5450 = vadd.f32 %v5084, %v5314
        %v5451 = vadd.f32 %v5085, %v5321
        %v5452 = vadd.f32 %v5086, %v5326
        %v5453 = vadd.f32 %v5087, %v5333
        %v5454 = vadd.f32 %v5088, %v5336
        %v5455 = vadd.f32 %v5089, %v5343
        %v5456 = vadd.f32 %v5090, %v5348
        %v5457 = vadd.f32 %v5091, %v5355
        %v5458 = vadd.f32 %v5092, %v5358
        %v5459 = vadd.f32 %v5093, %v5365
        %v5460 = vadd.f32 %v5094, %v5370
        %v5461 = vadd.f32 %v5095, %v5377
        %v5462 = vadd.f32 %v5096, %v5380
        %v5463 = vadd.f32 %v5097, %v5387
        %v5464 = vadd.f32 %v5098, %v5392
        %v5465 = vadd.f32 %v5099, %v5399
        %v5466 = vadd.f32 %v5100, %v5402
        %v5467 = vadd.f32 %v5101, %v5409
        %v5468 = vadd.f32 %v5102, %v5414
        %v5469 = vadd.f32 %v5103, %v5421
        %v5470 = vadd.f32 %v5104, %v5424
        %v5471 = vadd.f32 %v5105, %v5431
        %v5472 = vadd.f32 %v5106, %v5436
        %v5473 = vld [vmem:[#allocation2 + $0x18] sm:$0xf]
        %v5474 = vld [vmem:[#allocation2 + $0x1c] sm:$0xf]
        %v5475 = vld [vmem:[#allocation2 + $0x20] sm:$0xf]
        %v5476 = vld [vmem:[#allocation2 + $0x24] sm:$0xf]
        %v5477 = vld [vmem:[#allocation2 + $0x28] sm:$0xf]
        %v5478 = vld [vmem:[#allocation2 + $0x2c] sm:$0xf]
        %v5479 = vld [vmem:[#allocation2 + $0x30] sm:$0xf]
        %v5480 = vld [vmem:[#allocation2 + $0x34] sm:$0xf]
        %v5481 = vld [vmem:[#allocation2 + $0x38] sm:$0xf]
        %v5482 = vld [vmem:[#allocation2 + $0x3c] sm:$0xf]
        %v5483 = vld [vmem:[#allocation2 + $0x40] sm:$0xf]
        %v5484 = vld [vmem:[#allocation2 + $0x44] sm:$0xf]
        %v5485 = vld [vmem:[#allocation2 + $0x48] sm:$0xf]
        %v5486 = vld [vmem:[#allocation2 + $0x4c] sm:$0xf]
        %v5487 = vld [vmem:[#allocation2 + $0x50] sm:$0xf]
        %v5488 = vld [vmem:[#allocation2 + $0x54] sm:$0xf]
        %v5489 = vld [vmem:[#allocation2 + $0x58] sm:$0xf]
        %v5490 = vld [vmem:[#allocation2 + $0x5c] sm:$0xf]
        %v5491 = vld [vmem:[#allocation2 + $0x60] sm:$0xf]
        %v5492 = vld [vmem:[#allocation2 + $0x64] sm:$0xf]
        %v5493 = vld [vmem:[#allocation2 + $0x68] sm:$0xf]
        %v5494 = vld [vmem:[#allocation2 + $0x6c] sm:$0xf]
        %v5495 = vld [vmem:[#allocation2 + $0x70] sm:$0xf]
        %v5496 = vld [vmem:[#allocation2 + $0x74] sm:$0xf]
        %v5497 = vld [vmem:[#allocation2 + $0x78] sm:$0xf]
        %v5498 = vld [vmem:[#allocation2 + $0x7c] sm:$0xf]
        %v5499 = vld [vmem:[#allocation2 + $0x80] sm:$0xf]
        %v5500 = vld [vmem:[#allocation2 + $0x84] sm:$0xf]
        %v5501 = vld [vmem:[#allocation2 + $0x88] sm:$0xf]
        %v5502 = vld [vmem:[#allocation2 + $0x8c] sm:$0xf]
        %v5503 = vld [vmem:[#allocation2 + $0x90] sm:$0xf]
        %v5504 = vld [vmem:[#allocation2 + $0x94] sm:$0xf]
        %v5505 = vld [vmem:[#allocation2 + $0x98] sm:$0xf]
        %v5506 = vld [vmem:[#allocation2 + $0x9c] sm:$0xf]
        %v5507 = vld [vmem:[#allocation2 + $0xa0] sm:$0xf]
        %v5508 = vld [vmem:[#allocation2 + $0xa4] sm:$0xf]
        %v5509 = vld [vmem:[#allocation2 + $0xa8] sm:$0xf]
        %v5510 = vld [vmem:[#allocation2 + $0xac] sm:$0xf]
        %v5511 = vld [vmem:[#allocation2 + $0xb0] sm:$0xf]
        %v5512 = vld [vmem:[#allocation2 + $0xb4] sm:$0xf]
        %v5513 = vld [vmem:[#allocation2 + $0xb8] sm:$0xf]
        %v5514 = vld [vmem:[#allocation2 + $0xbc] sm:$0xf]
        %v5515 = vld [vmem:[#allocation2 + $0xc0] sm:$0xf]
        %v5516 = vld [vmem:[#allocation2 + $0xc4] sm:$0xf]
        %v5517 = vld [vmem:[#allocation2 + $0xc8] sm:$0xf]
        %v5518 = vld [vmem:[#allocation2 + $0xcc] sm:$0xf]
        %v5519 = vld [vmem:[#allocation2 + $0xd0] sm:$0xf]
        %v5520 = vld [vmem:[#allocation2 + $0xd4] sm:$0xf]
        %v5569 = vunpack.c.l.b16 %v5473
        %v5570 = vunpack.c.l.b16 %v5474
        %v5571 = vunpack.c.l.b16 %v5475
        %v5572 = vunpack.c.l.b16 %v5476
        %v5573 = vunpack.c.l.b16 %v5477
        %v5574 = vunpack.c.l.b16 %v5478
        %v5575 = vunpack.c.l.b16 %v5479
        %v5576 = vunpack.c.l.b16 %v5480
        %v5577 = vunpack.c.l.b16 %v5481
        %v5578 = vunpack.c.l.b16 %v5482
        %v5579 = vunpack.c.l.b16 %v5483
        %v5580 = vunpack.c.l.b16 %v5484
        %v5581 = vunpack.c.l.b16 %v5485
        %v5582 = vunpack.c.l.b16 %v5486
        %v5583 = vunpack.c.l.b16 %v5487
        %v5584 = vunpack.c.l.b16 %v5488
        %v5585 = vunpack.c.l.b16 %v5489
        %v5586 = vunpack.c.l.b16 %v5490
        %v5587 = vunpack.c.l.b16 %v5491
        %v5588 = vunpack.c.l.b16 %v5492
        %v5589 = vunpack.c.l.b16 %v5493
        %v5590 = vunpack.c.l.b16 %v5494
        %v5591 = vunpack.c.l.b16 %v5495
        %v5592 = vunpack.c.l.b16 %v5496
        %v5593 = vunpack.c.l.b16 %v5497
        %v5594 = vunpack.c.l.b16 %v5498
        %v5595 = vunpack.c.l.b16 %v5499
        %v5596 = vunpack.c.l.b16 %v5500
        %v5597 = vunpack.c.l.b16 %v5501
        %v5598 = vunpack.c.l.b16 %v5502
        %v5599 = vunpack.c.l.b16 %v5503
        %v5600 = vunpack.c.l.b16 %v5504
        %v5601 = vunpack.c.l.b16 %v5505
        %v5602 = vunpack.c.l.b16 %v5506
        %v5603 = vunpack.c.l.b16 %v5507
        %v5604 = vunpack.c.l.b16 %v5508
        %v5605 = vunpack.c.l.b16 %v5509
        %v5606 = vunpack.c.l.b16 %v5510
        %v5607 = vunpack.c.l.b16 %v5511
        %v5608 = vunpack.c.l.b16 %v5512
        %v5609 = vunpack.c.l.b16 %v5513
        %v5610 = vunpack.c.l.b16 %v5514
        %v5611 = vunpack.c.l.b16 %v5515
        %v5612 = vunpack.c.l.b16 %v5516
        %v5613 = vunpack.c.l.b16 %v5517
        %v5614 = vunpack.c.l.b16 %v5518
        %v5615 = vunpack.c.l.b16 %v5519
        %v5616 = vunpack.c.l.b16 %v5520
        %v5617 = vpack.c.b16 %v5570, %v5569
        %v5618 = vpack.c.b16 %v5572, %v5571
        %v5619 = vpack.c.b16 %v5574, %v5573
        %v5620 = vpack.c.b16 %v5576, %v5575
        %v5621 = vpack.c.b16 %v5578, %v5577
        %v5622 = vpack.c.b16 %v5580, %v5579
        %v5623 = vpack.c.b16 %v5582, %v5581
        %v5624 = vpack.c.b16 %v5584, %v5583
        %v5625 = vpack.c.b16 %v5586, %v5585
        %v5626 = vpack.c.b16 %v5588, %v5587
        %v5627 = vpack.c.b16 %v5590, %v5589
        %v5628 = vpack.c.b16 %v5592, %v5591
        %v5629 = vpack.c.b16 %v5594, %v5593
        %v5630 = vpack.c.b16 %v5596, %v5595
        %v5631 = vpack.c.b16 %v5598, %v5597
        %v5632 = vpack.c.b16 %v5600, %v5599
        %v5633 = vpack.c.b16 %v5602, %v5601
        %v5634 = vpack.c.b16 %v5604, %v5603
        %v5635 = vpack.c.b16 %v5606, %v5605
        %v5636 = vpack.c.b16 %v5608, %v5607
        %v5637 = vpack.c.b16 %v5610, %v5609
        %v5638 = vpack.c.b16 %v5612, %v5611
        %v5639 = vpack.c.b16 %v5614, %v5613
        %v5640 = vpack.c.b16 %v5616, %v5615
        %v5681 = vunpack.c.l.b16 %v2599
        %v5682 = vunpack.c.l.b16 %v2600
        %v5683 = vunpack.c.l.b16 %v2601
        %v5684 = vunpack.c.l.b16 %v2602
        %v5685 = vunpack.c.l.b16 %v2603
        %v5686 = vunpack.c.l.b16 %v2604
        %v5687 = vunpack.c.l.b16 %v2605
        %v5688 = vunpack.c.l.b16 %v2606
        %v5689 = vunpack.c.l.b16 %v2607
        %v5690 = vunpack.c.l.b16 %v2608
        %v5691 = vunpack.c.l.b16 %v2609
        %v5692 = vunpack.c.l.b16 %v2610
        %v5693 = vunpack.c.l.b16 %v2611
        %v5694 = vunpack.c.l.b16 %v2612
        %v5695 = vunpack.c.l.b16 %v2613
        %v5696 = vunpack.c.l.b16 %v2614
        %v5697 = vpack.c.b16 %v5682, %v5681
        %v5698 = vpack.c.b16 %v5684, %v5683
        %v5699 = vpack.c.b16 %v5686, %v5685
        %v5700 = vpack.c.b16 %v5688, %v5687
        %v5701 = vpack.c.b16 %v5690, %v5689
        %v5702 = vpack.c.b16 %v5692, %v5691
        %v5703 = vpack.c.b16 %v5694, %v5693
        %v5704 = vpack.c.b16 %v5696, %v5695
        %5713 = vmatprep.subr.bf16.mxu0 0
        %5714 = vmatpush1.bf16.msra.mxu0 %v5697
        %5715 = vmatprep.subr.bf16.mxu0 0
        %5716 = vmatpush1.bf16.msra.mxu0 %v5698
        %5717 = vmatprep.subr.bf16.mxu0 0
        %5718 = vmatpush1.bf16.msra.mxu0 %v5699
        %5719 = vmatprep.subr.bf16.mxu0 0
        %5720 = vmatpush1.bf16.msra.mxu0 %v5700
        %5721 = vmatprep.subr.bf16.mxu0 0
        %5722 = vmatpush1.bf16.msra.mxu0 %v5701
        %5723 = vmatprep.subr.bf16.mxu0 0
        %5724 = vmatpush1.bf16.msra.mxu0 %v5702
        %5725 = vmatprep.subr.bf16.mxu0 0
        %5726 = vmatpush1.bf16.msra.mxu0 %v5703
        %5727 = vmatprep.subr.bf16.mxu0 0
        %5728 = vmatpush1.bf16.msra.mxu0 %v5704
        %5729 = vmatprep.subr.bf16.mxu0 0
        %5730 = vmatpush1.bf16.msra.mxu0 0
        %5731 = vmatprep.subr.bf16.mxu0 0
        %5732 = vmatpush1.bf16.msra.mxu0 0
        %5733 = vmatprep.subr.bf16.mxu0 0
        %5734 = vmatpush1.bf16.msra.mxu0 0
        %5735 = vmatprep.subr.bf16.mxu0 0
        %5736 = vmatpush1.bf16.msra.mxu0 0
        %5737 = vmatprep.subr.bf16.mxu0 0
        %5738 = vmatpush1.bf16.msra.mxu0 0
        %5739 = vmatprep.subr.bf16.mxu0 0
        %5740 = vmatpush1.bf16.msra.mxu0 0
        %5741 = vmatprep.subr.bf16.mxu0 0
        %5742 = vmatpush1.bf16.msra.mxu0 0
        %5743 = vmatprep.subr.bf16.mxu0 0
        %5744 = vmatpush1.bf16.msra.mxu0 0
        %5745 = vmatprep.mubr.bf16.mxu0 0
        %5746 = vmatmul.mubr.bf16.gmra.mrb[0].mxu0 %v5617
        %v5747 = vpop.f32.mrb[0].mxu0
        %v5748 = vadd.f32 0.0, %v5747
        %v5749 = vpop.f32.mrb[0].mxu0
        %v5750 = vpop.f32.mrb[0].mxu0
        %v5751 = vadd.f32 0.0, %v5750
        %v5752 = vpop.f32.mrb[0].mxu0
        %5753 = vmatprep.mubr.bf16.mxu0 0
        %5754 = vmatmul.mubr.bf16.gmra.mrb[0].mxu0 %v5618
        %v5755 = vpop.f32.mrb[0].mxu0
        %v5756 = vpop.f32.mrb[0].mxu0
        %v5757 = vpop.f32.mrb[0].mxu0
        %v5758 = vadd.f32 0.0, %v5757
        %v5759 = vpop.f32.mrb[0].mxu0
        %5760 = vmatprep.mubr.bf16.mxu0 0
        %5761 = vmatmul.mubr.bf16.gmra.mrb[0].mxu0 %v5619
        %v5762 = vpop.f32.mrb[0].mxu0
        %v5763 = vadd.f32 0.0, %v5762
        %v5764 = vpop.f32.mrb[0].mxu0
        %v5765 = vpop.f32.mrb[0].mxu0
        %v5766 = vpop.f32.mrb[0].mxu0
        %5767 = vmatprep.mubr.bf16.mxu0 0
        %5768 = vmatmul.mubr.bf16.gmra.mrb[0].mxu0 %v5620
        %v5769 = vpop.f32.mrb[0].mxu0
        %v5770 = vadd.f32 0.0, %v5769
        %v5771 = vpop.f32.mrb[0].mxu0
        %v5772 = vpop.f32.mrb[0].mxu0
        %v5773 = vadd.f32 0.0, %v5772
        %v5774 = vpop.f32.mrb[0].mxu0
        %5775 = vmatprep.mubr.bf16.mxu0 0
        %5776 = vmatmul.mubr.bf16.gmra.mrb[0].mxu0 %v5621
        %v5777 = vpop.f32.mrb[0].mxu0
        %v5778 = vpop.f32.mrb[0].mxu0
        %v5779 = vpop.f32.mrb[0].mxu0
        %v5780 = vadd.f32 0.0, %v5779
        %v5781 = vpop.f32.mrb[0].mxu0
        %5782 = vmatprep.mubr.bf16.mxu0 0
        %5783 = vmatmul.mubr.bf16.gmra.mrb[0].mxu0 %v5622
        %v5784 = vpop.f32.mrb[0].mxu0
        %v5785 = vadd.f32 0.0, %v5784
        %v5786 = vpop.f32.mrb[0].mxu0
        %v5787 = vpop.f32.mrb[0].mxu0
        %v5788 = vpop.f32.mrb[0].mxu0
        %5789 = vmatprep.mubr.bf16.mxu0 0
        %5790 = vmatmul.mubr.bf16.gmra.mrb[0].mxu0 %v5623
        %v5791 = vpop.f32.mrb[0].mxu0
        %v5792 = vadd.f32 0.0, %v5791
        %v5793 = vpop.f32.mrb[0].mxu0
        %v5794 = vpop.f32.mrb[0].mxu0
        %v5795 = vadd.f32 0.0, %v5794
        %v5796 = vpop.f32.mrb[0].mxu0
        %5797 = vmatprep.mubr.bf16.mxu0 0
        %5798 = vmatmul.mubr.bf16.gmra.mrb[0].mxu0 %v5624
        %v5799 = vpop.f32.mrb[0].mxu0
        %v5800 = vpop.f32.mrb[0].mxu0
        %v5801 = vpop.f32.mrb[0].mxu0
        %v5802 = vadd.f32 0.0, %v5801
        %v5803 = vpop.f32.mrb[0].mxu0
        %5804 = vmatprep.mubr.bf16.mxu0 0
        %5805 = vmatmul.mubr.bf16.gmra.mrb[0].mxu0 %v5625
        %v5806 = vpop.f32.mrb[0].mxu0
        %v5807 = vadd.f32 0.0, %v5806
        %v5808 = vpop.f32.mrb[0].mxu0
        %v5809 = vpop.f32.mrb[0].mxu0
        %v5810 = vpop.f32.mrb[0].mxu0
        %5811 = vmatprep.mubr.bf16.mxu0 0
        %5812 = vmatmul.mubr.bf16.gmra.mrb[0].mxu0 %v5626
        %v5813 = vpop.f32.mrb[0].mxu0
        %v5814 = vadd.f32 0.0, %v5813
        %v5815 = vpop.f32.mrb[0].mxu0
        %v5816 = vpop.f32.mrb[0].mxu0
        %v5817 = vadd.f32 0.0, %v5816
        %v5818 = vpop.f32.mrb[0].mxu0
        %5819 = vmatprep.mubr.bf16.mxu0 0
        %5820 = vmatmul.mubr.bf16.gmra.mrb[0].mxu0 %v5627
        %v5821 = vpop.f32.mrb[0].mxu0
        %v5822 = vpop.f32.mrb[0].mxu0
        %v5823 = vpop.f32.mrb[0].mxu0
        %v5824 = vadd.f32 0.0, %v5823
        %v5825 = vpop.f32.mrb[0].mxu0
        %5826 = vmatprep.mubr.bf16.mxu0 0
        %5827 = vmatmul.mubr.bf16.gmra.mrb[0].mxu0 %v5628
        %v5828 = vpop.f32.mrb[0].mxu0
        %v5829 = vadd.f32 0.0, %v5828
        %v5830 = vpop.f32.mrb[0].mxu0
        %v5831 = vpop.f32.mrb[0].mxu0
        %v5832 = vpop.f32.mrb[0].mxu0
        %5833 = vmatprep.mubr.bf16.mxu0 0
        %5834 = vmatmul.mubr.bf16.gmra.mrb[0].mxu0 %v5629
        %v5835 = vpop.f32.mrb[0].mxu0
        %v5836 = vadd.f32 0.0, %v5835
        %v5837 = vpop.f32.mrb[0].mxu0
        %v5838 = vpop.f32.mrb[0].mxu0
        %v5839 = vadd.f32 0.0, %v5838
        %v5840 = vpop.f32.mrb[0].mxu0
        %5841 = vmatprep.mubr.bf16.mxu0 0
        %5842 = vmatmul.mubr.bf16.gmra.mrb[0].mxu0 %v5630
        %v5843 = vpop.f32.mrb[0].mxu0
        %v5844 = vpop.f32.mrb[0].mxu0
        %v5845 = vpop.f32.mrb[0].mxu0
        %v5846 = vadd.f32 0.0, %v5845
        %v5847 = vpop.f32.mrb[0].mxu0
        %5848 = vmatprep.mubr.bf16.mxu0 0
        %5849 = vmatmul.mubr.bf16.gmra.mrb[0].mxu0 %v5631
        %v5850 = vpop.f32.mrb[0].mxu0
        %v5851 = vadd.f32 0.0, %v5850
        %v5852 = vpop.f32.mrb[0].mxu0
        %v5853 = vpop.f32.mrb[0].mxu0
        %v5854 = vpop.f32.mrb[0].mxu0
        %5855 = vmatprep.mubr.bf16.mxu0 0
        %5856 = vmatmul.mubr.bf16.gmra.mrb[0].mxu0 %v5632
        %v5857 = vpop.f32.mrb[0].mxu0
        %v5858 = vadd.f32 0.0, %v5857
        %v5859 = vpop.f32.mrb[0].mxu0
        %v5860 = vpop.f32.mrb[0].mxu0
        %v5861 = vadd.f32 0.0, %v5860
        %v5862 = vpop.f32.mrb[0].mxu0
        %5863 = vmatprep.mubr.bf16.mxu0 0
        %5864 = vmatmul.mubr.bf16.gmra.mrb[0].mxu0 %v5633
        %v5865 = vpop.f32.mrb[0].mxu0
        %v5866 = vpop.f32.mrb[0].mxu0
        %v5867 = vpop.f32.mrb[0].mxu0
        %v5868 = vadd.f32 0.0, %v5867
        %v5869 = vpop.f32.mrb[0].mxu0
        %5870 = vmatprep.mubr.bf16.mxu0 0
        %5871 = vmatmul.mubr.bf16.gmra.mrb[0].mxu0 %v5634
        %v5872 = vpop.f32.mrb[0].mxu0
        %v5873 = vadd.f32 0.0, %v5872
        %v5874 = vpop.f32.mrb[0].mxu0
        %v5875 = vpop.f32.mrb[0].mxu0
        %v5876 = vpop.f32.mrb[0].mxu0
        %5877 = vmatprep.mubr.bf16.mxu0 0
        %5878 = vmatmul.mubr.bf16.gmra.mrb[0].mxu0 %v5635
        %v5879 = vpop.f32.mrb[0].mxu0
        %v5880 = vadd.f32 0.0, %v5879
        %v5881 = vpop.f32.mrb[0].mxu0
        %v5882 = vpop.f32.mrb[0].mxu0
        %v5883 = vadd.f32 0.0, %v5882
        %v5884 = vpop.f32.mrb[0].mxu0
        %5885 = vmatprep.mubr.bf16.mxu0 0
        %5886 = vmatmul.mubr.bf16.gmra.mrb[0].mxu0 %v5636
        %v5887 = vpop.f32.mrb[0].mxu0
        %v5888 = vpop.f32.mrb[0].mxu0
        %v5889 = vpop.f32.mrb[0].mxu0
        %v5890 = vadd.f32 0.0, %v5889
        %v5891 = vpop.f32.mrb[0].mxu0
        %5892 = vmatprep.mubr.bf16.mxu0 0
        %5893 = vmatmul.mubr.bf16.gmra.mrb[0].mxu0 %v5637
        %v5894 = vpop.f32.mrb[0].mxu0
        %v5895 = vadd.f32 0.0, %v5894
        %v5896 = vpop.f32.mrb[0].mxu0
        %v5897 = vpop.f32.mrb[0].mxu0
        %v5898 = vpop.f32.mrb[0].mxu0
        %5899 = vmatprep.mubr.bf16.mxu0 0
        %5900 = vmatmul.mubr.bf16.gmra.mrb[0].mxu0 %v5638
        %v5901 = vpop.f32.mrb[0].mxu0
        %v5902 = vadd.f32 0.0, %v5901
        %v5903 = vpop.f32.mrb[0].mxu0
        %v5904 = vpop.f32.mrb[0].mxu0
        %v5905 = vadd.f32 0.0, %v5904
        %v5906 = vpop.f32.mrb[0].mxu0
        %5907 = vmatprep.mubr.bf16.mxu0 0
        %5908 = vmatmul.mubr.bf16.gmra.mrb[0].mxu0 %v5639
        %v5909 = vpop.f32.mrb[0].mxu0
        %v5910 = vpop.f32.mrb[0].mxu0
        %v5911 = vpop.f32.mrb[0].mxu0
        %v5912 = vadd.f32 0.0, %v5911
        %v5913 = vpop.f32.mrb[0].mxu0
        %5914 = vmatprep.mubr.bf16.mxu0 0
        %5915 = vmatmul.mubr.bf16.gmra.mrb[0].mxu0 %v5640
        %v5916 = vpop.f32.mrb[0].mxu0
        %v5917 = vadd.f32 0.0, %v5916
        %v5918 = vpop.f32.mrb[0].mxu0
        %v5919 = vpop.f32.mrb[0].mxu0
        %v5920 = vpop.f32.mrb[0].mxu0
        %5921 = vdwg.mxu0
        %v5922 = vadd.f32 %v5441, %v5748
        %v5923 = vadd.f32 %v5442, %v5751
        %v5924 = vadd.f32 %v5443, %v5758
        %v5925 = vadd.f32 %v5444, %v5763
        %v5926 = vadd.f32 %v5445, %v5770
        %v5927 = vadd.f32 %v5446, %v5773
        %v5928 = vadd.f32 %v5447, %v5780
        %v5929 = vadd.f32 %v5448, %v5785
        %v5930 = vadd.f32 %v5449, %v5792
        %v5931 = vadd.f32 %v5450, %v5795
        %v5932 = vadd.f32 %v5451, %v5802
        %v5933 = vadd.f32 %v5452, %v5807
        %v5934 = vadd.f32 %v5453, %v5814
        %v5935 = vadd.f32 %v5454, %v5817
        %v5936 = vadd.f32 %v5455, %v5824
        %v5937 = vadd.f32 %v5456, %v5829
        %v5938 = vadd.f32 %v5457, %v5836
        %v5939 = vadd.f32 %v5458, %v5839
        %v5940 = vadd.f32 %v5459, %v5846
        %v5941 = vadd.f32 %v5460, %v5851
        %v5942 = vadd.f32 %v5461, %v5858
        %v5943 = vadd.f32 %v5462, %v5861
        %v5944 = vadd.f32 %v5463, %v5868
        %v5945 = vadd.f32 %v5464, %v5873
        %v5946 = vadd.f32 %v5465, %v5880
        %v5947 = vadd.f32 %v5466, %v5883
        %v5948 = vadd.f32 %v5467, %v5890
        %v5949 = vadd.f32 %v5468, %v5895
        %v5950 = vadd.f32 %v5469, %v5902
        %v5951 = vadd.f32 %v5470, %v5905
        %v5952 = vadd.f32 %v5471, %v5912
        %v5953 = vadd.f32 %v5472, %v5917
        %v5954 = vld [vmem:[#allocation2 + $0x18] sm:$0xf]
        %v5955 = vld [vmem:[#allocation2 + $0x1c] sm:$0xf]
        %v5956 = vld [vmem:[#allocation2 + $0x20] sm:$0xf]
        %v5957 = vld [vmem:[#allocation2 + $0x24] sm:$0xf]
        %v5958 = vld [vmem:[#allocation2 + $0x28] sm:$0xf]
        %v5959 = vld [vmem:[#allocation2 + $0x2c] sm:$0xf]
        %v5960 = vld [vmem:[#allocation2 + $0x30] sm:$0xf]
        %v5961 = vld [vmem:[#allocation2 + $0x34] sm:$0xf]
        %v5962 = vld [vmem:[#allocation2 + $0x38] sm:$0xf]
        %v5963 = vld [vmem:[#allocation2 + $0x3c] sm:$0xf]
        %v5964 = vld [vmem:[#allocation2 + $0x40] sm:$0xf]
        %v5965 = vld [vmem:[#allocation2 + $0x44] sm:$0xf]
        %v5966 = vld [vmem:[#allocation2 + $0x48] sm:$0xf]
        %v5967 = vld [vmem:[#allocation2 + $0x4c] sm:$0xf]
        %v5968 = vld [vmem:[#allocation2 + $0x50] sm:$0xf]
        %v5969 = vld [vmem:[#allocation2 + $0x54] sm:$0xf]
        %v5970 = vld [vmem:[#allocation2 + $0x58] sm:$0xf]
        %v5971 = vld [vmem:[#allocation2 + $0x5c] sm:$0xf]
        %v5972 = vld [vmem:[#allocation2 + $0x60] sm:$0xf]
        %v5973 = vld [vmem:[#allocation2 + $0x64] sm:$0xf]
        %v5974 = vld [vmem:[#allocation2 + $0x68] sm:$0xf]
        %v5975 = vld [vmem:[#allocation2 + $0x6c] sm:$0xf]
        %v5976 = vld [vmem:[#allocation2 + $0x70] sm:$0xf]
        %v5977 = vld [vmem:[#allocation2 + $0x74] sm:$0xf]
        %v5978 = vld [vmem:[#allocation2 + $0x78] sm:$0xf]
        %v5979 = vld [vmem:[#allocation2 + $0x7c] sm:$0xf]
        %v5980 = vld [vmem:[#allocation2 + $0x80] sm:$0xf]
        %v5981 = vld [vmem:[#allocation2 + $0x84] sm:$0xf]
        %v5982 = vld [vmem:[#allocation2 + $0x88] sm:$0xf]
        %v5983 = vld [vmem:[#allocation2 + $0x8c] sm:$0xf]
        %v5984 = vld [vmem:[#allocation2 + $0x90] sm:$0xf]
        %v5985 = vld [vmem:[#allocation2 + $0x94] sm:$0xf]
        %v5986 = vld [vmem:[#allocation2 + $0x98] sm:$0xf]
        %v5987 = vld [vmem:[#allocation2 + $0x9c] sm:$0xf]
        %v5988 = vld [vmem:[#allocation2 + $0xa0] sm:$0xf]
        %v5989 = vld [vmem:[#allocation2 + $0xa4] sm:$0xf]
        %v5990 = vld [vmem:[#allocation2 + $0xa8] sm:$0xf]
        %v5991 = vld [vmem:[#allocation2 + $0xac] sm:$0xf]
        %v5992 = vld [vmem:[#allocation2 + $0xb0] sm:$0xf]
        %v5993 = vld [vmem:[#allocation2 + $0xb4] sm:$0xf]
        %v5994 = vld [vmem:[#allocation2 + $0xb8] sm:$0xf]
        %v5995 = vld [vmem:[#allocation2 + $0xbc] sm:$0xf]
        %v5996 = vld [vmem:[#allocation2 + $0xc0] sm:$0xf]
        %v5997 = vld [vmem:[#allocation2 + $0xc4] sm:$0xf]
        %v5998 = vld [vmem:[#allocation2 + $0xc8] sm:$0xf]
        %v5999 = vld [vmem:[#allocation2 + $0xcc] sm:$0xf]
        %v6000 = vld [vmem:[#allocation2 + $0xd0] sm:$0xf]
        %v6001 = vld [vmem:[#allocation2 + $0xd4] sm:$0xf]
        %v6002 = vld [vmem:[#allocation2 + $0xd8] sm:$0x1]
        %v6052 = vunpack.c.l.b16 %v5954
        %v6053 = vunpack.c.l.b16 %v5955
        %v6054 = vunpack.c.l.b16 %v5956
        %v6055 = vunpack.c.l.b16 %v5957
        %v6056 = vunpack.c.l.b16 %v5958
        %v6057 = vunpack.c.l.b16 %v5959
        %v6058 = vunpack.c.l.b16 %v5960
        %v6059 = vunpack.c.l.b16 %v5961
        %v6060 = vunpack.c.l.b16 %v5962
        %v6061 = vunpack.c.l.b16 %v5963
        %v6062 = vunpack.c.l.b16 %v5964
        %v6063 = vunpack.c.l.b16 %v5965
        %v6064 = vunpack.c.l.b16 %v5966
        %v6065 = vunpack.c.l.b16 %v5967
        %v6066 = vunpack.c.l.b16 %v5968
        %v6067 = vunpack.c.l.b16 %v5969
        %v6068 = vunpack.c.l.b16 %v5970
        %v6069 = vunpack.c.l.b16 %v5971
        %v6070 = vunpack.c.l.b16 %v5972
        %v6071 = vunpack.c.l.b16 %v5973
        %v6072 = vunpack.c.l.b16 %v5974
        %v6073 = vunpack.c.l.b16 %v5975
        %v6074 = vunpack.c.l.b16 %v5976
        %v6075 = vunpack.c.l.b16 %v5977
        %v6076 = vunpack.c.l.b16 %v5978
        %v6077 = vunpack.c.l.b16 %v5979
        %v6078 = vunpack.c.l.b16 %v5980
        %v6079 = vunpack.c.l.b16 %v5981
        %v6080 = vunpack.c.l.b16 %v5982
        %v6081 = vunpack.c.l.b16 %v5983
        %v6082 = vunpack.c.l.b16 %v5984
        %v6083 = vunpack.c.l.b16 %v5985
        %v6084 = vunpack.c.l.b16 %v5986
        %v6085 = vunpack.c.l.b16 %v5987
        %v6086 = vunpack.c.l.b16 %v5988
        %v6087 = vunpack.c.l.b16 %v5989
        %v6088 = vunpack.c.l.b16 %v5990
        %v6089 = vunpack.c.l.b16 %v5991
        %v6090 = vunpack.c.l.b16 %v5992
        %v6091 = vunpack.c.l.b16 %v5993
        %v6092 = vunpack.c.l.b16 %v5994
        %v6093 = vunpack.c.l.b16 %v5995
        %v6094 = vunpack.c.l.b16 %v5996
        %v6095 = vunpack.c.l.b16 %v5997
        %v6096 = vunpack.c.l.b16 %v5998
        %v6097 = vunpack.c.l.b16 %v5999
        %v6098 = vunpack.c.l.b16 %v6000
        %v6099 = vunpack.c.l.b16 %v6001
        %v6100 = vunpack.c.l.b16 %v6002
        %v6101 = vpack.c.b16 %v6053, %v6052
        %v6102 = vpack.c.b16 %v6055, %v6054
        %v6103 = vpack.c.b16 %v6057, %v6056
        %v6104 = vpack.c.b16 %v6059, %v6058
        %v6105 = vpack.c.b16 %v6061, %v6060
        %v6106 = vpack.c.b16 %v6063, %v6062
        %v6107 = vpack.c.b16 %v6065, %v6064
        %v6108 = vpack.c.b16 %v6067, %v6066
        %v6109 = vpack.c.b16 %v6069, %v6068
        %v6110 = vpack.c.b16 %v6071, %v6070
        %v6111 = vpack.c.b16 %v6073, %v6072
        %v6112 = vpack.c.b16 %v6075, %v6074
        %v6113 = vpack.c.b16 %v6077, %v6076
        %v6114 = vpack.c.b16 %v6079, %v6078
        %v6115 = vpack.c.b16 %v6081, %v6080
        %v6116 = vpack.c.b16 %v6083, %v6082
        %v6117 = vpack.c.b16 %v6085, %v6084
        %v6118 = vpack.c.b16 %v6087, %v6086
        %v6119 = vpack.c.b16 %v6089, %v6088
        %v6120 = vpack.c.b16 %v6091, %v6090
        %v6121 = vpack.c.b16 %v6093, %v6092
        %v6122 = vpack.c.b16 %v6095, %v6094
        %v6123 = vpack.c.b16 %v6097, %v6096
        %v6124 = vpack.c.b16 %v6099, %v6098
        %v6125 = vpack.c.b16 %v6100, %v6100
        %v6127 = vshrl.u32 %v6101, 16
        %v6129 = vshll.u32 %v6101, 16
        %v6131 = vrot.slane %v6129, 1
        %v6132 = vor.u32 %v6127, %v6131
        %v6134 = vshll.u32 %v6102, 16
        %v6136 = vrot.slane %v6134, 1
        %v6137 = vsel %vm2819, %v6132, %v6136
        %v6138 = vshrl.u32 %v6102, 16
        %v6140 = vor.u32 %v6138, %v6136
        %v6142 = vshll.u32 %v6103, 16
        %v6144 = vrot.slane %v6142, 1
        %v6145 = vsel %vm2819, %v6140, %v6144
        %v6146 = vshrl.u32 %v6103, 16
        %v6148 = vor.u32 %v6146, %v6144
        %v6150 = vshll.u32 %v6104, 16
        %v6152 = vrot.slane %v6150, 1
        %v6153 = vsel %vm2819, %v6148, %v6152
        %v6154 = vshrl.u32 %v6104, 16
        %v6156 = vor.u32 %v6154, %v6152
        %v6158 = vshll.u32 %v6105, 16
        %v6160 = vrot.slane %v6158, 1
        %v6161 = vsel %vm2819, %v6156, %v6160
        %v6162 = vshrl.u32 %v6105, 16
        %v6164 = vor.u32 %v6162, %v6160
        %v6166 = vshll.u32 %v6106, 16
        %v6168 = vrot.slane %v6166, 1
        %v6169 = vsel %vm2819, %v6164, %v6168
        %v6170 = vshrl.u32 %v6106, 16
        %v6172 = vor.u32 %v6170, %v6168
        %v6174 = vshll.u32 %v6107, 16
        %v6176 = vrot.slane %v6174, 1
        %v6177 = vsel %vm2819, %v6172, %v6176
        %v6178 = vshrl.u32 %v6107, 16
        %v6180 = vor.u32 %v6178, %v6176
        %v6182 = vshll.u32 %v6108, 16
        %v6184 = vrot.slane %v6182, 1
        %v6185 = vsel %vm2819, %v6180, %v6184
        %v6186 = vshrl.u32 %v6108, 16
        %v6188 = vor.u32 %v6186, %v6184
        %v6190 = vshll.u32 %v6109, 16
        %v6192 = vrot.slane %v6190, 1
        %v6193 = vsel %vm2819, %v6188, %v6192
        %v6194 = vshrl.u32 %v6109, 16
        %v6196 = vor.u32 %v6194, %v6192
        %v6198 = vshll.u32 %v6110, 16
        %v6200 = vrot.slane %v6198, 1
        %v6201 = vsel %vm2819, %v6196, %v6200
        %v6202 = vshrl.u32 %v6110, 16
        %v6204 = vor.u32 %v6202, %v6200
        %v6206 = vshll.u32 %v6111, 16
        %v6208 = vrot.slane %v6206, 1
        %v6209 = vsel %vm2819, %v6204, %v6208
        %v6210 = vshrl.u32 %v6111, 16
        %v6212 = vor.u32 %v6210, %v6208
        %v6214 = vshll.u32 %v6112, 16
        %v6216 = vrot.slane %v6214, 1
        %v6217 = vsel %vm2819, %v6212, %v6216
        %v6218 = vshrl.u32 %v6112, 16
        %v6220 = vor.u32 %v6218, %v6216
        %v6222 = vshll.u32 %v6113, 16
        %v6224 = vrot.slane %v6222, 1
        %v6225 = vsel %vm2819, %v6220, %v6224
        %v6226 = vshrl.u32 %v6113, 16
        %v6228 = vor.u32 %v6226, %v6224
        %v6230 = vshll.u32 %v6114, 16
        %v6232 = vrot.slane %v6230, 1
        %v6233 = vsel %vm2819, %v6228, %v6232
        %v6234 = vshrl.u32 %v6114, 16
        %v6236 = vor.u32 %v6234, %v6232
        %v6238 = vshll.u32 %v6115, 16
        %v6240 = vrot.slane %v6238, 1
        %v6241 = vsel %vm2819, %v6236, %v6240
        %v6242 = vshrl.u32 %v6115, 16
        %v6244 = vor.u32 %v6242, %v6240
        %v6246 = vshll.u32 %v6116, 16
        %v6248 = vrot.slane %v6246, 1
        %v6249 = vsel %vm2819, %v6244, %v6248
        %v6250 = vshrl.u32 %v6116, 16
        %v6252 = vor.u32 %v6250, %v6248
        %v6254 = vshll.u32 %v6117, 16
        %v6256 = vrot.slane %v6254, 1
        %v6257 = vsel %vm2819, %v6252, %v6256
        %v6258 = vshrl.u32 %v6117, 16
        %v6260 = vor.u32 %v6258, %v6256
        %v6262 = vshll.u32 %v6118, 16
        %v6264 = vrot.slane %v6262, 1
        %v6265 = vsel %vm2819, %v6260, %v6264
        %v6266 = vshrl.u32 %v6118, 16
        %v6268 = vor.u32 %v6266, %v6264
        %v6270 = vshll.u32 %v6119, 16
        %v6272 = vrot.slane %v6270, 1
        %v6273 = vsel %vm2819, %v6268, %v6272
        %v6274 = vshrl.u32 %v6119, 16
        %v6276 = vor.u32 %v6274, %v6272
        %v6278 = vshll.u32 %v6120, 16
        %v6280 = vrot.slane %v6278, 1
        %v6281 = vsel %vm2819, %v6276, %v6280
        %v6282 = vshrl.u32 %v6120, 16
        %v6284 = vor.u32 %v6282, %v6280
        %v6286 = vshll.u32 %v6121, 16
        %v6288 = vrot.slane %v6286, 1
        %v6289 = vsel %vm2819, %v6284, %v6288
        %v6290 = vshrl.u32 %v6121, 16
        %v6292 = vor.u32 %v6290, %v6288
        %v6294 = vshll.u32 %v6122, 16
        %v6296 = vrot.slane %v6294, 1
        %v6297 = vsel %vm2819, %v6292, %v6296
        %v6298 = vshrl.u32 %v6122, 16
        %v6300 = vor.u32 %v6298, %v6296
        %v6302 = vshll.u32 %v6123, 16
        %v6304 = vrot.slane %v6302, 1
        %v6305 = vsel %vm2819, %v6300, %v6304
        %v6306 = vshrl.u32 %v6123, 16
        %v6308 = vor.u32 %v6306, %v6304
        %v6310 = vshll.u32 %v6124, 16
        %v6312 = vrot.slane %v6310, 1
        %v6313 = vsel %vm2819, %v6308, %v6312
        %v6314 = vshrl.u32 %v6124, 16
        %v6316 = vor.u32 %v6314, %v6312
        %v6318 = vshll.u32 %v6125, 16
        %v6320 = vrot.slane %v6318, 1
        %v6321 = vsel %vm2819, %v6316, %v6320
        %v6362 = vunpack.c.l.b16 %v2615
        %v6363 = vunpack.c.l.b16 %v2616
        %v6364 = vunpack.c.l.b16 %v2617
        %v6365 = vunpack.c.l.b16 %v2618
        %v6366 = vunpack.c.l.b16 %v2619
        %v6367 = vunpack.c.l.b16 %v2620
        %v6368 = vunpack.c.l.b16 %v2621
        %v6369 = vunpack.c.l.b16 %v2622
        %v6370 = vunpack.c.l.b16 %v2623
        %v6371 = vunpack.c.l.b16 %v2624
        %v6372 = vunpack.c.l.b16 %v2625
        %v6373 = vunpack.c.l.b16 %v2626
        %v6374 = vunpack.c.l.b16 %v2627
        %v6375 = vunpack.c.l.b16 %v2628
        %v6376 = vunpack.c.l.b16 %v2629
        %v6377 = vunpack.c.l.b16 %v2630
        %v6378 = vpack.c.b16 %v6363, %v6362
        %v6379 = vpack.c.b16 %v6365, %v6364
        %v6380 = vpack.c.b16 %v6367, %v6366
        %v6381 = vpack.c.b16 %v6369, %v6368
        %v6382 = vpack.c.b16 %v6371, %v6370
        %v6383 = vpack.c.b16 %v6373, %v6372
        %v6384 = vpack.c.b16 %v6375, %v6374
        %v6385 = vpack.c.b16 %v6377, %v6376
        %6394 = vmatprep.subr.bf16.mxu0 0
        %6395 = vmatpush1.bf16.msra.mxu0 %v6378
        %6396 = vmatprep.subr.bf16.mxu0 0
        %6397 = vmatpush1.bf16.msra.mxu0 %v6379
        %6398 = vmatprep.subr.bf16.mxu0 0
        %6399 = vmatpush1.bf16.msra.mxu0 %v6380
        %6400 = vmatprep.subr.bf16.mxu0 0
        %6401 = vmatpush1.bf16.msra.mxu0 %v6381
        %6402 = vmatprep.subr.bf16.mxu0 0
        %6403 = vmatpush1.bf16.msra.mxu0 %v6382
        %6404 = vmatprep.subr.bf16.mxu0 0
        %6405 = vmatpush1.bf16.msra.mxu0 %v6383
        %6406 = vmatprep.subr.bf16.mxu0 0
        %6407 = vmatpush1.bf16.msra.mxu0 %v6384
        %6408 = vmatprep.subr.bf16.mxu0 0
        %6409 = vmatpush1.bf16.msra.mxu0 %v6385
        %6410 = vmatprep.subr.bf16.mxu0 0
        %6411 = vmatpush1.bf16.msra.mxu0 0
        %6412 = vmatprep.subr.bf16.mxu0 0
        %6413 = vmatpush1.bf16.msra.mxu0 0
        %6414 = vmatprep.subr.bf16.mxu0 0
        %6415 = vmatpush1.bf16.msra.mxu0 0
        %6416 = vmatprep.subr.bf16.mxu0 0
        %6417 = vmatpush1.bf16.msra.mxu0 0
        %6418 = vmatprep.subr.bf16.mxu0 0
        %6419 = vmatpush1.bf16.msra.mxu0 0
        %6420 = vmatprep.subr.bf16.mxu0 0
        %6421 = vmatpush1.bf16.msra.mxu0 0
        %6422 = vmatprep.subr.bf16.mxu0 0
        %6423 = vmatpush1.bf16.msra.mxu0 0
        %6424 = vmatprep.subr.bf16.mxu0 0
        %6425 = vmatpush1.bf16.msra.mxu0 0
        %6426 = vmatprep.mubr.bf16.mxu0 0
        %6427 = vmatmul.mubr.bf16.gmra.mrb[0].mxu0 %v6137
        %v6428 = vpop.f32.mrb[0].mxu0
        %v6429 = vadd.f32 0.0, %v6428
        %v6430 = vpop.f32.mrb[0].mxu0
        %v6431 = vpop.f32.mrb[0].mxu0
        %v6432 = vadd.f32 0.0, %v6431
        %v6433 = vpop.f32.mrb[0].mxu0
        %6434 = vmatprep.mubr.bf16.mxu0 0
        %6435 = vmatmul.mubr.bf16.gmra.mrb[0].mxu0 %v6145
        %v6436 = vpop.f32.mrb[0].mxu0
        %v6437 = vpop.f32.mrb[0].mxu0
        %v6438 = vpop.f32.mrb[0].mxu0
        %v6439 = vadd.f32 0.0, %v6438
        %v6440 = vpop.f32.mrb[0].mxu0
        %6441 = vmatprep.mubr.bf16.mxu0 0
        %6442 = vmatmul.mubr.bf16.gmra.mrb[0].mxu0 %v6153
        %v6443 = vpop.f32.mrb[0].mxu0
        %v6444 = vadd.f32 0.0, %v6443
        %v6445 = vpop.f32.mrb[0].mxu0
        %v6446 = vpop.f32.mrb[0].mxu0
        %v6447 = vpop.f32.mrb[0].mxu0
        %6448 = vmatprep.mubr.bf16.mxu0 0
        %6449 = vmatmul.mubr.bf16.gmra.mrb[0].mxu0 %v6161
        %v6450 = vpop.f32.mrb[0].mxu0
        %v6451 = vadd.f32 0.0, %v6450
        %v6452 = vpop.f32.mrb[0].mxu0
        %v6453 = vpop.f32.mrb[0].mxu0
        %v6454 = vadd.f32 0.0, %v6453
        %v6455 = vpop.f32.mrb[0].mxu0
        %6456 = vmatprep.mubr.bf16.mxu0 0
        %6457 = vmatmul.mubr.bf16.gmra.mrb[0].mxu0 %v6169
        %v6458 = vpop.f32.mrb[0].mxu0
        %v6459 = vpop.f32.mrb[0].mxu0
        %v6460 = vpop.f32.mrb[0].mxu0
        %v6461 = vadd.f32 0.0, %v6460
        %v6462 = vpop.f32.mrb[0].mxu0
        %6463 = vmatprep.mubr.bf16.mxu0 0
        %6464 = vmatmul.mubr.bf16.gmra.mrb[0].mxu0 %v6177
        %v6465 = vpop.f32.mrb[0].mxu0
        %v6466 = vadd.f32 0.0, %v6465
        %v6467 = vpop.f32.mrb[0].mxu0
        %v6468 = vpop.f32.mrb[0].mxu0
        %v6469 = vpop.f32.mrb[0].mxu0
        %6470 = vmatprep.mubr.bf16.mxu0 0
        %6471 = vmatmul.mubr.bf16.gmra.mrb[0].mxu0 %v6185
        %v6472 = vpop.f32.mrb[0].mxu0
        %v6473 = vadd.f32 0.0, %v6472
        %v6474 = vpop.f32.mrb[0].mxu0
        %v6475 = vpop.f32.mrb[0].mxu0
        %v6476 = vadd.f32 0.0, %v6475
        %v6477 = vpop.f32.mrb[0].mxu0
        %6478 = vmatprep.mubr.bf16.mxu0 0
        %6479 = vmatmul.mubr.bf16.gmra.mrb[0].mxu0 %v6193
        %v6480 = vpop.f32.mrb[0].mxu0
        %v6481 = vpop.f32.mrb[0].mxu0
        %v6482 = vpop.f32.mrb[0].mxu0
        %v6483 = vadd.f32 0.0, %v6482
        %v6484 = vpop.f32.mrb[0].mxu0
        %6485 = vmatprep.mubr.bf16.mxu0 0
        %6486 = vmatmul.mubr.bf16.gmra.mrb[0].mxu0 %v6201
        %v6487 = vpop.f32.mrb[0].mxu0
        %v6488 = vadd.f32 0.0, %v6487
        %v6489 = vpop.f32.mrb[0].mxu0
        %v6490 = vpop.f32.mrb[0].mxu0
        %v6491 = vpop.f32.mrb[0].mxu0
        %6492 = vmatprep.mubr.bf16.mxu0 0
        %6493 = vmatmul.mubr.bf16.gmra.mrb[0].mxu0 %v6209
        %v6494 = vpop.f32.mrb[0].mxu0
        %v6495 = vadd.f32 0.0, %v6494
        %v6496 = vpop.f32.mrb[0].mxu0
        %v6497 = vpop.f32.mrb[0].mxu0
        %v6498 = vadd.f32 0.0, %v6497
        %v6499 = vpop.f32.mrb[0].mxu0
        %6500 = vmatprep.mubr.bf16.mxu0 0
        %6501 = vmatmul.mubr.bf16.gmra.mrb[0].mxu0 %v6217
        %v6502 = vpop.f32.mrb[0].mxu0
        %v6503 = vpop.f32.mrb[0].mxu0
        %v6504 = vpop.f32.mrb[0].mxu0
        %v6505 = vadd.f32 0.0, %v6504
        %v6506 = vpop.f32.mrb[0].mxu0
        %6507 = vmatprep.mubr.bf16.mxu0 0
        %6508 = vmatmul.mubr.bf16.gmra.mrb[0].mxu0 %v6225
        %v6509 = vpop.f32.mrb[0].mxu0
        %v6510 = vadd.f32 0.0, %v6509
        %v6511 = vpop.f32.mrb[0].mxu0
        %v6512 = vpop.f32.mrb[0].mxu0
        %v6513 = vpop.f32.mrb[0].mxu0
        %6514 = vmatprep.mubr.bf16.mxu0 0
        %6515 = vmatmul.mubr.bf16.gmra.mrb[0].mxu0 %v6233
        %v6516 = vpop.f32.mrb[0].mxu0
        %v6517 = vadd.f32 0.0, %v6516
        %v6518 = vpop.f32.mrb[0].mxu0
        %v6519 = vpop.f32.mrb[0].mxu0
        %v6520 = vadd.f32 0.0, %v6519
        %v6521 = vpop.f32.mrb[0].mxu0
        %6522 = vmatprep.mubr.bf16.mxu0 0
        %6523 = vmatmul.mubr.bf16.gmra.mrb[0].mxu0 %v6241
        %v6524 = vpop.f32.mrb[0].mxu0
        %v6525 = vpop.f32.mrb[0].mxu0
        %v6526 = vpop.f32.mrb[0].mxu0
        %v6527 = vadd.f32 0.0, %v6526
        %v6528 = vpop.f32.mrb[0].mxu0
        %6529 = vmatprep.mubr.bf16.mxu0 0
        %6530 = vmatmul.mubr.bf16.gmra.mrb[0].mxu0 %v6249
        %v6531 = vpop.f32.mrb[0].mxu0
        %v6532 = vadd.f32 0.0, %v6531
        %v6533 = vpop.f32.mrb[0].mxu0
        %v6534 = vpop.f32.mrb[0].mxu0
        %v6535 = vpop.f32.mrb[0].mxu0
        %6536 = vmatprep.mubr.bf16.mxu0 0
        %6537 = vmatmul.mubr.bf16.gmra.mrb[0].mxu0 %v6257
        %v6538 = vpop.f32.mrb[0].mxu0
        %v6539 = vadd.f32 0.0, %v6538
        %v6540 = vpop.f32.mrb[0].mxu0
        %v6541 = vpop.f32.mrb[0].mxu0
        %v6542 = vadd.f32 0.0, %v6541
        %v6543 = vpop.f32.mrb[0].mxu0
        %6544 = vmatprep.mubr.bf16.mxu0 0
        %6545 = vmatmul.mubr.bf16.gmra.mrb[0].mxu0 %v6265
        %v6546 = vpop.f32.mrb[0].mxu0
        %v6547 = vpop.f32.mrb[0].mxu0
        %v6548 = vpop.f32.mrb[0].mxu0
        %v6549 = vadd.f32 0.0, %v6548
        %v6550 = vpop.f32.mrb[0].mxu0
        %6551 = vmatprep.mubr.bf16.mxu0 0
        %6552 = vmatmul.mubr.bf16.gmra.mrb[0].mxu0 %v6273
        %v6553 = vpop.f32.mrb[0].mxu0
        %v6554 = vadd.f32 0.0, %v6553
        %v6555 = vpop.f32.mrb[0].mxu0
        %v6556 = vpop.f32.mrb[0].mxu0
        %v6557 = vpop.f32.mrb[0].mxu0
        %6558 = vmatprep.mubr.bf16.mxu0 0
        %6559 = vmatmul.mubr.bf16.gmra.mrb[0].mxu0 %v6281
        %v6560 = vpop.f32.mrb[0].mxu0
        %v6561 = vadd.f32 0.0, %v6560
        %v6562 = vpop.f32.mrb[0].mxu0
        %v6563 = vpop.f32.mrb[0].mxu0
        %v6564 = vadd.f32 0.0, %v6563
        %v6565 = vpop.f32.mrb[0].mxu0
        %6566 = vmatprep.mubr.bf16.mxu0 0
        %6567 = vmatmul.mubr.bf16.gmra.mrb[0].mxu0 %v6289
        %v6568 = vpop.f32.mrb[0].mxu0
        %v6569 = vpop.f32.mrb[0].mxu0
        %v6570 = vpop.f32.mrb[0].mxu0
        %v6571 = vadd.f32 0.0, %v6570
        %v6572 = vpop.f32.mrb[0].mxu0
        %6573 = vmatprep.mubr.bf16.mxu0 0
        %6574 = vmatmul.mubr.bf16.gmra.mrb[0].mxu0 %v6297
        %v6575 = vpop.f32.mrb[0].mxu0
        %v6576 = vadd.f32 0.0, %v6575
        %v6577 = vpop.f32.mrb[0].mxu0
        %v6578 = vpop.f32.mrb[0].mxu0
        %v6579 = vpop.f32.mrb[0].mxu0
        %6580 = vmatprep.mubr.bf16.mxu0 0
        %6581 = vmatmul.mubr.bf16.gmra.mrb[0].mxu0 %v6305
        %v6582 = vpop.f32.mrb[0].mxu0
        %v6583 = vadd.f32 0.0, %v6582
        %v6584 = vpop.f32.mrb[0].mxu0
        %v6585 = vpop.f32.mrb[0].mxu0
        %v6586 = vadd.f32 0.0, %v6585
        %v6587 = vpop.f32.mrb[0].mxu0
        %6588 = vmatprep.mubr.bf16.mxu0 0
        %6589 = vmatmul.mubr.bf16.gmra.mrb[0].mxu0 %v6313
        %v6590 = vpop.f32.mrb[0].mxu0
        %v6591 = vpop.f32.mrb[0].mxu0
        %v6592 = vpop.f32.mrb[0].mxu0
        %v6593 = vadd.f32 0.0, %v6592
        %v6594 = vpop.f32.mrb[0].mxu0
        %6595 = vmatprep.mubr.bf16.mxu0 0
        %6596 = vmatmul.mubr.bf16.gmra.mrb[0].mxu0 %v6321
        %v6597 = vpop.f32.mrb[0].mxu0
        %v6598 = vadd.f32 0.0, %v6597
        %v6599 = vpop.f32.mrb[0].mxu0
        %v6600 = vpop.f32.mrb[0].mxu0
        %v6601 = vpop.f32.mrb[0].mxu0
        %6602 = vdwg.mxu0
        %v6603 = vadd.f32 %v5922, %v6429
        %v6604 = vadd.f32 %v5923, %v6432
        %v6605 = vadd.f32 %v5924, %v6439
        %v6606 = vadd.f32 %v5925, %v6444
        %v6607 = vadd.f32 %v5926, %v6451
        %v6608 = vadd.f32 %v5927, %v6454
        %v6609 = vadd.f32 %v5928, %v6461
        %v6610 = vadd.f32 %v5929, %v6466
        %v6611 = vadd.f32 %v5930, %v6473
        %v6612 = vadd.f32 %v5931, %v6476
        %v6613 = vadd.f32 %v5932, %v6483
        %v6614 = vadd.f32 %v5933, %v6488
        %v6615 = vadd.f32 %v5934, %v6495
        %v6616 = vadd.f32 %v5935, %v6498
        %v6617 = vadd.f32 %v5936, %v6505
        %v6618 = vadd.f32 %v5937, %v6510
        %v6619 = vadd.f32 %v5938, %v6517
        %v6620 = vadd.f32 %v5939, %v6520
        %v6621 = vadd.f32 %v5940, %v6527
        %v6622 = vadd.f32 %v5941, %v6532
        %v6623 = vadd.f32 %v5942, %v6539
        %v6624 = vadd.f32 %v5943, %v6542
        %v6625 = vadd.f32 %v5944, %v6549
        %v6626 = vadd.f32 %v5945, %v6554
        %v6627 = vadd.f32 %v5946, %v6561
        %v6628 = vadd.f32 %v5947, %v6564
        %v6629 = vadd.f32 %v5948, %v6571
        %v6630 = vadd.f32 %v5949, %v6576
        %v6631 = vadd.f32 %v5950, %v6583
        %v6632 = vadd.f32 %v5951, %v6586
        %v6633 = vadd.f32 %v5952, %v6593
        %v6634 = vadd.f32 %v5953, %v6598
        %v6635 = vld [vmem:[#allocation2 + $0x18] sm:$0xe]
        %v6637 = vunpack.c.l.b16 %v6635
        %v6638 = vpack.c.b16 %v6053, %v6637
        %v6639 = vrot.slane %v6638, 1
        %v6640 = vrot.slane %v6102, 1
        %v6641 = vsel %vm3582, %v6639, %v6640
        %v6642 = vrot.slane %v6103, 1
        %v6643 = vsel %vm3582, %v6640, %v6642
        %v6644 = vrot.slane %v6104, 1
        %v6645 = vsel %vm3582, %v6642, %v6644
        %v6646 = vrot.slane %v6105, 1
        %v6647 = vsel %vm3582, %v6644, %v6646
        %v6648 = vrot.slane %v6106, 1
        %v6649 = vsel %vm3582, %v6646, %v6648
        %v6650 = vrot.slane %v6107, 1
        %v6651 = vsel %vm3582, %v6648, %v6650
        %v6652 = vrot.slane %v6108, 1
        %v6653 = vsel %vm3582, %v6650, %v6652
        %v6654 = vrot.slane %v6109, 1
        %v6655 = vsel %vm3582, %v6652, %v6654
        %v6656 = vrot.slane %v6110, 1
        %v6657 = vsel %vm3582, %v6654, %v6656
        %v6658 = vrot.slane %v6111, 1
        %v6659 = vsel %vm3582, %v6656, %v6658
        %v6660 = vrot.slane %v6112, 1
        %v6661 = vsel %vm3582, %v6658, %v6660
        %v6662 = vrot.slane %v6113, 1
        %v6663 = vsel %vm3582, %v6660, %v6662
        %v6664 = vrot.slane %v6114, 1
        %v6665 = vsel %vm3582, %v6662, %v6664
        %v6666 = vrot.slane %v6115, 1
        %v6667 = vsel %vm3582, %v6664, %v6666
        %v6668 = vrot.slane %v6116, 1
        %v6669 = vsel %vm3582, %v6666, %v6668
        %v6670 = vrot.slane %v6117, 1
        %v6671 = vsel %vm3582, %v6668, %v6670
        %v6672 = vrot.slane %v6118, 1
        %v6673 = vsel %vm3582, %v6670, %v6672
        %v6674 = vrot.slane %v6119, 1
        %v6675 = vsel %vm3582, %v6672, %v6674
        %v6676 = vrot.slane %v6120, 1
        %v6677 = vsel %vm3582, %v6674, %v6676
        %v6678 = vrot.slane %v6121, 1
        %v6679 = vsel %vm3582, %v6676, %v6678
        %v6680 = vrot.slane %v6122, 1
        %v6681 = vsel %vm3582, %v6678, %v6680
        %v6682 = vrot.slane %v6123, 1
        %v6683 = vsel %vm3582, %v6680, %v6682
        %v6684 = vrot.slane %v6124, 1
        %v6685 = vsel %vm3582, %v6682, %v6684
        %v6686 = vrot.slane %v6125, 1
        %v6687 = vsel %vm3582, %v6684, %v6686
        %v6728 = vunpack.c.l.b16 %v2631
        %v6729 = vunpack.c.l.b16 %v2632
        %v6730 = vunpack.c.l.b16 %v2633
        %v6731 = vunpack.c.l.b16 %v2634
        %v6732 = vunpack.c.l.b16 %v2635
        %v6733 = vunpack.c.l.b16 %v2636
        %v6734 = vunpack.c.l.b16 %v2637
        %v6735 = vunpack.c.l.b16 %v2638
        %v6736 = vunpack.c.l.b16 %v2639
        %v6737 = vunpack.c.l.b16 %v2640
        %v6738 = vunpack.c.l.b16 %v2641
        %v6739 = vunpack.c.l.b16 %v2642
        %v6740 = vunpack.c.l.b16 %v2643
        %v6741 = vunpack.c.l.b16 %v2644
        %v6742 = vunpack.c.l.b16 %v2645
        %v6743 = vunpack.c.l.b16 %v2646
        %v6744 = vpack.c.b16 %v6729, %v6728
        %v6745 = vpack.c.b16 %v6731, %v6730
        %v6746 = vpack.c.b16 %v6733, %v6732
        %v6747 = vpack.c.b16 %v6735, %v6734
        %v6748 = vpack.c.b16 %v6737, %v6736
        %v6749 = vpack.c.b16 %v6739, %v6738
        %v6750 = vpack.c.b16 %v6741, %v6740
        %v6751 = vpack.c.b16 %v6743, %v6742
        %6760 = vmatprep.subr.bf16.mxu0 0
        %6761 = vmatpush1.bf16.msra.mxu0 %v6744
        %6762 = vmatprep.subr.bf16.mxu0 0
        %6763 = vmatpush1.bf16.msra.mxu0 %v6745
        %6764 = vmatprep.subr.bf16.mxu0 0
        %6765 = vmatpush1.bf16.msra.mxu0 %v6746
        %6766 = vmatprep.subr.bf16.mxu0 0
        %6767 = vmatpush1.bf16.msra.mxu0 %v6747
        %6768 = vmatprep.subr.bf16.mxu0 0
        %6769 = vmatpush1.bf16.msra.mxu0 %v6748
        %6770 = vmatprep.subr.bf16.mxu0 0
        %6771 = vmatpush1.bf16.msra.mxu0 %v6749
        %6772 = vmatprep.subr.bf16.mxu0 0
        %6773 = vmatpush1.bf16.msra.mxu0 %v6750
        %6774 = vmatprep.subr.bf16.mxu0 0
        %6775 = vmatpush1.bf16.msra.mxu0 %v6751
        %6776 = vmatprep.subr.bf16.mxu0 0
        %6777 = vmatpush1.bf16.msra.mxu0 0
        %6778 = vmatprep.subr.bf16.mxu0 0
        %6779 = vmatpush1.bf16.msra.mxu0 0
        %6780 = vmatprep.subr.bf16.mxu0 0
        %6781 = vmatpush1.bf16.msra.mxu0 0
        %6782 = vmatprep.subr.bf16.mxu0 0
        %6783 = vmatpush1.bf16.msra.mxu0 0
        %6784 = vmatprep.subr.bf16.mxu0 0
        %6785 = vmatpush1.bf16.msra.mxu0 0
        %6786 = vmatprep.subr.bf16.mxu0 0
        %6787 = vmatpush1.bf16.msra.mxu0 0
        %6788 = vmatprep.subr.bf16.mxu0 0
        %6789 = vmatpush1.bf16.msra.mxu0 0
        %6790 = vmatprep.subr.bf16.mxu0 0
        %6791 = vmatpush1.bf16.msra.mxu0 0
        %6792 = vmatprep.mubr.bf16.mxu0 0
        %6793 = vmatmul.mubr.bf16.gmra.mrb[0].mxu0 %v6641
        %v6794 = vpop.f32.mrb[0].mxu0
        %v6795 = vadd.f32 0.0, %v6794
        %v6796 = vpop.f32.mrb[0].mxu0
        %v6797 = vpop.f32.mrb[0].mxu0
        %v6798 = vadd.f32 0.0, %v6797
        %v6799 = vpop.f32.mrb[0].mxu0
        %6800 = vmatprep.mubr.bf16.mxu0 0
        %6801 = vmatmul.mubr.bf16.gmra.mrb[0].mxu0 %v6643
        %v6802 = vpop.f32.mrb[0].mxu0
        %v6803 = vpop.f32.mrb[0].mxu0
        %v6804 = vpop.f32.mrb[0].mxu0
        %v6805 = vadd.f32 0.0, %v6804
        %v6806 = vpop.f32.mrb[0].mxu0
        %6807 = vmatprep.mubr.bf16.mxu0 0
        %6808 = vmatmul.mubr.bf16.gmra.mrb[0].mxu0 %v6645
        %v6809 = vpop.f32.mrb[0].mxu0
        %v6810 = vadd.f32 0.0, %v6809
        %v6811 = vpop.f32.mrb[0].mxu0
        %v6812 = vpop.f32.mrb[0].mxu0
        %v6813 = vpop.f32.mrb[0].mxu0
        %6814 = vmatprep.mubr.bf16.mxu0 0
        %6815 = vmatmul.mubr.bf16.gmra.mrb[0].mxu0 %v6647
        %v6816 = vpop.f32.mrb[0].mxu0
        %v6817 = vadd.f32 0.0, %v6816
        %v6818 = vpop.f32.mrb[0].mxu0
        %v6819 = vpop.f32.mrb[0].mxu0
        %v6820 = vadd.f32 0.0, %v6819
        %v6821 = vpop.f32.mrb[0].mxu0
        %6822 = vmatprep.mubr.bf16.mxu0 0
        %6823 = vmatmul.mubr.bf16.gmra.mrb[0].mxu0 %v6649
        %v6824 = vpop.f32.mrb[0].mxu0
        %v6825 = vpop.f32.mrb[0].mxu0
        %v6826 = vpop.f32.mrb[0].mxu0
        %v6827 = vadd.f32 0.0, %v6826
        %v6828 = vpop.f32.mrb[0].mxu0
        %6829 = vmatprep.mubr.bf16.mxu0 0
        %6830 = vmatmul.mubr.bf16.gmra.mrb[0].mxu0 %v6651
        %v6831 = vpop.f32.mrb[0].mxu0
        %v6832 = vadd.f32 0.0, %v6831
        %v6833 = vpop.f32.mrb[0].mxu0
        %v6834 = vpop.f32.mrb[0].mxu0
        %v6835 = vpop.f32.mrb[0].mxu0
        %6836 = vmatprep.mubr.bf16.mxu0 0
        %6837 = vmatmul.mubr.bf16.gmra.mrb[0].mxu0 %v6653
        %v6838 = vpop.f32.mrb[0].mxu0
        %v6839 = vadd.f32 0.0, %v6838
        %v6840 = vpop.f32.mrb[0].mxu0
        %v6841 = vpop.f32.mrb[0].mxu0
        %v6842 = vadd.f32 0.0, %v6841
        %v6843 = vpop.f32.mrb[0].mxu0
        %6844 = vmatprep.mubr.bf16.mxu0 0
        %6845 = vmatmul.mubr.bf16.gmra.mrb[0].mxu0 %v6655
        %v6846 = vpop.f32.mrb[0].mxu0
        %v6847 = vpop.f32.mrb[0].mxu0
        %v6848 = vpop.f32.mrb[0].mxu0
        %v6849 = vadd.f32 0.0, %v6848
        %v6850 = vpop.f32.mrb[0].mxu0
        %6851 = vmatprep.mubr.bf16.mxu0 0
        %6852 = vmatmul.mubr.bf16.gmra.mrb[0].mxu0 %v6657
        %v6853 = vpop.f32.mrb[0].mxu0
        %v6854 = vadd.f32 0.0, %v6853
        %v6855 = vpop.f32.mrb[0].mxu0
        %v6856 = vpop.f32.mrb[0].mxu0
        %v6857 = vpop.f32.mrb[0].mxu0
        %6858 = vmatprep.mubr.bf16.mxu0 0
        %6859 = vmatmul.mubr.bf16.gmra.mrb[0].mxu0 %v6659
        %v6860 = vpop.f32.mrb[0].mxu0
        %v6861 = vadd.f32 0.0, %v6860
        %v6862 = vpop.f32.mrb[0].mxu0
        %v6863 = vpop.f32.mrb[0].mxu0
        %v6864 = vadd.f32 0.0, %v6863
        %v6865 = vpop.f32.mrb[0].mxu0
        %6866 = vmatprep.mubr.bf16.mxu0 0
        %6867 = vmatmul.mubr.bf16.gmra.mrb[0].mxu0 %v6661
        %v6868 = vpop.f32.mrb[0].mxu0
        %v6869 = vpop.f32.mrb[0].mxu0
        %v6870 = vpop.f32.mrb[0].mxu0
        %v6871 = vadd.f32 0.0, %v6870
        %v6872 = vpop.f32.mrb[0].mxu0
        %6873 = vmatprep.mubr.bf16.mxu0 0
        %6874 = vmatmul.mubr.bf16.gmra.mrb[0].mxu0 %v6663
        %v6875 = vpop.f32.mrb[0].mxu0
        %v6876 = vadd.f32 0.0, %v6875
        %v6877 = vpop.f32.mrb[0].mxu0
        %v6878 = vpop.f32.mrb[0].mxu0
        %v6879 = vpop.f32.mrb[0].mxu0
        %6880 = vmatprep.mubr.bf16.mxu0 0
        %6881 = vmatmul.mubr.bf16.gmra.mrb[0].mxu0 %v6665
        %v6882 = vpop.f32.mrb[0].mxu0
        %v6883 = vadd.f32 0.0, %v6882
        %v6884 = vpop.f32.mrb[0].mxu0
        %v6885 = vpop.f32.mrb[0].mxu0
        %v6886 = vadd.f32 0.0, %v6885
        %v6887 = vpop.f32.mrb[0].mxu0
        %6888 = vmatprep.mubr.bf16.mxu0 0
        %6889 = vmatmul.mubr.bf16.gmra.mrb[0].mxu0 %v6667
        %v6890 = vpop.f32.mrb[0].mxu0
        %v6891 = vpop.f32.mrb[0].mxu0
        %v6892 = vpop.f32.mrb[0].mxu0
        %v6893 = vadd.f32 0.0, %v6892
        %v6894 = vpop.f32.mrb[0].mxu0
        %6895 = vmatprep.mubr.bf16.mxu0 0
        %6896 = vmatmul.mubr.bf16.gmra.mrb[0].mxu0 %v6669
        %v6897 = vpop.f32.mrb[0].mxu0
        %v6898 = vadd.f32 0.0, %v6897
        %v6899 = vpop.f32.mrb[0].mxu0
        %v6900 = vpop.f32.mrb[0].mxu0
        %v6901 = vpop.f32.mrb[0].mxu0
        %6902 = vmatprep.mubr.bf16.mxu0 0
        %6903 = vmatmul.mubr.bf16.gmra.mrb[0].mxu0 %v6671
        %v6904 = vpop.f32.mrb[0].mxu0
        %v6905 = vadd.f32 0.0, %v6904
        %v6906 = vpop.f32.mrb[0].mxu0
        %v6907 = vpop.f32.mrb[0].mxu0
        %v6908 = vadd.f32 0.0, %v6907
        %v6909 = vpop.f32.mrb[0].mxu0
        %6910 = vmatprep.mubr.bf16.mxu0 0
        %6911 = vmatmul.mubr.bf16.gmra.mrb[0].mxu0 %v6673
        %v6912 = vpop.f32.mrb[0].mxu0
        %v6913 = vpop.f32.mrb[0].mxu0
        %v6914 = vpop.f32.mrb[0].mxu0
        %v6915 = vadd.f32 0.0, %v6914
        %v6916 = vpop.f32.mrb[0].mxu0
        %6917 = vmatprep.mubr.bf16.mxu0 0
        %6918 = vmatmul.mubr.bf16.gmra.mrb[0].mxu0 %v6675
        %v6919 = vpop.f32.mrb[0].mxu0
        %v6920 = vadd.f32 0.0, %v6919
        %v6921 = vpop.f32.mrb[0].mxu0
        %v6922 = vpop.f32.mrb[0].mxu0
        %v6923 = vpop.f32.mrb[0].mxu0
        %6924 = vmatprep.mubr.bf16.mxu0 0
        %6925 = vmatmul.mubr.bf16.gmra.mrb[0].mxu0 %v6677
        %v6926 = vpop.f32.mrb[0].mxu0
        %v6927 = vadd.f32 0.0, %v6926
        %v6928 = vpop.f32.mrb[0].mxu0
        %v6929 = vpop.f32.mrb[0].mxu0
        %v6930 = vadd.f32 0.0, %v6929
        %v6931 = vpop.f32.mrb[0].mxu0
        %6932 = vmatprep.mubr.bf16.mxu0 0
        %6933 = vmatmul.mubr.bf16.gmra.mrb[0].mxu0 %v6679
        %v6934 = vpop.f32.mrb[0].mxu0
        %v6935 = vpop.f32.mrb[0].mxu0
        %v6936 = vpop.f32.mrb[0].mxu0
        %v6937 = vadd.f32 0.0, %v6936
        %v6938 = vpop.f32.mrb[0].mxu0
        %6939 = vmatprep.mubr.bf16.mxu0 0
        %6940 = vmatmul.mubr.bf16.gmra.mrb[0].mxu0 %v6681
        %v6941 = vpop.f32.mrb[0].mxu0
        %v6942 = vadd.f32 0.0, %v6941
        %v6943 = vpop.f32.mrb[0].mxu0
        %v6944 = vpop.f32.mrb[0].mxu0
        %v6945 = vpop.f32.mrb[0].mxu0
        %6946 = vmatprep.mubr.bf16.mxu0 0
        %6947 = vmatmul.mubr.bf16.gmra.mrb[0].mxu0 %v6683
        %v6948 = vpop.f32.mrb[0].mxu0
        %v6949 = vadd.f32 0.0, %v6948
        %v6950 = vpop.f32.mrb[0].mxu0
        %v6951 = vpop.f32.mrb[0].mxu0
        %v6952 = vadd.f32 0.0, %v6951
        %v6953 = vpop.f32.mrb[0].mxu0
        %6954 = vmatprep.mubr.bf16.mxu0 0
        %6955 = vmatmul.mubr.bf16.gmra.mrb[0].mxu0 %v6685
        %v6956 = vpop.f32.mrb[0].mxu0
        %v6957 = vpop.f32.mrb[0].mxu0
        %v6958 = vpop.f32.mrb[0].mxu0
        %v6959 = vadd.f32 0.0, %v6958
        %v6960 = vpop.f32.mrb[0].mxu0
        %6961 = vmatprep.mubr.bf16.mxu0 0
        %6962 = vmatmul.mubr.bf16.gmra.mrb[0].mxu0 %v6687
        %v6963 = vpop.f32.mrb[0].mxu0
        %v6964 = vadd.f32 0.0, %v6963
        %v6965 = vpop.f32.mrb[0].mxu0
        %v6966 = vpop.f32.mrb[0].mxu0
        %v6967 = vpop.f32.mrb[0].mxu0
        %6968 = vdwg.mxu0
        %v6969 = vadd.f32 %v6603, %v6795
        %v6970 = vadd.f32 %v6604, %v6798
        %v6971 = vadd.f32 %v6605, %v6805
        %v6972 = vadd.f32 %v6606, %v6810
        %v6973 = vadd.f32 %v6607, %v6817
        %v6974 = vadd.f32 %v6608, %v6820
        %v6975 = vadd.f32 %v6609, %v6827
        %v6976 = vadd.f32 %v6610, %v6832
        %v6977 = vadd.f32 %v6611, %v6839
        %v6978 = vadd.f32 %v6612, %v6842
        %v6979 = vadd.f32 %v6613, %v6849
        %v6980 = vadd.f32 %v6614, %v6854
        %v6981 = vadd.f32 %v6615, %v6861
        %v6982 = vadd.f32 %v6616, %v6864
        %v6983 = vadd.f32 %v6617, %v6871
        %v6984 = vadd.f32 %v6618, %v6876
        %v6985 = vadd.f32 %v6619, %v6883
        %v6986 = vadd.f32 %v6620, %v6886
        %v6987 = vadd.f32 %v6621, %v6893
        %v6988 = vadd.f32 %v6622, %v6898
        %v6989 = vadd.f32 %v6623, %v6905
        %v6990 = vadd.f32 %v6624, %v6908
        %v6991 = vadd.f32 %v6625, %v6915
        %v6992 = vadd.f32 %v6626, %v6920
        %v6993 = vadd.f32 %v6627, %v6927
        %v6994 = vadd.f32 %v6628, %v6930
        %v6995 = vadd.f32 %v6629, %v6937
        %v6996 = vadd.f32 %v6630, %v6942
        %v6997 = vadd.f32 %v6631, %v6949
        %v6998 = vadd.f32 %v6632, %v6952
        %v6999 = vadd.f32 %v6633, %v6959
        %v7000 = vadd.f32 %v6634, %v6964
        %s7001 = scalar_lea.vmem [#allocation9], 1
        %v7002 = vld [vmem:[%s7001] sm:$0x1]
        %v7004 = vlaneseq
        %v7005 = vshrl.u32 %v7004, 7
        %v7006 = vsub.s32 0, %v7005
        %v7007 = vrot.slane %v7002, %v7006
        %v7009 = vadd.f32 %v6969, %v7007
        %v7010 = vadd.f32 %v6970, %v7007
        %v7011 = vadd.f32 %v6971, %v7007
        %v7012 = vadd.f32 %v6972, %v7007
        %v7013 = vadd.f32 %v6973, %v7007
        %v7014 = vadd.f32 %v6974, %v7007
        %v7015 = vadd.f32 %v6975, %v7007
        %v7016 = vadd.f32 %v6976, %v7007
        %v7017 = vadd.f32 %v6977, %v7007
        %v7018 = vadd.f32 %v6978, %v7007
        %v7019 = vadd.f32 %v6979, %v7007
        %v7020 = vadd.f32 %v6980, %v7007
        %v7021 = vadd.f32 %v6981, %v7007
        %v7022 = vadd.f32 %v6982, %v7007
        %v7023 = vadd.f32 %v6983, %v7007
        %v7024 = vadd.f32 %v6984, %v7007
        %v7025 = vadd.f32 %v6985, %v7007
        %v7026 = vadd.f32 %v6986, %v7007
        %v7027 = vadd.f32 %v6987, %v7007
        %v7028 = vadd.f32 %v6988, %v7007
        %v7029 = vadd.f32 %v6989, %v7007
        %v7030 = vadd.f32 %v6990, %v7007
        %v7031 = vadd.f32 %v6991, %v7007
        %v7032 = vadd.f32 %v6992, %v7007
        %v7033 = vadd.f32 %v6993, %v7007
        %v7034 = vadd.f32 %v6994, %v7007
        %v7035 = vadd.f32 %v6995, %v7007
        %v7036 = vadd.f32 %v6996, %v7007
        %v7037 = vadd.f32 %v6997, %v7007
        %v7038 = vadd.f32 %v6998, %v7007
        %v7039 = vadd.f32 %v6999, %v7007
        %v7040 = vadd.f32 %v7000, %v7007
        %v7041 = vmax.f32 %v7009, 0.0
        %v7042 = vmax.f32 %v7010, 0.0
        %v7043 = vmax.f32 %v7011, 0.0
        %v7044 = vmax.f32 %v7012, 0.0
        %v7045 = vmax.f32 %v7013, 0.0
        %v7046 = vmax.f32 %v7014, 0.0
        %v7047 = vmax.f32 %v7015, 0.0
        %v7048 = vmax.f32 %v7016, 0.0
        %v7049 = vmax.f32 %v7017, 0.0
        %v7050 = vmax.f32 %v7018, 0.0
        %v7051 = vmax.f32 %v7019, 0.0
        %v7052 = vmax.f32 %v7020, 0.0
        %v7053 = vmax.f32 %v7021, 0.0
        %v7054 = vmax.f32 %v7022, 0.0
        %v7055 = vmax.f32 %v7023, 0.0
        %v7056 = vmax.f32 %v7024, 0.0
        %v7057 = vmax.f32 %v7025, 0.0
        %v7058 = vmax.f32 %v7026, 0.0
        %v7059 = vmax.f32 %v7027, 0.0
        %v7060 = vmax.f32 %v7028, 0.0
        %v7061 = vmax.f32 %v7029, 0.0
        %v7062 = vmax.f32 %v7030, 0.0
        %v7063 = vmax.f32 %v7031, 0.0
        %v7064 = vmax.f32 %v7032, 0.0
        %v7065 = vmax.f32 %v7033, 0.0
        %v7066 = vmax.f32 %v7034, 0.0
        %v7067 = vmax.f32 %v7035, 0.0
        %v7068 = vmax.f32 %v7036, 0.0
        %v7069 = vmax.f32 %v7037, 0.0
        %v7070 = vmax.f32 %v7038, 0.0
        %v7071 = vmax.f32 %v7039, 0.0
        %v7072 = vmax.f32 %v7040, 0.0
        %v7073 = vmax.f32 %v7041, %v7043
        %v7074 = vmax.f32 %v7042, %v7044
        %v7075 = vmax.f32 %v7045, %v7047
        %v7076 = vmax.f32 %v7046, %v7048
        %v7077 = vmax.f32 %v7049, %v7051
        %v7078 = vmax.f32 %v7050, %v7052
        %v7079 = vmax.f32 %v7053, %v7055
        %v7080 = vmax.f32 %v7054, %v7056
        %v7081 = vmax.f32 %v7057, %v7059
        %v7082 = vmax.f32 %v7058, %v7060
        %v7083 = vmax.f32 %v7061, %v7063
        %v7084 = vmax.f32 %v7062, %v7064
        %v7085 = vmax.f32 %v7065, %v7067
        %v7086 = vmax.f32 %v7066, %v7068
        %v7087 = vmax.f32 %v7069, %v7071
        %v7088 = vmax.f32 %v7070, %v7072
        %v7105 = vcombine.high %v7073, %v7073
        %v7107 = vunpack.c.l.s4 1983009808
        %v7108 = vunpack.c.0.s8 %v7107
        %v7109 = vlaneseq
        %v7110 = vshrl.u32 %v7109, 7
        %v7111 = vsub.s32 %v7108, %v7110
        %v7112 = vrot.slane %v7073, %v7111
        %v7114 = vunpack.c.l.s4 1983009808
        %v7115 = vunpack.c.0.s8 %v7114
        %v7116 = vlaneseq
        %v7117 = vshrl.u32 %v7116, 7
        %v7118 = vsub.s32 %v7115, %v7117
        %v7119 = vrot.slane %v7105, %v7118
        %v7120 = vcombine.high %v7112, %v7112
        %v7121 = vcombine.high %v7119, %v7119
        %v7122 = vcombine.high %v7074, %v7074
        %v7124 = vunpack.c.l.s4 1983009808
        %v7125 = vunpack.c.0.s8 %v7124
        %v7126 = vlaneseq
        %v7127 = vshrl.u32 %v7126, 7
        %v7128 = vsub.s32 %v7125, %v7127
        %v7129 = vrot.slane %v7074, %v7128
        %v7131 = vunpack.c.l.s4 1983009808
        %v7132 = vunpack.c.0.s8 %v7131
        %v7133 = vlaneseq
        %v7134 = vshrl.u32 %v7133, 7
        %v7135 = vsub.s32 %v7132, %v7134
        %v7136 = vrot.slane %v7122, %v7135
        %v7137 = vcombine.high %v7129, %v7129
        %v7138 = vcombine.high %v7136, %v7136
        %v7139 = vcombine.high %v7075, %v7075
        %v7141 = vunpack.c.l.s4 1983009808
        %v7142 = vunpack.c.0.s8 %v7141
        %v7143 = vlaneseq
        %v7144 = vshrl.u32 %v7143, 7
        %v7145 = vsub.s32 %v7142, %v7144
        %v7146 = vrot.slane %v7075, %v7145
        %v7148 = vunpack.c.l.s4 1983009808
        %v7149 = vunpack.c.0.s8 %v7148
        %v7150 = vlaneseq
        %v7151 = vshrl.u32 %v7150, 7
        %v7152 = vsub.s32 %v7149, %v7151
        %v7153 = vrot.slane %v7139, %v7152
        %v7154 = vcombine.high %v7146, %v7146
        %v7155 = vcombine.high %v7153, %v7153
        %v7156 = vcombine.high %v7076, %v7076
        %v7158 = vunpack.c.l.s4 1983009808
        %v7159 = vunpack.c.0.s8 %v7158
        %v7160 = vlaneseq
        %v7161 = vshrl.u32 %v7160, 7
        %v7162 = vsub.s32 %v7159, %v7161
        %v7163 = vrot.slane %v7076, %v7162
        %v7165 = vunpack.c.l.s4 1983009808
        %v7166 = vunpack.c.0.s8 %v7165
        %v7167 = vlaneseq
        %v7168 = vshrl.u32 %v7167, 7
        %v7169 = vsub.s32 %v7166, %v7168
        %v7170 = vrot.slane %v7156, %v7169
        %v7171 = vcombine.high %v7163, %v7163
        %v7172 = vcombine.high %v7170, %v7170
        %v7173 = vcombine.high %v7077, %v7077
        %v7175 = vunpack.c.l.s4 1983009808
        %v7176 = vunpack.c.0.s8 %v7175
        %v7177 = vlaneseq
        %v7178 = vshrl.u32 %v7177, 7
        %v7179 = vsub.s32 %v7176, %v7178
        %v7180 = vrot.slane %v7077, %v7179
        %v7182 = vunpack.c.l.s4 1983009808
        %v7183 = vunpack.c.0.s8 %v7182
        %v7184 = vlaneseq
        %v7185 = vshrl.u32 %v7184, 7
        %v7186 = vsub.s32 %v7183, %v7185
        %v7187 = vrot.slane %v7173, %v7186
        %v7188 = vcombine.high %v7180, %v7180
        %v7189 = vcombine.high %v7187, %v7187
        %v7190 = vcombine.high %v7078, %v7078
        %v7192 = vunpack.c.l.s4 1983009808
        %v7193 = vunpack.c.0.s8 %v7192
        %v7194 = vlaneseq
        %v7195 = vshrl.u32 %v7194, 7
        %v7196 = vsub.s32 %v7193, %v7195
        %v7197 = vrot.slane %v7078, %v7196
        %v7199 = vunpack.c.l.s4 1983009808
        %v7200 = vunpack.c.0.s8 %v7199
        %v7201 = vlaneseq
        %v7202 = vshrl.u32 %v7201, 7
        %v7203 = vsub.s32 %v7200, %v7202
        %v7204 = vrot.slane %v7190, %v7203
        %v7205 = vcombine.high %v7197, %v7197
        %v7206 = vcombine.high %v7204, %v7204
        %v7207 = vcombine.high %v7079, %v7079
        %v7209 = vunpack.c.l.s4 1983009808
        %v7210 = vunpack.c.0.s8 %v7209
        %v7211 = vlaneseq
        %v7212 = vshrl.u32 %v7211, 7
        %v7213 = vsub.s32 %v7210, %v7212
        %v7214 = vrot.slane %v7079, %v7213
        %v7216 = vunpack.c.l.s4 1983009808
        %v7217 = vunpack.c.0.s8 %v7216
        %v7218 = vlaneseq
        %v7219 = vshrl.u32 %v7218, 7
        %v7220 = vsub.s32 %v7217, %v7219
        %v7221 = vrot.slane %v7207, %v7220
        %v7222 = vcombine.high %v7214, %v7214
        %v7223 = vcombine.high %v7221, %v7221
        %v7224 = vcombine.high %v7080, %v7080
        %v7226 = vunpack.c.l.s4 1983009808
        %v7227 = vunpack.c.0.s8 %v7226
        %v7228 = vlaneseq
        %v7229 = vshrl.u32 %v7228, 7
        %v7230 = vsub.s32 %v7227, %v7229
        %v7231 = vrot.slane %v7080, %v7230
        %v7233 = vunpack.c.l.s4 1983009808
        %v7234 = vunpack.c.0.s8 %v7233
        %v7235 = vlaneseq
        %v7236 = vshrl.u32 %v7235, 7
        %v7237 = vsub.s32 %v7234, %v7236
        %v7238 = vrot.slane %v7224, %v7237
        %v7239 = vcombine.high %v7231, %v7231
        %v7240 = vcombine.high %v7238, %v7238
        %v7241 = vcombine.high %v7081, %v7081
        %v7243 = vunpack.c.l.s4 1983009808
        %v7244 = vunpack.c.0.s8 %v7243
        %v7245 = vlaneseq
        %v7246 = vshrl.u32 %v7245, 7
        %v7247 = vsub.s32 %v7244, %v7246
        %v7248 = vrot.slane %v7081, %v7247
        %v7250 = vunpack.c.l.s4 1983009808
        %v7251 = vunpack.c.0.s8 %v7250
        %v7252 = vlaneseq
        %v7253 = vshrl.u32 %v7252, 7
        %v7254 = vsub.s32 %v7251, %v7253
        %v7255 = vrot.slane %v7241, %v7254
        %v7256 = vcombine.high %v7248, %v7248
        %v7257 = vcombine.high %v7255, %v7255
        %v7258 = vcombine.high %v7082, %v7082
        %v7260 = vunpack.c.l.s4 1983009808
        %v7261 = vunpack.c.0.s8 %v7260
        %v7262 = vlaneseq
        %v7263 = vshrl.u32 %v7262, 7
        %v7264 = vsub.s32 %v7261, %v7263
        %v7265 = vrot.slane %v7082, %v7264
        %v7267 = vunpack.c.l.s4 1983009808
        %v7268 = vunpack.c.0.s8 %v7267
        %v7269 = vlaneseq
        %v7270 = vshrl.u32 %v7269, 7
        %v7271 = vsub.s32 %v7268, %v7270
        %v7272 = vrot.slane %v7258, %v7271
        %v7273 = vcombine.high %v7265, %v7265
        %v7274 = vcombine.high %v7272, %v7272
        %v7275 = vcombine.high %v7083, %v7083
        %v7277 = vunpack.c.l.s4 1983009808
        %v7278 = vunpack.c.0.s8 %v7277
        %v7279 = vlaneseq
        %v7280 = vshrl.u32 %v7279, 7
        %v7281 = vsub.s32 %v7278, %v7280
        %v7282 = vrot.slane %v7083, %v7281
        %v7284 = vunpack.c.l.s4 1983009808
        %v7285 = vunpack.c.0.s8 %v7284
        %v7286 = vlaneseq
        %v7287 = vshrl.u32 %v7286, 7
        %v7288 = vsub.s32 %v7285, %v7287
        %v7289 = vrot.slane %v7275, %v7288
        %v7290 = vcombine.high %v7282, %v7282
        %v7291 = vcombine.high %v7289, %v7289
        %v7292 = vcombine.high %v7084, %v7084
        %v7294 = vunpack.c.l.s4 1983009808
        %v7295 = vunpack.c.0.s8 %v7294
        %v7296 = vlaneseq
        %v7297 = vshrl.u32 %v7296, 7
        %v7298 = vsub.s32 %v7295, %v7297
        %v7299 = vrot.slane %v7084, %v7298
        %v7301 = vunpack.c.l.s4 1983009808
        %v7302 = vunpack.c.0.s8 %v7301
        %v7303 = vlaneseq
        %v7304 = vshrl.u32 %v7303, 7
        %v7305 = vsub.s32 %v7302, %v7304
        %v7306 = vrot.slane %v7292, %v7305
        %v7307 = vcombine.high %v7299, %v7299
        %v7308 = vcombine.high %v7306, %v7306
        %v7309 = vcombine.high %v7085, %v7085
        %v7311 = vunpack.c.l.s4 1983009808
        %v7312 = vunpack.c.0.s8 %v7311
        %v7313 = vlaneseq
        %v7314 = vshrl.u32 %v7313, 7
        %v7315 = vsub.s32 %v7312, %v7314
        %v7316 = vrot.slane %v7085, %v7315
        %v7318 = vunpack.c.l.s4 1983009808
        %v7319 = vunpack.c.0.s8 %v7318
        %v7320 = vlaneseq
        %v7321 = vshrl.u32 %v7320, 7
        %v7322 = vsub.s32 %v7319, %v7321
        %v7323 = vrot.slane %v7309, %v7322
        %v7324 = vcombine.high %v7316, %v7316
        %v7325 = vcombine.high %v7323, %v7323
        %v7326 = vcombine.high %v7086, %v7086
        %v7328 = vunpack.c.l.s4 1983009808
        %v7329 = vunpack.c.0.s8 %v7328
        %v7330 = vlaneseq
        %v7331 = vshrl.u32 %v7330, 7
        %v7332 = vsub.s32 %v7329, %v7331
        %v7333 = vrot.slane %v7086, %v7332
        %v7335 = vunpack.c.l.s4 1983009808
        %v7336 = vunpack.c.0.s8 %v7335
        %v7337 = vlaneseq
        %v7338 = vshrl.u32 %v7337, 7
        %v7339 = vsub.s32 %v7336, %v7338
        %v7340 = vrot.slane %v7326, %v7339
        %v7341 = vcombine.high %v7333, %v7333
        %v7342 = vcombine.high %v7340, %v7340
        %v7343 = vcombine.high %v7087, %v7087
        %v7345 = vunpack.c.l.s4 1983009808
        %v7346 = vunpack.c.0.s8 %v7345
        %v7347 = vlaneseq
        %v7348 = vshrl.u32 %v7347, 7
        %v7349 = vsub.s32 %v7346, %v7348
        %v7350 = vrot.slane %v7087, %v7349
        %v7352 = vunpack.c.l.s4 1983009808
        %v7353 = vunpack.c.0.s8 %v7352
        %v7354 = vlaneseq
        %v7355 = vshrl.u32 %v7354, 7
        %v7356 = vsub.s32 %v7353, %v7355
        %v7357 = vrot.slane %v7343, %v7356
        %v7358 = vcombine.high %v7350, %v7350
        %v7359 = vcombine.high %v7357, %v7357
        %v7360 = vcombine.high %v7088, %v7088
        %v7362 = vunpack.c.l.s4 1983009808
        %v7363 = vunpack.c.0.s8 %v7362
        %v7364 = vlaneseq
        %v7365 = vshrl.u32 %v7364, 7
        %v7366 = vsub.s32 %v7363, %v7365
        %v7367 = vrot.slane %v7088, %v7366
        %v7369 = vunpack.c.l.s4 1983009808
        %v7370 = vunpack.c.0.s8 %v7369
        %v7371 = vlaneseq
        %v7372 = vshrl.u32 %v7371, 7
        %v7373 = vsub.s32 %v7370, %v7372
        %v7374 = vrot.slane %v7360, %v7373
        %v7375 = vcombine.high %v7367, %v7367
        %v7376 = vcombine.high %v7374, %v7374
        %vm7441 = vcmask 1041408
        %v7442 = vsel %vm7441, %v7112, -inf
        %v7443 = vrot.slane %v7442, 4
        %v7444 = vmax.f32 %v7442, %v7443
        %v7445 = vrot.slane %v7444, 2
        %v7446 = vmax.f32 %v7444, %v7445
        %v7447 = vrot.slane %v7446, 1
        %v7448 = vmax.f32 %v7446, %v7447
        %v7449 = vsel %vm7441, %v7120, -inf
        %v7450 = vrot.slane %v7449, 4
        %v7451 = vmax.f32 %v7449, %v7450
        %v7452 = vrot.slane %v7451, 2
        %v7453 = vmax.f32 %v7451, %v7452
        %v7454 = vrot.slane %v7453, 1
        %v7455 = vmax.f32 %v7453, %v7454
        %v7456 = vsel %vm7441, %v7119, -inf
        %v7457 = vrot.slane %v7456, 4
        %v7458 = vmax.f32 %v7456, %v7457
        %v7459 = vrot.slane %v7458, 2
        %v7460 = vmax.f32 %v7458, %v7459
        %v7461 = vrot.slane %v7460, 1
        %v7462 = vmax.f32 %v7460, %v7461
        %v7463 = vsel %vm7441, %v7121, -inf
        %v7464 = vrot.slane %v7463, 4
        %v7465 = vmax.f32 %v7463, %v7464
        %v7466 = vrot.slane %v7465, 2
        %v7467 = vmax.f32 %v7465, %v7466
        %v7468 = vrot.slane %v7467, 1
        %v7469 = vmax.f32 %v7467, %v7468
        %v7470 = vsel %vm7441, %v7129, -inf
        %v7471 = vrot.slane %v7470, 4
        %v7472 = vmax.f32 %v7470, %v7471
        %v7473 = vrot.slane %v7472, 2
        %v7474 = vmax.f32 %v7472, %v7473
        %v7475 = vrot.slane %v7474, 1
        %v7476 = vmax.f32 %v7474, %v7475
        %v7477 = vsel %vm7441, %v7137, -inf
        %v7478 = vrot.slane %v7477, 4
        %v7479 = vmax.f32 %v7477, %v7478
        %v7480 = vrot.slane %v7479, 2
        %v7481 = vmax.f32 %v7479, %v7480
        %v7482 = vrot.slane %v7481, 1
        %v7483 = vmax.f32 %v7481, %v7482
        %v7484 = vsel %vm7441, %v7136, -inf
        %v7485 = vrot.slane %v7484, 4
        %v7486 = vmax.f32 %v7484, %v7485
        %v7487 = vrot.slane %v7486, 2
        %v7488 = vmax.f32 %v7486, %v7487
        %v7489 = vrot.slane %v7488, 1
        %v7490 = vmax.f32 %v7488, %v7489
        %v7491 = vsel %vm7441, %v7138, -inf
        %v7492 = vrot.slane %v7491, 4
        %v7493 = vmax.f32 %v7491, %v7492
        %v7494 = vrot.slane %v7493, 2
        %v7495 = vmax.f32 %v7493, %v7494
        %v7496 = vrot.slane %v7495, 1
        %v7497 = vmax.f32 %v7495, %v7496
        %v7498 = vsel %vm7441, %v7146, -inf
        %v7499 = vrot.slane %v7498, 4
        %v7500 = vmax.f32 %v7498, %v7499
        %v7501 = vrot.slane %v7500, 2
        %v7502 = vmax.f32 %v7500, %v7501
        %v7503 = vrot.slane %v7502, 1
        %v7504 = vmax.f32 %v7502, %v7503
        %v7505 = vsel %vm7441, %v7154, -inf
        %v7506 = vrot.slane %v7505, 4
        %v7507 = vmax.f32 %v7505, %v7506
        %v7508 = vrot.slane %v7507, 2
        %v7509 = vmax.f32 %v7507, %v7508
        %v7510 = vrot.slane %v7509, 1
        %v7511 = vmax.f32 %v7509, %v7510
        %v7512 = vsel %vm7441, %v7153, -inf
        %v7513 = vrot.slane %v7512, 4
        %v7514 = vmax.f32 %v7512, %v7513
        %v7515 = vrot.slane %v7514, 2
        %v7516 = vmax.f32 %v7514, %v7515
        %v7517 = vrot.slane %v7516, 1
        %v7518 = vmax.f32 %v7516, %v7517
        %v7519 = vsel %vm7441, %v7155, -inf
        %v7520 = vrot.slane %v7519, 4
        %v7521 = vmax.f32 %v7519, %v7520
        %v7522 = vrot.slane %v7521, 2
        %v7523 = vmax.f32 %v7521, %v7522
        %v7524 = vrot.slane %v7523, 1
        %v7525 = vmax.f32 %v7523, %v7524
        %v7526 = vsel %vm7441, %v7163, -inf
        %v7527 = vrot.slane %v7526, 4
        %v7528 = vmax.f32 %v7526, %v7527
        %v7529 = vrot.slane %v7528, 2
        %v7530 = vmax.f32 %v7528, %v7529
        %v7531 = vrot.slane %v7530, 1
        %v7532 = vmax.f32 %v7530, %v7531
        %v7533 = vsel %vm7441, %v7171, -inf
        %v7534 = vrot.slane %v7533, 4
        %v7535 = vmax.f32 %v7533, %v7534
        %v7536 = vrot.slane %v7535, 2
        %v7537 = vmax.f32 %v7535, %v7536
        %v7538 = vrot.slane %v7537, 1
        %v7539 = vmax.f32 %v7537, %v7538
        %v7540 = vsel %vm7441, %v7170, -inf
        %v7541 = vrot.slane %v7540, 4
        %v7542 = vmax.f32 %v7540, %v7541
        %v7543 = vrot.slane %v7542, 2
        %v7544 = vmax.f32 %v7542, %v7543
        %v7545 = vrot.slane %v7544, 1
        %v7546 = vmax.f32 %v7544, %v7545
        %v7547 = vsel %vm7441, %v7172, -inf
        %v7548 = vrot.slane %v7547, 4
        %v7549 = vmax.f32 %v7547, %v7548
        %v7550 = vrot.slane %v7549, 2
        %v7551 = vmax.f32 %v7549, %v7550
        %v7552 = vrot.slane %v7551, 1
        %v7553 = vmax.f32 %v7551, %v7552
        %v7554 = vsel %vm7441, %v7180, -inf
        %v7555 = vrot.slane %v7554, 4
        %v7556 = vmax.f32 %v7554, %v7555
        %v7557 = vrot.slane %v7556, 2
        %v7558 = vmax.f32 %v7556, %v7557
        %v7559 = vrot.slane %v7558, 1
        %v7560 = vmax.f32 %v7558, %v7559
        %v7561 = vsel %vm7441, %v7188, -inf
        %v7562 = vrot.slane %v7561, 4
        %v7563 = vmax.f32 %v7561, %v7562
        %v7564 = vrot.slane %v7563, 2
        %v7565 = vmax.f32 %v7563, %v7564
        %v7566 = vrot.slane %v7565, 1
        %v7567 = vmax.f32 %v7565, %v7566
        %v7568 = vsel %vm7441, %v7187, -inf
        %v7569 = vrot.slane %v7568, 4
        %v7570 = vmax.f32 %v7568, %v7569
        %v7571 = vrot.slane %v7570, 2
        %v7572 = vmax.f32 %v7570, %v7571
        %v7573 = vrot.slane %v7572, 1
        %v7574 = vmax.f32 %v7572, %v7573
        %v7575 = vsel %vm7441, %v7189, -inf
        %v7576 = vrot.slane %v7575, 4
        %v7577 = vmax.f32 %v7575, %v7576
        %v7578 = vrot.slane %v7577, 2
        %v7579 = vmax.f32 %v7577, %v7578
        %v7580 = vrot.slane %v7579, 1
        %v7581 = vmax.f32 %v7579, %v7580
        %v7582 = vsel %vm7441, %v7197, -inf
        %v7583 = vrot.slane %v7582, 4
        %v7584 = vmax.f32 %v7582, %v7583
        %v7585 = vrot.slane %v7584, 2
        %v7586 = vmax.f32 %v7584, %v7585
        %v7587 = vrot.slane %v7586, 1
        %v7588 = vmax.f32 %v7586, %v7587
        %v7589 = vsel %vm7441, %v7205, -inf
        %v7590 = vrot.slane %v7589, 4
        %v7591 = vmax.f32 %v7589, %v7590
        %v7592 = vrot.slane %v7591, 2
        %v7593 = vmax.f32 %v7591, %v7592
        %v7594 = vrot.slane %v7593, 1
        %v7595 = vmax.f32 %v7593, %v7594
        %v7596 = vsel %vm7441, %v7204, -inf
        %v7597 = vrot.slane %v7596, 4
        %v7598 = vmax.f32 %v7596, %v7597
        %v7599 = vrot.slane %v7598, 2
        %v7600 = vmax.f32 %v7598, %v7599
        %v7601 = vrot.slane %v7600, 1
        %v7602 = vmax.f32 %v7600, %v7601
        %v7603 = vsel %vm7441, %v7206, -inf
        %v7604 = vrot.slane %v7603, 4
        %v7605 = vmax.f32 %v7603, %v7604
        %v7606 = vrot.slane %v7605, 2
        %v7607 = vmax.f32 %v7605, %v7606
        %v7608 = vrot.slane %v7607, 1
        %v7609 = vmax.f32 %v7607, %v7608
        %v7610 = vsel %vm7441, %v7214, -inf
        %v7611 = vrot.slane %v7610, 4
        %v7612 = vmax.f32 %v7610, %v7611
        %v7613 = vrot.slane %v7612, 2
        %v7614 = vmax.f32 %v7612, %v7613
        %v7615 = vrot.slane %v7614, 1
        %v7616 = vmax.f32 %v7614, %v7615
        %v7617 = vsel %vm7441, %v7222, -inf
        %v7618 = vrot.slane %v7617, 4
        %v7619 = vmax.f32 %v7617, %v7618
        %v7620 = vrot.slane %v7619, 2
        %v7621 = vmax.f32 %v7619, %v7620
        %v7622 = vrot.slane %v7621, 1
        %v7623 = vmax.f32 %v7621, %v7622
        %v7624 = vsel %vm7441, %v7221, -inf
        %v7625 = vrot.slane %v7624, 4
        %v7626 = vmax.f32 %v7624, %v7625
        %v7627 = vrot.slane %v7626, 2
        %v7628 = vmax.f32 %v7626, %v7627
        %v7629 = vrot.slane %v7628, 1
        %v7630 = vmax.f32 %v7628, %v7629
        %v7631 = vsel %vm7441, %v7223, -inf
        %v7632 = vrot.slane %v7631, 4
        %v7633 = vmax.f32 %v7631, %v7632
        %v7634 = vrot.slane %v7633, 2
        %v7635 = vmax.f32 %v7633, %v7634
        %v7636 = vrot.slane %v7635, 1
        %v7637 = vmax.f32 %v7635, %v7636
        %v7638 = vsel %vm7441, %v7231, -inf
        %v7639 = vrot.slane %v7638, 4
        %v7640 = vmax.f32 %v7638, %v7639
        %v7641 = vrot.slane %v7640, 2
        %v7642 = vmax.f32 %v7640, %v7641
        %v7643 = vrot.slane %v7642, 1
        %v7644 = vmax.f32 %v7642, %v7643
        %v7645 = vsel %vm7441, %v7239, -inf
        %v7646 = vrot.slane %v7645, 4
        %v7647 = vmax.f32 %v7645, %v7646
        %v7648 = vrot.slane %v7647, 2
        %v7649 = vmax.f32 %v7647, %v7648
        %v7650 = vrot.slane %v7649, 1
        %v7651 = vmax.f32 %v7649, %v7650
        %v7652 = vsel %vm7441, %v7238, -inf
        %v7653 = vrot.slane %v7652, 4
        %v7654 = vmax.f32 %v7652, %v7653
        %v7655 = vrot.slane %v7654, 2
        %v7656 = vmax.f32 %v7654, %v7655
        %v7657 = vrot.slane %v7656, 1
        %v7658 = vmax.f32 %v7656, %v7657
        %v7659 = vsel %vm7441, %v7240, -inf
        %v7660 = vrot.slane %v7659, 4
        %v7661 = vmax.f32 %v7659, %v7660
        %v7662 = vrot.slane %v7661, 2
        %v7663 = vmax.f32 %v7661, %v7662
        %v7664 = vrot.slane %v7663, 1
        %v7665 = vmax.f32 %v7663, %v7664
        %v7666 = vsel %vm7441, %v7248, -inf
        %v7667 = vrot.slane %v7666, 4
        %v7668 = vmax.f32 %v7666, %v7667
        %v7669 = vrot.slane %v7668, 2
        %v7670 = vmax.f32 %v7668, %v7669
        %v7671 = vrot.slane %v7670, 1
        %v7672 = vmax.f32 %v7670, %v7671
        %v7673 = vsel %vm7441, %v7256, -inf
        %v7674 = vrot.slane %v7673, 4
        %v7675 = vmax.f32 %v7673, %v7674
        %v7676 = vrot.slane %v7675, 2
        %v7677 = vmax.f32 %v7675, %v7676
        %v7678 = vrot.slane %v7677, 1
        %v7679 = vmax.f32 %v7677, %v7678
        %v7680 = vsel %vm7441, %v7255, -inf
        %v7681 = vrot.slane %v7680, 4
        %v7682 = vmax.f32 %v7680, %v7681
        %v7683 = vrot.slane %v7682, 2
        %v7684 = vmax.f32 %v7682, %v7683
        %v7685 = vrot.slane %v7684, 1
        %v7686 = vmax.f32 %v7684, %v7685
        %v7687 = vsel %vm7441, %v7257, -inf
        %v7688 = vrot.slane %v7687, 4
        %v7689 = vmax.f32 %v7687, %v7688
        %v7690 = vrot.slane %v7689, 2
        %v7691 = vmax.f32 %v7689, %v7690
        %v7692 = vrot.slane %v7691, 1
        %v7693 = vmax.f32 %v7691, %v7692
        %v7694 = vsel %vm7441, %v7265, -inf
        %v7695 = vrot.slane %v7694, 4
        %v7696 = vmax.f32 %v7694, %v7695
        %v7697 = vrot.slane %v7696, 2
        %v7698 = vmax.f32 %v7696, %v7697
        %v7699 = vrot.slane %v7698, 1
        %v7700 = vmax.f32 %v7698, %v7699
        %v7701 = vsel %vm7441, %v7273, -inf
        %v7702 = vrot.slane %v7701, 4
        %v7703 = vmax.f32 %v7701, %v7702
        %v7704 = vrot.slane %v7703, 2
        %v7705 = vmax.f32 %v7703, %v7704
        %v7706 = vrot.slane %v7705, 1
        %v7707 = vmax.f32 %v7705, %v7706
        %v7708 = vsel %vm7441, %v7272, -inf
        %v7709 = vrot.slane %v7708, 4
        %v7710 = vmax.f32 %v7708, %v7709
        %v7711 = vrot.slane %v7710, 2
        %v7712 = vmax.f32 %v7710, %v7711
        %v7713 = vrot.slane %v7712, 1
        %v7714 = vmax.f32 %v7712, %v7713
        %v7715 = vsel %vm7441, %v7274, -inf
        %v7716 = vrot.slane %v7715, 4
        %v7717 = vmax.f32 %v7715, %v7716
        %v7718 = vrot.slane %v7717, 2
        %v7719 = vmax.f32 %v7717, %v7718
        %v7720 = vrot.slane %v7719, 1
        %v7721 = vmax.f32 %v7719, %v7720
        %v7722 = vsel %vm7441, %v7282, -inf
        %v7723 = vrot.slane %v7722, 4
        %v7724 = vmax.f32 %v7722, %v7723
        %v7725 = vrot.slane %v7724, 2
        %v7726 = vmax.f32 %v7724, %v7725
        %v7727 = vrot.slane %v7726, 1
        %v7728 = vmax.f32 %v7726, %v7727
        %v7729 = vsel %vm7441, %v7290, -inf
        %v7730 = vrot.slane %v7729, 4
        %v7731 = vmax.f32 %v7729, %v7730
        %v7732 = vrot.slane %v7731, 2
        %v7733 = vmax.f32 %v7731, %v7732
        %v7734 = vrot.slane %v7733, 1
        %v7735 = vmax.f32 %v7733, %v7734
        %v7736 = vsel %vm7441, %v7289, -inf
        %v7737 = vrot.slane %v7736, 4
        %v7738 = vmax.f32 %v7736, %v7737
        %v7739 = vrot.slane %v7738, 2
        %v7740 = vmax.f32 %v7738, %v7739
        %v7741 = vrot.slane %v7740, 1
        %v7742 = vmax.f32 %v7740, %v7741
        %v7743 = vsel %vm7441, %v7291, -inf
        %v7744 = vrot.slane %v7743, 4
        %v7745 = vmax.f32 %v7743, %v7744
        %v7746 = vrot.slane %v7745, 2
        %v7747 = vmax.f32 %v7745, %v7746
        %v7748 = vrot.slane %v7747, 1
        %v7749 = vmax.f32 %v7747, %v7748
        %v7750 = vsel %vm7441, %v7299, -inf
        %v7751 = vrot.slane %v7750, 4
        %v7752 = vmax.f32 %v7750, %v7751
        %v7753 = vrot.slane %v7752, 2
        %v7754 = vmax.f32 %v7752, %v7753
        %v7755 = vrot.slane %v7754, 1
        %v7756 = vmax.f32 %v7754, %v7755
        %v7757 = vsel %vm7441, %v7307, -inf
        %v7758 = vrot.slane %v7757, 4
        %v7759 = vmax.f32 %v7757, %v7758
        %v7760 = vrot.slane %v7759, 2
        %v7761 = vmax.f32 %v7759, %v7760
        %v7762 = vrot.slane %v7761, 1
        %v7763 = vmax.f32 %v7761, %v7762
        %v7764 = vsel %vm7441, %v7306, -inf
        %v7765 = vrot.slane %v7764, 4
        %v7766 = vmax.f32 %v7764, %v7765
        %v7767 = vrot.slane %v7766, 2
        %v7768 = vmax.f32 %v7766, %v7767
        %v7769 = vrot.slane %v7768, 1
        %v7770 = vmax.f32 %v7768, %v7769
        %v7771 = vsel %vm7441, %v7308, -inf
        %v7772 = vrot.slane %v7771, 4
        %v7773 = vmax.f32 %v7771, %v7772
        %v7774 = vrot.slane %v7773, 2
        %v7775 = vmax.f32 %v7773, %v7774
        %v7776 = vrot.slane %v7775, 1
        %v7777 = vmax.f32 %v7775, %v7776
        %v7778 = vsel %vm7441, %v7316, -inf
        %v7779 = vrot.slane %v7778, 4
        %v7780 = vmax.f32 %v7778, %v7779
        %v7781 = vrot.slane %v7780, 2
        %v7782 = vmax.f32 %v7780, %v7781
        %v7783 = vrot.slane %v7782, 1
        %v7784 = vmax.f32 %v7782, %v7783
        %v7785 = vsel %vm7441, %v7324, -inf
        %v7786 = vrot.slane %v7785, 4
        %v7787 = vmax.f32 %v7785, %v7786
        %v7788 = vrot.slane %v7787, 2
        %v7789 = vmax.f32 %v7787, %v7788
        %v7790 = vrot.slane %v7789, 1
        %v7791 = vmax.f32 %v7789, %v7790
        %v7792 = vsel %vm7441, %v7323, -inf
        %v7793 = vrot.slane %v7792, 4
        %v7794 = vmax.f32 %v7792, %v7793
        %v7795 = vrot.slane %v7794, 2
        %v7796 = vmax.f32 %v7794, %v7795
        %v7797 = vrot.slane %v7796, 1
        %v7798 = vmax.f32 %v7796, %v7797
        %v7799 = vsel %vm7441, %v7325, -inf
        %v7800 = vrot.slane %v7799, 4
        %v7801 = vmax.f32 %v7799, %v7800
        %v7802 = vrot.slane %v7801, 2
        %v7803 = vmax.f32 %v7801, %v7802
        %v7804 = vrot.slane %v7803, 1
        %v7805 = vmax.f32 %v7803, %v7804
        %v7806 = vsel %vm7441, %v7333, -inf
        %v7807 = vrot.slane %v7806, 4
        %v7808 = vmax.f32 %v7806, %v7807
        %v7809 = vrot.slane %v7808, 2
        %v7810 = vmax.f32 %v7808, %v7809
        %v7811 = vrot.slane %v7810, 1
        %v7812 = vmax.f32 %v7810, %v7811
        %v7813 = vsel %vm7441, %v7341, -inf
        %v7814 = vrot.slane %v7813, 4
        %v7815 = vmax.f32 %v7813, %v7814
        %v7816 = vrot.slane %v7815, 2
        %v7817 = vmax.f32 %v7815, %v7816
        %v7818 = vrot.slane %v7817, 1
        %v7819 = vmax.f32 %v7817, %v7818
        %v7820 = vsel %vm7441, %v7340, -inf
        %v7821 = vrot.slane %v7820, 4
        %v7822 = vmax.f32 %v7820, %v7821
        %v7823 = vrot.slane %v7822, 2
        %v7824 = vmax.f32 %v7822, %v7823
        %v7825 = vrot.slane %v7824, 1
        %v7826 = vmax.f32 %v7824, %v7825
        %v7827 = vsel %vm7441, %v7342, -inf
        %v7828 = vrot.slane %v7827, 4
        %v7829 = vmax.f32 %v7827, %v7828
        %v7830 = vrot.slane %v7829, 2
        %v7831 = vmax.f32 %v7829, %v7830
        %v7832 = vrot.slane %v7831, 1
        %v7833 = vmax.f32 %v7831, %v7832
        %v7834 = vsel %vm7441, %v7350, -inf
        %v7835 = vrot.slane %v7834, 4
        %v7836 = vmax.f32 %v7834, %v7835
        %v7837 = vrot.slane %v7836, 2
        %v7838 = vmax.f32 %v7836, %v7837
        %v7839 = vrot.slane %v7838, 1
        %v7840 = vmax.f32 %v7838, %v7839
        %v7841 = vsel %vm7441, %v7358, -inf
        %v7842 = vrot.slane %v7841, 4
        %v7843 = vmax.f32 %v7841, %v7842
        %v7844 = vrot.slane %v7843, 2
        %v7845 = vmax.f32 %v7843, %v7844
        %v7846 = vrot.slane %v7845, 1
        %v7847 = vmax.f32 %v7845, %v7846
        %v7848 = vsel %vm7441, %v7357, -inf
        %v7849 = vrot.slane %v7848, 4
        %v7850 = vmax.f32 %v7848, %v7849
        %v7851 = vrot.slane %v7850, 2
        %v7852 = vmax.f32 %v7850, %v7851
        %v7853 = vrot.slane %v7852, 1
        %v7854 = vmax.f32 %v7852, %v7853
        %v7855 = vsel %vm7441, %v7359, -inf
        %v7856 = vrot.slane %v7855, 4
        %v7857 = vmax.f32 %v7855, %v7856
        %v7858 = vrot.slane %v7857, 2
        %v7859 = vmax.f32 %v7857, %v7858
        %v7860 = vrot.slane %v7859, 1
        %v7861 = vmax.f32 %v7859, %v7860
        %v7862 = vsel %vm7441, %v7367, -inf
        %v7863 = vrot.slane %v7862, 4
        %v7864 = vmax.f32 %v7862, %v7863
        %v7865 = vrot.slane %v7864, 2
        %v7866 = vmax.f32 %v7864, %v7865
        %v7867 = vrot.slane %v7866, 1
        %v7868 = vmax.f32 %v7866, %v7867
        %v7869 = vsel %vm7441, %v7375, -inf
        %v7870 = vrot.slane %v7869, 4
        %v7871 = vmax.f32 %v7869, %v7870
        %v7872 = vrot.slane %v7871, 2
        %v7873 = vmax.f32 %v7871, %v7872
        %v7874 = vrot.slane %v7873, 1
        %v7875 = vmax.f32 %v7873, %v7874
        %v7876 = vsel %vm7441, %v7374, -inf
        %v7877 = vrot.slane %v7876, 4
        %v7878 = vmax.f32 %v7876, %v7877
        %v7879 = vrot.slane %v7878, 2
        %v7880 = vmax.f32 %v7878, %v7879
        %v7881 = vrot.slane %v7880, 1
        %v7882 = vmax.f32 %v7880, %v7881
        %v7883 = vsel %vm7441, %v7376, -inf
        %v7884 = vrot.slane %v7883, 4
        %v7885 = vmax.f32 %v7883, %v7884
        %v7886 = vrot.slane %v7885, 2
        %v7887 = vmax.f32 %v7885, %v7886
        %v7888 = vrot.slane %v7887, 1
        %v7889 = vmax.f32 %v7887, %v7888
        %v7890 = vpack.c.bf16 %v7448, %v7448
        %v7891 = vpack.c.bf16 %v7455, %v7455
        %v7892 = vpack.c.bf16 %v7462, %v7462
        %v7893 = vpack.c.bf16 %v7469, %v7469
        %v7894 = vpack.c.bf16 %v7476, %v7476
        %v7895 = vpack.c.bf16 %v7483, %v7483
        %v7896 = vpack.c.bf16 %v7490, %v7490
        %v7897 = vpack.c.bf16 %v7497, %v7497
        %v7898 = vpack.c.bf16 %v7504, %v7504
        %v7899 = vpack.c.bf16 %v7511, %v7511
        %v7900 = vpack.c.bf16 %v7518, %v7518
        %v7901 = vpack.c.bf16 %v7525, %v7525
        %v7902 = vpack.c.bf16 %v7532, %v7532
        %v7903 = vpack.c.bf16 %v7539, %v7539
        %v7904 = vpack.c.bf16 %v7546, %v7546
        %v7905 = vpack.c.bf16 %v7553, %v7553
        %v7906 = vpack.c.bf16 %v7560, %v7560
        %v7907 = vpack.c.bf16 %v7567, %v7567
        %v7908 = vpack.c.bf16 %v7574, %v7574
        %v7909 = vpack.c.bf16 %v7581, %v7581
        %v7910 = vpack.c.bf16 %v7588, %v7588
        %v7911 = vpack.c.bf16 %v7595, %v7595
        %v7912 = vpack.c.bf16 %v7602, %v7602
        %v7913 = vpack.c.bf16 %v7609, %v7609
        %v7914 = vpack.c.bf16 %v7616, %v7616
        %v7915 = vpack.c.bf16 %v7623, %v7623
        %v7916 = vpack.c.bf16 %v7630, %v7630
        %v7917 = vpack.c.bf16 %v7637, %v7637
        %v7918 = vpack.c.bf16 %v7644, %v7644
        %v7919 = vpack.c.bf16 %v7651, %v7651
        %v7920 = vpack.c.bf16 %v7658, %v7658
        %v7921 = vpack.c.bf16 %v7665, %v7665
        %v7922 = vpack.c.bf16 %v7672, %v7672
        %v7923 = vpack.c.bf16 %v7679, %v7679
        %v7924 = vpack.c.bf16 %v7686, %v7686
        %v7925 = vpack.c.bf16 %v7693, %v7693
        %v7926 = vpack.c.bf16 %v7700, %v7700
        %v7927 = vpack.c.bf16 %v7707, %v7707
        %v7928 = vpack.c.bf16 %v7714, %v7714
        %v7929 = vpack.c.bf16 %v7721, %v7721
        %v7930 = vpack.c.bf16 %v7728, %v7728
        %v7931 = vpack.c.bf16 %v7735, %v7735
        %v7932 = vpack.c.bf16 %v7742, %v7742
        %v7933 = vpack.c.bf16 %v7749, %v7749
        %v7934 = vpack.c.bf16 %v7756, %v7756
        %v7935 = vpack.c.bf16 %v7763, %v7763
        %v7936 = vpack.c.bf16 %v7770, %v7770
        %v7937 = vpack.c.bf16 %v7777, %v7777
        %v7938 = vpack.c.bf16 %v7784, %v7784
        %v7939 = vpack.c.bf16 %v7791, %v7791
        %v7940 = vpack.c.bf16 %v7798, %v7798
        %v7941 = vpack.c.bf16 %v7805, %v7805
        %v7942 = vpack.c.bf16 %v7812, %v7812
        %v7943 = vpack.c.bf16 %v7819, %v7819
        %v7944 = vpack.c.bf16 %v7826, %v7826
        %v7945 = vpack.c.bf16 %v7833, %v7833
        %v7946 = vpack.c.bf16 %v7840, %v7840
        %v7947 = vpack.c.bf16 %v7847, %v7847
        %v7948 = vpack.c.bf16 %v7854, %v7854
        %v7949 = vpack.c.bf16 %v7861, %v7861
        %v7950 = vpack.c.bf16 %v7868, %v7868
        %v7951 = vpack.c.bf16 %v7875, %v7875
        %v7952 = vpack.c.bf16 %v7882, %v7882
        %v7953 = vpack.c.bf16 %v7889, %v7889
        %v8018 = vunpack.c.l.b16 %v7890
        %v8019 = vunpack.c.l.b16 %v7891
        %v8020 = vunpack.c.l.b16 %v7892
        %v8021 = vunpack.c.l.b16 %v7893
        %v8022 = vunpack.c.l.b16 %v7894
        %v8023 = vunpack.c.l.b16 %v7895
        %v8024 = vunpack.c.l.b16 %v7896
        %v8025 = vunpack.c.l.b16 %v7897
        %v8026 = vunpack.c.l.b16 %v7898
        %v8027 = vunpack.c.l.b16 %v7899
        %v8028 = vunpack.c.l.b16 %v7900
        %v8029 = vunpack.c.l.b16 %v7901
        %v8030 = vunpack.c.l.b16 %v7902
        %v8031 = vunpack.c.l.b16 %v7903
        %v8032 = vunpack.c.l.b16 %v7904
        %v8033 = vunpack.c.l.b16 %v7905
        %v8034 = vunpack.c.l.b16 %v7906
        %v8035 = vunpack.c.l.b16 %v7907
        %v8036 = vunpack.c.l.b16 %v7908
        %v8037 = vunpack.c.l.b16 %v7909
        %v8038 = vunpack.c.l.b16 %v7910
        %v8039 = vunpack.c.l.b16 %v7911
        %v8040 = vunpack.c.l.b16 %v7912
        %v8041 = vunpack.c.l.b16 %v7913
        %v8042 = vunpack.c.l.b16 %v7914
        %v8043 = vunpack.c.l.b16 %v7915
        %v8044 = vunpack.c.l.b16 %v7916
        %v8045 = vunpack.c.l.b16 %v7917
        %v8046 = vunpack.c.l.b16 %v7918
        %v8047 = vunpack.c.l.b16 %v7919
        %v8048 = vunpack.c.l.b16 %v7920
        %v8049 = vunpack.c.l.b16 %v7921
        %v8050 = vunpack.c.l.b16 %v7922
        %v8051 = vunpack.c.l.b16 %v7923
        %v8052 = vunpack.c.l.b16 %v7924
        %v8053 = vunpack.c.l.b16 %v7925
        %v8054 = vunpack.c.l.b16 %v7926
        %v8055 = vunpack.c.l.b16 %v7927
        %v8056 = vunpack.c.l.b16 %v7928
        %v8057 = vunpack.c.l.b16 %v7929
        %v8058 = vunpack.c.l.b16 %v7930
        %v8059 = vunpack.c.l.b16 %v7931
        %v8060 = vunpack.c.l.b16 %v7932
        %v8061 = vunpack.c.l.b16 %v7933
        %v8062 = vunpack.c.l.b16 %v7934
        %v8063 = vunpack.c.l.b16 %v7935
        %v8064 = vunpack.c.l.b16 %v7936
        %v8065 = vunpack.c.l.b16 %v7937
        %v8066 = vunpack.c.l.b16 %v7938
        %v8067 = vunpack.c.l.b16 %v7939
        %v8068 = vunpack.c.l.b16 %v7940
        %v8069 = vunpack.c.l.b16 %v7941
        %v8070 = vunpack.c.l.b16 %v7942
        %v8071 = vunpack.c.l.b16 %v7943
        %v8072 = vunpack.c.l.b16 %v7944
        %v8073 = vunpack.c.l.b16 %v7945
        %v8074 = vunpack.c.l.b16 %v7946
        %v8075 = vunpack.c.l.b16 %v7947
        %v8076 = vunpack.c.l.b16 %v7948
        %v8077 = vunpack.c.l.b16 %v7949
        %v8078 = vunpack.c.l.b16 %v7950
        %v8079 = vunpack.c.l.b16 %v7951
        %v8080 = vunpack.c.l.b16 %v7952
        %v8081 = vunpack.c.l.b16 %v7953
        %v8082 = vpack.c.b16 %v8018, %v8018
        %v8083 = vpack.c.b16 %v8019, %v8019
        %v8084 = vpack.c.b16 %v8020, %v8020
        %v8085 = vpack.c.b16 %v8021, %v8021
        %v8086 = vpack.c.b16 %v8022, %v8022
        %v8087 = vpack.c.b16 %v8023, %v8023
        %v8088 = vpack.c.b16 %v8024, %v8024
        %v8089 = vpack.c.b16 %v8025, %v8025
        %v8090 = vpack.c.b16 %v8026, %v8026
        %v8091 = vpack.c.b16 %v8027, %v8027
        %v8092 = vpack.c.b16 %v8028, %v8028
        %v8093 = vpack.c.b16 %v8029, %v8029
        %v8094 = vpack.c.b16 %v8030, %v8030
        %v8095 = vpack.c.b16 %v8031, %v8031
        %v8096 = vpack.c.b16 %v8032, %v8032
        %v8097 = vpack.c.b16 %v8033, %v8033
        %v8098 = vpack.c.b16 %v8034, %v8034
        %v8099 = vpack.c.b16 %v8035, %v8035
        %v8100 = vpack.c.b16 %v8036, %v8036
        %v8101 = vpack.c.b16 %v8037, %v8037
        %v8102 = vpack.c.b16 %v8038, %v8038
        %v8103 = vpack.c.b16 %v8039, %v8039
        %v8104 = vpack.c.b16 %v8040, %v8040
        %v8105 = vpack.c.b16 %v8041, %v8041
        %v8106 = vpack.c.b16 %v8042, %v8042
        %v8107 = vpack.c.b16 %v8043, %v8043
        %v8108 = vpack.c.b16 %v8044, %v8044
        %v8109 = vpack.c.b16 %v8045, %v8045
        %v8110 = vpack.c.b16 %v8046, %v8046
        %v8111 = vpack.c.b16 %v8047, %v8047
        %v8112 = vpack.c.b16 %v8048, %v8048
        %v8113 = vpack.c.b16 %v8049, %v8049
        %v8114 = vpack.c.b16 %v8050, %v8050
        %v8115 = vpack.c.b16 %v8051, %v8051
        %v8116 = vpack.c.b16 %v8052, %v8052
        %v8117 = vpack.c.b16 %v8053, %v8053
        %v8118 = vpack.c.b16 %v8054, %v8054
        %v8119 = vpack.c.b16 %v8055, %v8055
        %v8120 = vpack.c.b16 %v8056, %v8056
        %v8121 = vpack.c.b16 %v8057, %v8057
        %v8122 = vpack.c.b16 %v8058, %v8058
        %v8123 = vpack.c.b16 %v8059, %v8059
        %v8124 = vpack.c.b16 %v8060, %v8060
        %v8125 = vpack.c.b16 %v8061, %v8061
        %v8126 = vpack.c.b16 %v8062, %v8062
        %v8127 = vpack.c.b16 %v8063, %v8063
        %v8128 = vpack.c.b16 %v8064, %v8064
        %v8129 = vpack.c.b16 %v8065, %v8065
        %v8130 = vpack.c.b16 %v8066, %v8066
        %v8131 = vpack.c.b16 %v8067, %v8067
        %v8132 = vpack.c.b16 %v8068, %v8068
        %v8133 = vpack.c.b16 %v8069, %v8069
        %v8134 = vpack.c.b16 %v8070, %v8070
        %v8135 = vpack.c.b16 %v8071, %v8071
        %v8136 = vpack.c.b16 %v8072, %v8072
        %v8137 = vpack.c.b16 %v8073, %v8073
        %v8138 = vpack.c.b16 %v8074, %v8074
        %v8139 = vpack.c.b16 %v8075, %v8075
        %v8140 = vpack.c.b16 %v8076, %v8076
        %v8141 = vpack.c.b16 %v8077, %v8077
        %v8142 = vpack.c.b16 %v8078, %v8078
        %v8143 = vpack.c.b16 %v8079, %v8079
        %v8144 = vpack.c.b16 %v8080, %v8080
        %v8145 = vpack.c.b16 %v8081, %v8081
        %v8146 = vunpack.c.l.b16 %v8082
        %v8147 = vunpack.c.l.b16 %v8083
        %v8148 = vunpack.c.l.b16 %v8084
        %v8149 = vunpack.c.l.b16 %v8085
        %v8150 = vunpack.c.l.b16 %v8086
        %v8151 = vunpack.c.l.b16 %v8087
        %v8152 = vunpack.c.l.b16 %v8088
        %v8153 = vunpack.c.l.b16 %v8089
        %v8154 = vunpack.c.l.b16 %v8090
        %v8155 = vunpack.c.l.b16 %v8091
        %v8156 = vunpack.c.l.b16 %v8092
        %v8157 = vunpack.c.l.b16 %v8093
        %v8158 = vunpack.c.l.b16 %v8094
        %v8159 = vunpack.c.l.b16 %v8095
        %v8160 = vunpack.c.l.b16 %v8096
        %v8161 = vunpack.c.l.b16 %v8097
        %v8162 = vunpack.c.l.b16 %v8098
        %v8163 = vunpack.c.l.b16 %v8099
        %v8164 = vunpack.c.l.b16 %v8100
        %v8165 = vunpack.c.l.b16 %v8101
        %v8166 = vunpack.c.l.b16 %v8102
        %v8167 = vunpack.c.l.b16 %v8103
        %v8168 = vunpack.c.l.b16 %v8104
        %v8169 = vunpack.c.l.b16 %v8105
        %v8170 = vunpack.c.l.b16 %v8106
        %v8171 = vunpack.c.l.b16 %v8107
        %v8172 = vunpack.c.l.b16 %v8108
        %v8173 = vunpack.c.l.b16 %v8109
        %v8174 = vunpack.c.l.b16 %v8110
        %v8175 = vunpack.c.l.b16 %v8111
        %v8176 = vunpack.c.l.b16 %v8112
        %v8177 = vunpack.c.l.b16 %v8113
        %v8178 = vunpack.c.l.b16 %v8114
        %v8179 = vunpack.c.l.b16 %v8115
        %v8180 = vunpack.c.l.b16 %v8116
        %v8181 = vunpack.c.l.b16 %v8117
        %v8182 = vunpack.c.l.b16 %v8118
        %v8183 = vunpack.c.l.b16 %v8119
        %v8184 = vunpack.c.l.b16 %v8120
        %v8185 = vunpack.c.l.b16 %v8121
        %v8186 = vunpack.c.l.b16 %v8122
        %v8187 = vunpack.c.l.b16 %v8123
        %v8188 = vunpack.c.l.b16 %v8124
        %v8189 = vunpack.c.l.b16 %v8125
        %v8190 = vunpack.c.l.b16 %v8126
        %v8191 = vunpack.c.l.b16 %v8127
        %v8192 = vunpack.c.l.b16 %v8128
        %v8193 = vunpack.c.l.b16 %v8129
        %v8194 = vunpack.c.l.b16 %v8130
        %v8195 = vunpack.c.l.b16 %v8131
        %v8196 = vunpack.c.l.b16 %v8132
        %v8197 = vunpack.c.l.b16 %v8133
        %v8198 = vunpack.c.l.b16 %v8134
        %v8199 = vunpack.c.l.b16 %v8135
        %v8200 = vunpack.c.l.b16 %v8136
        %v8201 = vunpack.c.l.b16 %v8137
        %v8202 = vunpack.c.l.b16 %v8138
        %v8203 = vunpack.c.l.b16 %v8139
        %v8204 = vunpack.c.l.b16 %v8140
        %v8205 = vunpack.c.l.b16 %v8141
        %v8206 = vunpack.c.l.b16 %v8142
        %v8207 = vunpack.c.l.b16 %v8143
        %v8208 = vunpack.c.l.b16 %v8144
        %v8209 = vunpack.c.l.b16 %v8145
        %vm8210 = vcmask 1041409
        %v8211 = vsel %vm8210, %v8147, %v8146
        %vm8212 = vcmask 1042434
        %v8213 = vsel %vm8212, %v8148, %v8211
        %vm8214 = vcmask 1043459
        %v8215 = vsel %vm8214, %v8149, %v8213
        %vm8216 = vcmask 1044484
        %v8217 = vsel %vm8216, %v8150, %v8215
        %vm8218 = vcmask 1045509
        %v8219 = vsel %vm8218, %v8151, %v8217
        %vm8220 = vcmask 1046534
        %v8221 = vsel %vm8220, %v8152, %v8219
        %vm8222 = vcmask 1047559
        %v8223 = vsel %vm8222, %v8153, %v8221
        %v8224 = vsel %vm8210, %v8155, %v8154
        %v8225 = vsel %vm8212, %v8156, %v8224
        %v8226 = vsel %vm8214, %v8157, %v8225
        %v8227 = vsel %vm8216, %v8158, %v8226
        %v8228 = vsel %vm8218, %v8159, %v8227
        %v8229 = vsel %vm8220, %v8160, %v8228
        %v8230 = vsel %vm8222, %v8161, %v8229
        %v8231 = vsel %vm8210, %v8163, %v8162
        %v8232 = vsel %vm8212, %v8164, %v8231
        %v8233 = vsel %vm8214, %v8165, %v8232
        %v8234 = vsel %vm8216, %v8166, %v8233
        %v8235 = vsel %vm8218, %v8167, %v8234
        %v8236 = vsel %vm8220, %v8168, %v8235
        %v8237 = vsel %vm8222, %v8169, %v8236
        %v8238 = vsel %vm8210, %v8171, %v8170
        %v8239 = vsel %vm8212, %v8172, %v8238
        %v8240 = vsel %vm8214, %v8173, %v8239
        %v8241 = vsel %vm8216, %v8174, %v8240
        %v8242 = vsel %vm8218, %v8175, %v8241
        %v8243 = vsel %vm8220, %v8176, %v8242
        %v8244 = vsel %vm8222, %v8177, %v8243
        %v8245 = vsel %vm8210, %v8179, %v8178
        %v8246 = vsel %vm8212, %v8180, %v8245
        %v8247 = vsel %vm8214, %v8181, %v8246
        %v8248 = vsel %vm8216, %v8182, %v8247
        %v8249 = vsel %vm8218, %v8183, %v8248
        %v8250 = vsel %vm8220, %v8184, %v8249
        %v8251 = vsel %vm8222, %v8185, %v8250
        %v8252 = vsel %vm8210, %v8187, %v8186
        %v8253 = vsel %vm8212, %v8188, %v8252
        %v8254 = vsel %vm8214, %v8189, %v8253
        %v8255 = vsel %vm8216, %v8190, %v8254
        %v8256 = vsel %vm8218, %v8191, %v8255
        %v8257 = vsel %vm8220, %v8192, %v8256
        %v8258 = vsel %vm8222, %v8193, %v8257
        %v8259 = vsel %vm8210, %v8195, %v8194
        %v8260 = vsel %vm8212, %v8196, %v8259
        %v8261 = vsel %vm8214, %v8197, %v8260
        %v8262 = vsel %vm8216, %v8198, %v8261
        %v8263 = vsel %vm8218, %v8199, %v8262
        %v8264 = vsel %vm8220, %v8200, %v8263
        %v8265 = vsel %vm8222, %v8201, %v8264
        %v8266 = vsel %vm8210, %v8203, %v8202
        %v8267 = vsel %vm8212, %v8204, %v8266
        %v8268 = vsel %vm8214, %v8205, %v8267
        %v8269 = vsel %vm8216, %v8206, %v8268
        %v8270 = vsel %vm8218, %v8207, %v8269
        %v8271 = vsel %vm8220, %v8208, %v8270
        %v8272 = vsel %vm8222, %v8209, %v8271
        %v8273 = vpack.c.b16 %v8223, %v8223
        %v8274 = vpack.c.b16 %v8230, %v8230
        %v8275 = vpack.c.b16 %v8237, %v8237
        %v8276 = vpack.c.b16 %v8244, %v8244
        %v8277 = vpack.c.b16 %v8251, %v8251
        %v8278 = vpack.c.b16 %v8258, %v8258
        %v8279 = vpack.c.b16 %v8265, %v8265
        %v8280 = vpack.c.b16 %v8272, %v8272
        %8289 = vst [vmem:[%s259] sm:$0xf] %v8273
        %8290 = vst [vmem:[%s259 + $0x4] sm:$0xf] %v8274
        %8291 = vst [vmem:[%s259 + $0x8] sm:$0xf] %v8275
        %8292 = vst [vmem:[%s259 + $0xc] sm:$0xf] %v8276
        %8293 = vst [vmem:[%s259 + $0x10] sm:$0xf] %v8277
        %8294 = vst [vmem:[%s259 + $0x14] sm:$0xf] %v8278
        %8295 = vst [vmem:[%s259 + $0x18] sm:$0xf] %v8279
        %8296 = vst [vmem:[%s259 + $0x1c] sm:$0xf] %v8280
        %s8297 = sand.u32 %s120, 1
        %s8298 = scalar_lea.sflag [#allocation5], %s8297
        %s8299 = sand.u32 %s120, 1
        %s8300 = smul.addr %s8299, 32
        %s8301 = scalar_lea.vmem [#allocation11], %s8300
        // Predicated region
        $region53: #{block_forward_nchw.1} parent=35 // pred_check
          %p8302 = pneg %p130
        $region54: #{block_forward_nchw.1} parent=35 // pred_check_branch
          %8304 = sbr.rel (%p8302) target = $region56
        $region55: #{block_forward_nchw.1} parent=35 // pred_region
          %s8306 = ssub.s32 512, 512
          %8307 = vsyncadd %s8298, %s8306
          %s8308 = smul.addr %s23, 8
          %s8309 = smul.addr %s8308, 64
          %s8310 = scalar_lea.hbm %s4, %s8309
          %s8311 = sshll.u32 %s8301, 4
          %s8312 = int_to_ptr.vmem [resolvable:$true] %s8311
          %8317 = dma.vmem_to_hbm [thread:$0]  %s8312, 512, %s8310, %s8298, 64, 64, 4
        $region56: #{block_forward_nchw.1} parent=35 // pred_fallthru
          _
      $region36: #{block_forward_nchw.1} parent=5 // pred_fallthru
        _
      %p8318 = scmp.le.s32.totalorder 2, %s18
      // Predicated region
      $region57: #{block_forward_nchw.1} parent=5 // pred_check
        %p8319 = pneg %p8318
      $region58: #{block_forward_nchw.1} parent=5 // pred_check_branch
        %8321 = sbr.rel (%p8319) target = $region60
      $region59: #{block_forward_nchw.1} parent=5 // pred_region
        %s8322 = ssub.s32 %s18, 2
        // Predicated region
        $region61: #{block_forward_nchw.1} parent=59 // pred_check
          %p8323 = pneg %p136
        $region62: #{block_forward_nchw.1} parent=59 // pred_check_branch
          %8325 = sbr.rel (%p8323) target = $region64
        $region63: #{block_forward_nchw.1} parent=59 // pred_region
          %s8326 = sand.u32 %s121, 1
          %s8327 = scalar_lea.sflag [#allocation5], %s8326
          %s8328 = sand.u32 %s121, 1
          %s8329 = smul.addr %s8328, 32
          %s8330 = scalar_lea.vmem [#allocation11], %s8329
          %8331 = dma.done %s8327, 512
        $region64: #{block_forward_nchw.1} parent=59 // pred_fallthru
          _
      $region60: #{block_forward_nchw.1} parent=5 // pred_fallthru
        _
    $region6: #{block_forward_nchw.1} parent=1 // loop_footer
      %s22 = sadd.s32 1, %s18
    $region7: #{block_forward_nchw.1} parent=1 // loop_footer_branch
      %17 = sbr.rel target = $region3
    $region8: #{block_forward_nchw.1} parent=1 // loop_exit
      _
    %8332 = vsyncpa [#allocation4], 1
    %s8333 = scalar_lea.sflag [#allocation4], 1
    %8334 = vsyncpa %s8333, 1
    %8335 = vsyncpa [#allocation7], 1
    %8336 = vsyncpa [#allocation10], 1
    %8337 = vsyncpa [#allocation5], 1
    %s8338 = scalar_lea.sflag [#allocation5], 1
    %8339 = vsyncpa %s8338, 1

</llo_original>
